<compile_context>
chip_gen: v7x
topology: tpu7x:2x2x1
jax: 0.10.0
libtpu: 0.0.40
codegen_flags: <defaults>
</compile_context>

<pallas_src>
import numpy as np
import jax
import jax.numpy as jnp
from jax.experimental import pallas as pl
from jax.experimental.pallas import tpu as pltpu


def _sigmoid(x):
    # sigmoid(x) = 0.5*tanh(0.5x)+0.5 -> tanh runs on the EUP slot, so the
    # fully serial recurrences never pay for an f32 divide on the VPU.
    return 0.5 * jnp.tanh(0.5 * x) + 0.5


# --------------------------------------------------------------------------
# Fused kernel: in-kernel conv + pool, support LSTM, attention LSTMCell,
# cosine-similarity head.
# --------------------------------------------------------------------------
def _make_fused_kernel(ns, nq, Hs, Ws, C, H):
    """Fused MatchingNet forward; all shapes static (baked in at trace time)."""
    N = ns + nq
    D = H                      # input_size == hidden_size
    WpC = (Ws + 2) * C         # padded width * channels (conv GEMM K dim)

    def kernel(xr_ref, wband_ref, brow_ref, pmat_ref, wproj_ref,
               whh_ref, bl_ref, wrh_ref, ba_ref, out_ref):
        # ---- CNN: Conv2d(C, D, 3, pad=1) + ReLU + global average pool.
        # 3x3 conv as 3 row-shifted banded GEMMs; output lanes are
        # (w-major, d-minor), i.e. Ws*D wide.
        # TODO(synk): the reference takes an arbitrary cnn_net; a concrete
        # Conv3x3+ReLU+GAP encoder is used here as the CNN.
        xr = xr_ref[...]                                       # [N, Hs+2, WpC]
        acc = jnp.dot(xr[:, 0:Hs, :].reshape(N * Hs, WpC), wband_ref[0],
                      preferred_element_type=jnp.float32)      # [N*Hs, Ws*D]
        for kh in (1, 2):
            acc = acc + jnp.dot(xr[:, kh:kh + Hs, :].reshape(N * Hs, WpC),
                                wband_ref[kh],
                                preferred_element_type=jnp.float32)
        y = jnp.maximum(acc + brow_ref[...], 0.0)              # bias + ReLU
        # pool: sum over h (sublane reduce) then over w via a constant
        # [Ws*D, D] averaging matmul (otherwise-idle MXU).
        y_h = y.reshape(N, Hs, Ws * D).sum(axis=1)             # [N, Ws*D]
        pooled = jnp.dot(y_h, pmat_ref[...],
                         preferred_element_type=jnp.float32)   # [N, D]

        # ---- hoisted input projections for BOTH recurrences, one GEMM:
        # cols [0:4H) = pooled @ W_ih_lstm^T, cols [4H:8H) = pooled @ W_q^T.
        proj = jnp.dot(pooled, wproj_ref[...],
                       preferred_element_type=jnp.float32)     # [N, 8H]
        xw = proj[:ns, 0:4 * H] + bl_ref[...]                  # [ns, 4H]
        q0w = proj[ns:, 4 * H:8 * H] + ba_ref[...]             # [nq, 4H]
        q0 = pooled[ns:, :]                                    # [nq, H]

        # ---- sup_LSTM: forward direction of the bi-LSTM (batch=1, seq=ns).
        # The reference only reads hidden_state[:, :hidden_size], so the
        # reverse direction is dead compute and is skipped; the forward hidden
        # is added twice (x + h_fwd + h_fwd), exactly as in the module.
        # Gate-stacked weights: ONE [1,H]x[H,4H] MXU push per step.
        whh = whh_ref[...]                                     # [H, 4H]
        h = jnp.zeros((1, H), jnp.float32)
        c = jnp.zeros((1, H), jnp.float32)
        sup_rows = []
        for t in range(ns):                                    # fully unrolled
            g = xw[t:t + 1, :] + jnp.dot(h, whh,
                                         preferred_element_type=jnp.float32)
            gi = _sigmoid(g[:, 0:H])
            gf = _sigmoid(g[:, H:2 * H])
            gg = jnp.tanh(g[:, 2 * H:3 * H])
            go = _sigmoid(g[:, 3 * H:4 * H])
            c = gf * c + gi * gg
            h = go * jnp.tanh(c)
            sup_rows.append(pooled[t:t + 1, :] + 2.0 * h)
        sup_emb = jnp.concatenate(sup_rows, axis=0)            # [ns, H]
        sup_emb_t = sup_emb.T                                  # [H, ns] (once)

        # ---- query_LSTM: attention read-out + LSTMCell, ns steps.
        # Per step: ONE [nq,2H]x[2H,4H] gate GEMM on concat(read, h) instead
        # of 8 tiny per-gate matmuls; softmax uses an approx EUP reciprocal.
        wrh = wrh_ref[...]                                     # [2H, 4H]
        hq = q0                                                # h starts at q0
        cq = jnp.zeros((nq, H), jnp.float32)
        for _ in range(ns):                                    # fully unrolled
            dots = jnp.dot(hq, sup_emb_t,
                           preferred_element_type=jnp.float32)  # [nq, ns]
            m = jnp.max(dots, axis=1, keepdims=True)
            e = jnp.exp(dots - m)
            attn = e * pl.reciprocal(jnp.sum(e, axis=1, keepdims=True),
                                     approx=True)
            read = jnp.dot(attn, sup_emb,
                           preferred_element_type=jnp.float32)  # [nq, H]
            z = jnp.concatenate([read, hq], axis=1)             # [nq, 2H]
            g = q0w + jnp.dot(z, wrh, preferred_element_type=jnp.float32)
            gi = _sigmoid(g[:, 0:H])
            gf = _sigmoid(g[:, H:2 * H])
            gg = jnp.tanh(g[:, 2 * H:3 * H])
            go = _sigmoid(g[:, 3 * H:4 * H])
            cq = gf * cq + gi * gg
            hq = go * jnp.tanh(cq) + q0                          # residual add

        # ---- cosine similarity head (F.normalize, eps=1e-12) via EUP rsqrt.
        qn = hq * jax.lax.rsqrt(
            jnp.maximum(jnp.sum(hq * hq, axis=1, keepdims=True), 1e-24))
        s_inv = jax.lax.rsqrt(
            jnp.maximum(jnp.sum(sup_emb_t * sup_emb_t, axis=0, keepdims=True),
                        1e-24))                                  # [1, ns]
        out_ref[...] = jnp.dot(qn, sup_emb_t * s_inv,
                               preferred_element_type=jnp.float32)

    return kernel


# --------------------------------------------------------------------------
# JAX glue: minimal host prep + single fused pallas_call.
# --------------------------------------------------------------------------
def matching_net_forward(support_data, query_data, support_labels, params):
    del support_labels  # unused by the reference forward() as well
    ns, nq = support_data.shape[0], query_data.shape[0]
    x = jnp.concatenate([support_data, query_data], axis=0)    # support first
    N, C, Hs, Ws = x.shape
    H = params["whh_g"].shape[0]

    # Host prep is one transpose+pad+reshape fusion; the 3x3 im2col itself
    # happens inside the kernel, so HBM carries the raw (bf16) image only.
    xr = jnp.pad(jnp.transpose(x, (0, 2, 3, 1)),
                 ((0, 0), (1, 1), (1, 1), (0, 0)))
    xr = xr.reshape(N, Hs + 2, (Ws + 2) * C).astype(jnp.bfloat16)

    ins = (xr, params["w_band"], params["b_row"], params["pool_mat"],
           params["w_proj"], params["whh_g"], params["b_lstm"],
           params["w_rh"], params["b_att"])

    def full_spec(a):
        nd = a.ndim
        return pl.BlockSpec(a.shape, lambda i, nd=nd: (0,) * nd)

    # Scaling guard (v7x has 64 MiB physical / 32 MiB scoped VMEM): at these
    # shapes all buffers total <2 MiB. If episode/image size grows, tile the
    # conv GEMM over a grid axis on the N*Hs rows, accumulate pooled sums in a
    # VMEM scratch, run the recurrences under pl.when on the last step, and
    # set vmem_limit_bytes explicitly.
    # TODO(synk): when evaluating many episodes, add a leading "parallel" grid
    # axis (or batch at the JAX level) so the second TensorCore on v7x is used.
    return pl.pallas_call(
        _make_fused_kernel(ns, nq, Hs, Ws, C, H),
        out_shape=jax.ShapeDtypeStruct((nq, ns), jnp.float32),
        grid=(1,),
        in_specs=[full_spec(a) for a in ins],
        out_specs=pl.BlockSpec((nq, ns), lambda i: (0, 0)),
        compiler_params=pltpu.CompilerParams(
            dimension_semantics=("arbitrary",)),
    )(*ins)


# --------------------------------------------------------------------------
# Parameter setup (deterministic, synthetic) in kernel-friendly layouts.
# --------------------------------------------------------------------------
def init_params(key, C, D, H, Hs, Ws):
    assert D == H, "MatchingNet requires input_size == hidden_size"
    ks = jax.random.split(key, 10)
    s = 0.1
    p = {}

    # CNN: Conv2d(C, D, 3, padding=1) + bias.
    w_conv = jax.random.normal(ks[0], (D, C, 3, 3), jnp.float32) * s
    b_conv = jax.random.normal(ks[1], (D,), jnp.float32) * s
    p["w_conv"], p["b_conv"] = w_conv, b_conv          # raw (reference check)
    # Banded weights for the in-kernel conv: for row-shift kh,
    # w_band[kh, wp*C + c, w*D + d] = w_conv[d, c, kh, wp - w] if wp-w in {0,1,2}.
    Wp = Ws + 2
    wc = np.asarray(jax.device_get(w_conv))
    wb = np.zeros((3, Wp * C, Ws * D), np.float32)
    for kh in range(3):
        for kw in range(3):
            blk = wc[:, :, kh, kw].T                   # [C, D]
            for w in range(Ws):
                wp = w + kw
                wb[kh, wp * C:(wp + 1) * C, w * D:(w + 1) * D] = blk
    p["w_band"] = jnp.asarray(wb, jnp.bfloat16)        # [3, Wp*C, Ws*D]
    p["b_row"] = jnp.tile(b_conv, (Ws,)).reshape(1, Ws * D)
    p["pool_mat"] = jnp.asarray(
        np.tile(np.eye(D, dtype=np.float32), (Ws, 1)) / float(Hs * Ws))

    # bi-LSTM forward direction (PyTorch gate order i,f,g,o).
    w_ih = jax.random.normal(ks[2], (4 * H, D), jnp.float32) * s
    w_hh = jax.random.normal(ks[3], (4 * H, H), jnp.float32) * s
    b_ih = jax.random.normal(ks[4], (4 * H,), jnp.float32) * s
    b_hh = jax.random.normal(ks[5], (4 * H,), jnp.float32) * s
    # TODO(synk): the reverse bi-LSTM direction exists in the PyTorch module
    # but its outputs are never read by forward(); not materialized (dead).

    # attention LSTMCell: input 2H -> hidden H; W_ih split into the
    # init_query half (wq) and the read_out half (wr).
    w_ih_a = jax.random.normal(ks[6], (4 * H, 2 * H), jnp.float32) * s
    w_hh_a = jax.random.normal(ks[7], (4 * H, H), jnp.float32) * s
    b_ih_a = jax.random.normal(ks[8], (4 * H,), jnp.float32) * s
    b_hh_a = jax.random.normal(ks[9], (4 * H,), jnp.float32) * s

    # raw copies for the pure-JAX reference check
    p["w_ih"], p["w_hh"], p["b_ih"], p["b_hh"] = w_ih, w_hh, b_ih, b_hh
    p["w_ih_att"], p["w_hh_att"] = w_ih_a, w_hh_a
    p["b_ih_att"], p["b_hh_att"] = b_ih_a, b_hh_a

    # gate-stacked kernel layouts (4H = 128 lanes exactly fills a lane tile)
    p["w_proj"] = jnp.concatenate([w_ih.T, w_ih_a[:, :H].T], axis=1)  # [H, 8H]
    p["whh_g"] = w_hh.T                                               # [H, 4H]
    p["b_lstm"] = (b_ih + b_hh).reshape(1, 4 * H)
    p["w_rh"] = jnp.concatenate([w_ih_a[:, H:].T, w_hh_a.T], axis=0)  # [2H, 4H]
    p["b_att"] = (b_ih_a + b_hh_a).reshape(1, 4 * H)
    return p


# --------------------------------------------------------------------------
# Pure-JAX reference (mirrors the PyTorch module) used as a sanity check.
# --------------------------------------------------------------------------
def matching_net_reference(support_data, query_data, params):
    ns = support_data.shape[0]
    x = jnp.concatenate([support_data, query_data], axis=0)
    N, C, Hs, Ws = x.shape
    H = params["w_hh"].shape[1]

    # CNN via explicit im2col, same bf16 GEMM precision as the kernel.
    xp = jnp.pad(x, ((0, 0), (0, 0), (1, 1), (1, 1)))
    cols = [xp[:, :, dh:dh + Hs, dw:dw + Ws]
            for dh in range(3) for dw in range(3)]
    patches = (jnp.stack(cols, axis=2)
               .transpose(0, 3, 4, 1, 2).reshape(N * Hs * Ws, C * 9))
    wmat = params["w_conv"].reshape(H, C * 9).T
    y = jnp.dot(patches.astype(jnp.bfloat16), wmat.astype(jnp.bfloat16),
                preferred_element_type=jnp.float32) + params["b_conv"][None, :]
    pooled = jnp.maximum(y, 0.0).reshape(N, Hs * Ws, H).mean(axis=1)
    sup_x, q0 = pooled[:ns], pooled[ns:]

    def cell(x_t, h, c, w_ih, w_hh, b):
        g = x_t @ w_ih.T + h @ w_hh.T + b
        gi, gf, gg, go = jnp.split(g, 4, axis=1)
        c = jax.nn.sigmoid(gf) * c + jax.nn.sigmoid(gi) * jnp.tanh(gg)
        h = jax.nn.sigmoid(go) * jnp.tanh(c)
        return h, c

    b_l = params["b_ih"] + params["b_hh"]
    h = jnp.zeros((1, H), jnp.float32)
    c = jnp.zeros((1, H), jnp.float32)
    rows = []
    for t in range(ns):
        h, c = cell(sup_x[t:t + 1], h, c, params["w_ih"], params["w_hh"], b_l)
        rows.append(sup_x[t:t + 1] + 2.0 * h)
    sup_emb = jnp.concatenate(rows, axis=0)

    b_a = params["b_ih_att"] + params["b_hh_att"]
    hq, cq = q0, jnp.zeros_like(q0)
    for _ in range(ns):
        attn = jax.nn.softmax(hq @ sup_emb.T, axis=1)
        read = attn @ sup_emb
        hq, cq = cell(jnp.concatenate([q0, read], axis=1), hq, cq,
                      params["w_ih_att"], params["w_hh_att"], b_a)
        hq = hq + q0

    def nrm(v):
        return v / jnp.maximum(jnp.linalg.norm(v, axis=1, keepdims=True), 1e-12)
    return nrm(hq) @ nrm(sup_emb).T


if __name__ == "__main__":
    key = jax.random.PRNGKey(0)
    C, Hs, Ws = 4, 16, 16          # input channels / spatial size
    D = Hh = 32                    # input_size == hidden_size
    ns, nq = 8, 4                  # support / query set sizes

    k1, k2, k3, kp = jax.random.split(key, 4)
    support_data = jax.random.normal(k1, (ns, C, Hs, Ws), jnp.float32)
    query_data = jax.random.normal(k2, (nq, C, Hs, Ws), jnp.float32)
    support_labels = jax.random.randint(k3, (ns,), 0, 5)
    params = init_params(kp, C, D, Hh, Hs, Ws)

    out = jax.jit(matching_net_forward)(support_data, query_data,
                                        support_labels, params)
    jax.block_until_ready(out)
    assert out.shape == (nq, ns)
    assert bool(jnp.all(jnp.isfinite(out)))

    ref = jax.jit(matching_net_reference)(support_data, query_data, params)
    jax.block_until_ready(ref)
    max_diff = float(jnp.max(jnp.abs(out - ref)))
    assert max_diff < 2e-2, f"kernel/reference mismatch: max|diff|={max_diff}"

    print("KERNEL_OK")
</pallas_src>

<mosaic_0001>
module attributes {stable_mosaic.version = 11 : i64} {
  func.func @kernel(%arg0: i32, %arg1: memref<12x18x72xbf16, #tpu.memory_space<vmem>>, %arg2: memref<3x72x512xbf16, #tpu.memory_space<vmem>>, %arg3: memref<1x512xf32, #tpu.memory_space<vmem>>, %arg4: memref<512x32xf32, #tpu.memory_space<vmem>>, %arg5: memref<32x256xf32, #tpu.memory_space<vmem>>, %arg6: memref<32x128xf32, #tpu.memory_space<vmem>>, %arg7: memref<1x128xf32, #tpu.memory_space<vmem>>, %arg8: memref<64x128xf32, #tpu.memory_space<vmem>>, %arg9: memref<1x128xf32, #tpu.memory_space<vmem>>, %arg10: memref<4x8xf32, #tpu.memory_space<vmem>>) attributes {dimension_semantics = [#tpu.dimension_semantics<arbitrary>], iteration_bounds = array<i64: 1>, scalar_prefetch = 0 : i64, scratch_operands = 0 : i64, tpu.core_type = #tpu.core_type<tc>, window_params = [{pipeline_mode = #tpu.pipeline_mode<synchronous>, transform_indices = @transform_0, window_bounds = array<i64: 12, 18, 72>}, {pipeline_mode = #tpu.pipeline_mode<synchronous>, transform_indices = @transform_1, window_bounds = array<i64: 3, 72, 512>}, {pipeline_mode = #tpu.pipeline_mode<synchronous>, transform_indices = @transform_2, window_bounds = array<i64: 1, 512>}, {pipeline_mode = #tpu.pipeline_mode<synchronous>, transform_indices = @transform_3, window_bounds = array<i64: 512, 32>}, {pipeline_mode = #tpu.pipeline_mode<synchronous>, transform_indices = @transform_4, window_bounds = array<i64: 32, 256>}, {pipeline_mode = #tpu.pipeline_mode<synchronous>, transform_indices = @transform_5, window_bounds = array<i64: 32, 128>}, {pipeline_mode = #tpu.pipeline_mode<synchronous>, transform_indices = @transform_6, window_bounds = array<i64: 1, 128>}, {pipeline_mode = #tpu.pipeline_mode<synchronous>, transform_indices = @transform_7, window_bounds = array<i64: 64, 128>}, {pipeline_mode = #tpu.pipeline_mode<synchronous>, transform_indices = @transform_8, window_bounds = array<i64: 1, 128>}, {pipeline_mode = #tpu.pipeline_mode<synchronous>, transform_indices = @transform_9, window_bounds = array<i64: 4, 8>}]} {
    %c0 = arith.constant 0 : index
    %c0_0 = arith.constant 0 : index
    %c0_1 = arith.constant 0 : index
    %0 = vector.load %arg1[%c0, %c0_0, %c0_1] : memref<12x18x72xbf16, #tpu.memory_space<vmem>>, vector<12x18x72xbf16>
    %1 = vector.extract_strided_slice %0 {offsets = [0, 0, 0], sizes = [12, 16, 72], strides = [1, 1, 1]} : vector<12x18x72xbf16> to vector<12x16x72xbf16>
    %2 = vector.shape_cast %1 : vector<12x16x72xbf16> to vector<192x72xbf16>
    %c0_2 = arith.constant 0 : index
    %c0_3 = arith.constant 0 : index
    %c0_4 = arith.constant 0 : index
    %3 = vector.load %arg2[%c0_2, %c0_3, %c0_4] : memref<3x72x512xbf16, #tpu.memory_space<vmem>>, vector<1x72x512xbf16>
    %4 = vector.shape_cast %3 : vector<1x72x512xbf16> to vector<72x512xbf16>
    %cst = arith.constant dense<0.000000e+00> : vector<192x512xf32>
    %5 = tpu.matmul %2, %4, %cst {dimension_numbers = #tpu.dot_dimension_numbers<[1], [0], [0], [1], [0, 0, 1, 1], [], []>} : vector<192x72xbf16>, vector<72x512xbf16>, vector<192x512xf32> -> vector<192x512xf32>
    %6 = vector.extract_strided_slice %0 {offsets = [0, 1, 0], sizes = [12, 16, 72], strides = [1, 1, 1]} : vector<12x18x72xbf16> to vector<12x16x72xbf16>
    %7 = vector.shape_cast %6 : vector<12x16x72xbf16> to vector<192x72xbf16>
    %c1 = arith.constant 1 : index
    %c0_5 = arith.constant 0 : index
    %c0_6 = arith.constant 0 : index
    %8 = vector.load %arg2[%c1, %c0_5, %c0_6] : memref<3x72x512xbf16, #tpu.memory_space<vmem>>, vector<1x72x512xbf16>
    %9 = vector.shape_cast %8 : vector<1x72x512xbf16> to vector<72x512xbf16>
    %cst_7 = arith.constant dense<0.000000e+00> : vector<192x512xf32>
    %10 = tpu.matmul %7, %9, %cst_7 {dimension_numbers = #tpu.dot_dimension_numbers<[1], [0], [0], [1], [0, 0, 1, 1], [], []>} : vector<192x72xbf16>, vector<72x512xbf16>, vector<192x512xf32> -> vector<192x512xf32>
    %11 = arith.addf %5, %10 : vector<192x512xf32>
    %12 = vector.extract_strided_slice %0 {offsets = [0, 2, 0], sizes = [12, 16, 72], strides = [1, 1, 1]} : vector<12x18x72xbf16> to vector<12x16x72xbf16>
    %13 = vector.shape_cast %12 : vector<12x16x72xbf16> to vector<192x72xbf16>
    %c2 = arith.constant 2 : index
    %c0_8 = arith.constant 0 : index
    %c0_9 = arith.constant 0 : index
    %14 = vector.load %arg2[%c2, %c0_8, %c0_9] : memref<3x72x512xbf16, #tpu.memory_space<vmem>>, vector<1x72x512xbf16>
    %15 = vector.shape_cast %14 : vector<1x72x512xbf16> to vector<72x512xbf16>
    %cst_10 = arith.constant dense<0.000000e+00> : vector<192x512xf32>
    %16 = tpu.matmul %13, %15, %cst_10 {dimension_numbers = #tpu.dot_dimension_numbers<[1], [0], [0], [1], [0, 0, 1, 1], [], []>} : vector<192x72xbf16>, vector<72x512xbf16>, vector<192x512xf32> -> vector<192x512xf32>
    %17 = arith.addf %11, %16 : vector<192x512xf32>
    %c0_11 = arith.constant 0 : index
    %c0_12 = arith.constant 0 : index
    %18 = vector.load %arg3[%c0_11, %c0_12] : memref<1x512xf32, #tpu.memory_space<vmem>>, vector<1x512xf32>
    %19 = vector.broadcast %18 : vector<1x512xf32> to vector<192x512xf32>
    %20 = arith.addf %17, %19 : vector<192x512xf32>
    %cst_13 = arith.constant 0.000000e+00 : f32
    %21 = vector.broadcast %cst_13 : f32 to vector<192x512xf32>
    %22 = arith.maximumf %20, %21 : vector<192x512xf32>
    %23 = vector.shape_cast %22 : vector<192x512xf32> to vector<12x16x512xf32>
    %cst_14 = arith.constant dense<0.000000e+00> : vector<12x512xf32>
    %24 = vector.multi_reduction <add>, %23, %cst_14 [1] : vector<12x16x512xf32> to vector<12x512xf32>
    %c0_15 = arith.constant 0 : index
    %c0_16 = arith.constant 0 : index
    %25 = vector.load %arg4[%c0_15, %c0_16] : memref<512x32xf32, #tpu.memory_space<vmem>>, vector<512x32xf32>
    %cst_17 = arith.constant dense<0.000000e+00> : vector<12x32xf32>
    %26 = tpu.matmul %24, %25, %cst_17 {dimension_numbers = #tpu.dot_dimension_numbers<[1], [0], [0], [1], [0, 0, 1, 1], [], []>} : vector<12x512xf32>, vector<512x32xf32>, vector<12x32xf32> -> vector<12x32xf32>
    %c0_18 = arith.constant 0 : index
    %c0_19 = arith.constant 0 : index
    %27 = vector.load %arg5[%c0_18, %c0_19] : memref<32x256xf32, #tpu.memory_space<vmem>>, vector<32x256xf32>
    %cst_20 = arith.constant dense<0.000000e+00> : vector<12x256xf32>
    %28 = tpu.matmul %26, %27, %cst_20 {dimension_numbers = #tpu.dot_dimension_numbers<[1], [0], [0], [1], [0, 0, 1, 1], [], []>} : vector<12x32xf32>, vector<32x256xf32>, vector<12x256xf32> -> vector<12x256xf32>
    %29 = vector.extract_strided_slice %28 {offsets = [0, 0], sizes = [8, 128], strides = [1, 1]} : vector<12x256xf32> to vector<8x128xf32>
    %c0_21 = arith.constant 0 : index
    %c0_22 = arith.constant 0 : index
    %30 = vector.load %arg7[%c0_21, %c0_22] : memref<1x128xf32, #tpu.memory_space<vmem>>, vector<1x128xf32>
    %31 = vector.broadcast %30 : vector<1x128xf32> to vector<8x128xf32>
    %32 = arith.addf %29, %31 : vector<8x128xf32>
    %33 = vector.extract_strided_slice %28 {offsets = [8, 128], sizes = [4, 128], strides = [1, 1]} : vector<12x256xf32> to vector<4x128xf32>
    %c0_23 = arith.constant 0 : index
    %c0_24 = arith.constant 0 : index
    %34 = vector.load %arg9[%c0_23, %c0_24] : memref<1x128xf32, #tpu.memory_space<vmem>>, vector<1x128xf32>
    %35 = vector.broadcast %34 : vector<1x128xf32> to vector<4x128xf32>
    %36 = arith.addf %33, %35 : vector<4x128xf32>
    %37 = vector.extract_strided_slice %26 {offsets = [8, 0], sizes = [4, 32], strides = [1, 1]} : vector<12x32xf32> to vector<4x32xf32>
    %c0_25 = arith.constant 0 : index
    %c0_26 = arith.constant 0 : index
    %38 = vector.load %arg6[%c0_25, %c0_26] : memref<32x128xf32, #tpu.memory_space<vmem>>, vector<32x128xf32>
    %cst_27 = arith.constant 0.000000e+00 : f32
    %39 = vector.broadcast %cst_27 : f32 to vector<1x32xf32>
    %cst_28 = arith.constant 0.000000e+00 : f32
    %40 = vector.broadcast %cst_28 : f32 to vector<1x32xf32>
    %41 = vector.extract_strided_slice %32 {offsets = [0, 0], sizes = [1, 128], strides = [1, 1]} : vector<8x128xf32> to vector<1x128xf32>
    %cst_29 = arith.constant dense<0.000000e+00> : vector<1x128xf32>
    %42 = tpu.matmul %39, %38, %cst_29 {dimension_numbers = #tpu.dot_dimension_numbers<[1], [0], [0], [1], [0, 0, 1, 1], [], []>} : vector<1x32xf32>, vector<32x128xf32>, vector<1x128xf32> -> vector<1x128xf32>
    %43 = arith.addf %41, %42 : vector<1x128xf32>
    %44 = vector.extract_strided_slice %43 {offsets = [0, 0], sizes = [1, 32], strides = [1, 1]} : vector<1x128xf32> to vector<1x32xf32>
    %cst_30 = arith.constant 5.000000e-01 : f32
    %45 = vector.broadcast %cst_30 : f32 to vector<1x32xf32>
    %46 = arith.mulf %45, %44 : vector<1x32xf32>
    %47 = math.tanh %46 : vector<1x32xf32>
    %cst_31 = arith.constant 5.000000e-01 : f32
    %48 = vector.broadcast %cst_31 : f32 to vector<1x32xf32>
    %49 = arith.mulf %48, %47 : vector<1x32xf32>
    %cst_32 = arith.constant 5.000000e-01 : f32
    %50 = vector.broadcast %cst_32 : f32 to vector<1x32xf32>
    %51 = arith.addf %49, %50 : vector<1x32xf32>
    %52 = vector.extract_strided_slice %43 {offsets = [0, 32], sizes = [1, 32], strides = [1, 1]} : vector<1x128xf32> to vector<1x32xf32>
    %cst_33 = arith.constant 5.000000e-01 : f32
    %53 = vector.broadcast %cst_33 : f32 to vector<1x32xf32>
    %54 = arith.mulf %53, %52 : vector<1x32xf32>
    %55 = math.tanh %54 : vector<1x32xf32>
    %cst_34 = arith.constant 5.000000e-01 : f32
    %56 = vector.broadcast %cst_34 : f32 to vector<1x32xf32>
    %57 = arith.mulf %56, %55 : vector<1x32xf32>
    %cst_35 = arith.constant 5.000000e-01 : f32
    %58 = vector.broadcast %cst_35 : f32 to vector<1x32xf32>
    %59 = arith.addf %57, %58 : vector<1x32xf32>
    %60 = vector.extract_strided_slice %43 {offsets = [0, 64], sizes = [1, 32], strides = [1, 1]} : vector<1x128xf32> to vector<1x32xf32>
    %61 = math.tanh %60 : vector<1x32xf32>
    %62 = vector.extract_strided_slice %43 {offsets = [0, 96], sizes = [1, 32], strides = [1, 1]} : vector<1x128xf32> to vector<1x32xf32>
    %cst_36 = arith.constant 5.000000e-01 : f32
    %63 = vector.broadcast %cst_36 : f32 to vector<1x32xf32>
    %64 = arith.mulf %63, %62 : vector<1x32xf32>
    %65 = math.tanh %64 : vector<1x32xf32>
    %cst_37 = arith.constant 5.000000e-01 : f32
    %66 = vector.broadcast %cst_37 : f32 to vector<1x32xf32>
    %67 = arith.mulf %66, %65 : vector<1x32xf32>
    %cst_38 = arith.constant 5.000000e-01 : f32
    %68 = vector.broadcast %cst_38 : f32 to vector<1x32xf32>
    %69 = arith.addf %67, %68 : vector<1x32xf32>
    %70 = arith.mulf %59, %40 : vector<1x32xf32>
    %71 = arith.mulf %51, %61 : vector<1x32xf32>
    %72 = arith.addf %70, %71 : vector<1x32xf32>
    %73 = math.tanh %72 : vector<1x32xf32>
    %74 = arith.mulf %69, %73 : vector<1x32xf32>
    %75 = vector.extract_strided_slice %26 {offsets = [0, 0], sizes = [1, 32], strides = [1, 1]} : vector<12x32xf32> to vector<1x32xf32>
    %cst_39 = arith.constant 2.000000e+00 : f32
    %76 = vector.broadcast %cst_39 : f32 to vector<1x32xf32>
    %77 = arith.mulf %76, %74 : vector<1x32xf32>
    %78 = arith.addf %75, %77 : vector<1x32xf32>
    %79 = vector.extract_strided_slice %32 {offsets = [1, 0], sizes = [1, 128], strides = [1, 1]} : vector<8x128xf32> to vector<1x128xf32>
    %cst_40 = arith.constant dense<0.000000e+00> : vector<1x128xf32>
    %80 = tpu.matmul %74, %38, %cst_40 {dimension_numbers = #tpu.dot_dimension_numbers<[1], [0], [0], [1], [0, 0, 1, 1], [], []>} : vector<1x32xf32>, vector<32x128xf32>, vector<1x128xf32> -> vector<1x128xf32>
    %81 = arith.addf %79, %80 : vector<1x128xf32>
    %82 = vector.extract_strided_slice %81 {offsets = [0, 0], sizes = [1, 32], strides = [1, 1]} : vector<1x128xf32> to vector<1x32xf32>
    %cst_41 = arith.constant 5.000000e-01 : f32
    %83 = vector.broadcast %cst_41 : f32 to vector<1x32xf32>
    %84 = arith.mulf %83, %82 : vector<1x32xf32>
    %85 = math.tanh %84 : vector<1x32xf32>
    %cst_42 = arith.constant 5.000000e-01 : f32
    %86 = vector.broadcast %cst_42 : f32 to vector<1x32xf32>
    %87 = arith.mulf %86, %85 : vector<1x32xf32>
    %cst_43 = arith.constant 5.000000e-01 : f32
    %88 = vector.broadcast %cst_43 : f32 to vector<1x32xf32>
    %89 = arith.addf %87, %88 : vector<1x32xf32>
    %90 = vector.extract_strided_slice %81 {offsets = [0, 32], sizes = [1, 32], strides = [1, 1]} : vector<1x128xf32> to vector<1x32xf32>
    %cst_44 = arith.constant 5.000000e-01 : f32
    %91 = vector.broadcast %cst_44 : f32 to vector<1x32xf32>
    %92 = arith.mulf %91, %90 : vector<1x32xf32>
    %93 = math.tanh %92 : vector<1x32xf32>
    %cst_45 = arith.constant 5.000000e-01 : f32
    %94 = vector.broadcast %cst_45 : f32 to vector<1x32xf32>
    %95 = arith.mulf %94, %93 : vector<1x32xf32>
    %cst_46 = arith.constant 5.000000e-01 : f32
    %96 = vector.broadcast %cst_46 : f32 to vector<1x32xf32>
    %97 = arith.addf %95, %96 : vector<1x32xf32>
    %98 = vector.extract_strided_slice %81 {offsets = [0, 64], sizes = [1, 32], strides = [1, 1]} : vector<1x128xf32> to vector<1x32xf32>
    %99 = math.tanh %98 : vector<1x32xf32>
    %100 = vector.extract_strided_slice %81 {offsets = [0, 96], sizes = [1, 32], strides = [1, 1]} : vector<1x128xf32> to vector<1x32xf32>
    %cst_47 = arith.constant 5.000000e-01 : f32
    %101 = vector.broadcast %cst_47 : f32 to vector<1x32xf32>
    %102 = arith.mulf %101, %100 : vector<1x32xf32>
    %103 = math.tanh %102 : vector<1x32xf32>
    %cst_48 = arith.constant 5.000000e-01 : f32
    %104 = vector.broadcast %cst_48 : f32 to vector<1x32xf32>
    %105 = arith.mulf %104, %103 : vector<1x32xf32>
    %cst_49 = arith.constant 5.000000e-01 : f32
    %106 = vector.broadcast %cst_49 : f32 to vector<1x32xf32>
    %107 = arith.addf %105, %106 : vector<1x32xf32>
    %108 = arith.mulf %97, %72 : vector<1x32xf32>
    %109 = arith.mulf %89, %99 : vector<1x32xf32>
    %110 = arith.addf %108, %109 : vector<1x32xf32>
    %111 = math.tanh %110 : vector<1x32xf32>
    %112 = arith.mulf %107, %111 : vector<1x32xf32>
    %113 = vector.extract_strided_slice %26 {offsets = [1, 0], sizes = [1, 32], strides = [1, 1]} : vector<12x32xf32> to vector<1x32xf32>
    %cst_50 = arith.constant 2.000000e+00 : f32
    %114 = vector.broadcast %cst_50 : f32 to vector<1x32xf32>
    %115 = arith.mulf %114, %112 : vector<1x32xf32>
    %116 = arith.addf %113, %115 : vector<1x32xf32>
    %117 = vector.extract_strided_slice %32 {offsets = [2, 0], sizes = [1, 128], strides = [1, 1]} : vector<8x128xf32> to vector<1x128xf32>
    %cst_51 = arith.constant dense<0.000000e+00> : vector<1x128xf32>
    %118 = tpu.matmul %112, %38, %cst_51 {dimension_numbers = #tpu.dot_dimension_numbers<[1], [0], [0], [1], [0, 0, 1, 1], [], []>} : vector<1x32xf32>, vector<32x128xf32>, vector<1x128xf32> -> vector<1x128xf32>
    %119 = arith.addf %117, %118 : vector<1x128xf32>
    %120 = vector.extract_strided_slice %119 {offsets = [0, 0], sizes = [1, 32], strides = [1, 1]} : vector<1x128xf32> to vector<1x32xf32>
    %cst_52 = arith.constant 5.000000e-01 : f32
    %121 = vector.broadcast %cst_52 : f32 to vector<1x32xf32>
    %122 = arith.mulf %121, %120 : vector<1x32xf32>
    %123 = math.tanh %122 : vector<1x32xf32>
    %cst_53 = arith.constant 5.000000e-01 : f32
    %124 = vector.broadcast %cst_53 : f32 to vector<1x32xf32>
    %125 = arith.mulf %124, %123 : vector<1x32xf32>
    %cst_54 = arith.constant 5.000000e-01 : f32
    %126 = vector.broadcast %cst_54 : f32 to vector<1x32xf32>
    %127 = arith.addf %125, %126 : vector<1x32xf32>
    %128 = vector.extract_strided_slice %119 {offsets = [0, 32], sizes = [1, 32], strides = [1, 1]} : vector<1x128xf32> to vector<1x32xf32>
    %cst_55 = arith.constant 5.000000e-01 : f32
    %129 = vector.broadcast %cst_55 : f32 to vector<1x32xf32>
    %130 = arith.mulf %129, %128 : vector<1x32xf32>
    %131 = math.tanh %130 : vector<1x32xf32>
    %cst_56 = arith.constant 5.000000e-01 : f32
    %132 = vector.broadcast %cst_56 : f32 to vector<1x32xf32>
    %133 = arith.mulf %132, %131 : vector<1x32xf32>
    %cst_57 = arith.constant 5.000000e-01 : f32
    %134 = vector.broadcast %cst_57 : f32 to vector<1x32xf32>
    %135 = arith.addf %133, %134 : vector<1x32xf32>
    %136 = vector.extract_strided_slice %119 {offsets = [0, 64], sizes = [1, 32], strides = [1, 1]} : vector<1x128xf32> to vector<1x32xf32>
    %137 = math.tanh %136 : vector<1x32xf32>
    %138 = vector.extract_strided_slice %119 {offsets = [0, 96], sizes = [1, 32], strides = [1, 1]} : vector<1x128xf32> to vector<1x32xf32>
    %cst_58 = arith.constant 5.000000e-01 : f32
    %139 = vector.broadcast %cst_58 : f32 to vector<1x32xf32>
    %140 = arith.mulf %139, %138 : vector<1x32xf32>
    %141 = math.tanh %140 : vector<1x32xf32>
    %cst_59 = arith.constant 5.000000e-01 : f32
    %142 = vector.broadcast %cst_59 : f32 to vector<1x32xf32>
    %143 = arith.mulf %142, %141 : vector<1x32xf32>
    %cst_60 = arith.constant 5.000000e-01 : f32
    %144 = vector.broadcast %cst_60 : f32 to vector<1x32xf32>
    %145 = arith.addf %143, %144 : vector<1x32xf32>
    %146 = arith.mulf %135, %110 : vector<1x32xf32>
    %147 = arith.mulf %127, %137 : vector<1x32xf32>
    %148 = arith.addf %146, %147 : vector<1x32xf32>
    %149 = math.tanh %148 : vector<1x32xf32>
    %150 = arith.mulf %145, %149 : vector<1x32xf32>
    %151 = vector.extract_strided_slice %26 {offsets = [2, 0], sizes = [1, 32], strides = [1, 1]} : vector<12x32xf32> to vector<1x32xf32>
    %cst_61 = arith.constant 2.000000e+00 : f32
    %152 = vector.broadcast %cst_61 : f32 to vector<1x32xf32>
    %153 = arith.mulf %152, %150 : vector<1x32xf32>
    %154 = arith.addf %151, %153 : vector<1x32xf32>
    %155 = vector.extract_strided_slice %32 {offsets = [3, 0], sizes = [1, 128], strides = [1, 1]} : vector<8x128xf32> to vector<1x128xf32>
    %cst_62 = arith.constant dense<0.000000e+00> : vector<1x128xf32>
    %156 = tpu.matmul %150, %38, %cst_62 {dimension_numbers = #tpu.dot_dimension_numbers<[1], [0], [0], [1], [0, 0, 1, 1], [], []>} : vector<1x32xf32>, vector<32x128xf32>, vector<1x128xf32> -> vector<1x128xf32>
    %157 = arith.addf %155, %156 : vector<1x128xf32>
    %158 = vector.extract_strided_slice %157 {offsets = [0, 0], sizes = [1, 32], strides = [1, 1]} : vector<1x128xf32> to vector<1x32xf32>
    %cst_63 = arith.constant 5.000000e-01 : f32
    %159 = vector.broadcast %cst_63 : f32 to vector<1x32xf32>
    %160 = arith.mulf %159, %158 : vector<1x32xf32>
    %161 = math.tanh %160 : vector<1x32xf32>
    %cst_64 = arith.constant 5.000000e-01 : f32
    %162 = vector.broadcast %cst_64 : f32 to vector<1x32xf32>
    %163 = arith.mulf %162, %161 : vector<1x32xf32>
    %cst_65 = arith.constant 5.000000e-01 : f32
    %164 = vector.broadcast %cst_65 : f32 to vector<1x32xf32>
    %165 = arith.addf %163, %164 : vector<1x32xf32>
    %166 = vector.extract_strided_slice %157 {offsets = [0, 32], sizes = [1, 32], strides = [1, 1]} : vector<1x128xf32> to vector<1x32xf32>
    %cst_66 = arith.constant 5.000000e-01 : f32
    %167 = vector.broadcast %cst_66 : f32 to vector<1x32xf32>
    %168 = arith.mulf %167, %166 : vector<1x32xf32>
    %169 = math.tanh %168 : vector<1x32xf32>
    %cst_67 = arith.constant 5.000000e-01 : f32
    %170 = vector.broadcast %cst_67 : f32 to vector<1x32xf32>
    %171 = arith.mulf %170, %169 : vector<1x32xf32>
    %cst_68 = arith.constant 5.000000e-01 : f32
    %172 = vector.broadcast %cst_68 : f32 to vector<1x32xf32>
    %173 = arith.addf %171, %172 : vector<1x32xf32>
    %174 = vector.extract_strided_slice %157 {offsets = [0, 64], sizes = [1, 32], strides = [1, 1]} : vector<1x128xf32> to vector<1x32xf32>
    %175 = math.tanh %174 : vector<1x32xf32>
    %176 = vector.extract_strided_slice %157 {offsets = [0, 96], sizes = [1, 32], strides = [1, 1]} : vector<1x128xf32> to vector<1x32xf32>
    %cst_69 = arith.constant 5.000000e-01 : f32
    %177 = vector.broadcast %cst_69 : f32 to vector<1x32xf32>
    %178 = arith.mulf %177, %176 : vector<1x32xf32>
    %179 = math.tanh %178 : vector<1x32xf32>
    %cst_70 = arith.constant 5.000000e-01 : f32
    %180 = vector.broadcast %cst_70 : f32 to vector<1x32xf32>
    %181 = arith.mulf %180, %179 : vector<1x32xf32>
    %cst_71 = arith.constant 5.000000e-01 : f32
    %182 = vector.broadcast %cst_71 : f32 to vector<1x32xf32>
    %183 = arith.addf %181, %182 : vector<1x32xf32>
    %184 = arith.mulf %173, %148 : vector<1x32xf32>
    %185 = arith.mulf %165, %175 : vector<1x32xf32>
    %186 = arith.addf %184, %185 : vector<1x32xf32>
    %187 = math.tanh %186 : vector<1x32xf32>
    %188 = arith.mulf %183, %187 : vector<1x32xf32>
    %189 = vector.extract_strided_slice %26 {offsets = [3, 0], sizes = [1, 32], strides = [1, 1]} : vector<12x32xf32> to vector<1x32xf32>
    %cst_72 = arith.constant 2.000000e+00 : f32
    %190 = vector.broadcast %cst_72 : f32 to vector<1x32xf32>
    %191 = arith.mulf %190, %188 : vector<1x32xf32>
    %192 = arith.addf %189, %191 : vector<1x32xf32>
    %193 = vector.extract_strided_slice %32 {offsets = [4, 0], sizes = [1, 128], strides = [1, 1]} : vector<8x128xf32> to vector<1x128xf32>
    %cst_73 = arith.constant dense<0.000000e+00> : vector<1x128xf32>
    %194 = tpu.matmul %188, %38, %cst_73 {dimension_numbers = #tpu.dot_dimension_numbers<[1], [0], [0], [1], [0, 0, 1, 1], [], []>} : vector<1x32xf32>, vector<32x128xf32>, vector<1x128xf32> -> vector<1x128xf32>
    %195 = arith.addf %193, %194 : vector<1x128xf32>
    %196 = vector.extract_strided_slice %195 {offsets = [0, 0], sizes = [1, 32], strides = [1, 1]} : vector<1x128xf32> to vector<1x32xf32>
    %cst_74 = arith.constant 5.000000e-01 : f32
    %197 = vector.broadcast %cst_74 : f32 to vector<1x32xf32>
    %198 = arith.mulf %197, %196 : vector<1x32xf32>
    %199 = math.tanh %198 : vector<1x32xf32>
    %cst_75 = arith.constant 5.000000e-01 : f32
    %200 = vector.broadcast %cst_75 : f32 to vector<1x32xf32>
    %201 = arith.mulf %200, %199 : vector<1x32xf32>
    %cst_76 = arith.constant 5.000000e-01 : f32
    %202 = vector.broadcast %cst_76 : f32 to vector<1x32xf32>
    %203 = arith.addf %201, %202 : vector<1x32xf32>
    %204 = vector.extract_strided_slice %195 {offsets = [0, 32], sizes = [1, 32], strides = [1, 1]} : vector<1x128xf32> to vector<1x32xf32>
    %cst_77 = arith.constant 5.000000e-01 : f32
    %205 = vector.broadcast %cst_77 : f32 to vector<1x32xf32>
    %206 = arith.mulf %205, %204 : vector<1x32xf32>
    %207 = math.tanh %206 : vector<1x32xf32>
    %cst_78 = arith.constant 5.000000e-01 : f32
    %208 = vector.broadcast %cst_78 : f32 to vector<1x32xf32>
    %209 = arith.mulf %208, %207 : vector<1x32xf32>
    %cst_79 = arith.constant 5.000000e-01 : f32
    %210 = vector.broadcast %cst_79 : f32 to vector<1x32xf32>
    %211 = arith.addf %209, %210 : vector<1x32xf32>
    %212 = vector.extract_strided_slice %195 {offsets = [0, 64], sizes = [1, 32], strides = [1, 1]} : vector<1x128xf32> to vector<1x32xf32>
    %213 = math.tanh %212 : vector<1x32xf32>
    %214 = vector.extract_strided_slice %195 {offsets = [0, 96], sizes = [1, 32], strides = [1, 1]} : vector<1x128xf32> to vector<1x32xf32>
    %cst_80 = arith.constant 5.000000e-01 : f32
    %215 = vector.broadcast %cst_80 : f32 to vector<1x32xf32>
    %216 = arith.mulf %215, %214 : vector<1x32xf32>
    %217 = math.tanh %216 : vector<1x32xf32>
    %cst_81 = arith.constant 5.000000e-01 : f32
    %218 = vector.broadcast %cst_81 : f32 to vector<1x32xf32>
    %219 = arith.mulf %218, %217 : vector<1x32xf32>
    %cst_82 = arith.constant 5.000000e-01 : f32
    %220 = vector.broadcast %cst_82 : f32 to vector<1x32xf32>
    %221 = arith.addf %219, %220 : vector<1x32xf32>
    %222 = arith.mulf %211, %186 : vector<1x32xf32>
    %223 = arith.mulf %203, %213 : vector<1x32xf32>
    %224 = arith.addf %222, %223 : vector<1x32xf32>
    %225 = math.tanh %224 : vector<1x32xf32>
    %226 = arith.mulf %221, %225 : vector<1x32xf32>
    %227 = vector.extract_strided_slice %26 {offsets = [4, 0], sizes = [1, 32], strides = [1, 1]} : vector<12x32xf32> to vector<1x32xf32>
    %cst_83 = arith.constant 2.000000e+00 : f32
    %228 = vector.broadcast %cst_83 : f32 to vector<1x32xf32>
    %229 = arith.mulf %228, %226 : vector<1x32xf32>
    %230 = arith.addf %227, %229 : vector<1x32xf32>
    %231 = vector.extract_strided_slice %32 {offsets = [5, 0], sizes = [1, 128], strides = [1, 1]} : vector<8x128xf32> to vector<1x128xf32>
    %cst_84 = arith.constant dense<0.000000e+00> : vector<1x128xf32>
    %232 = tpu.matmul %226, %38, %cst_84 {dimension_numbers = #tpu.dot_dimension_numbers<[1], [0], [0], [1], [0, 0, 1, 1], [], []>} : vector<1x32xf32>, vector<32x128xf32>, vector<1x128xf32> -> vector<1x128xf32>
    %233 = arith.addf %231, %232 : vector<1x128xf32>
    %234 = vector.extract_strided_slice %233 {offsets = [0, 0], sizes = [1, 32], strides = [1, 1]} : vector<1x128xf32> to vector<1x32xf32>
    %cst_85 = arith.constant 5.000000e-01 : f32
    %235 = vector.broadcast %cst_85 : f32 to vector<1x32xf32>
    %236 = arith.mulf %235, %234 : vector<1x32xf32>
    %237 = math.tanh %236 : vector<1x32xf32>
    %cst_86 = arith.constant 5.000000e-01 : f32
    %238 = vector.broadcast %cst_86 : f32 to vector<1x32xf32>
    %239 = arith.mulf %238, %237 : vector<1x32xf32>
    %cst_87 = arith.constant 5.000000e-01 : f32
    %240 = vector.broadcast %cst_87 : f32 to vector<1x32xf32>
    %241 = arith.addf %239, %240 : vector<1x32xf32>
    %242 = vector.extract_strided_slice %233 {offsets = [0, 32], sizes = [1, 32], strides = [1, 1]} : vector<1x128xf32> to vector<1x32xf32>
    %cst_88 = arith.constant 5.000000e-01 : f32
    %243 = vector.broadcast %cst_88 : f32 to vector<1x32xf32>
    %244 = arith.mulf %243, %242 : vector<1x32xf32>
    %245 = math.tanh %244 : vector<1x32xf32>
    %cst_89 = arith.constant 5.000000e-01 : f32
    %246 = vector.broadcast %cst_89 : f32 to vector<1x32xf32>
    %247 = arith.mulf %246, %245 : vector<1x32xf32>
    %cst_90 = arith.constant 5.000000e-01 : f32
    %248 = vector.broadcast %cst_90 : f32 to vector<1x32xf32>
    %249 = arith.addf %247, %248 : vector<1x32xf32>
    %250 = vector.extract_strided_slice %233 {offsets = [0, 64], sizes = [1, 32], strides = [1, 1]} : vector<1x128xf32> to vector<1x32xf32>
    %251 = math.tanh %250 : vector<1x32xf32>
    %252 = vector.extract_strided_slice %233 {offsets = [0, 96], sizes = [1, 32], strides = [1, 1]} : vector<1x128xf32> to vector<1x32xf32>
    %cst_91 = arith.constant 5.000000e-01 : f32
    %253 = vector.broadcast %cst_91 : f32 to vector<1x32xf32>
    %254 = arith.mulf %253, %252 : vector<1x32xf32>
    %255 = math.tanh %254 : vector<1x32xf32>
    %cst_92 = arith.constant 5.000000e-01 : f32
    %256 = vector.broadcast %cst_92 : f32 to vector<1x32xf32>
    %257 = arith.mulf %256, %255 : vector<1x32xf32>
    %cst_93 = arith.constant 5.000000e-01 : f32
    %258 = vector.broadcast %cst_93 : f32 to vector<1x32xf32>
    %259 = arith.addf %257, %258 : vector<1x32xf32>
    %260 = arith.mulf %249, %224 : vector<1x32xf32>
    %261 = arith.mulf %241, %251 : vector<1x32xf32>
    %262 = arith.addf %260, %261 : vector<1x32xf32>
    %263 = math.tanh %262 : vector<1x32xf32>
    %264 = arith.mulf %259, %263 : vector<1x32xf32>
    %265 = vector.extract_strided_slice %26 {offsets = [5, 0], sizes = [1, 32], strides = [1, 1]} : vector<12x32xf32> to vector<1x32xf32>
    %cst_94 = arith.constant 2.000000e+00 : f32
    %266 = vector.broadcast %cst_94 : f32 to vector<1x32xf32>
    %267 = arith.mulf %266, %264 : vector<1x32xf32>
    %268 = arith.addf %265, %267 : vector<1x32xf32>
    %269 = vector.extract_strided_slice %32 {offsets = [6, 0], sizes = [1, 128], strides = [1, 1]} : vector<8x128xf32> to vector<1x128xf32>
    %cst_95 = arith.constant dense<0.000000e+00> : vector<1x128xf32>
    %270 = tpu.matmul %264, %38, %cst_95 {dimension_numbers = #tpu.dot_dimension_numbers<[1], [0], [0], [1], [0, 0, 1, 1], [], []>} : vector<1x32xf32>, vector<32x128xf32>, vector<1x128xf32> -> vector<1x128xf32>
    %271 = arith.addf %269, %270 : vector<1x128xf32>
    %272 = vector.extract_strided_slice %271 {offsets = [0, 0], sizes = [1, 32], strides = [1, 1]} : vector<1x128xf32> to vector<1x32xf32>
    %cst_96 = arith.constant 5.000000e-01 : f32
    %273 = vector.broadcast %cst_96 : f32 to vector<1x32xf32>
    %274 = arith.mulf %273, %272 : vector<1x32xf32>
    %275 = math.tanh %274 : vector<1x32xf32>
    %cst_97 = arith.constant 5.000000e-01 : f32
    %276 = vector.broadcast %cst_97 : f32 to vector<1x32xf32>
    %277 = arith.mulf %276, %275 : vector<1x32xf32>
    %cst_98 = arith.constant 5.000000e-01 : f32
    %278 = vector.broadcast %cst_98 : f32 to vector<1x32xf32>
    %279 = arith.addf %277, %278 : vector<1x32xf32>
    %280 = vector.extract_strided_slice %271 {offsets = [0, 32], sizes = [1, 32], strides = [1, 1]} : vector<1x128xf32> to vector<1x32xf32>
    %cst_99 = arith.constant 5.000000e-01 : f32
    %281 = vector.broadcast %cst_99 : f32 to vector<1x32xf32>
    %282 = arith.mulf %281, %280 : vector<1x32xf32>
    %283 = math.tanh %282 : vector<1x32xf32>
    %cst_100 = arith.constant 5.000000e-01 : f32
    %284 = vector.broadcast %cst_100 : f32 to vector<1x32xf32>
    %285 = arith.mulf %284, %283 : vector<1x32xf32>
    %cst_101 = arith.constant 5.000000e-01 : f32
    %286 = vector.broadcast %cst_101 : f32 to vector<1x32xf32>
    %287 = arith.addf %285, %286 : vector<1x32xf32>
    %288 = vector.extract_strided_slice %271 {offsets = [0, 64], sizes = [1, 32], strides = [1, 1]} : vector<1x128xf32> to vector<1x32xf32>
    %289 = math.tanh %288 : vector<1x32xf32>
    %290 = vector.extract_strided_slice %271 {offsets = [0, 96], sizes = [1, 32], strides = [1, 1]} : vector<1x128xf32> to vector<1x32xf32>
    %cst_102 = arith.constant 5.000000e-01 : f32
    %291 = vector.broadcast %cst_102 : f32 to vector<1x32xf32>
    %292 = arith.mulf %291, %290 : vector<1x32xf32>
    %293 = math.tanh %292 : vector<1x32xf32>
    %cst_103 = arith.constant 5.000000e-01 : f32
    %294 = vector.broadcast %cst_103 : f32 to vector<1x32xf32>
    %295 = arith.mulf %294, %293 : vector<1x32xf32>
    %cst_104 = arith.constant 5.000000e-01 : f32
    %296 = vector.broadcast %cst_104 : f32 to vector<1x32xf32>
    %297 = arith.addf %295, %296 : vector<1x32xf32>
    %298 = arith.mulf %287, %262 : vector<1x32xf32>
    %299 = arith.mulf %279, %289 : vector<1x32xf32>
    %300 = arith.addf %298, %299 : vector<1x32xf32>
    %301 = math.tanh %300 : vector<1x32xf32>
    %302 = arith.mulf %297, %301 : vector<1x32xf32>
    %303 = vector.extract_strided_slice %26 {offsets = [6, 0], sizes = [1, 32], strides = [1, 1]} : vector<12x32xf32> to vector<1x32xf32>
    %cst_105 = arith.constant 2.000000e+00 : f32
    %304 = vector.broadcast %cst_105 : f32 to vector<1x32xf32>
    %305 = arith.mulf %304, %302 : vector<1x32xf32>
    %306 = arith.addf %303, %305 : vector<1x32xf32>
    %307 = vector.extract_strided_slice %32 {offsets = [7, 0], sizes = [1, 128], strides = [1, 1]} : vector<8x128xf32> to vector<1x128xf32>
    %cst_106 = arith.constant dense<0.000000e+00> : vector<1x128xf32>
    %308 = tpu.matmul %302, %38, %cst_106 {dimension_numbers = #tpu.dot_dimension_numbers<[1], [0], [0], [1], [0, 0, 1, 1], [], []>} : vector<1x32xf32>, vector<32x128xf32>, vector<1x128xf32> -> vector<1x128xf32>
    %309 = arith.addf %307, %308 : vector<1x128xf32>
    %310 = vector.extract_strided_slice %309 {offsets = [0, 0], sizes = [1, 32], strides = [1, 1]} : vector<1x128xf32> to vector<1x32xf32>
    %cst_107 = arith.constant 5.000000e-01 : f32
    %311 = vector.broadcast %cst_107 : f32 to vector<1x32xf32>
    %312 = arith.mulf %311, %310 : vector<1x32xf32>
    %313 = math.tanh %312 : vector<1x32xf32>
    %cst_108 = arith.constant 5.000000e-01 : f32
    %314 = vector.broadcast %cst_108 : f32 to vector<1x32xf32>
    %315 = arith.mulf %314, %313 : vector<1x32xf32>
    %cst_109 = arith.constant 5.000000e-01 : f32
    %316 = vector.broadcast %cst_109 : f32 to vector<1x32xf32>
    %317 = arith.addf %315, %316 : vector<1x32xf32>
    %318 = vector.extract_strided_slice %309 {offsets = [0, 32], sizes = [1, 32], strides = [1, 1]} : vector<1x128xf32> to vector<1x32xf32>
    %cst_110 = arith.constant 5.000000e-01 : f32
    %319 = vector.broadcast %cst_110 : f32 to vector<1x32xf32>
    %320 = arith.mulf %319, %318 : vector<1x32xf32>
    %321 = math.tanh %320 : vector<1x32xf32>
    %cst_111 = arith.constant 5.000000e-01 : f32
    %322 = vector.broadcast %cst_111 : f32 to vector<1x32xf32>
    %323 = arith.mulf %322, %321 : vector<1x32xf32>
    %cst_112 = arith.constant 5.000000e-01 : f32
    %324 = vector.broadcast %cst_112 : f32 to vector<1x32xf32>
    %325 = arith.addf %323, %324 : vector<1x32xf32>
    %326 = vector.extract_strided_slice %309 {offsets = [0, 64], sizes = [1, 32], strides = [1, 1]} : vector<1x128xf32> to vector<1x32xf32>
    %327 = math.tanh %326 : vector<1x32xf32>
    %328 = vector.extract_strided_slice %309 {offsets = [0, 96], sizes = [1, 32], strides = [1, 1]} : vector<1x128xf32> to vector<1x32xf32>
    %cst_113 = arith.constant 5.000000e-01 : f32
    %329 = vector.broadcast %cst_113 : f32 to vector<1x32xf32>
    %330 = arith.mulf %329, %328 : vector<1x32xf32>
    %331 = math.tanh %330 : vector<1x32xf32>
    %cst_114 = arith.constant 5.000000e-01 : f32
    %332 = vector.broadcast %cst_114 : f32 to vector<1x32xf32>
    %333 = arith.mulf %332, %331 : vector<1x32xf32>
    %cst_115 = arith.constant 5.000000e-01 : f32
    %334 = vector.broadcast %cst_115 : f32 to vector<1x32xf32>
    %335 = arith.addf %333, %334 : vector<1x32xf32>
    %336 = arith.mulf %325, %300 : vector<1x32xf32>
    %337 = arith.mulf %317, %327 : vector<1x32xf32>
    %338 = arith.addf %336, %337 : vector<1x32xf32>
    %339 = math.tanh %338 : vector<1x32xf32>
    %340 = arith.mulf %335, %339 : vector<1x32xf32>
    %341 = vector.extract_strided_slice %26 {offsets = [7, 0], sizes = [1, 32], strides = [1, 1]} : vector<12x32xf32> to vector<1x32xf32>
    %cst_116 = arith.constant 2.000000e+00 : f32
    %342 = vector.broadcast %cst_116 : f32 to vector<1x32xf32>
    %343 = arith.mulf %342, %340 : vector<1x32xf32>
    %344 = arith.addf %341, %343 : vector<1x32xf32>
    %345 = tpu.concatenate %78, %116, %154, %192, %230, %268, %306, %344 in 0 : vector<1x32xf32>, vector<1x32xf32>, vector<1x32xf32>, vector<1x32xf32>, vector<1x32xf32>, vector<1x32xf32>, vector<1x32xf32>, vector<1x32xf32> -> vector<8x32xf32>
    %346 = tpu.transpose %345, [1, 0] : vector<8x32xf32> -> vector<32x8xf32>
    %c0_117 = arith.constant 0 : index
    %c0_118 = arith.constant 0 : index
    %347 = vector.load %arg8[%c0_117, %c0_118] : memref<64x128xf32, #tpu.memory_space<vmem>>, vector<64x128xf32>
    %cst_119 = arith.constant 0.000000e+00 : f32
    %348 = vector.broadcast %cst_119 : f32 to vector<4x32xf32>
    %cst_120 = arith.constant dense<0.000000e+00> : vector<4x8xf32>
    %349 = tpu.matmul %37, %346, %cst_120 {dimension_numbers = #tpu.dot_dimension_numbers<[1], [0], [0], [1], [0, 0, 1, 1], [], []>} : vector<4x32xf32>, vector<32x8xf32>, vector<4x8xf32> -> vector<4x8xf32>
    %cst_121 = arith.constant dense<0xFF800000> : vector<4xf32>
    %350 = vector.multi_reduction <maximumf>, %349, %cst_121 [1] : vector<4x8xf32> to vector<4xf32>
    %351 = vector.shape_cast %350 : vector<4xf32> to vector<4x1xf32>
    %352 = vector.broadcast %351 : vector<4x1xf32> to vector<4x8xf32>
    %353 = arith.subf %349, %352 : vector<4x8xf32>
    %354 = math.exp %353 : vector<4x8xf32>
    %cst_122 = arith.constant dense<0.000000e+00> : vector<4xf32>
    %355 = vector.multi_reduction <add>, %354, %cst_122 [1] : vector<4x8xf32> to vector<4xf32>
    %356 = vector.shape_cast %355 : vector<4xf32> to vector<4x1xf32>
    %357 = tpu.reciprocal %356 {approx = true} : vector<4x1xf32> -> vector<4x1xf32>
    %358 = vector.broadcast %357 : vector<4x1xf32> to vector<4x8xf32>
    %359 = arith.mulf %354, %358 : vector<4x8xf32>
    %cst_123 = arith.constant dense<0.000000e+00> : vector<4x32xf32>
    %360 = tpu.matmul %359, %345, %cst_123 {dimension_numbers = #tpu.dot_dimension_numbers<[1], [0], [0], [1], [0, 0, 1, 1], [], []>} : vector<4x8xf32>, vector<8x32xf32>, vector<4x32xf32> -> vector<4x32xf32>
    %361 = tpu.concatenate %360, %37 in 1 : vector<4x32xf32>, vector<4x32xf32> -> vector<4x64xf32>
    %cst_124 = arith.constant dense<0.000000e+00> : vector<4x128xf32>
    %362 = tpu.matmul %361, %347, %cst_124 {dimension_numbers = #tpu.dot_dimension_numbers<[1], [0], [0], [1], [0, 0, 1, 1], [], []>} : vector<4x64xf32>, vector<64x128xf32>, vector<4x128xf32> -> vector<4x128xf32>
    %363 = arith.addf %36, %362 : vector<4x128xf32>
    %364 = vector.extract_strided_slice %363 {offsets = [0, 0], sizes = [4, 32], strides = [1, 1]} : vector<4x128xf32> to vector<4x32xf32>
    %cst_125 = arith.constant 5.000000e-01 : f32
    %365 = vector.broadcast %cst_125 : f32 to vector<4x32xf32>
    %366 = arith.mulf %365, %364 : vector<4x32xf32>
    %367 = math.tanh %366 : vector<4x32xf32>
    %cst_126 = arith.constant 5.000000e-01 : f32
    %368 = vector.broadcast %cst_126 : f32 to vector<4x32xf32>
    %369 = arith.mulf %368, %367 : vector<4x32xf32>
    %cst_127 = arith.constant 5.000000e-01 : f32
    %370 = vector.broadcast %cst_127 : f32 to vector<4x32xf32>
    %371 = arith.addf %369, %370 : vector<4x32xf32>
    %372 = vector.extract_strided_slice %363 {offsets = [0, 32], sizes = [4, 32], strides = [1, 1]} : vector<4x128xf32> to vector<4x32xf32>
    %cst_128 = arith.constant 5.000000e-01 : f32
    %373 = vector.broadcast %cst_128 : f32 to vector<4x32xf32>
    %374 = arith.mulf %373, %372 : vector<4x32xf32>
    %375 = math.tanh %374 : vector<4x32xf32>
    %cst_129 = arith.constant 5.000000e-01 : f32
    %376 = vector.broadcast %cst_129 : f32 to vector<4x32xf32>
    %377 = arith.mulf %376, %375 : vector<4x32xf32>
    %cst_130 = arith.constant 5.000000e-01 : f32
    %378 = vector.broadcast %cst_130 : f32 to vector<4x32xf32>
    %379 = arith.addf %377, %378 : vector<4x32xf32>
    %380 = vector.extract_strided_slice %363 {offsets = [0, 64], sizes = [4, 32], strides = [1, 1]} : vector<4x128xf32> to vector<4x32xf32>
    %381 = math.tanh %380 : vector<4x32xf32>
    %382 = vector.extract_strided_slice %363 {offsets = [0, 96], sizes = [4, 32], strides = [1, 1]} : vector<4x128xf32> to vector<4x32xf32>
    %cst_131 = arith.constant 5.000000e-01 : f32
    %383 = vector.broadcast %cst_131 : f32 to vector<4x32xf32>
    %384 = arith.mulf %383, %382 : vector<4x32xf32>
    %385 = math.tanh %384 : vector<4x32xf32>
    %cst_132 = arith.constant 5.000000e-01 : f32
    %386 = vector.broadcast %cst_132 : f32 to vector<4x32xf32>
    %387 = arith.mulf %386, %385 : vector<4x32xf32>
    %cst_133 = arith.constant 5.000000e-01 : f32
    %388 = vector.broadcast %cst_133 : f32 to vector<4x32xf32>
    %389 = arith.addf %387, %388 : vector<4x32xf32>
    %390 = arith.mulf %379, %348 : vector<4x32xf32>
    %391 = arith.mulf %371, %381 : vector<4x32xf32>
    %392 = arith.addf %390, %391 : vector<4x32xf32>
    %393 = math.tanh %392 : vector<4x32xf32>
    %394 = arith.mulf %389, %393 : vector<4x32xf32>
    %395 = arith.addf %394, %37 : vector<4x32xf32>
    %cst_134 = arith.constant dense<0.000000e+00> : vector<4x8xf32>
    %396 = tpu.matmul %395, %346, %cst_134 {dimension_numbers = #tpu.dot_dimension_numbers<[1], [0], [0], [1], [0, 0, 1, 1], [], []>} : vector<4x32xf32>, vector<32x8xf32>, vector<4x8xf32> -> vector<4x8xf32>
    %cst_135 = arith.constant dense<0xFF800000> : vector<4xf32>
    %397 = vector.multi_reduction <maximumf>, %396, %cst_135 [1] : vector<4x8xf32> to vector<4xf32>
    %398 = vector.shape_cast %397 : vector<4xf32> to vector<4x1xf32>
    %399 = vector.broadcast %398 : vector<4x1xf32> to vector<4x8xf32>
    %400 = arith.subf %396, %399 : vector<4x8xf32>
    %401 = math.exp %400 : vector<4x8xf32>
    %cst_136 = arith.constant dense<0.000000e+00> : vector<4xf32>
    %402 = vector.multi_reduction <add>, %401, %cst_136 [1] : vector<4x8xf32> to vector<4xf32>
    %403 = vector.shape_cast %402 : vector<4xf32> to vector<4x1xf32>
    %404 = tpu.reciprocal %403 {approx = true} : vector<4x1xf32> -> vector<4x1xf32>
    %405 = vector.broadcast %404 : vector<4x1xf32> to vector<4x8xf32>
    %406 = arith.mulf %401, %405 : vector<4x8xf32>
    %cst_137 = arith.constant dense<0.000000e+00> : vector<4x32xf32>
    %407 = tpu.matmul %406, %345, %cst_137 {dimension_numbers = #tpu.dot_dimension_numbers<[1], [0], [0], [1], [0, 0, 1, 1], [], []>} : vector<4x8xf32>, vector<8x32xf32>, vector<4x32xf32> -> vector<4x32xf32>
    %408 = tpu.concatenate %407, %395 in 1 : vector<4x32xf32>, vector<4x32xf32> -> vector<4x64xf32>
    %cst_138 = arith.constant dense<0.000000e+00> : vector<4x128xf32>
    %409 = tpu.matmul %408, %347, %cst_138 {dimension_numbers = #tpu.dot_dimension_numbers<[1], [0], [0], [1], [0, 0, 1, 1], [], []>} : vector<4x64xf32>, vector<64x128xf32>, vector<4x128xf32> -> vector<4x128xf32>
    %410 = arith.addf %36, %409 : vector<4x128xf32>
    %411 = vector.extract_strided_slice %410 {offsets = [0, 0], sizes = [4, 32], strides = [1, 1]} : vector<4x128xf32> to vector<4x32xf32>
    %cst_139 = arith.constant 5.000000e-01 : f32
    %412 = vector.broadcast %cst_139 : f32 to vector<4x32xf32>
    %413 = arith.mulf %412, %411 : vector<4x32xf32>
    %414 = math.tanh %413 : vector<4x32xf32>
    %cst_140 = arith.constant 5.000000e-01 : f32
    %415 = vector.broadcast %cst_140 : f32 to vector<4x32xf32>
    %416 = arith.mulf %415, %414 : vector<4x32xf32>
    %cst_141 = arith.constant 5.000000e-01 : f32
    %417 = vector.broadcast %cst_141 : f32 to vector<4x32xf32>
    %418 = arith.addf %416, %417 : vector<4x32xf32>
    %419 = vector.extract_strided_slice %410 {offsets = [0, 32], sizes = [4, 32], strides = [1, 1]} : vector<4x128xf32> to vector<4x32xf32>
    %cst_142 = arith.constant 5.000000e-01 : f32
    %420 = vector.broadcast %cst_142 : f32 to vector<4x32xf32>
    %421 = arith.mulf %420, %419 : vector<4x32xf32>
    %422 = math.tanh %421 : vector<4x32xf32>
    %cst_143 = arith.constant 5.000000e-01 : f32
    %423 = vector.broadcast %cst_143 : f32 to vector<4x32xf32>
    %424 = arith.mulf %423, %422 : vector<4x32xf32>
    %cst_144 = arith.constant 5.000000e-01 : f32
    %425 = vector.broadcast %cst_144 : f32 to vector<4x32xf32>
    %426 = arith.addf %424, %425 : vector<4x32xf32>
    %427 = vector.extract_strided_slice %410 {offsets = [0, 64], sizes = [4, 32], strides = [1, 1]} : vector<4x128xf32> to vector<4x32xf32>
    %428 = math.tanh %427 : vector<4x32xf32>
    %429 = vector.extract_strided_slice %410 {offsets = [0, 96], sizes = [4, 32], strides = [1, 1]} : vector<4x128xf32> to vector<4x32xf32>
    %cst_145 = arith.constant 5.000000e-01 : f32
    %430 = vector.broadcast %cst_145 : f32 to vector<4x32xf32>
    %431 = arith.mulf %430, %429 : vector<4x32xf32>
    %432 = math.tanh %431 : vector<4x32xf32>
    %cst_146 = arith.constant 5.000000e-01 : f32
    %433 = vector.broadcast %cst_146 : f32 to vector<4x32xf32>
    %434 = arith.mulf %433, %432 : vector<4x32xf32>
    %cst_147 = arith.constant 5.000000e-01 : f32
    %435 = vector.broadcast %cst_147 : f32 to vector<4x32xf32>
    %436 = arith.addf %434, %435 : vector<4x32xf32>
    %437 = arith.mulf %426, %392 : vector<4x32xf32>
    %438 = arith.mulf %418, %428 : vector<4x32xf32>
    %439 = arith.addf %437, %438 : vector<4x32xf32>
    %440 = math.tanh %439 : vector<4x32xf32>
    %441 = arith.mulf %436, %440 : vector<4x32xf32>
    %442 = arith.addf %441, %37 : vector<4x32xf32>
    %cst_148 = arith.constant dense<0.000000e+00> : vector<4x8xf32>
    %443 = tpu.matmul %442, %346, %cst_148 {dimension_numbers = #tpu.dot_dimension_numbers<[1], [0], [0], [1], [0, 0, 1, 1], [], []>} : vector<4x32xf32>, vector<32x8xf32>, vector<4x8xf32> -> vector<4x8xf32>
    %cst_149 = arith.constant dense<0xFF800000> : vector<4xf32>
    %444 = vector.multi_reduction <maximumf>, %443, %cst_149 [1] : vector<4x8xf32> to vector<4xf32>
    %445 = vector.shape_cast %444 : vector<4xf32> to vector<4x1xf32>
    %446 = vector.broadcast %445 : vector<4x1xf32> to vector<4x8xf32>
    %447 = arith.subf %443, %446 : vector<4x8xf32>
    %448 = math.exp %447 : vector<4x8xf32>
    %cst_150 = arith.constant dense<0.000000e+00> : vector<4xf32>
    %449 = vector.multi_reduction <add>, %448, %cst_150 [1] : vector<4x8xf32> to vector<4xf32>
    %450 = vector.shape_cast %449 : vector<4xf32> to vector<4x1xf32>
    %451 = tpu.reciprocal %450 {approx = true} : vector<4x1xf32> -> vector<4x1xf32>
    %452 = vector.broadcast %451 : vector<4x1xf32> to vector<4x8xf32>
    %453 = arith.mulf %448, %452 : vector<4x8xf32>
    %cst_151 = arith.constant dense<0.000000e+00> : vector<4x32xf32>
    %454 = tpu.matmul %453, %345, %cst_151 {dimension_numbers = #tpu.dot_dimension_numbers<[1], [0], [0], [1], [0, 0, 1, 1], [], []>} : vector<4x8xf32>, vector<8x32xf32>, vector<4x32xf32> -> vector<4x32xf32>
    %455 = tpu.concatenate %454, %442 in 1 : vector<4x32xf32>, vector<4x32xf32> -> vector<4x64xf32>
    %cst_152 = arith.constant dense<0.000000e+00> : vector<4x128xf32>
    %456 = tpu.matmul %455, %347, %cst_152 {dimension_numbers = #tpu.dot_dimension_numbers<[1], [0], [0], [1], [0, 0, 1, 1], [], []>} : vector<4x64xf32>, vector<64x128xf32>, vector<4x128xf32> -> vector<4x128xf32>
    %457 = arith.addf %36, %456 : vector<4x128xf32>
    %458 = vector.extract_strided_slice %457 {offsets = [0, 0], sizes = [4, 32], strides = [1, 1]} : vector<4x128xf32> to vector<4x32xf32>
    %cst_153 = arith.constant 5.000000e-01 : f32
    %459 = vector.broadcast %cst_153 : f32 to vector<4x32xf32>
    %460 = arith.mulf %459, %458 : vector<4x32xf32>
    %461 = math.tanh %460 : vector<4x32xf32>
    %cst_154 = arith.constant 5.000000e-01 : f32
    %462 = vector.broadcast %cst_154 : f32 to vector<4x32xf32>
    %463 = arith.mulf %462, %461 : vector<4x32xf32>
    %cst_155 = arith.constant 5.000000e-01 : f32
    %464 = vector.broadcast %cst_155 : f32 to vector<4x32xf32>
    %465 = arith.addf %463, %464 : vector<4x32xf32>
    %466 = vector.extract_strided_slice %457 {offsets = [0, 32], sizes = [4, 32], strides = [1, 1]} : vector<4x128xf32> to vector<4x32xf32>
    %cst_156 = arith.constant 5.000000e-01 : f32
    %467 = vector.broadcast %cst_156 : f32 to vector<4x32xf32>
    %468 = arith.mulf %467, %466 : vector<4x32xf32>
    %469 = math.tanh %468 : vector<4x32xf32>
    %cst_157 = arith.constant 5.000000e-01 : f32
    %470 = vector.broadcast %cst_157 : f32 to vector<4x32xf32>
    %471 = arith.mulf %470, %469 : vector<4x32xf32>
    %cst_158 = arith.constant 5.000000e-01 : f32
    %472 = vector.broadcast %cst_158 : f32 to vector<4x32xf32>
    %473 = arith.addf %471, %472 : vector<4x32xf32>
    %474 = vector.extract_strided_slice %457 {offsets = [0, 64], sizes = [4, 32], strides = [1, 1]} : vector<4x128xf32> to vector<4x32xf32>
    %475 = math.tanh %474 : vector<4x32xf32>
    %476 = vector.extract_strided_slice %457 {offsets = [0, 96], sizes = [4, 32], strides = [1, 1]} : vector<4x128xf32> to vector<4x32xf32>
    %cst_159 = arith.constant 5.000000e-01 : f32
    %477 = vector.broadcast %cst_159 : f32 to vector<4x32xf32>
    %478 = arith.mulf %477, %476 : vector<4x32xf32>
    %479 = math.tanh %478 : vector<4x32xf32>
    %cst_160 = arith.constant 5.000000e-01 : f32
    %480 = vector.broadcast %cst_160 : f32 to vector<4x32xf32>
    %481 = arith.mulf %480, %479 : vector<4x32xf32>
    %cst_161 = arith.constant 5.000000e-01 : f32
    %482 = vector.broadcast %cst_161 : f32 to vector<4x32xf32>
    %483 = arith.addf %481, %482 : vector<4x32xf32>
    %484 = arith.mulf %473, %439 : vector<4x32xf32>
    %485 = arith.mulf %465, %475 : vector<4x32xf32>
    %486 = arith.addf %484, %485 : vector<4x32xf32>
    %487 = math.tanh %486 : vector<4x32xf32>
    %488 = arith.mulf %483, %487 : vector<4x32xf32>
    %489 = arith.addf %488, %37 : vector<4x32xf32>
    %cst_162 = arith.constant dense<0.000000e+00> : vector<4x8xf32>
    %490 = tpu.matmul %489, %346, %cst_162 {dimension_numbers = #tpu.dot_dimension_numbers<[1], [0], [0], [1], [0, 0, 1, 1], [], []>} : vector<4x32xf32>, vector<32x8xf32>, vector<4x8xf32> -> vector<4x8xf32>
    %cst_163 = arith.constant dense<0xFF800000> : vector<4xf32>
    %491 = vector.multi_reduction <maximumf>, %490, %cst_163 [1] : vector<4x8xf32> to vector<4xf32>
    %492 = vector.shape_cast %491 : vector<4xf32> to vector<4x1xf32>
    %493 = vector.broadcast %492 : vector<4x1xf32> to vector<4x8xf32>
    %494 = arith.subf %490, %493 : vector<4x8xf32>
    %495 = math.exp %494 : vector<4x8xf32>
    %cst_164 = arith.constant dense<0.000000e+00> : vector<4xf32>
    %496 = vector.multi_reduction <add>, %495, %cst_164 [1] : vector<4x8xf32> to vector<4xf32>
    %497 = vector.shape_cast %496 : vector<4xf32> to vector<4x1xf32>
    %498 = tpu.reciprocal %497 {approx = true} : vector<4x1xf32> -> vector<4x1xf32>
    %499 = vector.broadcast %498 : vector<4x1xf32> to vector<4x8xf32>
    %500 = arith.mulf %495, %499 : vector<4x8xf32>
    %cst_165 = arith.constant dense<0.000000e+00> : vector<4x32xf32>
    %501 = tpu.matmul %500, %345, %cst_165 {dimension_numbers = #tpu.dot_dimension_numbers<[1], [0], [0], [1], [0, 0, 1, 1], [], []>} : vector<4x8xf32>, vector<8x32xf32>, vector<4x32xf32> -> vector<4x32xf32>
    %502 = tpu.concatenate %501, %489 in 1 : vector<4x32xf32>, vector<4x32xf32> -> vector<4x64xf32>
    %cst_166 = arith.constant dense<0.000000e+00> : vector<4x128xf32>
    %503 = tpu.matmul %502, %347, %cst_166 {dimension_numbers = #tpu.dot_dimension_numbers<[1], [0], [0], [1], [0, 0, 1, 1], [], []>} : vector<4x64xf32>, vector<64x128xf32>, vector<4x128xf32> -> vector<4x128xf32>
    %504 = arith.addf %36, %503 : vector<4x128xf32>
    %505 = vector.extract_strided_slice %504 {offsets = [0, 0], sizes = [4, 32], strides = [1, 1]} : vector<4x128xf32> to vector<4x32xf32>
    %cst_167 = arith.constant 5.000000e-01 : f32
    %506 = vector.broadcast %cst_167 : f32 to vector<4x32xf32>
    %507 = arith.mulf %506, %505 : vector<4x32xf32>
    %508 = math.tanh %507 : vector<4x32xf32>
    %cst_168 = arith.constant 5.000000e-01 : f32
    %509 = vector.broadcast %cst_168 : f32 to vector<4x32xf32>
    %510 = arith.mulf %509, %508 : vector<4x32xf32>
    %cst_169 = arith.constant 5.000000e-01 : f32
    %511 = vector.broadcast %cst_169 : f32 to vector<4x32xf32>
    %512 = arith.addf %510, %511 : vector<4x32xf32>
    %513 = vector.extract_strided_slice %504 {offsets = [0, 32], sizes = [4, 32], strides = [1, 1]} : vector<4x128xf32> to vector<4x32xf32>
    %cst_170 = arith.constant 5.000000e-01 : f32
    %514 = vector.broadcast %cst_170 : f32 to vector<4x32xf32>
    %515 = arith.mulf %514, %513 : vector<4x32xf32>
    %516 = math.tanh %515 : vector<4x32xf32>
    %cst_171 = arith.constant 5.000000e-01 : f32
    %517 = vector.broadcast %cst_171 : f32 to vector<4x32xf32>
    %518 = arith.mulf %517, %516 : vector<4x32xf32>
    %cst_172 = arith.constant 5.000000e-01 : f32
    %519 = vector.broadcast %cst_172 : f32 to vector<4x32xf32>
    %520 = arith.addf %518, %519 : vector<4x32xf32>
    %521 = vector.extract_strided_slice %504 {offsets = [0, 64], sizes = [4, 32], strides = [1, 1]} : vector<4x128xf32> to vector<4x32xf32>
    %522 = math.tanh %521 : vector<4x32xf32>
    %523 = vector.extract_strided_slice %504 {offsets = [0, 96], sizes = [4, 32], strides = [1, 1]} : vector<4x128xf32> to vector<4x32xf32>
    %cst_173 = arith.constant 5.000000e-01 : f32
    %524 = vector.broadcast %cst_173 : f32 to vector<4x32xf32>
    %525 = arith.mulf %524, %523 : vector<4x32xf32>
    %526 = math.tanh %525 : vector<4x32xf32>
    %cst_174 = arith.constant 5.000000e-01 : f32
    %527 = vector.broadcast %cst_174 : f32 to vector<4x32xf32>
    %528 = arith.mulf %527, %526 : vector<4x32xf32>
    %cst_175 = arith.constant 5.000000e-01 : f32
    %529 = vector.broadcast %cst_175 : f32 to vector<4x32xf32>
    %530 = arith.addf %528, %529 : vector<4x32xf32>
    %531 = arith.mulf %520, %486 : vector<4x32xf32>
    %532 = arith.mulf %512, %522 : vector<4x32xf32>
    %533 = arith.addf %531, %532 : vector<4x32xf32>
    %534 = math.tanh %533 : vector<4x32xf32>
    %535 = arith.mulf %530, %534 : vector<4x32xf32>
    %536 = arith.addf %535, %37 : vector<4x32xf32>
    %cst_176 = arith.constant dense<0.000000e+00> : vector<4x8xf32>
    %537 = tpu.matmul %536, %346, %cst_176 {dimension_numbers = #tpu.dot_dimension_numbers<[1], [0], [0], [1], [0, 0, 1, 1], [], []>} : vector<4x32xf32>, vector<32x8xf32>, vector<4x8xf32> -> vector<4x8xf32>
    %cst_177 = arith.constant dense<0xFF800000> : vector<4xf32>
    %538 = vector.multi_reduction <maximumf>, %537, %cst_177 [1] : vector<4x8xf32> to vector<4xf32>
    %539 = vector.shape_cast %538 : vector<4xf32> to vector<4x1xf32>
    %540 = vector.broadcast %539 : vector<4x1xf32> to vector<4x8xf32>
    %541 = arith.subf %537, %540 : vector<4x8xf32>
    %542 = math.exp %541 : vector<4x8xf32>
    %cst_178 = arith.constant dense<0.000000e+00> : vector<4xf32>
    %543 = vector.multi_reduction <add>, %542, %cst_178 [1] : vector<4x8xf32> to vector<4xf32>
    %544 = vector.shape_cast %543 : vector<4xf32> to vector<4x1xf32>
    %545 = tpu.reciprocal %544 {approx = true} : vector<4x1xf32> -> vector<4x1xf32>
    %546 = vector.broadcast %545 : vector<4x1xf32> to vector<4x8xf32>
    %547 = arith.mulf %542, %546 : vector<4x8xf32>
    %cst_179 = arith.constant dense<0.000000e+00> : vector<4x32xf32>
    %548 = tpu.matmul %547, %345, %cst_179 {dimension_numbers = #tpu.dot_dimension_numbers<[1], [0], [0], [1], [0, 0, 1, 1], [], []>} : vector<4x8xf32>, vector<8x32xf32>, vector<4x32xf32> -> vector<4x32xf32>
    %549 = tpu.concatenate %548, %536 in 1 : vector<4x32xf32>, vector<4x32xf32> -> vector<4x64xf32>
    %cst_180 = arith.constant dense<0.000000e+00> : vector<4x128xf32>
    %550 = tpu.matmul %549, %347, %cst_180 {dimension_numbers = #tpu.dot_dimension_numbers<[1], [0], [0], [1], [0, 0, 1, 1], [], []>} : vector<4x64xf32>, vector<64x128xf32>, vector<4x128xf32> -> vector<4x128xf32>
    %551 = arith.addf %36, %550 : vector<4x128xf32>
    %552 = vector.extract_strided_slice %551 {offsets = [0, 0], sizes = [4, 32], strides = [1, 1]} : vector<4x128xf32> to vector<4x32xf32>
    %cst_181 = arith.constant 5.000000e-01 : f32
    %553 = vector.broadcast %cst_181 : f32 to vector<4x32xf32>
    %554 = arith.mulf %553, %552 : vector<4x32xf32>
    %555 = math.tanh %554 : vector<4x32xf32>
    %cst_182 = arith.constant 5.000000e-01 : f32
    %556 = vector.broadcast %cst_182 : f32 to vector<4x32xf32>
    %557 = arith.mulf %556, %555 : vector<4x32xf32>
    %cst_183 = arith.constant 5.000000e-01 : f32
    %558 = vector.broadcast %cst_183 : f32 to vector<4x32xf32>
    %559 = arith.addf %557, %558 : vector<4x32xf32>
    %560 = vector.extract_strided_slice %551 {offsets = [0, 32], sizes = [4, 32], strides = [1, 1]} : vector<4x128xf32> to vector<4x32xf32>
    %cst_184 = arith.constant 5.000000e-01 : f32
    %561 = vector.broadcast %cst_184 : f32 to vector<4x32xf32>
    %562 = arith.mulf %561, %560 : vector<4x32xf32>
    %563 = math.tanh %562 : vector<4x32xf32>
    %cst_185 = arith.constant 5.000000e-01 : f32
    %564 = vector.broadcast %cst_185 : f32 to vector<4x32xf32>
    %565 = arith.mulf %564, %563 : vector<4x32xf32>
    %cst_186 = arith.constant 5.000000e-01 : f32
    %566 = vector.broadcast %cst_186 : f32 to vector<4x32xf32>
    %567 = arith.addf %565, %566 : vector<4x32xf32>
    %568 = vector.extract_strided_slice %551 {offsets = [0, 64], sizes = [4, 32], strides = [1, 1]} : vector<4x128xf32> to vector<4x32xf32>
    %569 = math.tanh %568 : vector<4x32xf32>
    %570 = vector.extract_strided_slice %551 {offsets = [0, 96], sizes = [4, 32], strides = [1, 1]} : vector<4x128xf32> to vector<4x32xf32>
    %cst_187 = arith.constant 5.000000e-01 : f32
    %571 = vector.broadcast %cst_187 : f32 to vector<4x32xf32>
    %572 = arith.mulf %571, %570 : vector<4x32xf32>
    %573 = math.tanh %572 : vector<4x32xf32>
    %cst_188 = arith.constant 5.000000e-01 : f32
    %574 = vector.broadcast %cst_188 : f32 to vector<4x32xf32>
    %575 = arith.mulf %574, %573 : vector<4x32xf32>
    %cst_189 = arith.constant 5.000000e-01 : f32
    %576 = vector.broadcast %cst_189 : f32 to vector<4x32xf32>
    %577 = arith.addf %575, %576 : vector<4x32xf32>
    %578 = arith.mulf %567, %533 : vector<4x32xf32>
    %579 = arith.mulf %559, %569 : vector<4x32xf32>
    %580 = arith.addf %578, %579 : vector<4x32xf32>
    %581 = math.tanh %580 : vector<4x32xf32>
    %582 = arith.mulf %577, %581 : vector<4x32xf32>
    %583 = arith.addf %582, %37 : vector<4x32xf32>
    %cst_190 = arith.constant dense<0.000000e+00> : vector<4x8xf32>
    %584 = tpu.matmul %583, %346, %cst_190 {dimension_numbers = #tpu.dot_dimension_numbers<[1], [0], [0], [1], [0, 0, 1, 1], [], []>} : vector<4x32xf32>, vector<32x8xf32>, vector<4x8xf32> -> vector<4x8xf32>
    %cst_191 = arith.constant dense<0xFF800000> : vector<4xf32>
    %585 = vector.multi_reduction <maximumf>, %584, %cst_191 [1] : vector<4x8xf32> to vector<4xf32>
    %586 = vector.shape_cast %585 : vector<4xf32> to vector<4x1xf32>
    %587 = vector.broadcast %586 : vector<4x1xf32> to vector<4x8xf32>
    %588 = arith.subf %584, %587 : vector<4x8xf32>
    %589 = math.exp %588 : vector<4x8xf32>
    %cst_192 = arith.constant dense<0.000000e+00> : vector<4xf32>
    %590 = vector.multi_reduction <add>, %589, %cst_192 [1] : vector<4x8xf32> to vector<4xf32>
    %591 = vector.shape_cast %590 : vector<4xf32> to vector<4x1xf32>
    %592 = tpu.reciprocal %591 {approx = true} : vector<4x1xf32> -> vector<4x1xf32>
    %593 = vector.broadcast %592 : vector<4x1xf32> to vector<4x8xf32>
    %594 = arith.mulf %589, %593 : vector<4x8xf32>
    %cst_193 = arith.constant dense<0.000000e+00> : vector<4x32xf32>
    %595 = tpu.matmul %594, %345, %cst_193 {dimension_numbers = #tpu.dot_dimension_numbers<[1], [0], [0], [1], [0, 0, 1, 1], [], []>} : vector<4x8xf32>, vector<8x32xf32>, vector<4x32xf32> -> vector<4x32xf32>
    %596 = tpu.concatenate %595, %583 in 1 : vector<4x32xf32>, vector<4x32xf32> -> vector<4x64xf32>
    %cst_194 = arith.constant dense<0.000000e+00> : vector<4x128xf32>
    %597 = tpu.matmul %596, %347, %cst_194 {dimension_numbers = #tpu.dot_dimension_numbers<[1], [0], [0], [1], [0, 0, 1, 1], [], []>} : vector<4x64xf32>, vector<64x128xf32>, vector<4x128xf32> -> vector<4x128xf32>
    %598 = arith.addf %36, %597 : vector<4x128xf32>
    %599 = vector.extract_strided_slice %598 {offsets = [0, 0], sizes = [4, 32], strides = [1, 1]} : vector<4x128xf32> to vector<4x32xf32>
    %cst_195 = arith.constant 5.000000e-01 : f32
    %600 = vector.broadcast %cst_195 : f32 to vector<4x32xf32>
    %601 = arith.mulf %600, %599 : vector<4x32xf32>
    %602 = math.tanh %601 : vector<4x32xf32>
    %cst_196 = arith.constant 5.000000e-01 : f32
    %603 = vector.broadcast %cst_196 : f32 to vector<4x32xf32>
    %604 = arith.mulf %603, %602 : vector<4x32xf32>
    %cst_197 = arith.constant 5.000000e-01 : f32
    %605 = vector.broadcast %cst_197 : f32 to vector<4x32xf32>
    %606 = arith.addf %604, %605 : vector<4x32xf32>
    %607 = vector.extract_strided_slice %598 {offsets = [0, 32], sizes = [4, 32], strides = [1, 1]} : vector<4x128xf32> to vector<4x32xf32>
    %cst_198 = arith.constant 5.000000e-01 : f32
    %608 = vector.broadcast %cst_198 : f32 to vector<4x32xf32>
    %609 = arith.mulf %608, %607 : vector<4x32xf32>
    %610 = math.tanh %609 : vector<4x32xf32>
    %cst_199 = arith.constant 5.000000e-01 : f32
    %611 = vector.broadcast %cst_199 : f32 to vector<4x32xf32>
    %612 = arith.mulf %611, %610 : vector<4x32xf32>
    %cst_200 = arith.constant 5.000000e-01 : f32
    %613 = vector.broadcast %cst_200 : f32 to vector<4x32xf32>
    %614 = arith.addf %612, %613 : vector<4x32xf32>
    %615 = vector.extract_strided_slice %598 {offsets = [0, 64], sizes = [4, 32], strides = [1, 1]} : vector<4x128xf32> to vector<4x32xf32>
    %616 = math.tanh %615 : vector<4x32xf32>
    %617 = vector.extract_strided_slice %598 {offsets = [0, 96], sizes = [4, 32], strides = [1, 1]} : vector<4x128xf32> to vector<4x32xf32>
    %cst_201 = arith.constant 5.000000e-01 : f32
    %618 = vector.broadcast %cst_201 : f32 to vector<4x32xf32>
    %619 = arith.mulf %618, %617 : vector<4x32xf32>
    %620 = math.tanh %619 : vector<4x32xf32>
    %cst_202 = arith.constant 5.000000e-01 : f32
    %621 = vector.broadcast %cst_202 : f32 to vector<4x32xf32>
    %622 = arith.mulf %621, %620 : vector<4x32xf32>
    %cst_203 = arith.constant 5.000000e-01 : f32
    %623 = vector.broadcast %cst_203 : f32 to vector<4x32xf32>
    %624 = arith.addf %622, %623 : vector<4x32xf32>
    %625 = arith.mulf %614, %580 : vector<4x32xf32>
    %626 = arith.mulf %606, %616 : vector<4x32xf32>
    %627 = arith.addf %625, %626 : vector<4x32xf32>
    %628 = math.tanh %627 : vector<4x32xf32>
    %629 = arith.mulf %624, %628 : vector<4x32xf32>
    %630 = arith.addf %629, %37 : vector<4x32xf32>
    %cst_204 = arith.constant dense<0.000000e+00> : vector<4x8xf32>
    %631 = tpu.matmul %630, %346, %cst_204 {dimension_numbers = #tpu.dot_dimension_numbers<[1], [0], [0], [1], [0, 0, 1, 1], [], []>} : vector<4x32xf32>, vector<32x8xf32>, vector<4x8xf32> -> vector<4x8xf32>
    %cst_205 = arith.constant dense<0xFF800000> : vector<4xf32>
    %632 = vector.multi_reduction <maximumf>, %631, %cst_205 [1] : vector<4x8xf32> to vector<4xf32>
    %633 = vector.shape_cast %632 : vector<4xf32> to vector<4x1xf32>
    %634 = vector.broadcast %633 : vector<4x1xf32> to vector<4x8xf32>
    %635 = arith.subf %631, %634 : vector<4x8xf32>
    %636 = math.exp %635 : vector<4x8xf32>
    %cst_206 = arith.constant dense<0.000000e+00> : vector<4xf32>
    %637 = vector.multi_reduction <add>, %636, %cst_206 [1] : vector<4x8xf32> to vector<4xf32>
    %638 = vector.shape_cast %637 : vector<4xf32> to vector<4x1xf32>
    %639 = tpu.reciprocal %638 {approx = true} : vector<4x1xf32> -> vector<4x1xf32>
    %640 = vector.broadcast %639 : vector<4x1xf32> to vector<4x8xf32>
    %641 = arith.mulf %636, %640 : vector<4x8xf32>
    %cst_207 = arith.constant dense<0.000000e+00> : vector<4x32xf32>
    %642 = tpu.matmul %641, %345, %cst_207 {dimension_numbers = #tpu.dot_dimension_numbers<[1], [0], [0], [1], [0, 0, 1, 1], [], []>} : vector<4x8xf32>, vector<8x32xf32>, vector<4x32xf32> -> vector<4x32xf32>
    %643 = tpu.concatenate %642, %630 in 1 : vector<4x32xf32>, vector<4x32xf32> -> vector<4x64xf32>
    %cst_208 = arith.constant dense<0.000000e+00> : vector<4x128xf32>
    %644 = tpu.matmul %643, %347, %cst_208 {dimension_numbers = #tpu.dot_dimension_numbers<[1], [0], [0], [1], [0, 0, 1, 1], [], []>} : vector<4x64xf32>, vector<64x128xf32>, vector<4x128xf32> -> vector<4x128xf32>
    %645 = arith.addf %36, %644 : vector<4x128xf32>
    %646 = vector.extract_strided_slice %645 {offsets = [0, 0], sizes = [4, 32], strides = [1, 1]} : vector<4x128xf32> to vector<4x32xf32>
    %cst_209 = arith.constant 5.000000e-01 : f32
    %647 = vector.broadcast %cst_209 : f32 to vector<4x32xf32>
    %648 = arith.mulf %647, %646 : vector<4x32xf32>
    %649 = math.tanh %648 : vector<4x32xf32>
    %cst_210 = arith.constant 5.000000e-01 : f32
    %650 = vector.broadcast %cst_210 : f32 to vector<4x32xf32>
    %651 = arith.mulf %650, %649 : vector<4x32xf32>
    %cst_211 = arith.constant 5.000000e-01 : f32
    %652 = vector.broadcast %cst_211 : f32 to vector<4x32xf32>
    %653 = arith.addf %651, %652 : vector<4x32xf32>
    %654 = vector.extract_strided_slice %645 {offsets = [0, 32], sizes = [4, 32], strides = [1, 1]} : vector<4x128xf32> to vector<4x32xf32>
    %cst_212 = arith.constant 5.000000e-01 : f32
    %655 = vector.broadcast %cst_212 : f32 to vector<4x32xf32>
    %656 = arith.mulf %655, %654 : vector<4x32xf32>
    %657 = math.tanh %656 : vector<4x32xf32>
    %cst_213 = arith.constant 5.000000e-01 : f32
    %658 = vector.broadcast %cst_213 : f32 to vector<4x32xf32>
    %659 = arith.mulf %658, %657 : vector<4x32xf32>
    %cst_214 = arith.constant 5.000000e-01 : f32
    %660 = vector.broadcast %cst_214 : f32 to vector<4x32xf32>
    %661 = arith.addf %659, %660 : vector<4x32xf32>
    %662 = vector.extract_strided_slice %645 {offsets = [0, 64], sizes = [4, 32], strides = [1, 1]} : vector<4x128xf32> to vector<4x32xf32>
    %663 = math.tanh %662 : vector<4x32xf32>
    %664 = vector.extract_strided_slice %645 {offsets = [0, 96], sizes = [4, 32], strides = [1, 1]} : vector<4x128xf32> to vector<4x32xf32>
    %cst_215 = arith.constant 5.000000e-01 : f32
    %665 = vector.broadcast %cst_215 : f32 to vector<4x32xf32>
    %666 = arith.mulf %665, %664 : vector<4x32xf32>
    %667 = math.tanh %666 : vector<4x32xf32>
    %cst_216 = arith.constant 5.000000e-01 : f32
    %668 = vector.broadcast %cst_216 : f32 to vector<4x32xf32>
    %669 = arith.mulf %668, %667 : vector<4x32xf32>
    %cst_217 = arith.constant 5.000000e-01 : f32
    %670 = vector.broadcast %cst_217 : f32 to vector<4x32xf32>
    %671 = arith.addf %669, %670 : vector<4x32xf32>
    %672 = arith.mulf %661, %627 : vector<4x32xf32>
    %673 = arith.mulf %653, %663 : vector<4x32xf32>
    %674 = arith.addf %672, %673 : vector<4x32xf32>
    %675 = math.tanh %674 : vector<4x32xf32>
    %676 = arith.mulf %671, %675 : vector<4x32xf32>
    %677 = arith.addf %676, %37 : vector<4x32xf32>
    %cst_218 = arith.constant dense<0.000000e+00> : vector<4x8xf32>
    %678 = tpu.matmul %677, %346, %cst_218 {dimension_numbers = #tpu.dot_dimension_numbers<[1], [0], [0], [1], [0, 0, 1, 1], [], []>} : vector<4x32xf32>, vector<32x8xf32>, vector<4x8xf32> -> vector<4x8xf32>
    %cst_219 = arith.constant dense<0xFF800000> : vector<4xf32>
    %679 = vector.multi_reduction <maximumf>, %678, %cst_219 [1] : vector<4x8xf32> to vector<4xf32>
    %680 = vector.shape_cast %679 : vector<4xf32> to vector<4x1xf32>
    %681 = vector.broadcast %680 : vector<4x1xf32> to vector<4x8xf32>
    %682 = arith.subf %678, %681 : vector<4x8xf32>
    %683 = math.exp %682 : vector<4x8xf32>
    %cst_220 = arith.constant dense<0.000000e+00> : vector<4xf32>
    %684 = vector.multi_reduction <add>, %683, %cst_220 [1] : vector<4x8xf32> to vector<4xf32>
    %685 = vector.shape_cast %684 : vector<4xf32> to vector<4x1xf32>
    %686 = tpu.reciprocal %685 {approx = true} : vector<4x1xf32> -> vector<4x1xf32>
    %687 = vector.broadcast %686 : vector<4x1xf32> to vector<4x8xf32>
    %688 = arith.mulf %683, %687 : vector<4x8xf32>
    %cst_221 = arith.constant dense<0.000000e+00> : vector<4x32xf32>
    %689 = tpu.matmul %688, %345, %cst_221 {dimension_numbers = #tpu.dot_dimension_numbers<[1], [0], [0], [1], [0, 0, 1, 1], [], []>} : vector<4x8xf32>, vector<8x32xf32>, vector<4x32xf32> -> vector<4x32xf32>
    %690 = tpu.concatenate %689, %677 in 1 : vector<4x32xf32>, vector<4x32xf32> -> vector<4x64xf32>
    %cst_222 = arith.constant dense<0.000000e+00> : vector<4x128xf32>
    %691 = tpu.matmul %690, %347, %cst_222 {dimension_numbers = #tpu.dot_dimension_numbers<[1], [0], [0], [1], [0, 0, 1, 1], [], []>} : vector<4x64xf32>, vector<64x128xf32>, vector<4x128xf32> -> vector<4x128xf32>
    %692 = arith.addf %36, %691 : vector<4x128xf32>
    %693 = vector.extract_strided_slice %692 {offsets = [0, 0], sizes = [4, 32], strides = [1, 1]} : vector<4x128xf32> to vector<4x32xf32>
    %cst_223 = arith.constant 5.000000e-01 : f32
    %694 = vector.broadcast %cst_223 : f32 to vector<4x32xf32>
    %695 = arith.mulf %694, %693 : vector<4x32xf32>
    %696 = math.tanh %695 : vector<4x32xf32>
    %cst_224 = arith.constant 5.000000e-01 : f32
    %697 = vector.broadcast %cst_224 : f32 to vector<4x32xf32>
    %698 = arith.mulf %697, %696 : vector<4x32xf32>
    %cst_225 = arith.constant 5.000000e-01 : f32
    %699 = vector.broadcast %cst_225 : f32 to vector<4x32xf32>
    %700 = arith.addf %698, %699 : vector<4x32xf32>
    %701 = vector.extract_strided_slice %692 {offsets = [0, 32], sizes = [4, 32], strides = [1, 1]} : vector<4x128xf32> to vector<4x32xf32>
    %cst_226 = arith.constant 5.000000e-01 : f32
    %702 = vector.broadcast %cst_226 : f32 to vector<4x32xf32>
    %703 = arith.mulf %702, %701 : vector<4x32xf32>
    %704 = math.tanh %703 : vector<4x32xf32>
    %cst_227 = arith.constant 5.000000e-01 : f32
    %705 = vector.broadcast %cst_227 : f32 to vector<4x32xf32>
    %706 = arith.mulf %705, %704 : vector<4x32xf32>
    %cst_228 = arith.constant 5.000000e-01 : f32
    %707 = vector.broadcast %cst_228 : f32 to vector<4x32xf32>
    %708 = arith.addf %706, %707 : vector<4x32xf32>
    %709 = vector.extract_strided_slice %692 {offsets = [0, 64], sizes = [4, 32], strides = [1, 1]} : vector<4x128xf32> to vector<4x32xf32>
    %710 = math.tanh %709 : vector<4x32xf32>
    %711 = vector.extract_strided_slice %692 {offsets = [0, 96], sizes = [4, 32], strides = [1, 1]} : vector<4x128xf32> to vector<4x32xf32>
    %cst_229 = arith.constant 5.000000e-01 : f32
    %712 = vector.broadcast %cst_229 : f32 to vector<4x32xf32>
    %713 = arith.mulf %712, %711 : vector<4x32xf32>
    %714 = math.tanh %713 : vector<4x32xf32>
    %cst_230 = arith.constant 5.000000e-01 : f32
    %715 = vector.broadcast %cst_230 : f32 to vector<4x32xf32>
    %716 = arith.mulf %715, %714 : vector<4x32xf32>
    %cst_231 = arith.constant 5.000000e-01 : f32
    %717 = vector.broadcast %cst_231 : f32 to vector<4x32xf32>
    %718 = arith.addf %716, %717 : vector<4x32xf32>
    %719 = arith.mulf %708, %674 : vector<4x32xf32>
    %720 = arith.mulf %700, %710 : vector<4x32xf32>
    %721 = arith.addf %719, %720 : vector<4x32xf32>
    %722 = math.tanh %721 : vector<4x32xf32>
    %723 = arith.mulf %718, %722 : vector<4x32xf32>
    %724 = arith.addf %723, %37 : vector<4x32xf32>
    %725 = arith.mulf %724, %724 : vector<4x32xf32>
    %cst_232 = arith.constant dense<0.000000e+00> : vector<4xf32>
    %726 = vector.multi_reduction <add>, %725, %cst_232 [1] : vector<4x32xf32> to vector<4xf32>
    %727 = vector.shape_cast %726 : vector<4xf32> to vector<4x1xf32>
    %cst_233 = arith.constant 1.000000e-24 : f32
    %728 = vector.broadcast %cst_233 : f32 to vector<4x1xf32>
    %729 = arith.maximumf %727, %728 : vector<4x1xf32>
    %730 = math.rsqrt %729 : vector<4x1xf32>
    %731 = vector.broadcast %730 : vector<4x1xf32> to vector<4x32xf32>
    %732 = arith.mulf %724, %731 : vector<4x32xf32>
    %733 = arith.mulf %346, %346 : vector<32x8xf32>
    %cst_234 = arith.constant dense<0.000000e+00> : vector<8xf32>
    %734 = vector.multi_reduction <add>, %733, %cst_234 [0] : vector<32x8xf32> to vector<8xf32>
    %735 = vector.shape_cast %734 : vector<8xf32> to vector<1x8xf32>
    %cst_235 = arith.constant 1.000000e-24 : f32
    %736 = vector.broadcast %cst_235 : f32 to vector<1x8xf32>
    %737 = arith.maximumf %735, %736 : vector<1x8xf32>
    %738 = math.rsqrt %737 : vector<1x8xf32>
    %739 = vector.broadcast %738 : vector<1x8xf32> to vector<32x8xf32>
    %740 = arith.mulf %346, %739 : vector<32x8xf32>
    %cst_236 = arith.constant dense<0.000000e+00> : vector<4x8xf32>
    %741 = tpu.matmul %732, %740, %cst_236 {dimension_numbers = #tpu.dot_dimension_numbers<[1], [0], [0], [1], [0, 0, 1, 1], [], []>} : vector<4x32xf32>, vector<32x8xf32>, vector<4x8xf32> -> vector<4x8xf32>
    %c0_237 = arith.constant 0 : index
    %c0_238 = arith.constant 0 : index
    %742 = vector.load %arg10[%c0_237, %c0_238] : memref<4x8xf32, #tpu.memory_space<vmem>>, vector<4x8xf32>
    tpu.vector_store %arg10[%c0_237, %c0_238], %741 {strides = array<i32>} : memref<4x8xf32, #tpu.memory_space<vmem>>, vector<4x8xf32>,
    return
  }
  func.func @transform_0(%arg0: i32) -> (i32, i32, i32) {
    %c0_i32 = arith.constant 0 : i32
    %c0_i32_0 = arith.constant 0 : i32
    %c0_i32_1 = arith.constant 0 : i32
    %c0_i32_2 = arith.constant 0 : i32
    return %c0_i32, %c0_i32_0, %c0_i32_1 : i32, i32, i32
  }
  func.func @transform_1(%arg0: i32) -> (i32, i32, i32) {
    %c0_i32 = arith.constant 0 : i32
    %c0_i32_0 = arith.constant 0 : i32
    %c0_i32_1 = arith.constant 0 : i32
    %c0_i32_2 = arith.constant 0 : i32
    return %c0_i32, %c0_i32_0, %c0_i32_1 : i32, i32, i32
  }
  func.func @transform_2(%arg0: i32) -> (i32, i32) {
    %c0_i32 = arith.constant 0 : i32
    %c0_i32_0 = arith.constant 0 : i32
    %c0_i32_1 = arith.constant 0 : i32
    return %c0_i32, %c0_i32_0 : i32, i32
  }
  func.func @transform_3(%arg0: i32) -> (i32, i32) {
    %c0_i32 = arith.constant 0 : i32
    %c0_i32_0 = arith.constant 0 : i32
    %c0_i32_1 = arith.constant 0 : i32
    return %c0_i32, %c0_i32_0 : i32, i32
  }
  func.func @transform_4(%arg0: i32) -> (i32, i32) {
    %c0_i32 = arith.constant 0 : i32
    %c0_i32_0 = arith.constant 0 : i32
    %c0_i32_1 = arith.constant 0 : i32
    return %c0_i32, %c0_i32_0 : i32, i32
  }
  func.func @transform_5(%arg0: i32) -> (i32, i32) {
    %c0_i32 = arith.constant 0 : i32
    %c0_i32_0 = arith.constant 0 : i32
    %c0_i32_1 = arith.constant 0 : i32
    return %c0_i32, %c0_i32_0 : i32, i32
  }
  func.func @transform_6(%arg0: i32) -> (i32, i32) {
    %c0_i32 = arith.constant 0 : i32
    %c0_i32_0 = arith.constant 0 : i32
    %c0_i32_1 = arith.constant 0 : i32
    return %c0_i32, %c0_i32_0 : i32, i32
  }
  func.func @transform_7(%arg0: i32) -> (i32, i32) {
    %c0_i32 = arith.constant 0 : i32
    %c0_i32_0 = arith.constant 0 : i32
    %c0_i32_1 = arith.constant 0 : i32
    return %c0_i32, %c0_i32_0 : i32, i32
  }
  func.func @transform_8(%arg0: i32) -> (i32, i32) {
    %c0_i32 = arith.constant 0 : i32
    %c0_i32_0 = arith.constant 0 : i32
    %c0_i32_1 = arith.constant 0 : i32
    return %c0_i32, %c0_i32_0 : i32, i32
  }
  func.func @transform_9(%arg0: i32) -> (i32, i32) {
    %c0_i32 = arith.constant 0 : i32
    %c0_i32_0 = arith.constant 0 : i32
    %c0_i32_1 = arith.constant 0 : i32
    return %c0_i32, %c0_i32_0 : i32, i32
  }
}

</mosaic_0001>

<llo_original>
// kernel: matching_net_forward.1
$region0: #{matching_net_forward.1}
  #allocation0 [shape = 'u32[]', space=smem, size = 0x4, offset = 0x4, fixed_abs, tag = 'smem constant byte address 0x4 - core index']
  #allocation1 [shape = 'u32[144,128]{1,0:T(1,128)}', space=vmem, size = 0x12000, scoped, tag = 'internal scratch']
  %s0 = inlined_call_operand.vmem [shape: bf16[12,18,72], index: 0, kind: input, shape index: {}]
  %s1 = inlined_call_operand.vmem [shape: bf16[3,72,512], index: 1, kind: input, shape index: {}]
  %s2 = inlined_call_operand.vmem [shape: f32[1,512], index: 2, kind: input, shape index: {}]
  %s3 = inlined_call_operand.vmem [shape: f32[512,32], index: 3, kind: input, shape index: {}]
  %s4 = inlined_call_operand.vmem [shape: f32[32,256], index: 4, kind: input, shape index: {}]
  %s5 = inlined_call_operand.vmem [shape: f32[32,128], index: 5, kind: input, shape index: {}]
  %s6 = inlined_call_operand.vmem [shape: f32[1,128], index: 6, kind: input, shape index: {}]
  %s7 = inlined_call_operand.vmem [shape: f32[64,128], index: 7, kind: input, shape index: {}]
  %s8 = inlined_call_operand.vmem [shape: f32[1,128], index: 8, kind: input, shape index: {}]
  %s9 = inlined_call_operand.hbm [shape: f32[4,8], index: 9, kind: output, shape index: {}]
  %s10 = sld [smem:[#allocation0]]
  $region46: #{matching_net_forward.1} parent=0
    _
  %s12 = ssub.s32 1, %s10
  %s13 = scalar_select 0, %s12, %s10
  $region1: #{matching_net_forward.1} parent=0
    #allocation2 [shape = 'u8[2048]{0}', space=vmem, size = 0x800, scoped, tag = 'output window, operand 0, single buffered']
    #allocation3 [shape = 's32[1]{0}', space=sflag, size = 0x4, scoped, tag = 'scoped memory for matching_net_forward.1']
    %14 = vsyncpa [#allocation3], 0
    // Predicated region
    $region2: #{matching_net_forward.1} parent=1 // pred_check
      _
    $region3: #{matching_net_forward.1} parent=1 // pred_check_branch
      %16 = sbr.rel (0) target = $region5
    $region4: #{matching_net_forward.1} parent=1 // pred_region
      _
    $region5: #{matching_net_forward.1} parent=1 // pred_fallthru
      _
    // Predicated region
    $region6: #{matching_net_forward.1} parent=1 // pred_check
      _
    $region7: #{matching_net_forward.1} parent=1 // pred_check_branch
      %18 = sbr.rel (0) target = $region9
    $region8: #{matching_net_forward.1} parent=1 // pred_region
      _
    $region9: #{matching_net_forward.1} parent=1 // pred_fallthru
      _
    // Predicated region
    $region10: #{matching_net_forward.1} parent=1 // pred_check
      _
    $region11: #{matching_net_forward.1} parent=1 // pred_check_branch
      %20 = sbr.rel (0) target = $region13
    $region12: #{matching_net_forward.1} parent=1 // pred_region
      _
    $region13: #{matching_net_forward.1} parent=1 // pred_fallthru
      _
    // Predicated region
    $region14: #{matching_net_forward.1} parent=1 // pred_check
      _
    $region15: #{matching_net_forward.1} parent=1 // pred_check_branch
      %22 = sbr.rel (0) target = $region17
    $region16: #{matching_net_forward.1} parent=1 // pred_region
      _
    $region17: #{matching_net_forward.1} parent=1 // pred_fallthru
      _
    // Predicated region
    $region18: #{matching_net_forward.1} parent=1 // pred_check
      _
    $region19: #{matching_net_forward.1} parent=1 // pred_check_branch
      %24 = sbr.rel (0) target = $region21
    $region20: #{matching_net_forward.1} parent=1 // pred_region
      _
    $region21: #{matching_net_forward.1} parent=1 // pred_fallthru
      _
    // Predicated region
    $region22: #{matching_net_forward.1} parent=1 // pred_check
      _
    $region23: #{matching_net_forward.1} parent=1 // pred_check_branch
      %26 = sbr.rel (0) target = $region25
    $region24: #{matching_net_forward.1} parent=1 // pred_region
      _
    $region25: #{matching_net_forward.1} parent=1 // pred_fallthru
      _
    // Predicated region
    $region26: #{matching_net_forward.1} parent=1 // pred_check
      _
    $region27: #{matching_net_forward.1} parent=1 // pred_check_branch
      %28 = sbr.rel (0) target = $region29
    $region28: #{matching_net_forward.1} parent=1 // pred_region
      _
    $region29: #{matching_net_forward.1} parent=1 // pred_fallthru
      _
    // Predicated region
    $region30: #{matching_net_forward.1} parent=1 // pred_check
      _
    $region31: #{matching_net_forward.1} parent=1 // pred_check_branch
      %30 = sbr.rel (0) target = $region33
    $region32: #{matching_net_forward.1} parent=1 // pred_region
      _
    $region33: #{matching_net_forward.1} parent=1 // pred_fallthru
      _
    // Predicated region
    $region34: #{matching_net_forward.1} parent=1 // pred_check
      _
    $region35: #{matching_net_forward.1} parent=1 // pred_check_branch
      %32 = sbr.rel (0) target = $region37
    $region36: #{matching_net_forward.1} parent=1 // pred_region
      _
    $region37: #{matching_net_forward.1} parent=1 // pred_fallthru
      _
    %v34 = vld [vmem:[%s0] sm:$0xf]
    %v35 = vld [vmem:[%s0 + $0x4] sm:$0xf]
    %v36 = vld [vmem:[%s0 + $0x8] sm:$0x1]
    %v37 = vld [vmem:[%s0 + $0xc] sm:$0xf]
    %v38 = vld [vmem:[%s0 + $0x10] sm:$0xf]
    %v39 = vld [vmem:[%s0 + $0x14] sm:$0x1]
    %v40 = vld [vmem:[%s0 + $0x18] sm:$0xf]
    %v41 = vld [vmem:[%s0 + $0x1c] sm:$0xf]
    %v42 = vld [vmem:[%s0 + $0x20] sm:$0x1]
    %v43 = vld [vmem:[%s0 + $0x24] sm:$0xf]
    %v44 = vld [vmem:[%s0 + $0x28] sm:$0xf]
    %v45 = vld [vmem:[%s0 + $0x2c] sm:$0x1]
    %v46 = vld [vmem:[%s0 + $0x30] sm:$0xf]
    %v47 = vld [vmem:[%s0 + $0x34] sm:$0xf]
    %v48 = vld [vmem:[%s0 + $0x38] sm:$0x1]
    %v49 = vld [vmem:[%s0 + $0x3c] sm:$0xf]
    %v50 = vld [vmem:[%s0 + $0x40] sm:$0xf]
    %v51 = vld [vmem:[%s0 + $0x44] sm:$0x1]
    %v52 = vld [vmem:[%s0 + $0x48] sm:$0xf]
    %v53 = vld [vmem:[%s0 + $0x4c] sm:$0xf]
    %v54 = vld [vmem:[%s0 + $0x50] sm:$0x1]
    %v55 = vld [vmem:[%s0 + $0x54] sm:$0xf]
    %v56 = vld [vmem:[%s0 + $0x58] sm:$0xf]
    %v57 = vld [vmem:[%s0 + $0x5c] sm:$0x1]
    %v58 = vld [vmem:[%s0 + $0x60] sm:$0xf]
    %v59 = vld [vmem:[%s0 + $0x64] sm:$0xf]
    %v60 = vld [vmem:[%s0 + $0x68] sm:$0x1]
    %v61 = vld [vmem:[%s0 + $0x6c] sm:$0xf]
    %v62 = vld [vmem:[%s0 + $0x70] sm:$0xf]
    %v63 = vld [vmem:[%s0 + $0x74] sm:$0x1]
    %v64 = vld [vmem:[%s0 + $0x78] sm:$0xf]
    %v65 = vld [vmem:[%s0 + $0x7c] sm:$0xf]
    %v66 = vld [vmem:[%s0 + $0x80] sm:$0x1]
    %v67 = vld [vmem:[%s0 + $0x84] sm:$0xf]
    %v68 = vld [vmem:[%s0 + $0x88] sm:$0xf]
    %v69 = vld [vmem:[%s0 + $0x8c] sm:$0x1]
    %v70 = vld [vmem:[%s1] sm:$0xff]
    %v71 = vld [vmem:[%s1 + $0x8] sm:$0xff]
    %v72 = vld [vmem:[%s1 + $0x10] sm:$0xff]
    %v73 = vld [vmem:[%s1 + $0x18] sm:$0xff]
    %v74 = vld [vmem:[%s1 + $0x20] sm:$0xff]
    %v75 = vld [vmem:[%s1 + $0x28] sm:$0xff]
    %v76 = vld [vmem:[%s1 + $0x30] sm:$0xff]
    %v77 = vld [vmem:[%s1 + $0x38] sm:$0xff]
    %v78 = vld [vmem:[%s1 + $0x40] sm:$0xff]
    %v79 = vld [vmem:[%s1 + $0x48] sm:$0xff]
    %v80 = vld [vmem:[%s1 + $0x50] sm:$0xff]
    %v81 = vld [vmem:[%s1 + $0x58] sm:$0xff]
    %v82 = vld [vmem:[%s1 + $0x60] sm:$0xff]
    %v83 = vld [vmem:[%s1 + $0x68] sm:$0xff]
    %v84 = vld [vmem:[%s1 + $0x70] sm:$0xff]
    %v85 = vld [vmem:[%s1 + $0x78] sm:$0xff]
    %v86 = vld [vmem:[%s1 + $0x80] sm:$0xff]
    %v87 = vld [vmem:[%s1 + $0x88] sm:$0xff]
    %vm88 = vsmask.f32 3328
    %vm89 = vsmask.f32 7440
    %vm90 = vmor %vm88, %vm89
    %v92 = vshrl.u32 %v34, 16
    %v94 = vrot.slane %v92, 4
    %v95 = vshll.u32 %v34, 16
    %v97 = vrot.slane %v95, 5
    %v98 = vor.u32 %v94, %v97
    %v99 = vrot.slane %v98, 4
    %v101 = vshll.u32 %v35, 16
    %v103 = vrot.slane %v101, 5
    %v104 = vsel %vm90, %v99, %v103
    %v105 = vshrl.u32 %v35, 16
    %v107 = vrot.slane %v105, 4
    %v108 = vor.u32 %v107, %v103
    %v109 = vrot.slane %v108, 4
    %v111 = vshll.u32 %v36, 16
    %v113 = vrot.slane %v111, 5
    %v114 = vsel %vm90, %v109, %v113
    %v116 = vshrl.u32 %v37, 16
    %v118 = vrot.slane %v116, 4
    %v119 = vshll.u32 %v37, 16
    %v121 = vrot.slane %v119, 5
    %v122 = vor.u32 %v118, %v121
    %v123 = vrot.slane %v122, 4
    %v125 = vshll.u32 %v38, 16
    %v127 = vrot.slane %v125, 5
    %v128 = vsel %vm90, %v123, %v127
    %v129 = vshrl.u32 %v38, 16
    %v131 = vrot.slane %v129, 4
    %v132 = vor.u32 %v131, %v127
    %v133 = vrot.slane %v132, 4
    %v135 = vshll.u32 %v39, 16
    %v137 = vrot.slane %v135, 5
    %v138 = vsel %vm90, %v133, %v137
    %v140 = vshrl.u32 %v40, 16
    %v142 = vrot.slane %v140, 4
    %v143 = vshll.u32 %v40, 16
    %v145 = vrot.slane %v143, 5
    %v146 = vor.u32 %v142, %v145
    %v147 = vrot.slane %v146, 4
    %v149 = vshll.u32 %v41, 16
    %v151 = vrot.slane %v149, 5
    %v152 = vsel %vm90, %v147, %v151
    %v153 = vshrl.u32 %v41, 16
    %v155 = vrot.slane %v153, 4
    %v156 = vor.u32 %v155, %v151
    %v157 = vrot.slane %v156, 4
    %v159 = vshll.u32 %v42, 16
    %v161 = vrot.slane %v159, 5
    %v162 = vsel %vm90, %v157, %v161
    %v164 = vshrl.u32 %v43, 16
    %v166 = vrot.slane %v164, 4
    %v167 = vshll.u32 %v43, 16
    %v169 = vrot.slane %v167, 5
    %v170 = vor.u32 %v166, %v169
    %v171 = vrot.slane %v170, 4
    %v173 = vshll.u32 %v44, 16
    %v175 = vrot.slane %v173, 5
    %v176 = vsel %vm90, %v171, %v175
    %v177 = vshrl.u32 %v44, 16
    %v179 = vrot.slane %v177, 4
    %v180 = vor.u32 %v179, %v175
    %v181 = vrot.slane %v180, 4
    %v183 = vshll.u32 %v45, 16
    %v185 = vrot.slane %v183, 5
    %v186 = vsel %vm90, %v181, %v185
    %v188 = vshrl.u32 %v46, 16
    %v190 = vrot.slane %v188, 4
    %v191 = vshll.u32 %v46, 16
    %v193 = vrot.slane %v191, 5
    %v194 = vor.u32 %v190, %v193
    %v195 = vrot.slane %v194, 4
    %v197 = vshll.u32 %v47, 16
    %v199 = vrot.slane %v197, 5
    %v200 = vsel %vm90, %v195, %v199
    %v201 = vshrl.u32 %v47, 16
    %v203 = vrot.slane %v201, 4
    %v204 = vor.u32 %v203, %v199
    %v205 = vrot.slane %v204, 4
    %v207 = vshll.u32 %v48, 16
    %v209 = vrot.slane %v207, 5
    %v210 = vsel %vm90, %v205, %v209
    %v212 = vshrl.u32 %v49, 16
    %v214 = vrot.slane %v212, 4
    %v215 = vshll.u32 %v49, 16
    %v217 = vrot.slane %v215, 5
    %v218 = vor.u32 %v214, %v217
    %v219 = vrot.slane %v218, 4
    %v221 = vshll.u32 %v50, 16
    %v223 = vrot.slane %v221, 5
    %v224 = vsel %vm90, %v219, %v223
    %v225 = vshrl.u32 %v50, 16
    %v227 = vrot.slane %v225, 4
    %v228 = vor.u32 %v227, %v223
    %v229 = vrot.slane %v228, 4
    %v231 = vshll.u32 %v51, 16
    %v233 = vrot.slane %v231, 5
    %v234 = vsel %vm90, %v229, %v233
    %v236 = vshrl.u32 %v52, 16
    %v238 = vrot.slane %v236, 4
    %v239 = vshll.u32 %v52, 16
    %v241 = vrot.slane %v239, 5
    %v242 = vor.u32 %v238, %v241
    %v243 = vrot.slane %v242, 4
    %v245 = vshll.u32 %v53, 16
    %v247 = vrot.slane %v245, 5
    %v248 = vsel %vm90, %v243, %v247
    %v249 = vshrl.u32 %v53, 16
    %v251 = vrot.slane %v249, 4
    %v252 = vor.u32 %v251, %v247
    %v253 = vrot.slane %v252, 4
    %v255 = vshll.u32 %v54, 16
    %v257 = vrot.slane %v255, 5
    %v258 = vsel %vm90, %v253, %v257
    %v260 = vshrl.u32 %v55, 16
    %v262 = vrot.slane %v260, 4
    %v263 = vshll.u32 %v55, 16
    %v265 = vrot.slane %v263, 5
    %v266 = vor.u32 %v262, %v265
    %v267 = vrot.slane %v266, 4
    %v269 = vshll.u32 %v56, 16
    %v271 = vrot.slane %v269, 5
    %v272 = vsel %vm90, %v267, %v271
    %v273 = vshrl.u32 %v56, 16
    %v275 = vrot.slane %v273, 4
    %v276 = vor.u32 %v275, %v271
    %v277 = vrot.slane %v276, 4
    %v279 = vshll.u32 %v57, 16
    %v281 = vrot.slane %v279, 5
    %v282 = vsel %vm90, %v277, %v281
    %v284 = vshrl.u32 %v58, 16
    %v286 = vrot.slane %v284, 4
    %v287 = vshll.u32 %v58, 16
    %v289 = vrot.slane %v287, 5
    %v290 = vor.u32 %v286, %v289
    %v291 = vrot.slane %v290, 4
    %v293 = vshll.u32 %v59, 16
    %v295 = vrot.slane %v293, 5
    %v296 = vsel %vm90, %v291, %v295
    %v297 = vshrl.u32 %v59, 16
    %v299 = vrot.slane %v297, 4
    %v300 = vor.u32 %v299, %v295
    %v301 = vrot.slane %v300, 4
    %v303 = vshll.u32 %v60, 16
    %v305 = vrot.slane %v303, 5
    %v306 = vsel %vm90, %v301, %v305
    %v308 = vshrl.u32 %v61, 16
    %v310 = vrot.slane %v308, 4
    %v311 = vshll.u32 %v61, 16
    %v313 = vrot.slane %v311, 5
    %v314 = vor.u32 %v310, %v313
    %v315 = vrot.slane %v314, 4
    %v317 = vshll.u32 %v62, 16
    %v319 = vrot.slane %v317, 5
    %v320 = vsel %vm90, %v315, %v319
    %v321 = vshrl.u32 %v62, 16
    %v323 = vrot.slane %v321, 4
    %v324 = vor.u32 %v323, %v319
    %v325 = vrot.slane %v324, 4
    %v327 = vshll.u32 %v63, 16
    %v329 = vrot.slane %v327, 5
    %v330 = vsel %vm90, %v325, %v329
    %v332 = vshrl.u32 %v64, 16
    %v334 = vrot.slane %v332, 4
    %v335 = vshll.u32 %v64, 16
    %v337 = vrot.slane %v335, 5
    %v338 = vor.u32 %v334, %v337
    %v339 = vrot.slane %v338, 4
    %v341 = vshll.u32 %v65, 16
    %v343 = vrot.slane %v341, 5
    %v344 = vsel %vm90, %v339, %v343
    %v345 = vshrl.u32 %v65, 16
    %v347 = vrot.slane %v345, 4
    %v348 = vor.u32 %v347, %v343
    %v349 = vrot.slane %v348, 4
    %v351 = vshll.u32 %v66, 16
    %v353 = vrot.slane %v351, 5
    %v354 = vsel %vm90, %v349, %v353
    %v356 = vshrl.u32 %v67, 16
    %v358 = vrot.slane %v356, 4
    %v359 = vshll.u32 %v67, 16
    %v361 = vrot.slane %v359, 5
    %v362 = vor.u32 %v358, %v361
    %v363 = vrot.slane %v362, 4
    %v365 = vshll.u32 %v68, 16
    %v367 = vrot.slane %v365, 5
    %v368 = vsel %vm90, %v363, %v367
    %v369 = vshrl.u32 %v68, 16
    %v371 = vrot.slane %v369, 4
    %v372 = vor.u32 %v371, %v367
    %v373 = vrot.slane %v372, 4
    %v375 = vshll.u32 %v69, 16
    %v377 = vrot.slane %v375, 5
    %v378 = vsel %vm90, %v373, %v377
    %s379 = scalar_lea.vmem %s1, 144
    %v380 = vld [vmem:[%s379] sm:$0xff]
    %v381 = vld [vmem:[%s379 + $0x8] sm:$0xff]
    %v382 = vld [vmem:[%s379 + $0x10] sm:$0xff]
    %v383 = vld [vmem:[%s379 + $0x18] sm:$0xff]
    %v384 = vld [vmem:[%s379 + $0x20] sm:$0xff]
    %v385 = vld [vmem:[%s379 + $0x28] sm:$0xff]
    %v386 = vld [vmem:[%s379 + $0x30] sm:$0xff]
    %v387 = vld [vmem:[%s379 + $0x38] sm:$0xff]
    %v388 = vld [vmem:[%s379 + $0x40] sm:$0xff]
    %v389 = vld [vmem:[%s379 + $0x48] sm:$0xff]
    %v390 = vld [vmem:[%s379 + $0x50] sm:$0xff]
    %v391 = vld [vmem:[%s379 + $0x58] sm:$0xff]
    %v392 = vld [vmem:[%s379 + $0x60] sm:$0xff]
    %v393 = vld [vmem:[%s379 + $0x68] sm:$0xff]
    %v394 = vld [vmem:[%s379 + $0x70] sm:$0xff]
    %v395 = vld [vmem:[%s379 + $0x78] sm:$0xff]
    %v396 = vld [vmem:[%s379 + $0x80] sm:$0xff]
    %v397 = vld [vmem:[%s379 + $0x88] sm:$0xff]
    %v398 = vunpack.c.l.b16 %v104
    %v399 = vunpack.c.l.b16 %v114
    %v400 = vunpack.c.l.b16 %v128
    %v401 = vunpack.c.l.b16 %v138
    %v402 = vunpack.c.l.b16 %v152
    %v403 = vunpack.c.l.b16 %v162
    %v404 = vunpack.c.l.b16 %v176
    %v405 = vunpack.c.l.b16 %v186
    %v406 = vunpack.c.l.b16 %v200
    %v407 = vunpack.c.l.b16 %v210
    %v408 = vunpack.c.l.b16 %v224
    %v409 = vunpack.c.l.b16 %v234
    %v410 = vunpack.c.l.b16 %v248
    %v411 = vunpack.c.l.b16 %v258
    %v412 = vunpack.c.l.b16 %v272
    %v413 = vunpack.c.l.b16 %v282
    %v414 = vunpack.c.l.b16 %v296
    %v415 = vunpack.c.l.b16 %v306
    %v416 = vunpack.c.l.b16 %v320
    %v417 = vunpack.c.l.b16 %v330
    %v418 = vunpack.c.l.b16 %v344
    %v419 = vunpack.c.l.b16 %v354
    %v420 = vunpack.c.l.b16 %v368
    %v421 = vunpack.c.l.b16 %v378
    %v422 = vpack.c.b16 %v399, %v398
    %v423 = vpack.c.b16 %v401, %v400
    %v424 = vpack.c.b16 %v403, %v402
    %v425 = vpack.c.b16 %v405, %v404
    %v426 = vpack.c.b16 %v407, %v406
    %v427 = vpack.c.b16 %v409, %v408
    %v428 = vpack.c.b16 %v411, %v410
    %v429 = vpack.c.b16 %v413, %v412
    %v430 = vpack.c.b16 %v415, %v414
    %v431 = vpack.c.b16 %v417, %v416
    %v432 = vpack.c.b16 %v419, %v418
    %v433 = vpack.c.b16 %v421, %v420
    %v452 = vunpack.c.l.b16 %v380
    %v453 = vunpack.c.h.b16 %v380
    %v454 = vunpack.c.l.b16 %v381
    %v455 = vunpack.c.h.b16 %v381
    %v456 = vunpack.c.l.b16 %v382
    %v457 = vunpack.c.h.b16 %v382
    %v458 = vunpack.c.l.b16 %v383
    %v459 = vunpack.c.h.b16 %v383
    %v460 = vunpack.c.l.b16 %v384
    %v461 = vunpack.c.h.b16 %v384
    %v462 = vunpack.c.l.b16 %v385
    %v463 = vunpack.c.h.b16 %v385
    %v464 = vunpack.c.l.b16 %v386
    %v465 = vunpack.c.h.b16 %v386
    %v466 = vunpack.c.l.b16 %v387
    %v467 = vunpack.c.h.b16 %v387
    %v468 = vunpack.c.l.b16 %v388
    %v469 = vunpack.c.h.b16 %v388
    %v470 = vunpack.c.l.b16 %v389
    %v471 = vunpack.c.h.b16 %v389
    %v472 = vunpack.c.l.b16 %v390
    %v473 = vunpack.c.h.b16 %v390
    %v474 = vunpack.c.l.b16 %v391
    %v475 = vunpack.c.h.b16 %v391
    %v476 = vunpack.c.l.b16 %v392
    %v477 = vunpack.c.h.b16 %v392
    %v478 = vunpack.c.l.b16 %v393
    %v479 = vunpack.c.h.b16 %v393
    %v480 = vunpack.c.l.b16 %v394
    %v481 = vunpack.c.h.b16 %v394
    %v482 = vunpack.c.l.b16 %v395
    %v483 = vunpack.c.h.b16 %v395
    %v484 = vunpack.c.l.b16 %v396
    %v485 = vunpack.c.h.b16 %v396
    %v486 = vunpack.c.l.b16 %v397
    %v487 = vunpack.c.h.b16 %v397
    %v488 = vpack.c.b16 %v456, %v452
    %v489 = vpack.c.b16 %v457, %v453
    %v490 = vpack.c.b16 %v458, %v454
    %v491 = vpack.c.b16 %v459, %v455
    %v492 = vpack.c.b16 %v464, %v460
    %v493 = vpack.c.b16 %v465, %v461
    %v494 = vpack.c.b16 %v466, %v462
    %v495 = vpack.c.b16 %v467, %v463
    %v496 = vpack.c.b16 %v472, %v468
    %v497 = vpack.c.b16 %v473, %v469
    %v498 = vpack.c.b16 %v474, %v470
    %v499 = vpack.c.b16 %v475, %v471
    %v500 = vpack.c.b16 %v480, %v476
    %v501 = vpack.c.b16 %v481, %v477
    %v502 = vpack.c.b16 %v482, %v478
    %v503 = vpack.c.b16 %v483, %v479
    %v504 = vpack.c.b16 %v484, %v484
    %v505 = vpack.c.b16 %v485, %v485
    %v506 = vpack.c.b16 %v486, %v486
    %v507 = vpack.c.b16 %v487, %v487
    %vm524 = vcmask 588800
    %v526 = vsel %vm524, %v422, 0
    %v529 = vsel %vm524, %v423, 0
    %v532 = vsel %vm524, %v424, 0
    %v535 = vsel %vm524, %v425, 0
    %v538 = vsel %vm524, %v426, 0
    %v541 = vsel %vm524, %v427, 0
    %v544 = vsel %vm524, %v428, 0
    %v547 = vsel %vm524, %v429, 0
    %v550 = vsel %vm524, %v430, 0
    %v553 = vsel %vm524, %v431, 0
    %v556 = vsel %vm524, %v432, 0
    %v559 = vsel %vm524, %v433, 0
    %vm561 = vcmask 1043456
    %v563 = vsel %vm561, %v504, 0
    %v566 = vsel %vm561, %v505, 0
    %v569 = vsel %vm561, %v506, 0
    %v572 = vsel %vm561, %v507, 0
    %574 = vmatprep.subr.bf16.mxu0 %v489
    %575 = vmatpush1.bf16.msra.mxu0 %v488
    %576 = vmatprep.subr.bf16.mxu0 %v493
    %577 = vmatpush1.bf16.msra.mxu0 %v492
    %578 = vmatprep.subr.bf16.mxu0 %v497
    %579 = vmatpush1.bf16.msra.mxu0 %v496
    %580 = vmatprep.subr.bf16.mxu0 %v501
    %581 = vmatpush1.bf16.msra.mxu0 %v500
    %582 = vmatprep.subr.bf16.mxu0 %v566
    %583 = vmatpush1.bf16.msra.mxu0 %v563
    %584 = vmatprep.subr.bf16.mxu0 0
    %585 = vmatpush1.bf16.msra.mxu0 0
    %586 = vmatprep.subr.bf16.mxu0 0
    %587 = vmatpush1.bf16.msra.mxu0 0
    %588 = vmatprep.subr.bf16.mxu0 0
    %589 = vmatpush1.bf16.msra.mxu0 0
    %590 = vmatprep.subr.bf16.mxu0 0
    %591 = vmatpush1.bf16.msra.mxu0 0
    %592 = vmatprep.subr.bf16.mxu0 0
    %593 = vmatpush1.bf16.msra.mxu0 0
    %594 = vmatprep.subr.bf16.mxu0 0
    %595 = vmatpush1.bf16.msra.mxu0 0
    %596 = vmatprep.subr.bf16.mxu0 0
    %597 = vmatpush1.bf16.msra.mxu0 0
    %598 = vmatprep.subr.bf16.mxu0 0
    %599 = vmatpush1.bf16.msra.mxu0 0
    %600 = vmatprep.subr.bf16.mxu0 0
    %601 = vmatpush1.bf16.msra.mxu0 0
    %602 = vmatprep.subr.bf16.mxu0 0
    %603 = vmatpush1.bf16.msra.mxu0 0
    %604 = vmatprep.subr.bf16.mxu0 0
    %605 = vmatpush1.bf16.msra.mxu0 0
    %606 = vmatprep.mubr.bf16.mxu0 0
    %607 = vmatmul.mubr.bf16.gmra.mrb[0].mxu0 %v526
    %v608 = vpop.f32.mrb[0].mxu0
    %v609 = vadd.f32 0.0, %v608
    %v610 = vpop.f32.mrb[0].mxu0
    %v611 = vadd.f32 0.0, %v610
    %v612 = vpop.f32.mrb[0].mxu0
    %v613 = vadd.f32 0.0, %v612
    %v614 = vpop.f32.mrb[0].mxu0
    %v615 = vadd.f32 0.0, %v614
    %616 = vmatprep.mubr.bf16.mxu0 0
    %617 = vmatmul.mubr.bf16.gmra.mrb[0].mxu0 %v529
    %v618 = vpop.f32.mrb[0].mxu0
    %v619 = vadd.f32 0.0, %v618
    %v620 = vpop.f32.mrb[0].mxu0
    %v621 = vadd.f32 0.0, %v620
    %v622 = vpop.f32.mrb[0].mxu0
    %v623 = vadd.f32 0.0, %v622
    %v624 = vpop.f32.mrb[0].mxu0
    %v625 = vadd.f32 0.0, %v624
    %626 = vmatprep.mubr.bf16.mxu0 0
    %627 = vmatmul.mubr.bf16.gmra.mrb[0].mxu0 %v532
    %v628 = vpop.f32.mrb[0].mxu0
    %v629 = vadd.f32 0.0, %v628
    %v630 = vpop.f32.mrb[0].mxu0
    %v631 = vadd.f32 0.0, %v630
    %v632 = vpop.f32.mrb[0].mxu0
    %v633 = vadd.f32 0.0, %v632
    %v634 = vpop.f32.mrb[0].mxu0
    %v635 = vadd.f32 0.0, %v634
    %636 = vmatprep.mubr.bf16.mxu0 0
    %637 = vmatmul.mubr.bf16.gmra.mrb[0].mxu0 %v535
    %v638 = vpop.f32.mrb[0].mxu0
    %v639 = vadd.f32 0.0, %v638
    %v640 = vpop.f32.mrb[0].mxu0
    %v641 = vadd.f32 0.0, %v640
    %v642 = vpop.f32.mrb[0].mxu0
    %v643 = vadd.f32 0.0, %v642
    %v644 = vpop.f32.mrb[0].mxu0
    %v645 = vadd.f32 0.0, %v644
    %646 = vmatprep.mubr.bf16.mxu0 0
    %647 = vmatmul.mubr.bf16.gmra.mrb[0].mxu0 %v538
    %v648 = vpop.f32.mrb[0].mxu0
    %v649 = vadd.f32 0.0, %v648
    %v650 = vpop.f32.mrb[0].mxu0
    %v651 = vadd.f32 0.0, %v650
    %v652 = vpop.f32.mrb[0].mxu0
    %v653 = vadd.f32 0.0, %v652
    %v654 = vpop.f32.mrb[0].mxu0
    %v655 = vadd.f32 0.0, %v654
    %656 = vmatprep.mubr.bf16.mxu0 0
    %657 = vmatmul.mubr.bf16.gmra.mrb[0].mxu0 %v541
    %v658 = vpop.f32.mrb[0].mxu0
    %v659 = vadd.f32 0.0, %v658
    %v660 = vpop.f32.mrb[0].mxu0
    %v661 = vadd.f32 0.0, %v660
    %v662 = vpop.f32.mrb[0].mxu0
    %v663 = vadd.f32 0.0, %v662
    %v664 = vpop.f32.mrb[0].mxu0
    %v665 = vadd.f32 0.0, %v664
    %666 = vmatprep.mubr.bf16.mxu0 0
    %667 = vmatmul.mubr.bf16.gmra.mrb[0].mxu0 %v544
    %v668 = vpop.f32.mrb[0].mxu0
    %v669 = vadd.f32 0.0, %v668
    %v670 = vpop.f32.mrb[0].mxu0
    %v671 = vadd.f32 0.0, %v670
    %v672 = vpop.f32.mrb[0].mxu0
    %v673 = vadd.f32 0.0, %v672
    %v674 = vpop.f32.mrb[0].mxu0
    %v675 = vadd.f32 0.0, %v674
    %676 = vmatprep.mubr.bf16.mxu0 0
    %677 = vmatmul.mubr.bf16.gmra.mrb[0].mxu0 %v547
    %v678 = vpop.f32.mrb[0].mxu0
    %v679 = vadd.f32 0.0, %v678
    %v680 = vpop.f32.mrb[0].mxu0
    %v681 = vadd.f32 0.0, %v680
    %v682 = vpop.f32.mrb[0].mxu0
    %v683 = vadd.f32 0.0, %v682
    %v684 = vpop.f32.mrb[0].mxu0
    %v685 = vadd.f32 0.0, %v684
    %686 = vmatprep.mubr.bf16.mxu0 0
    %687 = vmatmul.mubr.bf16.gmra.mrb[0].mxu0 %v550
    %v688 = vpop.f32.mrb[0].mxu0
    %v689 = vadd.f32 0.0, %v688
    %v690 = vpop.f32.mrb[0].mxu0
    %v691 = vadd.f32 0.0, %v690
    %v692 = vpop.f32.mrb[0].mxu0
    %v693 = vadd.f32 0.0, %v692
    %v694 = vpop.f32.mrb[0].mxu0
    %v695 = vadd.f32 0.0, %v694
    %696 = vmatprep.mubr.bf16.mxu0 0
    %697 = vmatmul.mubr.bf16.gmra.mrb[0].mxu0 %v553
    %v698 = vpop.f32.mrb[0].mxu0
    %v699 = vadd.f32 0.0, %v698
    %v700 = vpop.f32.mrb[0].mxu0
    %v701 = vadd.f32 0.0, %v700
    %v702 = vpop.f32.mrb[0].mxu0
    %v703 = vadd.f32 0.0, %v702
    %v704 = vpop.f32.mrb[0].mxu0
    %v705 = vadd.f32 0.0, %v704
    %706 = vmatprep.mubr.bf16.mxu0 0
    %707 = vmatmul.mubr.bf16.gmra.mrb[0].mxu0 %v556
    %v708 = vpop.f32.mrb[0].mxu0
    %v709 = vadd.f32 0.0, %v708
    %v710 = vpop.f32.mrb[0].mxu0
    %v711 = vadd.f32 0.0, %v710
    %v712 = vpop.f32.mrb[0].mxu0
    %v713 = vadd.f32 0.0, %v712
    %v714 = vpop.f32.mrb[0].mxu0
    %v715 = vadd.f32 0.0, %v714
    %716 = vmatprep.mubr.bf16.mxu0 0
    %717 = vmatmul.mubr.bf16.gmra.mrb[0].mxu0 %v559
    %v718 = vpop.f32.mrb[0].mxu0
    %v719 = vadd.f32 0.0, %v718
    %v720 = vpop.f32.mrb[0].mxu0
    %v721 = vadd.f32 0.0, %v720
    %v722 = vpop.f32.mrb[0].mxu0
    %v723 = vadd.f32 0.0, %v722
    %v724 = vpop.f32.mrb[0].mxu0
    %v725 = vadd.f32 0.0, %v724
    %726 = vdwg.mxu0
    %727 = vmatprep.subr.bf16.mxu0 %v491
    %728 = vmatpush1.bf16.msra.mxu0 %v490
    %729 = vmatprep.subr.bf16.mxu0 %v495
    %730 = vmatpush1.bf16.msra.mxu0 %v494
    %731 = vmatprep.subr.bf16.mxu0 %v499
    %732 = vmatpush1.bf16.msra.mxu0 %v498
    %733 = vmatprep.subr.bf16.mxu0 %v503
    %734 = vmatpush1.bf16.msra.mxu0 %v502
    %735 = vmatprep.subr.bf16.mxu0 %v572
    %736 = vmatpush1.bf16.msra.mxu0 %v569
    %737 = vmatprep.subr.bf16.mxu0 0
    %738 = vmatpush1.bf16.msra.mxu0 0
    %739 = vmatprep.subr.bf16.mxu0 0
    %740 = vmatpush1.bf16.msra.mxu0 0
    %741 = vmatprep.subr.bf16.mxu0 0
    %742 = vmatpush1.bf16.msra.mxu0 0
    %743 = vmatprep.subr.bf16.mxu0 0
    %744 = vmatpush1.bf16.msra.mxu0 0
    %745 = vmatprep.subr.bf16.mxu0 0
    %746 = vmatpush1.bf16.msra.mxu0 0
    %747 = vmatprep.subr.bf16.mxu0 0
    %748 = vmatpush1.bf16.msra.mxu0 0
    %749 = vmatprep.subr.bf16.mxu0 0
    %750 = vmatpush1.bf16.msra.mxu0 0
    %751 = vmatprep.subr.bf16.mxu0 0
    %752 = vmatpush1.bf16.msra.mxu0 0
    %753 = vmatprep.subr.bf16.mxu0 0
    %754 = vmatpush1.bf16.msra.mxu0 0
    %755 = vmatprep.subr.bf16.mxu0 0
    %756 = vmatpush1.bf16.msra.mxu0 0
    %757 = vmatprep.subr.bf16.mxu0 0
    %758 = vmatpush1.bf16.msra.mxu0 0
    %759 = vmatprep.mubr.bf16.mxu0 0
    %760 = vmatmul.mubr.bf16.gmra.mrb[0].mxu0 %v526
    %v761 = vpop.f32.mrb[0].mxu0
    %v762 = vadd.f32 0.0, %v761
    %v763 = vpop.f32.mrb[0].mxu0
    %v764 = vadd.f32 0.0, %v763
    %v765 = vpop.f32.mrb[0].mxu0
    %v766 = vadd.f32 0.0, %v765
    %v767 = vpop.f32.mrb[0].mxu0
    %v768 = vadd.f32 0.0, %v767
    %769 = vmatprep.mubr.bf16.mxu0 0
    %770 = vmatmul.mubr.bf16.gmra.mrb[0].mxu0 %v529
    %v771 = vpop.f32.mrb[0].mxu0
    %v772 = vadd.f32 0.0, %v771
    %v773 = vpop.f32.mrb[0].mxu0
    %v774 = vadd.f32 0.0, %v773
    %v775 = vpop.f32.mrb[0].mxu0
    %v776 = vadd.f32 0.0, %v775
    %v777 = vpop.f32.mrb[0].mxu0
    %v778 = vadd.f32 0.0, %v777
    %779 = vmatprep.mubr.bf16.mxu0 0
    %780 = vmatmul.mubr.bf16.gmra.mrb[0].mxu0 %v532
    %v781 = vpop.f32.mrb[0].mxu0
    %v782 = vadd.f32 0.0, %v781
    %v783 = vpop.f32.mrb[0].mxu0
    %v784 = vadd.f32 0.0, %v783
    %v785 = vpop.f32.mrb[0].mxu0
    %v786 = vadd.f32 0.0, %v785
    %v787 = vpop.f32.mrb[0].mxu0
    %v788 = vadd.f32 0.0, %v787
    %789 = vmatprep.mubr.bf16.mxu0 0
    %790 = vmatmul.mubr.bf16.gmra.mrb[0].mxu0 %v535
    %v791 = vpop.f32.mrb[0].mxu0
    %v792 = vadd.f32 0.0, %v791
    %v793 = vpop.f32.mrb[0].mxu0
    %v794 = vadd.f32 0.0, %v793
    %v795 = vpop.f32.mrb[0].mxu0
    %v796 = vadd.f32 0.0, %v795
    %v797 = vpop.f32.mrb[0].mxu0
    %v798 = vadd.f32 0.0, %v797
    %799 = vmatprep.mubr.bf16.mxu0 0
    %800 = vmatmul.mubr.bf16.gmra.mrb[0].mxu0 %v538
    %v801 = vpop.f32.mrb[0].mxu0
    %v802 = vadd.f32 0.0, %v801
    %v803 = vpop.f32.mrb[0].mxu0
    %v804 = vadd.f32 0.0, %v803
    %v805 = vpop.f32.mrb[0].mxu0
    %v806 = vadd.f32 0.0, %v805
    %v807 = vpop.f32.mrb[0].mxu0
    %v808 = vadd.f32 0.0, %v807
    %809 = vmatprep.mubr.bf16.mxu0 0
    %810 = vmatmul.mubr.bf16.gmra.mrb[0].mxu0 %v541
    %v811 = vpop.f32.mrb[0].mxu0
    %v812 = vadd.f32 0.0, %v811
    %v813 = vpop.f32.mrb[0].mxu0
    %v814 = vadd.f32 0.0, %v813
    %v815 = vpop.f32.mrb[0].mxu0
    %v816 = vadd.f32 0.0, %v815
    %v817 = vpop.f32.mrb[0].mxu0
    %v818 = vadd.f32 0.0, %v817
    %819 = vmatprep.mubr.bf16.mxu0 0
    %820 = vmatmul.mubr.bf16.gmra.mrb[0].mxu0 %v544
    %v821 = vpop.f32.mrb[0].mxu0
    %v822 = vadd.f32 0.0, %v821
    %v823 = vpop.f32.mrb[0].mxu0
    %v824 = vadd.f32 0.0, %v823
    %v825 = vpop.f32.mrb[0].mxu0
    %v826 = vadd.f32 0.0, %v825
    %v827 = vpop.f32.mrb[0].mxu0
    %v828 = vadd.f32 0.0, %v827
    %829 = vmatprep.mubr.bf16.mxu0 0
    %830 = vmatmul.mubr.bf16.gmra.mrb[0].mxu0 %v547
    %v831 = vpop.f32.mrb[0].mxu0
    %v832 = vadd.f32 0.0, %v831
    %v833 = vpop.f32.mrb[0].mxu0
    %v834 = vadd.f32 0.0, %v833
    %v835 = vpop.f32.mrb[0].mxu0
    %v836 = vadd.f32 0.0, %v835
    %v837 = vpop.f32.mrb[0].mxu0
    %v838 = vadd.f32 0.0, %v837
    %839 = vmatprep.mubr.bf16.mxu0 0
    %840 = vmatmul.mubr.bf16.gmra.mrb[0].mxu0 %v550
    %v841 = vpop.f32.mrb[0].mxu0
    %v842 = vadd.f32 0.0, %v841
    %v843 = vpop.f32.mrb[0].mxu0
    %v844 = vadd.f32 0.0, %v843
    %v845 = vpop.f32.mrb[0].mxu0
    %v846 = vadd.f32 0.0, %v845
    %v847 = vpop.f32.mrb[0].mxu0
    %v848 = vadd.f32 0.0, %v847
    %849 = vmatprep.mubr.bf16.mxu0 0
    %850 = vmatmul.mubr.bf16.gmra.mrb[0].mxu0 %v553
    %v851 = vpop.f32.mrb[0].mxu0
    %v852 = vadd.f32 0.0, %v851
    %v853 = vpop.f32.mrb[0].mxu0
    %v854 = vadd.f32 0.0, %v853
    %v855 = vpop.f32.mrb[0].mxu0
    %v856 = vadd.f32 0.0, %v855
    %v857 = vpop.f32.mrb[0].mxu0
    %v858 = vadd.f32 0.0, %v857
    %859 = vmatprep.mubr.bf16.mxu0 0
    %860 = vmatmul.mubr.bf16.gmra.mrb[0].mxu0 %v556
    %v861 = vpop.f32.mrb[0].mxu0
    %v862 = vadd.f32 0.0, %v861
    %v863 = vpop.f32.mrb[0].mxu0
    %v864 = vadd.f32 0.0, %v863
    %v865 = vpop.f32.mrb[0].mxu0
    %v866 = vadd.f32 0.0, %v865
    %v867 = vpop.f32.mrb[0].mxu0
    %v868 = vadd.f32 0.0, %v867
    %869 = vmatprep.mubr.bf16.mxu0 0
    %870 = vmatmul.mubr.bf16.gmra.mrb[0].mxu0 %v559
    %v871 = vpop.f32.mrb[0].mxu0
    %v872 = vadd.f32 0.0, %v871
    %v873 = vpop.f32.mrb[0].mxu0
    %v874 = vadd.f32 0.0, %v873
    %v875 = vpop.f32.mrb[0].mxu0
    %v876 = vadd.f32 0.0, %v875
    %v877 = vpop.f32.mrb[0].mxu0
    %v878 = vadd.f32 0.0, %v877
    %879 = vdwg.mxu0
    %v904 = vunpack.c.l.b16 %v34
    %v905 = vunpack.c.l.b16 %v35
    %v906 = vunpack.c.l.b16 %v37
    %v907 = vunpack.c.l.b16 %v38
    %v908 = vunpack.c.l.b16 %v40
    %v909 = vunpack.c.l.b16 %v41
    %v910 = vunpack.c.l.b16 %v43
    %v911 = vunpack.c.l.b16 %v44
    %v912 = vunpack.c.l.b16 %v46
    %v913 = vunpack.c.l.b16 %v47
    %v914 = vunpack.c.l.b16 %v49
    %v915 = vunpack.c.l.b16 %v50
    %v916 = vunpack.c.l.b16 %v52
    %v917 = vunpack.c.l.b16 %v53
    %v918 = vunpack.c.l.b16 %v55
    %v919 = vunpack.c.l.b16 %v56
    %v920 = vunpack.c.l.b16 %v58
    %v921 = vunpack.c.l.b16 %v59
    %v922 = vunpack.c.l.b16 %v61
    %v923 = vunpack.c.l.b16 %v62
    %v924 = vunpack.c.l.b16 %v64
    %v925 = vunpack.c.l.b16 %v65
    %v926 = vunpack.c.l.b16 %v67
    %v927 = vunpack.c.l.b16 %v68
    %v928 = vpack.c.b16 %v905, %v904
    %v929 = vpack.c.b16 %v907, %v906
    %v930 = vpack.c.b16 %v909, %v908
    %v931 = vpack.c.b16 %v911, %v910
    %v932 = vpack.c.b16 %v913, %v912
    %v933 = vpack.c.b16 %v915, %v914
    %v934 = vpack.c.b16 %v917, %v916
    %v935 = vpack.c.b16 %v919, %v918
    %v936 = vpack.c.b16 %v921, %v920
    %v937 = vpack.c.b16 %v923, %v922
    %v938 = vpack.c.b16 %v925, %v924
    %v939 = vpack.c.b16 %v927, %v926
    %v958 = vunpack.c.l.b16 %v70
    %v959 = vunpack.c.h.b16 %v70
    %v960 = vunpack.c.l.b16 %v71
    %v961 = vunpack.c.h.b16 %v71
    %v962 = vunpack.c.l.b16 %v72
    %v963 = vunpack.c.h.b16 %v72
    %v964 = vunpack.c.l.b16 %v73
    %v965 = vunpack.c.h.b16 %v73
    %v966 = vunpack.c.l.b16 %v74
    %v967 = vunpack.c.h.b16 %v74
    %v968 = vunpack.c.l.b16 %v75
    %v969 = vunpack.c.h.b16 %v75
    %v970 = vunpack.c.l.b16 %v76
    %v971 = vunpack.c.h.b16 %v76
    %v972 = vunpack.c.l.b16 %v77
    %v973 = vunpack.c.h.b16 %v77
    %v974 = vunpack.c.l.b16 %v78
    %v975 = vunpack.c.h.b16 %v78
    %v976 = vunpack.c.l.b16 %v79
    %v977 = vunpack.c.h.b16 %v79
    %v978 = vunpack.c.l.b16 %v80
    %v979 = vunpack.c.h.b16 %v80
    %v980 = vunpack.c.l.b16 %v81
    %v981 = vunpack.c.h.b16 %v81
    %v982 = vunpack.c.l.b16 %v82
    %v983 = vunpack.c.h.b16 %v82
    %v984 = vunpack.c.l.b16 %v83
    %v985 = vunpack.c.h.b16 %v83
    %v986 = vunpack.c.l.b16 %v84
    %v987 = vunpack.c.h.b16 %v84
    %v988 = vunpack.c.l.b16 %v85
    %v989 = vunpack.c.h.b16 %v85
    %v990 = vunpack.c.l.b16 %v86
    %v991 = vunpack.c.h.b16 %v86
    %v992 = vunpack.c.l.b16 %v87
    %v993 = vunpack.c.h.b16 %v87
    %v994 = vpack.c.b16 %v962, %v958
    %v995 = vpack.c.b16 %v963, %v959
    %v996 = vpack.c.b16 %v964, %v960
    %v997 = vpack.c.b16 %v965, %v961
    %v998 = vpack.c.b16 %v970, %v966
    %v999 = vpack.c.b16 %v971, %v967
    %v1000 = vpack.c.b16 %v972, %v968
    %v1001 = vpack.c.b16 %v973, %v969
    %v1002 = vpack.c.b16 %v978, %v974
    %v1003 = vpack.c.b16 %v979, %v975
    %v1004 = vpack.c.b16 %v980, %v976
    %v1005 = vpack.c.b16 %v981, %v977
    %v1006 = vpack.c.b16 %v986, %v982
    %v1007 = vpack.c.b16 %v987, %v983
    %v1008 = vpack.c.b16 %v988, %v984
    %v1009 = vpack.c.b16 %v989, %v985
    %v1010 = vpack.c.b16 %v990, %v990
    %v1011 = vpack.c.b16 %v991, %v991
    %v1012 = vpack.c.b16 %v992, %v992
    %v1013 = vpack.c.b16 %v993, %v993
    %v1031 = vsel %vm524, %v928, 0
    %v1034 = vsel %vm524, %v929, 0
    %v1037 = vsel %vm524, %v930, 0
    %v1040 = vsel %vm524, %v931, 0
    %v1043 = vsel %vm524, %v932, 0
    %v1046 = vsel %vm524, %v933, 0
    %v1049 = vsel %vm524, %v934, 0
    %v1052 = vsel %vm524, %v935, 0
    %v1055 = vsel %vm524, %v936, 0
    %v1058 = vsel %vm524, %v937, 0
    %v1061 = vsel %vm524, %v938, 0
    %v1064 = vsel %vm524, %v939, 0
    %v1067 = vsel %vm561, %v1010, 0
    %v1070 = vsel %vm561, %v1011, 0
    %v1073 = vsel %vm561, %v1012, 0
    %v1076 = vsel %vm561, %v1013, 0
    %1078 = vmatprep.subr.bf16.mxu0 %v995
    %1079 = vmatpush1.bf16.msra.mxu0 %v994
    %1080 = vmatprep.subr.bf16.mxu0 %v999
    %1081 = vmatpush1.bf16.msra.mxu0 %v998
    %1082 = vmatprep.subr.bf16.mxu0 %v1003
    %1083 = vmatpush1.bf16.msra.mxu0 %v1002
    %1084 = vmatprep.subr.bf16.mxu0 %v1007
    %1085 = vmatpush1.bf16.msra.mxu0 %v1006
    %1086 = vmatprep.subr.bf16.mxu0 %v1070
    %1087 = vmatpush1.bf16.msra.mxu0 %v1067
    %1088 = vmatprep.subr.bf16.mxu0 0
    %1089 = vmatpush1.bf16.msra.mxu0 0
    %1090 = vmatprep.subr.bf16.mxu0 0
    %1091 = vmatpush1.bf16.msra.mxu0 0
    %1092 = vmatprep.subr.bf16.mxu0 0
    %1093 = vmatpush1.bf16.msra.mxu0 0
    %1094 = vmatprep.subr.bf16.mxu0 0
    %1095 = vmatpush1.bf16.msra.mxu0 0
    %1096 = vmatprep.subr.bf16.mxu0 0
    %1097 = vmatpush1.bf16.msra.mxu0 0
    %1098 = vmatprep.subr.bf16.mxu0 0
    %1099 = vmatpush1.bf16.msra.mxu0 0
    %1100 = vmatprep.subr.bf16.mxu0 0
    %1101 = vmatpush1.bf16.msra.mxu0 0
    %1102 = vmatprep.subr.bf16.mxu0 0
    %1103 = vmatpush1.bf16.msra.mxu0 0
    %1104 = vmatprep.subr.bf16.mxu0 0
    %1105 = vmatpush1.bf16.msra.mxu0 0
    %1106 = vmatprep.subr.bf16.mxu0 0
    %1107 = vmatpush1.bf16.msra.mxu0 0
    %1108 = vmatprep.subr.bf16.mxu0 0
    %1109 = vmatpush1.bf16.msra.mxu0 0
    %1110 = vmatprep.mubr.bf16.mxu0 0
    %1111 = vmatmul.mubr.bf16.gmra.mrb[0].mxu0 %v1031
    %v1112 = vpop.f32.mrb[0].mxu0
    %v1113 = vadd.f32 %v609, %v1112
    %v1114 = vpop.f32.mrb[0].mxu0
    %v1115 = vadd.f32 %v611, %v1114
    %v1116 = vpop.f32.mrb[0].mxu0
    %v1117 = vadd.f32 %v613, %v1116
    %v1118 = vpop.f32.mrb[0].mxu0
    %v1119 = vadd.f32 %v615, %v1118
    %1120 = vmatprep.mubr.bf16.mxu0 0
    %1121 = vmatmul.mubr.bf16.gmra.mrb[0].mxu0 %v1034
    %v1122 = vpop.f32.mrb[0].mxu0
    %v1123 = vadd.f32 %v619, %v1122
    %v1124 = vpop.f32.mrb[0].mxu0
    %v1125 = vadd.f32 %v621, %v1124
    %v1126 = vpop.f32.mrb[0].mxu0
    %v1127 = vadd.f32 %v623, %v1126
    %v1128 = vpop.f32.mrb[0].mxu0
    %v1129 = vadd.f32 %v625, %v1128
    %1130 = vmatprep.mubr.bf16.mxu0 0
    %1131 = vmatmul.mubr.bf16.gmra.mrb[0].mxu0 %v1037
    %v1132 = vpop.f32.mrb[0].mxu0
    %v1133 = vadd.f32 %v629, %v1132
    %v1134 = vpop.f32.mrb[0].mxu0
    %v1135 = vadd.f32 %v631, %v1134
    %v1136 = vpop.f32.mrb[0].mxu0
    %v1137 = vadd.f32 %v633, %v1136
    %v1138 = vpop.f32.mrb[0].mxu0
    %v1139 = vadd.f32 %v635, %v1138
    %1140 = vmatprep.mubr.bf16.mxu0 0
    %1141 = vmatmul.mubr.bf16.gmra.mrb[0].mxu0 %v1040
    %v1142 = vpop.f32.mrb[0].mxu0
    %v1143 = vadd.f32 %v639, %v1142
    %v1144 = vpop.f32.mrb[0].mxu0
    %v1145 = vadd.f32 %v641, %v1144
    %v1146 = vpop.f32.mrb[0].mxu0
    %v1147 = vadd.f32 %v643, %v1146
    %v1148 = vpop.f32.mrb[0].mxu0
    %v1149 = vadd.f32 %v645, %v1148
    %1150 = vmatprep.mubr.bf16.mxu0 0
    %1151 = vmatmul.mubr.bf16.gmra.mrb[0].mxu0 %v1043
    %v1152 = vpop.f32.mrb[0].mxu0
    %v1153 = vadd.f32 %v649, %v1152
    %v1154 = vpop.f32.mrb[0].mxu0
    %v1155 = vadd.f32 %v651, %v1154
    %v1156 = vpop.f32.mrb[0].mxu0
    %v1157 = vadd.f32 %v653, %v1156
    %v1158 = vpop.f32.mrb[0].mxu0
    %v1159 = vadd.f32 %v655, %v1158
    %1160 = vmatprep.mubr.bf16.mxu0 0
    %1161 = vmatmul.mubr.bf16.gmra.mrb[0].mxu0 %v1046
    %v1162 = vpop.f32.mrb[0].mxu0
    %v1163 = vadd.f32 %v659, %v1162
    %v1164 = vpop.f32.mrb[0].mxu0
    %v1165 = vadd.f32 %v661, %v1164
    %v1166 = vpop.f32.mrb[0].mxu0
    %v1167 = vadd.f32 %v663, %v1166
    %v1168 = vpop.f32.mrb[0].mxu0
    %v1169 = vadd.f32 %v665, %v1168
    %1170 = vmatprep.mubr.bf16.mxu0 0
    %1171 = vmatmul.mubr.bf16.gmra.mrb[0].mxu0 %v1049
    %v1172 = vpop.f32.mrb[0].mxu0
    %v1173 = vadd.f32 %v669, %v1172
    %v1174 = vpop.f32.mrb[0].mxu0
    %v1175 = vadd.f32 %v671, %v1174
    %v1176 = vpop.f32.mrb[0].mxu0
    %v1177 = vadd.f32 %v673, %v1176
    %v1178 = vpop.f32.mrb[0].mxu0
    %v1179 = vadd.f32 %v675, %v1178
    %1180 = vmatprep.mubr.bf16.mxu0 0
    %1181 = vmatmul.mubr.bf16.gmra.mrb[0].mxu0 %v1052
    %v1182 = vpop.f32.mrb[0].mxu0
    %v1183 = vadd.f32 %v679, %v1182
    %v1184 = vpop.f32.mrb[0].mxu0
    %v1185 = vadd.f32 %v681, %v1184
    %v1186 = vpop.f32.mrb[0].mxu0
    %v1187 = vadd.f32 %v683, %v1186
    %v1188 = vpop.f32.mrb[0].mxu0
    %v1189 = vadd.f32 %v685, %v1188
    %1190 = vmatprep.mubr.bf16.mxu0 0
    %1191 = vmatmul.mubr.bf16.gmra.mrb[0].mxu0 %v1055
    %v1192 = vpop.f32.mrb[0].mxu0
    %v1193 = vadd.f32 %v689, %v1192
    %v1194 = vpop.f32.mrb[0].mxu0
    %v1195 = vadd.f32 %v691, %v1194
    %v1196 = vpop.f32.mrb[0].mxu0
    %v1197 = vadd.f32 %v693, %v1196
    %v1198 = vpop.f32.mrb[0].mxu0
    %v1199 = vadd.f32 %v695, %v1198
    %1200 = vmatprep.mubr.bf16.mxu0 0
    %1201 = vmatmul.mubr.bf16.gmra.mrb[0].mxu0 %v1058
    %v1202 = vpop.f32.mrb[0].mxu0
    %v1203 = vadd.f32 %v699, %v1202
    %v1204 = vpop.f32.mrb[0].mxu0
    %v1205 = vadd.f32 %v701, %v1204
    %v1206 = vpop.f32.mrb[0].mxu0
    %v1207 = vadd.f32 %v703, %v1206
    %v1208 = vpop.f32.mrb[0].mxu0
    %v1209 = vadd.f32 %v705, %v1208
    %1210 = vmatprep.mubr.bf16.mxu0 0
    %1211 = vmatmul.mubr.bf16.gmra.mrb[0].mxu0 %v1061
    %v1212 = vpop.f32.mrb[0].mxu0
    %v1213 = vadd.f32 %v709, %v1212
    %v1214 = vpop.f32.mrb[0].mxu0
    %v1215 = vadd.f32 %v711, %v1214
    %v1216 = vpop.f32.mrb[0].mxu0
    %v1217 = vadd.f32 %v713, %v1216
    %v1218 = vpop.f32.mrb[0].mxu0
    %v1219 = vadd.f32 %v715, %v1218
    %1220 = vmatprep.mubr.bf16.mxu0 0
    %1221 = vmatmul.mubr.bf16.gmra.mrb[0].mxu0 %v1064
    %v1222 = vpop.f32.mrb[0].mxu0
    %v1223 = vadd.f32 %v719, %v1222
    %v1224 = vpop.f32.mrb[0].mxu0
    %v1225 = vadd.f32 %v721, %v1224
    %v1226 = vpop.f32.mrb[0].mxu0
    %v1227 = vadd.f32 %v723, %v1226
    %v1228 = vpop.f32.mrb[0].mxu0
    %v1229 = vadd.f32 %v725, %v1228
    %1230 = vdwg.mxu0
    %1231 = vmatprep.subr.bf16.mxu0 %v997
    %1232 = vmatpush1.bf16.msra.mxu0 %v996
    %1233 = vmatprep.subr.bf16.mxu0 %v1001
    %1234 = vmatpush1.bf16.msra.mxu0 %v1000
    %1235 = vmatprep.subr.bf16.mxu0 %v1005
    %1236 = vmatpush1.bf16.msra.mxu0 %v1004
    %1237 = vmatprep.subr.bf16.mxu0 %v1009
    %1238 = vmatpush1.bf16.msra.mxu0 %v1008
    %1239 = vmatprep.subr.bf16.mxu0 %v1076
    %1240 = vmatpush1.bf16.msra.mxu0 %v1073
    %1241 = vmatprep.subr.bf16.mxu0 0
    %1242 = vmatpush1.bf16.msra.mxu0 0
    %1243 = vmatprep.subr.bf16.mxu0 0
    %1244 = vmatpush1.bf16.msra.mxu0 0
    %1245 = vmatprep.subr.bf16.mxu0 0
    %1246 = vmatpush1.bf16.msra.mxu0 0
    %1247 = vmatprep.subr.bf16.mxu0 0
    %1248 = vmatpush1.bf16.msra.mxu0 0
    %1249 = vmatprep.subr.bf16.mxu0 0
    %1250 = vmatpush1.bf16.msra.mxu0 0
    %1251 = vmatprep.subr.bf16.mxu0 0
    %1252 = vmatpush1.bf16.msra.mxu0 0
    %1253 = vmatprep.subr.bf16.mxu0 0
    %1254 = vmatpush1.bf16.msra.mxu0 0
    %1255 = vmatprep.subr.bf16.mxu0 0
    %1256 = vmatpush1.bf16.msra.mxu0 0
    %1257 = vmatprep.subr.bf16.mxu0 0
    %1258 = vmatpush1.bf16.msra.mxu0 0
    %1259 = vmatprep.subr.bf16.mxu0 0
    %1260 = vmatpush1.bf16.msra.mxu0 0
    %1261 = vmatprep.subr.bf16.mxu0 0
    %1262 = vmatpush1.bf16.msra.mxu0 0
    %1263 = vmatprep.mubr.bf16.mxu0 0
    %1264 = vmatmul.mubr.bf16.gmra.mrb[0].mxu0 %v1031
    %v1265 = vpop.f32.mrb[0].mxu0
    %v1266 = vadd.f32 %v762, %v1265
    %v1267 = vpop.f32.mrb[0].mxu0
    %v1268 = vadd.f32 %v764, %v1267
    %v1269 = vpop.f32.mrb[0].mxu0
    %v1270 = vadd.f32 %v766, %v1269
    %v1271 = vpop.f32.mrb[0].mxu0
    %v1272 = vadd.f32 %v768, %v1271
    %1273 = vmatprep.mubr.bf16.mxu0 0
    %1274 = vmatmul.mubr.bf16.gmra.mrb[0].mxu0 %v1034
    %v1275 = vpop.f32.mrb[0].mxu0
    %v1276 = vadd.f32 %v772, %v1275
    %v1277 = vpop.f32.mrb[0].mxu0
    %v1278 = vadd.f32 %v774, %v1277
    %v1279 = vpop.f32.mrb[0].mxu0
    %v1280 = vadd.f32 %v776, %v1279
    %v1281 = vpop.f32.mrb[0].mxu0
    %v1282 = vadd.f32 %v778, %v1281
    %1283 = vmatprep.mubr.bf16.mxu0 0
    %1284 = vmatmul.mubr.bf16.gmra.mrb[0].mxu0 %v1037
    %v1285 = vpop.f32.mrb[0].mxu0
    %v1286 = vadd.f32 %v782, %v1285
    %v1287 = vpop.f32.mrb[0].mxu0
    %v1288 = vadd.f32 %v784, %v1287
    %v1289 = vpop.f32.mrb[0].mxu0
    %v1290 = vadd.f32 %v786, %v1289
    %v1291 = vpop.f32.mrb[0].mxu0
    %v1292 = vadd.f32 %v788, %v1291
    %1293 = vmatprep.mubr.bf16.mxu0 0
    %1294 = vmatmul.mubr.bf16.gmra.mrb[0].mxu0 %v1040
    %v1295 = vpop.f32.mrb[0].mxu0
    %v1296 = vadd.f32 %v792, %v1295
    %v1297 = vpop.f32.mrb[0].mxu0
    %v1298 = vadd.f32 %v794, %v1297
    %v1299 = vpop.f32.mrb[0].mxu0
    %v1300 = vadd.f32 %v796, %v1299
    %v1301 = vpop.f32.mrb[0].mxu0
    %v1302 = vadd.f32 %v798, %v1301
    %1303 = vmatprep.mubr.bf16.mxu0 0
    %1304 = vmatmul.mubr.bf16.gmra.mrb[0].mxu0 %v1043
    %v1305 = vpop.f32.mrb[0].mxu0
    %v1306 = vadd.f32 %v802, %v1305
    %v1307 = vpop.f32.mrb[0].mxu0
    %v1308 = vadd.f32 %v804, %v1307
    %v1309 = vpop.f32.mrb[0].mxu0
    %v1310 = vadd.f32 %v806, %v1309
    %v1311 = vpop.f32.mrb[0].mxu0
    %v1312 = vadd.f32 %v808, %v1311
    %1313 = vmatprep.mubr.bf16.mxu0 0
    %1314 = vmatmul.mubr.bf16.gmra.mrb[0].mxu0 %v1046
    %v1315 = vpop.f32.mrb[0].mxu0
    %v1316 = vadd.f32 %v812, %v1315
    %v1317 = vpop.f32.mrb[0].mxu0
    %v1318 = vadd.f32 %v814, %v1317
    %v1319 = vpop.f32.mrb[0].mxu0
    %v1320 = vadd.f32 %v816, %v1319
    %v1321 = vpop.f32.mrb[0].mxu0
    %v1322 = vadd.f32 %v818, %v1321
    %1323 = vmatprep.mubr.bf16.mxu0 0
    %1324 = vmatmul.mubr.bf16.gmra.mrb[0].mxu0 %v1049
    %v1325 = vpop.f32.mrb[0].mxu0
    %v1326 = vadd.f32 %v822, %v1325
    %v1327 = vpop.f32.mrb[0].mxu0
    %v1328 = vadd.f32 %v824, %v1327
    %v1329 = vpop.f32.mrb[0].mxu0
    %v1330 = vadd.f32 %v826, %v1329
    %v1331 = vpop.f32.mrb[0].mxu0
    %v1332 = vadd.f32 %v828, %v1331
    %1333 = vmatprep.mubr.bf16.mxu0 0
    %1334 = vmatmul.mubr.bf16.gmra.mrb[0].mxu0 %v1052
    %v1335 = vpop.f32.mrb[0].mxu0
    %v1336 = vadd.f32 %v832, %v1335
    %v1337 = vpop.f32.mrb[0].mxu0
    %v1338 = vadd.f32 %v834, %v1337
    %v1339 = vpop.f32.mrb[0].mxu0
    %v1340 = vadd.f32 %v836, %v1339
    %v1341 = vpop.f32.mrb[0].mxu0
    %v1342 = vadd.f32 %v838, %v1341
    %1343 = vmatprep.mubr.bf16.mxu0 0
    %1344 = vmatmul.mubr.bf16.gmra.mrb[0].mxu0 %v1055
    %v1345 = vpop.f32.mrb[0].mxu0
    %v1346 = vadd.f32 %v842, %v1345
    %v1347 = vpop.f32.mrb[0].mxu0
    %v1348 = vadd.f32 %v844, %v1347
    %v1349 = vpop.f32.mrb[0].mxu0
    %v1350 = vadd.f32 %v846, %v1349
    %v1351 = vpop.f32.mrb[0].mxu0
    %v1352 = vadd.f32 %v848, %v1351
    %1353 = vmatprep.mubr.bf16.mxu0 0
    %1354 = vmatmul.mubr.bf16.gmra.mrb[0].mxu0 %v1058
    %v1355 = vpop.f32.mrb[0].mxu0
    %v1356 = vadd.f32 %v852, %v1355
    %v1357 = vpop.f32.mrb[0].mxu0
    %v1358 = vadd.f32 %v854, %v1357
    %v1359 = vpop.f32.mrb[0].mxu0
    %v1360 = vadd.f32 %v856, %v1359
    %v1361 = vpop.f32.mrb[0].mxu0
    %v1362 = vadd.f32 %v858, %v1361
    %1363 = vmatprep.mubr.bf16.mxu0 0
    %1364 = vmatmul.mubr.bf16.gmra.mrb[0].mxu0 %v1061
    %v1365 = vpop.f32.mrb[0].mxu0
    %v1366 = vadd.f32 %v862, %v1365
    %v1367 = vpop.f32.mrb[0].mxu0
    %v1368 = vadd.f32 %v864, %v1367
    %v1369 = vpop.f32.mrb[0].mxu0
    %v1370 = vadd.f32 %v866, %v1369
    %v1371 = vpop.f32.mrb[0].mxu0
    %v1372 = vadd.f32 %v868, %v1371
    %1373 = vmatprep.mubr.bf16.mxu0 0
    %1374 = vmatmul.mubr.bf16.gmra.mrb[0].mxu0 %v1064
    %v1375 = vpop.f32.mrb[0].mxu0
    %v1376 = vadd.f32 %v872, %v1375
    %v1377 = vpop.f32.mrb[0].mxu0
    %v1378 = vadd.f32 %v874, %v1377
    %v1379 = vpop.f32.mrb[0].mxu0
    %v1380 = vadd.f32 %v876, %v1379
    %v1381 = vpop.f32.mrb[0].mxu0
    %v1382 = vadd.f32 %v878, %v1381
    %1383 = vdwg.mxu0
    %vm1396 = vcmask 1042432
    %vm1397 = vcmask 1046532
    %vm1398 = vmor %vm1396, %vm1397
    %v1399 = vrot.slane %v34, 5
    %v1400 = vrot.slane %v1399, 4
    %v1401 = vrot.slane %v35, 5
    %v1402 = vsel %vm1398, %v1400, %v1401
    %v1403 = vrot.slane %v1401, 4
    %v1404 = vrot.slane %v36, 5
    %v1405 = vsel %vm1398, %v1403, %v1404
    %v1406 = vrot.slane %v37, 5
    %v1407 = vrot.slane %v1406, 4
    %v1408 = vrot.slane %v38, 5
    %v1409 = vsel %vm1398, %v1407, %v1408
    %v1410 = vrot.slane %v1408, 4
    %v1411 = vrot.slane %v39, 5
    %v1412 = vsel %vm1398, %v1410, %v1411
    %v1413 = vrot.slane %v40, 5
    %v1414 = vrot.slane %v1413, 4
    %v1415 = vrot.slane %v41, 5
    %v1416 = vsel %vm1398, %v1414, %v1415
    %v1417 = vrot.slane %v1415, 4
    %v1418 = vrot.slane %v42, 5
    %v1419 = vsel %vm1398, %v1417, %v1418
    %v1420 = vrot.slane %v43, 5
    %v1421 = vrot.slane %v1420, 4
    %v1422 = vrot.slane %v44, 5
    %v1423 = vsel %vm1398, %v1421, %v1422
    %v1424 = vrot.slane %v1422, 4
    %v1425 = vrot.slane %v45, 5
    %v1426 = vsel %vm1398, %v1424, %v1425
    %v1427 = vrot.slane %v46, 5
    %v1428 = vrot.slane %v1427, 4
    %v1429 = vrot.slane %v47, 5
    %v1430 = vsel %vm1398, %v1428, %v1429
    %v1431 = vrot.slane %v1429, 4
    %v1432 = vrot.slane %v48, 5
    %v1433 = vsel %vm1398, %v1431, %v1432
    %v1434 = vrot.slane %v49, 5
    %v1435 = vrot.slane %v1434, 4
    %v1436 = vrot.slane %v50, 5
    %v1437 = vsel %vm1398, %v1435, %v1436
    %v1438 = vrot.slane %v1436, 4
    %v1439 = vrot.slane %v51, 5
    %v1440 = vsel %vm1398, %v1438, %v1439
    %v1441 = vrot.slane %v52, 5
    %v1442 = vrot.slane %v1441, 4
    %v1443 = vrot.slane %v53, 5
    %v1444 = vsel %vm1398, %v1442, %v1443
    %v1445 = vrot.slane %v1443, 4
    %v1446 = vrot.slane %v54, 5
    %v1447 = vsel %vm1398, %v1445, %v1446
    %v1448 = vrot.slane %v55, 5
    %v1449 = vrot.slane %v1448, 4
    %v1450 = vrot.slane %v56, 5
    %v1451 = vsel %vm1398, %v1449, %v1450
    %v1452 = vrot.slane %v1450, 4
    %v1453 = vrot.slane %v57, 5
    %v1454 = vsel %vm1398, %v1452, %v1453
    %v1455 = vrot.slane %v58, 5
    %v1456 = vrot.slane %v1455, 4
    %v1457 = vrot.slane %v59, 5
    %v1458 = vsel %vm1398, %v1456, %v1457
    %v1459 = vrot.slane %v1457, 4
    %v1460 = vrot.slane %v60, 5
    %v1461 = vsel %vm1398, %v1459, %v1460
    %v1462 = vrot.slane %v61, 5
    %v1463 = vrot.slane %v1462, 4
    %v1464 = vrot.slane %v62, 5
    %v1465 = vsel %vm1398, %v1463, %v1464
    %v1466 = vrot.slane %v1464, 4
    %v1467 = vrot.slane %v63, 5
    %v1468 = vsel %vm1398, %v1466, %v1467
    %v1469 = vrot.slane %v64, 5
    %v1470 = vrot.slane %v1469, 4
    %v1471 = vrot.slane %v65, 5
    %v1472 = vsel %vm1398, %v1470, %v1471
    %v1473 = vrot.slane %v1471, 4
    %v1474 = vrot.slane %v66, 5
    %v1475 = vsel %vm1398, %v1473, %v1474
    %v1476 = vrot.slane %v67, 5
    %v1477 = vrot.slane %v1476, 4
    %v1478 = vrot.slane %v68, 5
    %v1479 = vsel %vm1398, %v1477, %v1478
    %v1480 = vrot.slane %v1478, 4
    %v1481 = vrot.slane %v69, 5
    %v1482 = vsel %vm1398, %v1480, %v1481
    %s1483 = scalar_lea.vmem %s1, 288
    %v1484 = vld [vmem:[%s1483] sm:$0xff]
    %v1485 = vld [vmem:[%s1483 + $0x8] sm:$0xff]
    %v1486 = vld [vmem:[%s1483 + $0x10] sm:$0xff]
    %v1487 = vld [vmem:[%s1483 + $0x18] sm:$0xff]
    %v1488 = vld [vmem:[%s1483 + $0x20] sm:$0xff]
    %v1489 = vld [vmem:[%s1483 + $0x28] sm:$0xff]
    %v1490 = vld [vmem:[%s1483 + $0x30] sm:$0xff]
    %v1491 = vld [vmem:[%s1483 + $0x38] sm:$0xff]
    %v1492 = vld [vmem:[%s1483 + $0x40] sm:$0xff]
    %v1493 = vld [vmem:[%s1483 + $0x48] sm:$0xff]
    %v1494 = vld [vmem:[%s1483 + $0x50] sm:$0xff]
    %v1495 = vld [vmem:[%s1483 + $0x58] sm:$0xff]
    %v1496 = vld [vmem:[%s1483 + $0x60] sm:$0xff]
    %v1497 = vld [vmem:[%s1483 + $0x68] sm:$0xff]
    %v1498 = vld [vmem:[%s1483 + $0x70] sm:$0xff]
    %v1499 = vld [vmem:[%s1483 + $0x78] sm:$0xff]
    %v1500 = vld [vmem:[%s1483 + $0x80] sm:$0xff]
    %v1501 = vld [vmem:[%s1483 + $0x88] sm:$0xff]
    %v1502 = vunpack.c.l.b16 %v1402
    %v1503 = vunpack.c.l.b16 %v1405
    %v1504 = vunpack.c.l.b16 %v1409
    %v1505 = vunpack.c.l.b16 %v1412
    %v1506 = vunpack.c.l.b16 %v1416
    %v1507 = vunpack.c.l.b16 %v1419
    %v1508 = vunpack.c.l.b16 %v1423
    %v1509 = vunpack.c.l.b16 %v1426
    %v1510 = vunpack.c.l.b16 %v1430
    %v1511 = vunpack.c.l.b16 %v1433
    %v1512 = vunpack.c.l.b16 %v1437
    %v1513 = vunpack.c.l.b16 %v1440
    %v1514 = vunpack.c.l.b16 %v1444
    %v1515 = vunpack.c.l.b16 %v1447
    %v1516 = vunpack.c.l.b16 %v1451
    %v1517 = vunpack.c.l.b16 %v1454
    %v1518 = vunpack.c.l.b16 %v1458
    %v1519 = vunpack.c.l.b16 %v1461
    %v1520 = vunpack.c.l.b16 %v1465
    %v1521 = vunpack.c.l.b16 %v1468
    %v1522 = vunpack.c.l.b16 %v1472
    %v1523 = vunpack.c.l.b16 %v1475
    %v1524 = vunpack.c.l.b16 %v1479
    %v1525 = vunpack.c.l.b16 %v1482
    %v1526 = vpack.c.b16 %v1503, %v1502
    %v1527 = vpack.c.b16 %v1505, %v1504
    %v1528 = vpack.c.b16 %v1507, %v1506
    %v1529 = vpack.c.b16 %v1509, %v1508
    %v1530 = vpack.c.b16 %v1511, %v1510
    %v1531 = vpack.c.b16 %v1513, %v1512
    %v1532 = vpack.c.b16 %v1515, %v1514
    %v1533 = vpack.c.b16 %v1517, %v1516
    %v1534 = vpack.c.b16 %v1519, %v1518
    %v1535 = vpack.c.b16 %v1521, %v1520
    %v1536 = vpack.c.b16 %v1523, %v1522
    %v1537 = vpack.c.b16 %v1525, %v1524
    %v1556 = vunpack.c.l.b16 %v1484
    %v1557 = vunpack.c.h.b16 %v1484
    %v1558 = vunpack.c.l.b16 %v1485
    %v1559 = vunpack.c.h.b16 %v1485
    %v1560 = vunpack.c.l.b16 %v1486
    %v1561 = vunpack.c.h.b16 %v1486
    %v1562 = vunpack.c.l.b16 %v1487
    %v1563 = vunpack.c.h.b16 %v1487
    %v1564 = vunpack.c.l.b16 %v1488
    %v1565 = vunpack.c.h.b16 %v1488
    %v1566 = vunpack.c.l.b16 %v1489
    %v1567 = vunpack.c.h.b16 %v1489
    %v1568 = vunpack.c.l.b16 %v1490
    %v1569 = vunpack.c.h.b16 %v1490
    %v1570 = vunpack.c.l.b16 %v1491
    %v1571 = vunpack.c.h.b16 %v1491
    %v1572 = vunpack.c.l.b16 %v1492
    %v1573 = vunpack.c.h.b16 %v1492
    %v1574 = vunpack.c.l.b16 %v1493
    %v1575 = vunpack.c.h.b16 %v1493
    %v1576 = vunpack.c.l.b16 %v1494
    %v1577 = vunpack.c.h.b16 %v1494
    %v1578 = vunpack.c.l.b16 %v1495
    %v1579 = vunpack.c.h.b16 %v1495
    %v1580 = vunpack.c.l.b16 %v1496
    %v1581 = vunpack.c.h.b16 %v1496
    %v1582 = vunpack.c.l.b16 %v1497
    %v1583 = vunpack.c.h.b16 %v1497
    %v1584 = vunpack.c.l.b16 %v1498
    %v1585 = vunpack.c.h.b16 %v1498
    %v1586 = vunpack.c.l.b16 %v1499
    %v1587 = vunpack.c.h.b16 %v1499
    %v1588 = vunpack.c.l.b16 %v1500
    %v1589 = vunpack.c.h.b16 %v1500
    %v1590 = vunpack.c.l.b16 %v1501
    %v1591 = vunpack.c.h.b16 %v1501
    %v1592 = vpack.c.b16 %v1560, %v1556
    %v1593 = vpack.c.b16 %v1561, %v1557
    %v1594 = vpack.c.b16 %v1562, %v1558
    %v1595 = vpack.c.b16 %v1563, %v1559
    %v1596 = vpack.c.b16 %v1568, %v1564
    %v1597 = vpack.c.b16 %v1569, %v1565
    %v1598 = vpack.c.b16 %v1570, %v1566
    %v1599 = vpack.c.b16 %v1571, %v1567
    %v1600 = vpack.c.b16 %v1576, %v1572
    %v1601 = vpack.c.b16 %v1577, %v1573
    %v1602 = vpack.c.b16 %v1578, %v1574
    %v1603 = vpack.c.b16 %v1579, %v1575
    %v1604 = vpack.c.b16 %v1584, %v1580
    %v1605 = vpack.c.b16 %v1585, %v1581
    %v1606 = vpack.c.b16 %v1586, %v1582
    %v1607 = vpack.c.b16 %v1587, %v1583
    %v1608 = vpack.c.b16 %v1588, %v1588
    %v1609 = vpack.c.b16 %v1589, %v1589
    %v1610 = vpack.c.b16 %v1590, %v1590
    %v1611 = vpack.c.b16 %v1591, %v1591
    %v1629 = vsel %vm524, %v1526, 0
    %v1632 = vsel %vm524, %v1527, 0
    %v1635 = vsel %vm524, %v1528, 0
    %v1638 = vsel %vm524, %v1529, 0
    %v1641 = vsel %vm524, %v1530, 0
    %v1644 = vsel %vm524, %v1531, 0
    %v1647 = vsel %vm524, %v1532, 0
    %v1650 = vsel %vm524, %v1533, 0
    %v1653 = vsel %vm524, %v1534, 0
    %v1656 = vsel %vm524, %v1535, 0
    %v1659 = vsel %vm524, %v1536, 0
    %v1662 = vsel %vm524, %v1537, 0
    %v1665 = vsel %vm561, %v1608, 0
    %v1668 = vsel %vm561, %v1609, 0
    %v1671 = vsel %vm561, %v1610, 0
    %v1674 = vsel %vm561, %v1611, 0
    %1676 = vmatprep.subr.bf16.mxu0 %v1593
    %1677 = vmatpush1.bf16.msra.mxu0 %v1592
    %1678 = vmatprep.subr.bf16.mxu0 %v1597
    %1679 = vmatpush1.bf16.msra.mxu0 %v1596
    %1680 = vmatprep.subr.bf16.mxu0 %v1601
    %1681 = vmatpush1.bf16.msra.mxu0 %v1600
    %1682 = vmatprep.subr.bf16.mxu0 %v1605
    %1683 = vmatpush1.bf16.msra.mxu0 %v1604
    %1684 = vmatprep.subr.bf16.mxu0 %v1668
    %1685 = vmatpush1.bf16.msra.mxu0 %v1665
    %1686 = vmatprep.subr.bf16.mxu0 0
    %1687 = vmatpush1.bf16.msra.mxu0 0
    %1688 = vmatprep.subr.bf16.mxu0 0
    %1689 = vmatpush1.bf16.msra.mxu0 0
    %1690 = vmatprep.subr.bf16.mxu0 0
    %1691 = vmatpush1.bf16.msra.mxu0 0
    %1692 = vmatprep.subr.bf16.mxu0 0
    %1693 = vmatpush1.bf16.msra.mxu0 0
    %1694 = vmatprep.subr.bf16.mxu0 0
    %1695 = vmatpush1.bf16.msra.mxu0 0
    %1696 = vmatprep.subr.bf16.mxu0 0
    %1697 = vmatpush1.bf16.msra.mxu0 0
    %1698 = vmatprep.subr.bf16.mxu0 0
    %1699 = vmatpush1.bf16.msra.mxu0 0
    %1700 = vmatprep.subr.bf16.mxu0 0
    %1701 = vmatpush1.bf16.msra.mxu0 0
    %1702 = vmatprep.subr.bf16.mxu0 0
    %1703 = vmatpush1.bf16.msra.mxu0 0
    %1704 = vmatprep.subr.bf16.mxu0 0
    %1705 = vmatpush1.bf16.msra.mxu0 0
    %1706 = vmatprep.subr.bf16.mxu0 0
    %1707 = vmatpush1.bf16.msra.mxu0 0
    %1708 = vmatprep.mubr.bf16.mxu0 0
    %1709 = vmatmul.mubr.bf16.gmra.mrb[0].mxu0 %v1629
    %v1710 = vpop.f32.mrb[0].mxu0
    %v1711 = vadd.f32 0.0, %v1710
    %v1712 = vpop.f32.mrb[0].mxu0
    %v1713 = vadd.f32 0.0, %v1712
    %v1714 = vpop.f32.mrb[0].mxu0
    %v1715 = vadd.f32 0.0, %v1714
    %v1716 = vpop.f32.mrb[0].mxu0
    %v1717 = vadd.f32 0.0, %v1716
    %1718 = vmatprep.mubr.bf16.mxu0 0
    %1719 = vmatmul.mubr.bf16.gmra.mrb[0].mxu0 %v1632
    %v1720 = vpop.f32.mrb[0].mxu0
    %v1721 = vadd.f32 0.0, %v1720
    %v1722 = vpop.f32.mrb[0].mxu0
    %v1723 = vadd.f32 0.0, %v1722
    %v1724 = vpop.f32.mrb[0].mxu0
    %v1725 = vadd.f32 0.0, %v1724
    %v1726 = vpop.f32.mrb[0].mxu0
    %v1727 = vadd.f32 0.0, %v1726
    %1728 = vmatprep.mubr.bf16.mxu0 0
    %1729 = vmatmul.mubr.bf16.gmra.mrb[0].mxu0 %v1635
    %v1730 = vpop.f32.mrb[0].mxu0
    %v1731 = vadd.f32 0.0, %v1730
    %v1732 = vpop.f32.mrb[0].mxu0
    %v1733 = vadd.f32 0.0, %v1732
    %v1734 = vpop.f32.mrb[0].mxu0
    %v1735 = vadd.f32 0.0, %v1734
    %v1736 = vpop.f32.mrb[0].mxu0
    %v1737 = vadd.f32 0.0, %v1736
    %1738 = vmatprep.mubr.bf16.mxu0 0
    %1739 = vmatmul.mubr.bf16.gmra.mrb[0].mxu0 %v1638
    %v1740 = vpop.f32.mrb[0].mxu0
    %v1741 = vadd.f32 0.0, %v1740
    %v1742 = vpop.f32.mrb[0].mxu0
    %v1743 = vadd.f32 0.0, %v1742
    %v1744 = vpop.f32.mrb[0].mxu0
    %v1745 = vadd.f32 0.0, %v1744
    %v1746 = vpop.f32.mrb[0].mxu0
    %v1747 = vadd.f32 0.0, %v1746
    %1748 = vmatprep.mubr.bf16.mxu0 0
    %1749 = vmatmul.mubr.bf16.gmra.mrb[0].mxu0 %v1641
    %v1750 = vpop.f32.mrb[0].mxu0
    %v1751 = vadd.f32 0.0, %v1750
    %v1752 = vpop.f32.mrb[0].mxu0
    %v1753 = vadd.f32 0.0, %v1752
    %v1754 = vpop.f32.mrb[0].mxu0
    %v1755 = vadd.f32 0.0, %v1754
    %v1756 = vpop.f32.mrb[0].mxu0
    %v1757 = vadd.f32 0.0, %v1756
    %1758 = vmatprep.mubr.bf16.mxu0 0
    %1759 = vmatmul.mubr.bf16.gmra.mrb[0].mxu0 %v1644
    %v1760 = vpop.f32.mrb[0].mxu0
    %v1761 = vadd.f32 0.0, %v1760
    %v1762 = vpop.f32.mrb[0].mxu0
    %v1763 = vadd.f32 0.0, %v1762
    %v1764 = vpop.f32.mrb[0].mxu0
    %v1765 = vadd.f32 0.0, %v1764
    %v1766 = vpop.f32.mrb[0].mxu0
    %v1767 = vadd.f32 0.0, %v1766
    %1768 = vmatprep.mubr.bf16.mxu0 0
    %1769 = vmatmul.mubr.bf16.gmra.mrb[0].mxu0 %v1647
    %v1770 = vpop.f32.mrb[0].mxu0
    %v1771 = vadd.f32 0.0, %v1770
    %v1772 = vpop.f32.mrb[0].mxu0
    %v1773 = vadd.f32 0.0, %v1772
    %v1774 = vpop.f32.mrb[0].mxu0
    %v1775 = vadd.f32 0.0, %v1774
    %v1776 = vpop.f32.mrb[0].mxu0
    %v1777 = vadd.f32 0.0, %v1776
    %1778 = vmatprep.mubr.bf16.mxu0 0
    %1779 = vmatmul.mubr.bf16.gmra.mrb[0].mxu0 %v1650
    %v1780 = vpop.f32.mrb[0].mxu0
    %v1781 = vadd.f32 0.0, %v1780
    %v1782 = vpop.f32.mrb[0].mxu0
    %v1783 = vadd.f32 0.0, %v1782
    %v1784 = vpop.f32.mrb[0].mxu0
    %v1785 = vadd.f32 0.0, %v1784
    %v1786 = vpop.f32.mrb[0].mxu0
    %v1787 = vadd.f32 0.0, %v1786
    %1788 = vmatprep.mubr.bf16.mxu0 0
    %1789 = vmatmul.mubr.bf16.gmra.mrb[0].mxu0 %v1653
    %v1790 = vpop.f32.mrb[0].mxu0
    %v1791 = vadd.f32 0.0, %v1790
    %v1792 = vpop.f32.mrb[0].mxu0
    %v1793 = vadd.f32 0.0, %v1792
    %v1794 = vpop.f32.mrb[0].mxu0
    %v1795 = vadd.f32 0.0, %v1794
    %v1796 = vpop.f32.mrb[0].mxu0
    %v1797 = vadd.f32 0.0, %v1796
    %1798 = vmatprep.mubr.bf16.mxu0 0
    %1799 = vmatmul.mubr.bf16.gmra.mrb[0].mxu0 %v1656
    %v1800 = vpop.f32.mrb[0].mxu0
    %v1801 = vadd.f32 0.0, %v1800
    %v1802 = vpop.f32.mrb[0].mxu0
    %v1803 = vadd.f32 0.0, %v1802
    %v1804 = vpop.f32.mrb[0].mxu0
    %v1805 = vadd.f32 0.0, %v1804
    %v1806 = vpop.f32.mrb[0].mxu0
    %v1807 = vadd.f32 0.0, %v1806
    %1808 = vmatprep.mubr.bf16.mxu0 0
    %1809 = vmatmul.mubr.bf16.gmra.mrb[0].mxu0 %v1659
    %v1810 = vpop.f32.mrb[0].mxu0
    %v1811 = vadd.f32 0.0, %v1810
    %v1812 = vpop.f32.mrb[0].mxu0
    %v1813 = vadd.f32 0.0, %v1812
    %v1814 = vpop.f32.mrb[0].mxu0
    %v1815 = vadd.f32 0.0, %v1814
    %v1816 = vpop.f32.mrb[0].mxu0
    %v1817 = vadd.f32 0.0, %v1816
    %1818 = vmatprep.mubr.bf16.mxu0 0
    %1819 = vmatmul.mubr.bf16.gmra.mrb[0].mxu0 %v1662
    %v1820 = vpop.f32.mrb[0].mxu0
    %v1821 = vadd.f32 0.0, %v1820
    %v1822 = vpop.f32.mrb[0].mxu0
    %v1823 = vadd.f32 0.0, %v1822
    %v1824 = vpop.f32.mrb[0].mxu0
    %v1825 = vadd.f32 0.0, %v1824
    %v1826 = vpop.f32.mrb[0].mxu0
    %v1827 = vadd.f32 0.0, %v1826
    %1828 = vdwg.mxu0
    %1829 = vmatprep.subr.bf16.mxu0 %v1595
    %1830 = vmatpush1.bf16.msra.mxu0 %v1594
    %1831 = vmatprep.subr.bf16.mxu0 %v1599
    %1832 = vmatpush1.bf16.msra.mxu0 %v1598
    %1833 = vmatprep.subr.bf16.mxu0 %v1603
    %1834 = vmatpush1.bf16.msra.mxu0 %v1602
    %1835 = vmatprep.subr.bf16.mxu0 %v1607
    %1836 = vmatpush1.bf16.msra.mxu0 %v1606
    %1837 = vmatprep.subr.bf16.mxu0 %v1674
    %1838 = vmatpush1.bf16.msra.mxu0 %v1671
    %1839 = vmatprep.subr.bf16.mxu0 0
    %1840 = vmatpush1.bf16.msra.mxu0 0
    %1841 = vmatprep.subr.bf16.mxu0 0
    %1842 = vmatpush1.bf16.msra.mxu0 0
    %1843 = vmatprep.subr.bf16.mxu0 0
    %1844 = vmatpush1.bf16.msra.mxu0 0
    %1845 = vmatprep.subr.bf16.mxu0 0
    %1846 = vmatpush1.bf16.msra.mxu0 0
    %1847 = vmatprep.subr.bf16.mxu0 0
    %1848 = vmatpush1.bf16.msra.mxu0 0
    %1849 = vmatprep.subr.bf16.mxu0 0
    %1850 = vmatpush1.bf16.msra.mxu0 0
    %1851 = vmatprep.subr.bf16.mxu0 0
    %1852 = vmatpush1.bf16.msra.mxu0 0
    %1853 = vmatprep.subr.bf16.mxu0 0
    %1854 = vmatpush1.bf16.msra.mxu0 0
    %1855 = vmatprep.subr.bf16.mxu0 0
    %1856 = vmatpush1.bf16.msra.mxu0 0
    %1857 = vmatprep.subr.bf16.mxu0 0
    %1858 = vmatpush1.bf16.msra.mxu0 0
    %1859 = vmatprep.subr.bf16.mxu0 0
    %1860 = vmatpush1.bf16.msra.mxu0 0
    %1861 = vmatprep.mubr.bf16.mxu0 0
    %1862 = vmatmul.mubr.bf16.gmra.mrb[0].mxu0 %v1629
    %v1863 = vpop.f32.mrb[0].mxu0
    %v1864 = vadd.f32 0.0, %v1863
    %v1865 = vpop.f32.mrb[0].mxu0
    %v1866 = vadd.f32 0.0, %v1865
    %v1867 = vpop.f32.mrb[0].mxu0
    %v1868 = vadd.f32 0.0, %v1867
    %v1869 = vpop.f32.mrb[0].mxu0
    %v1870 = vadd.f32 0.0, %v1869
    %1871 = vmatprep.mubr.bf16.mxu0 0
    %1872 = vmatmul.mubr.bf16.gmra.mrb[0].mxu0 %v1632
    %v1873 = vpop.f32.mrb[0].mxu0
    %v1874 = vadd.f32 0.0, %v1873
    %v1875 = vpop.f32.mrb[0].mxu0
    %v1876 = vadd.f32 0.0, %v1875
    %v1877 = vpop.f32.mrb[0].mxu0
    %v1878 = vadd.f32 0.0, %v1877
    %v1879 = vpop.f32.mrb[0].mxu0
    %v1880 = vadd.f32 0.0, %v1879
    %1881 = vmatprep.mubr.bf16.mxu0 0
    %1882 = vmatmul.mubr.bf16.gmra.mrb[0].mxu0 %v1635
    %v1883 = vpop.f32.mrb[0].mxu0
    %v1884 = vadd.f32 0.0, %v1883
    %v1885 = vpop.f32.mrb[0].mxu0
    %v1886 = vadd.f32 0.0, %v1885
    %v1887 = vpop.f32.mrb[0].mxu0
    %v1888 = vadd.f32 0.0, %v1887
    %v1889 = vpop.f32.mrb[0].mxu0
    %v1890 = vadd.f32 0.0, %v1889
    %1891 = vmatprep.mubr.bf16.mxu0 0
    %1892 = vmatmul.mubr.bf16.gmra.mrb[0].mxu0 %v1638
    %v1893 = vpop.f32.mrb[0].mxu0
    %v1894 = vadd.f32 0.0, %v1893
    %v1895 = vpop.f32.mrb[0].mxu0
    %v1896 = vadd.f32 0.0, %v1895
    %v1897 = vpop.f32.mrb[0].mxu0
    %v1898 = vadd.f32 0.0, %v1897
    %v1899 = vpop.f32.mrb[0].mxu0
    %v1900 = vadd.f32 0.0, %v1899
    %1901 = vmatprep.mubr.bf16.mxu0 0
    %1902 = vmatmul.mubr.bf16.gmra.mrb[0].mxu0 %v1641
    %v1903 = vpop.f32.mrb[0].mxu0
    %v1904 = vadd.f32 0.0, %v1903
    %v1905 = vpop.f32.mrb[0].mxu0
    %v1906 = vadd.f32 0.0, %v1905
    %v1907 = vpop.f32.mrb[0].mxu0
    %v1908 = vadd.f32 0.0, %v1907
    %v1909 = vpop.f32.mrb[0].mxu0
    %v1910 = vadd.f32 0.0, %v1909
    %1911 = vmatprep.mubr.bf16.mxu0 0
    %1912 = vmatmul.mubr.bf16.gmra.mrb[0].mxu0 %v1644
    %v1913 = vpop.f32.mrb[0].mxu0
    %v1914 = vadd.f32 0.0, %v1913
    %v1915 = vpop.f32.mrb[0].mxu0
    %v1916 = vadd.f32 0.0, %v1915
    %v1917 = vpop.f32.mrb[0].mxu0
    %v1918 = vadd.f32 0.0, %v1917
    %v1919 = vpop.f32.mrb[0].mxu0
    %v1920 = vadd.f32 0.0, %v1919
    %1921 = vmatprep.mubr.bf16.mxu0 0
    %1922 = vmatmul.mubr.bf16.gmra.mrb[0].mxu0 %v1647
    %v1923 = vpop.f32.mrb[0].mxu0
    %v1924 = vadd.f32 0.0, %v1923
    %v1925 = vpop.f32.mrb[0].mxu0
    %v1926 = vadd.f32 0.0, %v1925
    %v1927 = vpop.f32.mrb[0].mxu0
    %v1928 = vadd.f32 0.0, %v1927
    %v1929 = vpop.f32.mrb[0].mxu0
    %v1930 = vadd.f32 0.0, %v1929
    %1931 = vmatprep.mubr.bf16.mxu0 0
    %1932 = vmatmul.mubr.bf16.gmra.mrb[0].mxu0 %v1650
    %v1933 = vpop.f32.mrb[0].mxu0
    %v1934 = vadd.f32 0.0, %v1933
    %v1935 = vpop.f32.mrb[0].mxu0
    %v1936 = vadd.f32 0.0, %v1935
    %v1937 = vpop.f32.mrb[0].mxu0
    %v1938 = vadd.f32 0.0, %v1937
    %v1939 = vpop.f32.mrb[0].mxu0
    %v1940 = vadd.f32 0.0, %v1939
    %1941 = vmatprep.mubr.bf16.mxu0 0
    %1942 = vmatmul.mubr.bf16.gmra.mrb[0].mxu0 %v1653
    %v1943 = vpop.f32.mrb[0].mxu0
    %v1944 = vadd.f32 0.0, %v1943
    %v1945 = vpop.f32.mrb[0].mxu0
    %v1946 = vadd.f32 0.0, %v1945
    %v1947 = vpop.f32.mrb[0].mxu0
    %v1948 = vadd.f32 0.0, %v1947
    %v1949 = vpop.f32.mrb[0].mxu0
    %v1950 = vadd.f32 0.0, %v1949
    %1951 = vmatprep.mubr.bf16.mxu0 0
    %1952 = vmatmul.mubr.bf16.gmra.mrb[0].mxu0 %v1656
    %v1953 = vpop.f32.mrb[0].mxu0
    %v1954 = vadd.f32 0.0, %v1953
    %v1955 = vpop.f32.mrb[0].mxu0
    %v1956 = vadd.f32 0.0, %v1955
    %v1957 = vpop.f32.mrb[0].mxu0
    %v1958 = vadd.f32 0.0, %v1957
    %v1959 = vpop.f32.mrb[0].mxu0
    %v1960 = vadd.f32 0.0, %v1959
    %1961 = vmatprep.mubr.bf16.mxu0 0
    %1962 = vmatmul.mubr.bf16.gmra.mrb[0].mxu0 %v1659
    %v1963 = vpop.f32.mrb[0].mxu0
    %v1964 = vadd.f32 0.0, %v1963
    %v1965 = vpop.f32.mrb[0].mxu0
    %v1966 = vadd.f32 0.0, %v1965
    %v1967 = vpop.f32.mrb[0].mxu0
    %v1968 = vadd.f32 0.0, %v1967
    %v1969 = vpop.f32.mrb[0].mxu0
    %v1970 = vadd.f32 0.0, %v1969
    %1971 = vmatprep.mubr.bf16.mxu0 0
    %1972 = vmatmul.mubr.bf16.gmra.mrb[0].mxu0 %v1662
    %v1973 = vpop.f32.mrb[0].mxu0
    %v1974 = vadd.f32 0.0, %v1973
    %v1975 = vpop.f32.mrb[0].mxu0
    %v1976 = vadd.f32 0.0, %v1975
    %v1977 = vpop.f32.mrb[0].mxu0
    %v1978 = vadd.f32 0.0, %v1977
    %v1979 = vpop.f32.mrb[0].mxu0
    %v1980 = vadd.f32 0.0, %v1979
    %1981 = vdwg.mxu0
    %v1982 = vadd.f32 %v1113, %v1711
    %v1983 = vadd.f32 %v1115, %v1713
    %v1984 = vadd.f32 %v1266, %v1864
    %v1985 = vadd.f32 %v1268, %v1866
    %v1986 = vadd.f32 %v1117, %v1715
    %v1987 = vadd.f32 %v1119, %v1717
    %v1988 = vadd.f32 %v1270, %v1868
    %v1989 = vadd.f32 %v1272, %v1870
    %v1990 = vadd.f32 %v1123, %v1721
    %v1991 = vadd.f32 %v1125, %v1723
    %v1992 = vadd.f32 %v1276, %v1874
    %v1993 = vadd.f32 %v1278, %v1876
    %v1994 = vadd.f32 %v1127, %v1725
    %v1995 = vadd.f32 %v1129, %v1727
    %v1996 = vadd.f32 %v1280, %v1878
    %v1997 = vadd.f32 %v1282, %v1880
    %v1998 = vadd.f32 %v1133, %v1731
    %v1999 = vadd.f32 %v1135, %v1733
    %v2000 = vadd.f32 %v1286, %v1884
    %v2001 = vadd.f32 %v1288, %v1886
    %v2002 = vadd.f32 %v1137, %v1735
    %v2003 = vadd.f32 %v1139, %v1737
    %v2004 = vadd.f32 %v1290, %v1888
    %v2005 = vadd.f32 %v1292, %v1890
    %v2006 = vadd.f32 %v1143, %v1741
    %v2007 = vadd.f32 %v1145, %v1743
    %v2008 = vadd.f32 %v1296, %v1894
    %v2009 = vadd.f32 %v1298, %v1896
    %v2010 = vadd.f32 %v1147, %v1745
    %v2011 = vadd.f32 %v1149, %v1747
    %v2012 = vadd.f32 %v1300, %v1898
    %v2013 = vadd.f32 %v1302, %v1900
    %v2014 = vadd.f32 %v1153, %v1751
    %v2015 = vadd.f32 %v1155, %v1753
    %v2016 = vadd.f32 %v1306, %v1904
    %v2017 = vadd.f32 %v1308, %v1906
    %v2018 = vadd.f32 %v1157, %v1755
    %v2019 = vadd.f32 %v1159, %v1757
    %v2020 = vadd.f32 %v1310, %v1908
    %v2021 = vadd.f32 %v1312, %v1910
    %v2022 = vadd.f32 %v1163, %v1761
    %v2023 = vadd.f32 %v1165, %v1763
    %v2024 = vadd.f32 %v1316, %v1914
    %v2025 = vadd.f32 %v1318, %v1916
    %v2026 = vadd.f32 %v1167, %v1765
    %v2027 = vadd.f32 %v1169, %v1767
    %v2028 = vadd.f32 %v1320, %v1918
    %v2029 = vadd.f32 %v1322, %v1920
    %v2030 = vadd.f32 %v1173, %v1771
    %v2031 = vadd.f32 %v1175, %v1773
    %v2032 = vadd.f32 %v1326, %v1924
    %v2033 = vadd.f32 %v1328, %v1926
    %v2034 = vadd.f32 %v1177, %v1775
    %v2035 = vadd.f32 %v1179, %v1777
    %v2036 = vadd.f32 %v1330, %v1928
    %v2037 = vadd.f32 %v1332, %v1930
    %v2038 = vadd.f32 %v1183, %v1781
    %v2039 = vadd.f32 %v1185, %v1783
    %v2040 = vadd.f32 %v1336, %v1934
    %v2041 = vadd.f32 %v1338, %v1936
    %v2042 = vadd.f32 %v1187, %v1785
    %v2043 = vadd.f32 %v1189, %v1787
    %v2044 = vadd.f32 %v1340, %v1938
    %v2045 = vadd.f32 %v1342, %v1940
    %v2046 = vadd.f32 %v1193, %v1791
    %v2047 = vadd.f32 %v1195, %v1793
    %v2048 = vadd.f32 %v1346, %v1944
    %v2049 = vadd.f32 %v1348, %v1946
    %v2050 = vadd.f32 %v1197, %v1795
    %v2051 = vadd.f32 %v1199, %v1797
    %v2052 = vadd.f32 %v1350, %v1948
    %v2053 = vadd.f32 %v1352, %v1950
    %v2054 = vadd.f32 %v1203, %v1801
    %v2055 = vadd.f32 %v1205, %v1803
    %v2056 = vadd.f32 %v1356, %v1954
    %v2057 = vadd.f32 %v1358, %v1956
    %v2058 = vadd.f32 %v1207, %v1805
    %v2059 = vadd.f32 %v1209, %v1807
    %v2060 = vadd.f32 %v1360, %v1958
    %v2061 = vadd.f32 %v1362, %v1960
    %v2062 = vadd.f32 %v1213, %v1811
    %v2063 = vadd.f32 %v1215, %v1813
    %v2064 = vadd.f32 %v1366, %v1964
    %v2065 = vadd.f32 %v1368, %v1966
    %v2066 = vadd.f32 %v1217, %v1815
    %v2067 = vadd.f32 %v1219, %v1817
    %v2068 = vadd.f32 %v1370, %v1968
    %v2069 = vadd.f32 %v1372, %v1970
    %v2070 = vadd.f32 %v1223, %v1821
    %v2071 = vadd.f32 %v1225, %v1823
    %v2072 = vadd.f32 %v1376, %v1974
    %v2073 = vadd.f32 %v1378, %v1976
    %v2074 = vadd.f32 %v1227, %v1825
    %v2075 = vadd.f32 %v1229, %v1827
    %v2076 = vadd.f32 %v1380, %v1978
    %v2077 = vadd.f32 %v1382, %v1980
    %v2078 = vld [vmem:[%s2] sm:$0xf]
    %v2080 = vlaneseq
    %v2081 = vshrl.u32 %v2080, 7
    %v2082 = vsub.s32 0, %v2081
    %v2083 = vrot.slane %v2078, %v2082
    %v2084 = vlaneseq
    %v2085 = vshrl.u32 %v2084, 7
    %v2086 = vsub.s32 1, %v2085
    %v2087 = vrot.slane %v2078, %v2086
    %v2088 = vlaneseq
    %v2089 = vshrl.u32 %v2088, 7
    %v2090 = vsub.s32 2, %v2089
    %v2091 = vrot.slane %v2078, %v2090
    %v2092 = vlaneseq
    %v2093 = vshrl.u32 %v2092, 7
    %v2094 = vsub.s32 3, %v2093
    %v2095 = vrot.slane %v2078, %v2094
    %v2100 = vadd.f32 %v1982, %v2083
    %v2101 = vadd.f32 %v1983, %v2087
    %v2102 = vadd.f32 %v1984, %v2091
    %v2103 = vadd.f32 %v1985, %v2095
    %v2104 = vadd.f32 %v1986, %v2083
    %v2105 = vadd.f32 %v1987, %v2087
    %v2106 = vadd.f32 %v1988, %v2091
    %v2107 = vadd.f32 %v1989, %v2095
    %v2108 = vadd.f32 %v1990, %v2083
    %v2109 = vadd.f32 %v1991, %v2087
    %v2110 = vadd.f32 %v1992, %v2091
    %v2111 = vadd.f32 %v1993, %v2095
    %v2112 = vadd.f32 %v1994, %v2083
    %v2113 = vadd.f32 %v1995, %v2087
    %v2114 = vadd.f32 %v1996, %v2091
    %v2115 = vadd.f32 %v1997, %v2095
    %v2116 = vadd.f32 %v1998, %v2083
    %v2117 = vadd.f32 %v1999, %v2087
    %v2118 = vadd.f32 %v2000, %v2091
    %v2119 = vadd.f32 %v2001, %v2095
    %v2120 = vadd.f32 %v2002, %v2083
    %v2121 = vadd.f32 %v2003, %v2087
    %v2122 = vadd.f32 %v2004, %v2091
    %v2123 = vadd.f32 %v2005, %v2095
    %v2124 = vadd.f32 %v2006, %v2083
    %v2125 = vadd.f32 %v2007, %v2087
    %v2126 = vadd.f32 %v2008, %v2091
    %v2127 = vadd.f32 %v2009, %v2095
    %v2128 = vadd.f32 %v2010, %v2083
    %v2129 = vadd.f32 %v2011, %v2087
    %v2130 = vadd.f32 %v2012, %v2091
    %v2131 = vadd.f32 %v2013, %v2095
    %v2132 = vadd.f32 %v2014, %v2083
    %v2133 = vadd.f32 %v2015, %v2087
    %v2134 = vadd.f32 %v2016, %v2091
    %v2135 = vadd.f32 %v2017, %v2095
    %v2136 = vadd.f32 %v2018, %v2083
    %v2137 = vadd.f32 %v2019, %v2087
    %v2138 = vadd.f32 %v2020, %v2091
    %v2139 = vadd.f32 %v2021, %v2095
    %v2140 = vadd.f32 %v2022, %v2083
    %v2141 = vadd.f32 %v2023, %v2087
    %v2142 = vadd.f32 %v2024, %v2091
    %v2143 = vadd.f32 %v2025, %v2095
    %v2144 = vadd.f32 %v2026, %v2083
    %v2145 = vadd.f32 %v2027, %v2087
    %v2146 = vadd.f32 %v2028, %v2091
    %v2147 = vadd.f32 %v2029, %v2095
    %v2148 = vadd.f32 %v2030, %v2083
    %v2149 = vadd.f32 %v2031, %v2087
    %v2150 = vadd.f32 %v2032, %v2091
    %v2151 = vadd.f32 %v2033, %v2095
    %v2152 = vadd.f32 %v2034, %v2083
    %v2153 = vadd.f32 %v2035, %v2087
    %v2154 = vadd.f32 %v2036, %v2091
    %v2155 = vadd.f32 %v2037, %v2095
    %v2156 = vadd.f32 %v2038, %v2083
    %v2157 = vadd.f32 %v2039, %v2087
    %v2158 = vadd.f32 %v2040, %v2091
    %v2159 = vadd.f32 %v2041, %v2095
    %v2160 = vadd.f32 %v2042, %v2083
    %v2161 = vadd.f32 %v2043, %v2087
    %v2162 = vadd.f32 %v2044, %v2091
    %v2163 = vadd.f32 %v2045, %v2095
    %v2164 = vadd.f32 %v2046, %v2083
    %v2165 = vadd.f32 %v2047, %v2087
    %v2166 = vadd.f32 %v2048, %v2091
    %v2167 = vadd.f32 %v2049, %v2095
    %v2168 = vadd.f32 %v2050, %v2083
    %v2169 = vadd.f32 %v2051, %v2087
    %v2170 = vadd.f32 %v2052, %v2091
    %v2171 = vadd.f32 %v2053, %v2095
    %v2172 = vadd.f32 %v2054, %v2083
    %v2173 = vadd.f32 %v2055, %v2087
    %v2174 = vadd.f32 %v2056, %v2091
    %v2175 = vadd.f32 %v2057, %v2095
    %v2176 = vadd.f32 %v2058, %v2083
    %v2177 = vadd.f32 %v2059, %v2087
    %v2178 = vadd.f32 %v2060, %v2091
    %v2179 = vadd.f32 %v2061, %v2095
    %v2180 = vadd.f32 %v2062, %v2083
    %v2181 = vadd.f32 %v2063, %v2087
    %v2182 = vadd.f32 %v2064, %v2091
    %v2183 = vadd.f32 %v2065, %v2095
    %v2184 = vadd.f32 %v2066, %v2083
    %v2185 = vadd.f32 %v2067, %v2087
    %v2186 = vadd.f32 %v2068, %v2091
    %v2187 = vadd.f32 %v2069, %v2095
    %v2188 = vadd.f32 %v2070, %v2083
    %v2189 = vadd.f32 %v2071, %v2087
    %v2190 = vadd.f32 %v2072, %v2091
    %v2191 = vadd.f32 %v2073, %v2095
    %v2192 = vadd.f32 %v2074, %v2083
    %v2193 = vadd.f32 %v2075, %v2087
    %v2194 = vadd.f32 %v2076, %v2091
    %v2195 = vadd.f32 %v2077, %v2095
    %v2196 = vmax.f32 %v2100, 0.0
    %v2197 = vmax.f32 %v2101, 0.0
    %v2198 = vmax.f32 %v2102, 0.0
    %v2199 = vmax.f32 %v2103, 0.0
    %v2200 = vmax.f32 %v2104, 0.0
    %v2201 = vmax.f32 %v2105, 0.0
    %v2202 = vmax.f32 %v2106, 0.0
    %v2203 = vmax.f32 %v2107, 0.0
    %v2204 = vmax.f32 %v2108, 0.0
    %v2205 = vmax.f32 %v2109, 0.0
    %v2206 = vmax.f32 %v2110, 0.0
    %v2207 = vmax.f32 %v2111, 0.0
    %v2208 = vmax.f32 %v2112, 0.0
    %v2209 = vmax.f32 %v2113, 0.0
    %v2210 = vmax.f32 %v2114, 0.0
    %v2211 = vmax.f32 %v2115, 0.0
    %v2212 = vmax.f32 %v2116, 0.0
    %v2213 = vmax.f32 %v2117, 0.0
    %v2214 = vmax.f32 %v2118, 0.0
    %v2215 = vmax.f32 %v2119, 0.0
    %v2216 = vmax.f32 %v2120, 0.0
    %v2217 = vmax.f32 %v2121, 0.0
    %v2218 = vmax.f32 %v2122, 0.0
    %v2219 = vmax.f32 %v2123, 0.0
    %v2220 = vmax.f32 %v2124, 0.0
    %v2221 = vmax.f32 %v2125, 0.0
    %v2222 = vmax.f32 %v2126, 0.0
    %v2223 = vmax.f32 %v2127, 0.0
    %v2224 = vmax.f32 %v2128, 0.0
    %v2225 = vmax.f32 %v2129, 0.0
    %v2226 = vmax.f32 %v2130, 0.0
    %v2227 = vmax.f32 %v2131, 0.0
    %v2228 = vmax.f32 %v2132, 0.0
    %v2229 = vmax.f32 %v2133, 0.0
    %v2230 = vmax.f32 %v2134, 0.0
    %v2231 = vmax.f32 %v2135, 0.0
    %v2232 = vmax.f32 %v2136, 0.0
    %v2233 = vmax.f32 %v2137, 0.0
    %v2234 = vmax.f32 %v2138, 0.0
    %v2235 = vmax.f32 %v2139, 0.0
    %v2236 = vmax.f32 %v2140, 0.0
    %v2237 = vmax.f32 %v2141, 0.0
    %v2238 = vmax.f32 %v2142, 0.0
    %v2239 = vmax.f32 %v2143, 0.0
    %v2240 = vmax.f32 %v2144, 0.0
    %v2241 = vmax.f32 %v2145, 0.0
    %v2242 = vmax.f32 %v2146, 0.0
    %v2243 = vmax.f32 %v2147, 0.0
    %v2244 = vmax.f32 %v2148, 0.0
    %v2245 = vmax.f32 %v2149, 0.0
    %v2246 = vmax.f32 %v2150, 0.0
    %v2247 = vmax.f32 %v2151, 0.0
    %v2248 = vmax.f32 %v2152, 0.0
    %v2249 = vmax.f32 %v2153, 0.0
    %v2250 = vmax.f32 %v2154, 0.0
    %v2251 = vmax.f32 %v2155, 0.0
    %v2252 = vmax.f32 %v2156, 0.0
    %v2253 = vmax.f32 %v2157, 0.0
    %v2254 = vmax.f32 %v2158, 0.0
    %v2255 = vmax.f32 %v2159, 0.0
    %v2256 = vmax.f32 %v2160, 0.0
    %v2257 = vmax.f32 %v2161, 0.0
    %v2258 = vmax.f32 %v2162, 0.0
    %v2259 = vmax.f32 %v2163, 0.0
    %v2260 = vmax.f32 %v2164, 0.0
    %v2261 = vmax.f32 %v2165, 0.0
    %v2262 = vmax.f32 %v2166, 0.0
    %v2263 = vmax.f32 %v2167, 0.0
    %v2264 = vmax.f32 %v2168, 0.0
    %v2265 = vmax.f32 %v2169, 0.0
    %v2266 = vmax.f32 %v2170, 0.0
    %v2267 = vmax.f32 %v2171, 0.0
    %v2268 = vmax.f32 %v2172, 0.0
    %v2269 = vmax.f32 %v2173, 0.0
    %v2270 = vmax.f32 %v2174, 0.0
    %v2271 = vmax.f32 %v2175, 0.0
    %v2272 = vmax.f32 %v2176, 0.0
    %v2273 = vmax.f32 %v2177, 0.0
    %v2274 = vmax.f32 %v2178, 0.0
    %v2275 = vmax.f32 %v2179, 0.0
    %v2276 = vmax.f32 %v2180, 0.0
    %v2277 = vmax.f32 %v2181, 0.0
    %v2278 = vmax.f32 %v2182, 0.0
    %v2279 = vmax.f32 %v2183, 0.0
    %v2280 = vmax.f32 %v2184, 0.0
    %v2281 = vmax.f32 %v2185, 0.0
    %v2282 = vmax.f32 %v2186, 0.0
    %v2283 = vmax.f32 %v2187, 0.0
    %v2284 = vmax.f32 %v2188, 0.0
    %v2285 = vmax.f32 %v2189, 0.0
    %v2286 = vmax.f32 %v2190, 0.0
    %v2287 = vmax.f32 %v2191, 0.0
    %v2288 = vmax.f32 %v2192, 0.0
    %v2289 = vmax.f32 %v2193, 0.0
    %v2290 = vmax.f32 %v2194, 0.0
    %v2291 = vmax.f32 %v2195, 0.0
    %v2292 = vadd.f32 %v2196, %v2200
    %v2293 = vrot.slane %v2292, 4
    %v2294 = vadd.f32 %v2292, %v2293
    %v2295 = vrot.slane %v2294, 2
    %v2296 = vadd.f32 %v2294, %v2295
    %v2297 = vrot.slane %v2296, 1
    %v2298 = vadd.f32 %v2296, %v2297
    %v2299 = vadd.f32 %v2197, %v2201
    %v2300 = vrot.slane %v2299, 4
    %v2301 = vadd.f32 %v2299, %v2300
    %v2302 = vrot.slane %v2301, 2
    %v2303 = vadd.f32 %v2301, %v2302
    %v2304 = vrot.slane %v2303, 1
    %v2305 = vadd.f32 %v2303, %v2304
    %v2306 = vadd.f32 %v2198, %v2202
    %v2307 = vrot.slane %v2306, 4
    %v2308 = vadd.f32 %v2306, %v2307
    %v2309 = vrot.slane %v2308, 2
    %v2310 = vadd.f32 %v2308, %v2309
    %v2311 = vrot.slane %v2310, 1
    %v2312 = vadd.f32 %v2310, %v2311
    %v2313 = vadd.f32 %v2199, %v2203
    %v2314 = vrot.slane %v2313, 4
    %v2315 = vadd.f32 %v2313, %v2314
    %v2316 = vrot.slane %v2315, 2
    %v2317 = vadd.f32 %v2315, %v2316
    %v2318 = vrot.slane %v2317, 1
    %v2319 = vadd.f32 %v2317, %v2318
    %v2320 = vadd.f32 %v2204, %v2208
    %v2321 = vrot.slane %v2320, 4
    %v2322 = vadd.f32 %v2320, %v2321
    %v2323 = vrot.slane %v2322, 2
    %v2324 = vadd.f32 %v2322, %v2323
    %v2325 = vrot.slane %v2324, 1
    %v2326 = vadd.f32 %v2324, %v2325
    %v2327 = vadd.f32 %v2205, %v2209
    %v2328 = vrot.slane %v2327, 4
    %v2329 = vadd.f32 %v2327, %v2328
    %v2330 = vrot.slane %v2329, 2
    %v2331 = vadd.f32 %v2329, %v2330
    %v2332 = vrot.slane %v2331, 1
    %v2333 = vadd.f32 %v2331, %v2332
    %v2334 = vadd.f32 %v2206, %v2210
    %v2335 = vrot.slane %v2334, 4
    %v2336 = vadd.f32 %v2334, %v2335
    %v2337 = vrot.slane %v2336, 2
    %v2338 = vadd.f32 %v2336, %v2337
    %v2339 = vrot.slane %v2338, 1
    %v2340 = vadd.f32 %v2338, %v2339
    %v2341 = vadd.f32 %v2207, %v2211
    %v2342 = vrot.slane %v2341, 4
    %v2343 = vadd.f32 %v2341, %v2342
    %v2344 = vrot.slane %v2343, 2
    %v2345 = vadd.f32 %v2343, %v2344
    %v2346 = vrot.slane %v2345, 1
    %v2347 = vadd.f32 %v2345, %v2346
    %v2348 = vadd.f32 %v2212, %v2216
    %v2349 = vrot.slane %v2348, 4
    %v2350 = vadd.f32 %v2348, %v2349
    %v2351 = vrot.slane %v2350, 2
    %v2352 = vadd.f32 %v2350, %v2351
    %v2353 = vrot.slane %v2352, 1
    %v2354 = vadd.f32 %v2352, %v2353
    %v2355 = vadd.f32 %v2213, %v2217
    %v2356 = vrot.slane %v2355, 4
    %v2357 = vadd.f32 %v2355, %v2356
    %v2358 = vrot.slane %v2357, 2
    %v2359 = vadd.f32 %v2357, %v2358
    %v2360 = vrot.slane %v2359, 1
    %v2361 = vadd.f32 %v2359, %v2360
    %v2362 = vadd.f32 %v2214, %v2218
    %v2363 = vrot.slane %v2362, 4
    %v2364 = vadd.f32 %v2362, %v2363
    %v2365 = vrot.slane %v2364, 2
    %v2366 = vadd.f32 %v2364, %v2365
    %v2367 = vrot.slane %v2366, 1
    %v2368 = vadd.f32 %v2366, %v2367
    %v2369 = vadd.f32 %v2215, %v2219
    %v2370 = vrot.slane %v2369, 4
    %v2371 = vadd.f32 %v2369, %v2370
    %v2372 = vrot.slane %v2371, 2
    %v2373 = vadd.f32 %v2371, %v2372
    %v2374 = vrot.slane %v2373, 1
    %v2375 = vadd.f32 %v2373, %v2374
    %v2376 = vadd.f32 %v2220, %v2224
    %v2377 = vrot.slane %v2376, 4
    %v2378 = vadd.f32 %v2376, %v2377
    %v2379 = vrot.slane %v2378, 2
    %v2380 = vadd.f32 %v2378, %v2379
    %v2381 = vrot.slane %v2380, 1
    %v2382 = vadd.f32 %v2380, %v2381
    %v2383 = vadd.f32 %v2221, %v2225
    %v2384 = vrot.slane %v2383, 4
    %v2385 = vadd.f32 %v2383, %v2384
    %v2386 = vrot.slane %v2385, 2
    %v2387 = vadd.f32 %v2385, %v2386
    %v2388 = vrot.slane %v2387, 1
    %v2389 = vadd.f32 %v2387, %v2388
    %v2390 = vadd.f32 %v2222, %v2226
    %v2391 = vrot.slane %v2390, 4
    %v2392 = vadd.f32 %v2390, %v2391
    %v2393 = vrot.slane %v2392, 2
    %v2394 = vadd.f32 %v2392, %v2393
    %v2395 = vrot.slane %v2394, 1
    %v2396 = vadd.f32 %v2394, %v2395
    %v2397 = vadd.f32 %v2223, %v2227
    %v2398 = vrot.slane %v2397, 4
    %v2399 = vadd.f32 %v2397, %v2398
    %v2400 = vrot.slane %v2399, 2
    %v2401 = vadd.f32 %v2399, %v2400
    %v2402 = vrot.slane %v2401, 1
    %v2403 = vadd.f32 %v2401, %v2402
    %v2404 = vadd.f32 %v2228, %v2232
    %v2405 = vrot.slane %v2404, 4
    %v2406 = vadd.f32 %v2404, %v2405
    %v2407 = vrot.slane %v2406, 2
    %v2408 = vadd.f32 %v2406, %v2407
    %v2409 = vrot.slane %v2408, 1
    %v2410 = vadd.f32 %v2408, %v2409
    %v2411 = vadd.f32 %v2229, %v2233
    %v2412 = vrot.slane %v2411, 4
    %v2413 = vadd.f32 %v2411, %v2412
    %v2414 = vrot.slane %v2413, 2
    %v2415 = vadd.f32 %v2413, %v2414
    %v2416 = vrot.slane %v2415, 1
    %v2417 = vadd.f32 %v2415, %v2416
    %v2418 = vadd.f32 %v2230, %v2234
    %v2419 = vrot.slane %v2418, 4
    %v2420 = vadd.f32 %v2418, %v2419
    %v2421 = vrot.slane %v2420, 2
    %v2422 = vadd.f32 %v2420, %v2421
    %v2423 = vrot.slane %v2422, 1
    %v2424 = vadd.f32 %v2422, %v2423
    %v2425 = vadd.f32 %v2231, %v2235
    %v2426 = vrot.slane %v2425, 4
    %v2427 = vadd.f32 %v2425, %v2426
    %v2428 = vrot.slane %v2427, 2
    %v2429 = vadd.f32 %v2427, %v2428
    %v2430 = vrot.slane %v2429, 1
    %v2431 = vadd.f32 %v2429, %v2430
    %v2432 = vadd.f32 %v2236, %v2240
    %v2433 = vrot.slane %v2432, 4
    %v2434 = vadd.f32 %v2432, %v2433
    %v2435 = vrot.slane %v2434, 2
    %v2436 = vadd.f32 %v2434, %v2435
    %v2437 = vrot.slane %v2436, 1
    %v2438 = vadd.f32 %v2436, %v2437
    %v2439 = vadd.f32 %v2237, %v2241
    %v2440 = vrot.slane %v2439, 4
    %v2441 = vadd.f32 %v2439, %v2440
    %v2442 = vrot.slane %v2441, 2
    %v2443 = vadd.f32 %v2441, %v2442
    %v2444 = vrot.slane %v2443, 1
    %v2445 = vadd.f32 %v2443, %v2444
    %v2446 = vadd.f32 %v2238, %v2242
    %v2447 = vrot.slane %v2446, 4
    %v2448 = vadd.f32 %v2446, %v2447
    %v2449 = vrot.slane %v2448, 2
    %v2450 = vadd.f32 %v2448, %v2449
    %v2451 = vrot.slane %v2450, 1
    %v2452 = vadd.f32 %v2450, %v2451
    %v2453 = vadd.f32 %v2239, %v2243
    %v2454 = vrot.slane %v2453, 4
    %v2455 = vadd.f32 %v2453, %v2454
    %v2456 = vrot.slane %v2455, 2
    %v2457 = vadd.f32 %v2455, %v2456
    %v2458 = vrot.slane %v2457, 1
    %v2459 = vadd.f32 %v2457, %v2458
    %v2460 = vadd.f32 %v2244, %v2248
    %v2461 = vrot.slane %v2460, 4
    %v2462 = vadd.f32 %v2460, %v2461
    %v2463 = vrot.slane %v2462, 2
    %v2464 = vadd.f32 %v2462, %v2463
    %v2465 = vrot.slane %v2464, 1
    %v2466 = vadd.f32 %v2464, %v2465
    %v2467 = vadd.f32 %v2245, %v2249
    %v2468 = vrot.slane %v2467, 4
    %v2469 = vadd.f32 %v2467, %v2468
    %v2470 = vrot.slane %v2469, 2
    %v2471 = vadd.f32 %v2469, %v2470
    %v2472 = vrot.slane %v2471, 1
    %v2473 = vadd.f32 %v2471, %v2472
    %v2474 = vadd.f32 %v2246, %v2250
    %v2475 = vrot.slane %v2474, 4
    %v2476 = vadd.f32 %v2474, %v2475
    %v2477 = vrot.slane %v2476, 2
    %v2478 = vadd.f32 %v2476, %v2477
    %v2479 = vrot.slane %v2478, 1
    %v2480 = vadd.f32 %v2478, %v2479
    %v2481 = vadd.f32 %v2247, %v2251
    %v2482 = vrot.slane %v2481, 4
    %v2483 = vadd.f32 %v2481, %v2482
    %v2484 = vrot.slane %v2483, 2
    %v2485 = vadd.f32 %v2483, %v2484
    %v2486 = vrot.slane %v2485, 1
    %v2487 = vadd.f32 %v2485, %v2486
    %v2488 = vadd.f32 %v2252, %v2256
    %v2489 = vrot.slane %v2488, 4
    %v2490 = vadd.f32 %v2488, %v2489
    %v2491 = vrot.slane %v2490, 2
    %v2492 = vadd.f32 %v2490, %v2491
    %v2493 = vrot.slane %v2492, 1
    %v2494 = vadd.f32 %v2492, %v2493
    %v2495 = vadd.f32 %v2253, %v2257
    %v2496 = vrot.slane %v2495, 4
    %v2497 = vadd.f32 %v2495, %v2496
    %v2498 = vrot.slane %v2497, 2
    %v2499 = vadd.f32 %v2497, %v2498
    %v2500 = vrot.slane %v2499, 1
    %v2501 = vadd.f32 %v2499, %v2500
    %v2502 = vadd.f32 %v2254, %v2258
    %v2503 = vrot.slane %v2502, 4
    %v2504 = vadd.f32 %v2502, %v2503
    %v2505 = vrot.slane %v2504, 2
    %v2506 = vadd.f32 %v2504, %v2505
    %v2507 = vrot.slane %v2506, 1
    %v2508 = vadd.f32 %v2506, %v2507
    %v2509 = vadd.f32 %v2255, %v2259
    %v2510 = vrot.slane %v2509, 4
    %v2511 = vadd.f32 %v2509, %v2510
    %v2512 = vrot.slane %v2511, 2
    %v2513 = vadd.f32 %v2511, %v2512
    %v2514 = vrot.slane %v2513, 1
    %v2515 = vadd.f32 %v2513, %v2514
    %v2516 = vadd.f32 %v2260, %v2264
    %v2517 = vrot.slane %v2516, 4
    %v2518 = vadd.f32 %v2516, %v2517
    %v2519 = vrot.slane %v2518, 2
    %v2520 = vadd.f32 %v2518, %v2519
    %v2521 = vrot.slane %v2520, 1
    %v2522 = vadd.f32 %v2520, %v2521
    %v2523 = vadd.f32 %v2261, %v2265
    %v2524 = vrot.slane %v2523, 4
    %v2525 = vadd.f32 %v2523, %v2524
    %v2526 = vrot.slane %v2525, 2
    %v2527 = vadd.f32 %v2525, %v2526
    %v2528 = vrot.slane %v2527, 1
    %v2529 = vadd.f32 %v2527, %v2528
    %v2530 = vadd.f32 %v2262, %v2266
    %v2531 = vrot.slane %v2530, 4
    %v2532 = vadd.f32 %v2530, %v2531
    %v2533 = vrot.slane %v2532, 2
    %v2534 = vadd.f32 %v2532, %v2533
    %v2535 = vrot.slane %v2534, 1
    %v2536 = vadd.f32 %v2534, %v2535
    %v2537 = vadd.f32 %v2263, %v2267
    %v2538 = vrot.slane %v2537, 4
    %v2539 = vadd.f32 %v2537, %v2538
    %v2540 = vrot.slane %v2539, 2
    %v2541 = vadd.f32 %v2539, %v2540
    %v2542 = vrot.slane %v2541, 1
    %v2543 = vadd.f32 %v2541, %v2542
    %v2544 = vadd.f32 %v2268, %v2272
    %v2545 = vrot.slane %v2544, 4
    %v2546 = vadd.f32 %v2544, %v2545
    %v2547 = vrot.slane %v2546, 2
    %v2548 = vadd.f32 %v2546, %v2547
    %v2549 = vrot.slane %v2548, 1
    %v2550 = vadd.f32 %v2548, %v2549
    %v2551 = vadd.f32 %v2269, %v2273
    %v2552 = vrot.slane %v2551, 4
    %v2553 = vadd.f32 %v2551, %v2552
    %v2554 = vrot.slane %v2553, 2
    %v2555 = vadd.f32 %v2553, %v2554
    %v2556 = vrot.slane %v2555, 1
    %v2557 = vadd.f32 %v2555, %v2556
    %v2558 = vadd.f32 %v2270, %v2274
    %v2559 = vrot.slane %v2558, 4
    %v2560 = vadd.f32 %v2558, %v2559
    %v2561 = vrot.slane %v2560, 2
    %v2562 = vadd.f32 %v2560, %v2561
    %v2563 = vrot.slane %v2562, 1
    %v2564 = vadd.f32 %v2562, %v2563
    %v2565 = vadd.f32 %v2271, %v2275
    %v2566 = vrot.slane %v2565, 4
    %v2567 = vadd.f32 %v2565, %v2566
    %v2568 = vrot.slane %v2567, 2
    %v2569 = vadd.f32 %v2567, %v2568
    %v2570 = vrot.slane %v2569, 1
    %v2571 = vadd.f32 %v2569, %v2570
    %v2572 = vadd.f32 %v2276, %v2280
    %v2573 = vrot.slane %v2572, 4
    %v2574 = vadd.f32 %v2572, %v2573
    %v2575 = vrot.slane %v2574, 2
    %v2576 = vadd.f32 %v2574, %v2575
    %v2577 = vrot.slane %v2576, 1
    %v2578 = vadd.f32 %v2576, %v2577
    %v2579 = vadd.f32 %v2277, %v2281
    %v2580 = vrot.slane %v2579, 4
    %v2581 = vadd.f32 %v2579, %v2580
    %v2582 = vrot.slane %v2581, 2
    %v2583 = vadd.f32 %v2581, %v2582
    %v2584 = vrot.slane %v2583, 1
    %v2585 = vadd.f32 %v2583, %v2584
    %v2586 = vadd.f32 %v2278, %v2282
    %v2587 = vrot.slane %v2586, 4
    %v2588 = vadd.f32 %v2586, %v2587
    %v2589 = vrot.slane %v2588, 2
    %v2590 = vadd.f32 %v2588, %v2589
    %v2591 = vrot.slane %v2590, 1
    %v2592 = vadd.f32 %v2590, %v2591
    %v2593 = vadd.f32 %v2279, %v2283
    %v2594 = vrot.slane %v2593, 4
    %v2595 = vadd.f32 %v2593, %v2594
    %v2596 = vrot.slane %v2595, 2
    %v2597 = vadd.f32 %v2595, %v2596
    %v2598 = vrot.slane %v2597, 1
    %v2599 = vadd.f32 %v2597, %v2598
    %v2600 = vadd.f32 %v2284, %v2288
    %v2601 = vrot.slane %v2600, 4
    %v2602 = vadd.f32 %v2600, %v2601
    %v2603 = vrot.slane %v2602, 2
    %v2604 = vadd.f32 %v2602, %v2603
    %v2605 = vrot.slane %v2604, 1
    %v2606 = vadd.f32 %v2604, %v2605
    %v2607 = vadd.f32 %v2285, %v2289
    %v2608 = vrot.slane %v2607, 4
    %v2609 = vadd.f32 %v2607, %v2608
    %v2610 = vrot.slane %v2609, 2
    %v2611 = vadd.f32 %v2609, %v2610
    %v2612 = vrot.slane %v2611, 1
    %v2613 = vadd.f32 %v2611, %v2612
    %v2614 = vadd.f32 %v2286, %v2290
    %v2615 = vrot.slane %v2614, 4
    %v2616 = vadd.f32 %v2614, %v2615
    %v2617 = vrot.slane %v2616, 2
    %v2618 = vadd.f32 %v2616, %v2617
    %v2619 = vrot.slane %v2618, 1
    %v2620 = vadd.f32 %v2618, %v2619
    %v2621 = vadd.f32 %v2287, %v2291
    %v2622 = vrot.slane %v2621, 4
    %v2623 = vadd.f32 %v2621, %v2622
    %v2624 = vrot.slane %v2623, 2
    %v2625 = vadd.f32 %v2623, %v2624
    %v2626 = vrot.slane %v2625, 1
    %v2627 = vadd.f32 %v2625, %v2626
    %v2628 = vld [vmem:[%s3] sm:$0xff]
    %v2629 = vld [vmem:[%s3 + $0x8] sm:$0xff]
    %v2630 = vld [vmem:[%s3 + $0x10] sm:$0xff]
    %v2631 = vld [vmem:[%s3 + $0x18] sm:$0xff]
    %v2632 = vld [vmem:[%s3 + $0x20] sm:$0xff]
    %v2633 = vld [vmem:[%s3 + $0x28] sm:$0xff]
    %v2634 = vld [vmem:[%s3 + $0x30] sm:$0xff]
    %v2635 = vld [vmem:[%s3 + $0x38] sm:$0xff]
    %v2636 = vld [vmem:[%s3 + $0x40] sm:$0xff]
    %v2637 = vld [vmem:[%s3 + $0x48] sm:$0xff]
    %v2638 = vld [vmem:[%s3 + $0x50] sm:$0xff]
    %v2639 = vld [vmem:[%s3 + $0x58] sm:$0xff]
    %v2640 = vld [vmem:[%s3 + $0x60] sm:$0xff]
    %v2641 = vld [vmem:[%s3 + $0x68] sm:$0xff]
    %v2642 = vld [vmem:[%s3 + $0x70] sm:$0xff]
    %v2643 = vld [vmem:[%s3 + $0x78] sm:$0xff]
    %v2644 = vld [vmem:[%s3 + $0x80] sm:$0xff]
    %v2645 = vld [vmem:[%s3 + $0x88] sm:$0xff]
    %v2646 = vld [vmem:[%s3 + $0x90] sm:$0xff]
    %v2647 = vld [vmem:[%s3 + $0x98] sm:$0xff]
    %v2648 = vld [vmem:[%s3 + $0xa0] sm:$0xff]
    %v2649 = vld [vmem:[%s3 + $0xa8] sm:$0xff]
    %v2650 = vld [vmem:[%s3 + $0xb0] sm:$0xff]
    %v2651 = vld [vmem:[%s3 + $0xb8] sm:$0xff]
    %v2652 = vld [vmem:[%s3 + $0xc0] sm:$0xff]
    %v2653 = vld [vmem:[%s3 + $0xc8] sm:$0xff]
    %v2654 = vld [vmem:[%s3 + $0xd0] sm:$0xff]
    %v2655 = vld [vmem:[%s3 + $0xd8] sm:$0xff]
    %v2656 = vld [vmem:[%s3 + $0xe0] sm:$0xff]
    %v2657 = vld [vmem:[%s3 + $0xe8] sm:$0xff]
    %v2658 = vld [vmem:[%s3 + $0xf0] sm:$0xff]
    %v2659 = vld [vmem:[%s3 + $0xf8] sm:$0xff]
    %v2660 = vld [vmem:[%s3 + $0x100] sm:$0xff]
    %v2661 = vld [vmem:[%s3 + $0x108] sm:$0xff]
    %v2662 = vld [vmem:[%s3 + $0x110] sm:$0xff]
    %v2663 = vld [vmem:[%s3 + $0x118] sm:$0xff]
    %v2664 = vld [vmem:[%s3 + $0x120] sm:$0xff]
    %v2665 = vld [vmem:[%s3 + $0x128] sm:$0xff]
    %v2666 = vld [vmem:[%s3 + $0x130] sm:$0xff]
    %v2667 = vld [vmem:[%s3 + $0x138] sm:$0xff]
    %v2668 = vld [vmem:[%s3 + $0x140] sm:$0xff]
    %v2669 = vld [vmem:[%s3 + $0x148] sm:$0xff]
    %v2670 = vld [vmem:[%s3 + $0x150] sm:$0xff]
    %v2671 = vld [vmem:[%s3 + $0x158] sm:$0xff]
    %v2672 = vld [vmem:[%s3 + $0x160] sm:$0xff]
    %v2673 = vld [vmem:[%s3 + $0x168] sm:$0xff]
    %v2674 = vld [vmem:[%s3 + $0x170] sm:$0xff]
    %v2675 = vld [vmem:[%s3 + $0x178] sm:$0xff]
    %v2676 = vld [vmem:[%s3 + $0x180] sm:$0xff]
    %v2677 = vld [vmem:[%s3 + $0x188] sm:$0xff]
    %v2678 = vld [vmem:[%s3 + $0x190] sm:$0xff]
    %v2679 = vld [vmem:[%s3 + $0x198] sm:$0xff]
    %v2680 = vld [vmem:[%s3 + $0x1a0] sm:$0xff]
    %v2681 = vld [vmem:[%s3 + $0x1a8] sm:$0xff]
    %v2682 = vld [vmem:[%s3 + $0x1b0] sm:$0xff]
    %v2683 = vld [vmem:[%s3 + $0x1b8] sm:$0xff]
    %v2684 = vld [vmem:[%s3 + $0x1c0] sm:$0xff]
    %v2685 = vld [vmem:[%s3 + $0x1c8] sm:$0xff]
    %v2686 = vld [vmem:[%s3 + $0x1d0] sm:$0xff]
    %v2687 = vld [vmem:[%s3 + $0x1d8] sm:$0xff]
    %v2688 = vld [vmem:[%s3 + $0x1e0] sm:$0xff]
    %v2689 = vld [vmem:[%s3 + $0x1e8] sm:$0xff]
    %v2690 = vld [vmem:[%s3 + $0x1f0] sm:$0xff]
    %v2691 = vld [vmem:[%s3 + $0x1f8] sm:$0xff]
    %vm2740 = vcmask 1041409
    %v2741 = vsel %vm2740, %v2326, %v2298
    %vm2742 = vcmask 1042434
    %v2743 = vsel %vm2742, %v2354, %v2741
    %vm2744 = vcmask 1043459
    %v2745 = vsel %vm2744, %v2382, %v2743
    %vm2746 = vcmask 1044484
    %v2747 = vsel %vm2746, %v2410, %v2745
    %vm2748 = vcmask 1045509
    %v2749 = vsel %vm2748, %v2438, %v2747
    %vm2750 = vcmask 1046534
    %v2751 = vsel %vm2750, %v2466, %v2749
    %vm2752 = vcmask 1047559
    %v2753 = vsel %vm2752, %v2494, %v2751
    %v2754 = vsel %vm2740, %v2333, %v2305
    %v2755 = vsel %vm2742, %v2361, %v2754
    %v2756 = vsel %vm2744, %v2389, %v2755
    %v2757 = vsel %vm2746, %v2417, %v2756
    %v2758 = vsel %vm2748, %v2445, %v2757
    %v2759 = vsel %vm2750, %v2473, %v2758
    %v2760 = vsel %vm2752, %v2501, %v2759
    %v2761 = vsel %vm2740, %v2340, %v2312
    %v2762 = vsel %vm2742, %v2368, %v2761
    %v2763 = vsel %vm2744, %v2396, %v2762
    %v2764 = vsel %vm2746, %v2424, %v2763
    %v2765 = vsel %vm2748, %v2452, %v2764
    %v2766 = vsel %vm2750, %v2480, %v2765
    %v2767 = vsel %vm2752, %v2508, %v2766
    %v2768 = vsel %vm2740, %v2347, %v2319
    %v2769 = vsel %vm2742, %v2375, %v2768
    %v2770 = vsel %vm2744, %v2403, %v2769
    %v2771 = vsel %vm2746, %v2431, %v2770
    %v2772 = vsel %vm2748, %v2459, %v2771
    %v2773 = vsel %vm2750, %v2487, %v2772
    %v2774 = vsel %vm2752, %v2515, %v2773
    %v2775 = vsel %vm2740, %v2550, %v2522
    %v2776 = vsel %vm2742, %v2578, %v2775
    %v2777 = vsel %vm2744, %v2606, %v2776
    %v2778 = vsel %vm2740, %v2557, %v2529
    %v2779 = vsel %vm2742, %v2585, %v2778
    %v2780 = vsel %vm2744, %v2613, %v2779
    %v2781 = vsel %vm2740, %v2564, %v2536
    %v2782 = vsel %vm2742, %v2592, %v2781
    %v2783 = vsel %vm2744, %v2620, %v2782
    %v2784 = vsel %vm2740, %v2571, %v2543
    %v2785 = vsel %vm2742, %v2599, %v2784
    %v2786 = vsel %vm2744, %v2627, %v2785
    %2795 = vmatprep.subr.mxu0 0.0
    %2796 = vmatpush1.msra.mxu0 %v2628
    %2797 = vmatprep.subr.mxu0 0.0
    %2798 = vmatpush1.msra.mxu0 %v2629
    %2799 = vmatprep.subr.mxu0 0.0
    %2800 = vmatpush1.msra.mxu0 %v2630
    %2801 = vmatprep.subr.mxu0 0.0
    %2802 = vmatpush1.msra.mxu0 %v2631
    %2803 = vmatprep.subr.mxu0 0.0
    %2804 = vmatpush1.msra.mxu0 %v2632
    %2805 = vmatprep.subr.mxu0 0.0
    %2806 = vmatpush1.msra.mxu0 %v2633
    %2807 = vmatprep.subr.mxu0 0.0
    %2808 = vmatpush1.msra.mxu0 %v2634
    %2809 = vmatprep.subr.mxu0 0.0
    %2810 = vmatpush1.msra.mxu0 %v2635
    %2811 = vmatprep.subr.mxu0 0.0
    %2812 = vmatpush1.msra.mxu0 %v2636
    %2813 = vmatprep.subr.mxu0 0.0
    %2814 = vmatpush1.msra.mxu0 %v2637
    %2815 = vmatprep.subr.mxu0 0.0
    %2816 = vmatpush1.msra.mxu0 %v2638
    %2817 = vmatprep.subr.mxu0 0.0
    %2818 = vmatpush1.msra.mxu0 %v2639
    %2819 = vmatprep.subr.mxu0 0.0
    %2820 = vmatpush1.msra.mxu0 %v2640
    %2821 = vmatprep.subr.mxu0 0.0
    %2822 = vmatpush1.msra.mxu0 %v2641
    %2823 = vmatprep.subr.mxu0 0.0
    %2824 = vmatpush1.msra.mxu0 %v2642
    %2825 = vmatprep.subr.mxu0 0.0
    %2826 = vmatpush1.msra.mxu0 %v2643
    %2827 = vmatprep.subr.mxu0 0.0
    %2828 = vmatpush1.msra.mxu0 %v2644
    %2829 = vmatprep.subr.mxu0 0.0
    %2830 = vmatpush1.msra.mxu0 %v2645
    %2831 = vmatprep.subr.mxu0 0.0
    %2832 = vmatpush1.msra.mxu0 %v2646
    %2833 = vmatprep.subr.mxu0 0.0
    %2834 = vmatpush1.msra.mxu0 %v2647
    %2835 = vmatprep.subr.mxu0 0.0
    %2836 = vmatpush1.msra.mxu0 %v2648
    %2837 = vmatprep.subr.mxu0 0.0
    %2838 = vmatpush1.msra.mxu0 %v2649
    %2839 = vmatprep.subr.mxu0 0.0
    %2840 = vmatpush1.msra.mxu0 %v2650
    %2841 = vmatprep.subr.mxu0 0.0
    %2842 = vmatpush1.msra.mxu0 %v2651
    %2843 = vmatprep.subr.mxu0 0.0
    %2844 = vmatpush1.msra.mxu0 %v2652
    %2845 = vmatprep.subr.mxu0 0.0
    %2846 = vmatpush1.msra.mxu0 %v2653
    %2847 = vmatprep.subr.mxu0 0.0
    %2848 = vmatpush1.msra.mxu0 %v2654
    %2849 = vmatprep.subr.mxu0 0.0
    %2850 = vmatpush1.msra.mxu0 %v2655
    %2851 = vmatprep.subr.mxu0 0.0
    %2852 = vmatpush1.msra.mxu0 %v2656
    %2853 = vmatprep.subr.mxu0 0.0
    %2854 = vmatpush1.msra.mxu0 %v2657
    %2855 = vmatprep.subr.mxu0 0.0
    %2856 = vmatpush1.msra.mxu0 %v2658
    %2857 = vmatprep.subr.mxu0 0.0
    %2858 = vmatpush1.msra.mxu0 %v2659
    %2859 = vmatprep.mubr.f32.mxu0 %v2760
    %2860 = vmatmul.mubr.f32.gmra.mrb[0].mxu0 %v2753
    %v2861 = vpop.f32.mrb[0].mxu0
    %v2862 = vadd.f32 0.0, %v2861
    %v2863 = vpop.f32.mrb[0].mxu0
    %2864 = vmatprep.mubr.f32.mxu0 %v2780
    %2865 = vmatmul.mubr.f32.gmra.mrb[0].mxu0 %v2777
    %v2866 = vpop.f32.mrb[0].mxu0
    %v2867 = vadd.f32 0.0, %v2866
    %v2868 = vpop.f32.mrb[0].mxu0
    %2869 = vdwg.mxu0
    %2870 = vmatprep.subr.mxu0 0.0
    %2871 = vmatpush1.msra.mxu0 %v2660
    %2872 = vmatprep.subr.mxu0 0.0
    %2873 = vmatpush1.msra.mxu0 %v2661
    %2874 = vmatprep.subr.mxu0 0.0
    %2875 = vmatpush1.msra.mxu0 %v2662
    %2876 = vmatprep.subr.mxu0 0.0
    %2877 = vmatpush1.msra.mxu0 %v2663
    %2878 = vmatprep.subr.mxu0 0.0
    %2879 = vmatpush1.msra.mxu0 %v2664
    %2880 = vmatprep.subr.mxu0 0.0
    %2881 = vmatpush1.msra.mxu0 %v2665
    %2882 = vmatprep.subr.mxu0 0.0
    %2883 = vmatpush1.msra.mxu0 %v2666
    %2884 = vmatprep.subr.mxu0 0.0
    %2885 = vmatpush1.msra.mxu0 %v2667
    %2886 = vmatprep.subr.mxu0 0.0
    %2887 = vmatpush1.msra.mxu0 %v2668
    %2888 = vmatprep.subr.mxu0 0.0
    %2889 = vmatpush1.msra.mxu0 %v2669
    %2890 = vmatprep.subr.mxu0 0.0
    %2891 = vmatpush1.msra.mxu0 %v2670
    %2892 = vmatprep.subr.mxu0 0.0
    %2893 = vmatpush1.msra.mxu0 %v2671
    %2894 = vmatprep.subr.mxu0 0.0
    %2895 = vmatpush1.msra.mxu0 %v2672
    %2896 = vmatprep.subr.mxu0 0.0
    %2897 = vmatpush1.msra.mxu0 %v2673
    %2898 = vmatprep.subr.mxu0 0.0
    %2899 = vmatpush1.msra.mxu0 %v2674
    %2900 = vmatprep.subr.mxu0 0.0
    %2901 = vmatpush1.msra.mxu0 %v2675
    %2902 = vmatprep.subr.mxu0 0.0
    %2903 = vmatpush1.msra.mxu0 %v2676
    %2904 = vmatprep.subr.mxu0 0.0
    %2905 = vmatpush1.msra.mxu0 %v2677
    %2906 = vmatprep.subr.mxu0 0.0
    %2907 = vmatpush1.msra.mxu0 %v2678
    %2908 = vmatprep.subr.mxu0 0.0
    %2909 = vmatpush1.msra.mxu0 %v2679
    %2910 = vmatprep.subr.mxu0 0.0
    %2911 = vmatpush1.msra.mxu0 %v2680
    %2912 = vmatprep.subr.mxu0 0.0
    %2913 = vmatpush1.msra.mxu0 %v2681
    %2914 = vmatprep.subr.mxu0 0.0
    %2915 = vmatpush1.msra.mxu0 %v2682
    %2916 = vmatprep.subr.mxu0 0.0
    %2917 = vmatpush1.msra.mxu0 %v2683
    %2918 = vmatprep.subr.mxu0 0.0
    %2919 = vmatpush1.msra.mxu0 %v2684
    %2920 = vmatprep.subr.mxu0 0.0
    %2921 = vmatpush1.msra.mxu0 %v2685
    %2922 = vmatprep.subr.mxu0 0.0
    %2923 = vmatpush1.msra.mxu0 %v2686
    %2924 = vmatprep.subr.mxu0 0.0
    %2925 = vmatpush1.msra.mxu0 %v2687
    %2926 = vmatprep.subr.mxu0 0.0
    %2927 = vmatpush1.msra.mxu0 %v2688
    %2928 = vmatprep.subr.mxu0 0.0
    %2929 = vmatpush1.msra.mxu0 %v2689
    %2930 = vmatprep.subr.mxu0 0.0
    %2931 = vmatpush1.msra.mxu0 %v2690
    %2932 = vmatprep.subr.mxu0 0.0
    %2933 = vmatpush1.msra.mxu0 %v2691
    %2934 = vmatprep.mubr.f32.mxu0 %v2774
    %2935 = vmatmul.mubr.f32.gmra.mrb[0].mxu0 %v2767
    %v2936 = vpop.f32.mrb[0].mxu0
    %v2937 = vadd.f32 %v2862, %v2936
    %v2938 = vpop.f32.mrb[0].mxu0
    %2939 = vmatprep.mubr.f32.mxu0 %v2786
    %2940 = vmatmul.mubr.f32.gmra.mrb[0].mxu0 %v2783
    %v2941 = vpop.f32.mrb[0].mxu0
    %v2942 = vadd.f32 %v2867, %v2941
    %v2943 = vpop.f32.mrb[0].mxu0
    %2944 = vdwg.mxu0
    %v2945 = vld [vmem:[%s4] sm:$0xff]
    %v2946 = vld [vmem:[%s4 + $0x8] sm:$0xff]
    %v2947 = vld [vmem:[%s4 + $0x10] sm:$0xff]
    %v2948 = vld [vmem:[%s4 + $0x18] sm:$0xff]
    %v2949 = vld [vmem:[%s4 + $0x20] sm:$0xff]
    %v2950 = vld [vmem:[%s4 + $0x28] sm:$0xff]
    %v2951 = vld [vmem:[%s4 + $0x30] sm:$0xff]
    %v2952 = vld [vmem:[%s4 + $0x38] sm:$0xff]
    %vm2953 = vcmask 261120
    %v2955 = vsel %vm2953, %v2937, 0
    %v2958 = vsel %vm2953, %v2942, 0
    %2960 = vmatprep.subr.mxu0 %v2946
    %2961 = vmatpush1.msra.mxu0 %v2945
    %2962 = vmatprep.subr.mxu0 %v2948
    %2963 = vmatpush1.msra.mxu0 %v2947
    %2964 = vmatprep.subr.mxu0 %v2950
    %2965 = vmatpush1.msra.mxu0 %v2949
    %2966 = vmatprep.subr.mxu0 %v2952
    %2967 = vmatpush1.msra.mxu0 %v2951
    %2968 = vmatprep.subr.mxu0 0.0
    %2969 = vmatpush1.msra.mxu0 0.0
    %2970 = vmatprep.subr.mxu0 0.0
    %2971 = vmatpush1.msra.mxu0 0.0
    %2972 = vmatprep.subr.mxu0 0.0
    %2973 = vmatpush1.msra.mxu0 0.0
    %2974 = vmatprep.subr.mxu0 0.0
    %2975 = vmatpush1.msra.mxu0 0.0
    %2976 = vmatprep.subr.mxu0 0.0
    %2977 = vmatpush1.msra.mxu0 0.0
    %2978 = vmatprep.subr.mxu0 0.0
    %2979 = vmatpush1.msra.mxu0 0.0
    %2980 = vmatprep.subr.mxu0 0.0
    %2981 = vmatpush1.msra.mxu0 0.0
    %2982 = vmatprep.subr.mxu0 0.0
    %2983 = vmatpush1.msra.mxu0 0.0
    %2984 = vmatprep.subr.mxu0 0.0
    %2985 = vmatpush1.msra.mxu0 0.0
    %2986 = vmatprep.subr.mxu0 0.0
    %2987 = vmatpush1.msra.mxu0 0.0
    %2988 = vmatprep.subr.mxu0 0.0
    %2989 = vmatpush1.msra.mxu0 0.0
    %2990 = vmatprep.subr.mxu0 0.0
    %2991 = vmatpush1.msra.mxu0 0.0
    %2992 = vmatprep.subr.mxu0 0.0
    %2993 = vmatpush1.msra.mxu0 0.0
    %2994 = vmatprep.subr.mxu0 0.0
    %2995 = vmatpush1.msra.mxu0 0.0
    %2996 = vmatprep.subr.mxu0 0.0
    %2997 = vmatpush1.msra.mxu0 0.0
    %2998 = vmatprep.subr.mxu0 0.0
    %2999 = vmatpush1.msra.mxu0 0.0
    %3000 = vmatprep.subr.mxu0 0.0
    %3001 = vmatpush1.msra.mxu0 0.0
    %3002 = vmatprep.subr.mxu0 0.0
    %3003 = vmatpush1.msra.mxu0 0.0
    %3004 = vmatprep.subr.mxu0 0.0
    %3005 = vmatpush1.msra.mxu0 0.0
    %3006 = vmatprep.subr.mxu0 0.0
    %3007 = vmatpush1.msra.mxu0 0.0
    %3008 = vmatprep.subr.mxu0 0.0
    %3009 = vmatpush1.msra.mxu0 0.0
    %3010 = vmatprep.subr.mxu0 0.0
    %3011 = vmatpush1.msra.mxu0 0.0
    %3012 = vmatprep.subr.mxu0 0.0
    %3013 = vmatpush1.msra.mxu0 0.0
    %3014 = vmatprep.subr.mxu0 0.0
    %3015 = vmatpush1.msra.mxu0 0.0
    %3016 = vmatprep.subr.mxu0 0.0
    %3017 = vmatpush1.msra.mxu0 0.0
    %3018 = vmatprep.subr.mxu0 0.0
    %3019 = vmatpush1.msra.mxu0 0.0
    %3020 = vmatprep.subr.mxu0 0.0
    %3021 = vmatpush1.msra.mxu0 0.0
    %3022 = vmatprep.subr.mxu0 0.0
    %3023 = vmatpush1.msra.mxu0 0.0
    %3024 = vmatprep.mubr.f32.mxu0 0.0
    %3025 = vmatmul.mubr.f32.gmra.mrb[0].mxu0 %v2955
    %v3026 = vpop.f32.mrb[0].mxu0
    %v3027 = vadd.f32 0.0, %v3026
    %v3028 = vpop.f32.mrb[0].mxu0
    %3029 = vmatprep.mubr.f32.mxu0 0.0
    %3030 = vmatmul.mubr.f32.gmra.mrb[0].mxu0 %v2958
    %v3031 = vpop.f32.mrb[0].mxu0
    %v3032 = vpop.f32.mrb[0].mxu0
    %v3033 = vadd.f32 0.0, %v3032
    %3034 = vdwg.mxu0
    %v3035 = vld [vmem:[%s6] sm:$0x1]
    %v3037 = vlaneseq
    %v3038 = vshrl.u32 %v3037, 7
    %v3039 = vsub.s32 0, %v3038
    %v3040 = vrot.slane %v3035, %v3039
    %v3042 = vadd.f32 %v3027, %v3040
    %v3043 = vld [vmem:[%s8] sm:$0x1]
    %v3045 = vlaneseq
    %v3046 = vshrl.u32 %v3045, 7
    %v3047 = vsub.s32 0, %v3046
    %v3048 = vrot.slane %v3043, %v3047
    %v3050 = vadd.f32 %v3033, %v3048
    %v3051 = vld [vmem:[%s5] sm:$0xff]
    %v3052 = vld [vmem:[%s5 + $0x8] sm:$0xff]
    %v3053 = vld [vmem:[%s5 + $0x10] sm:$0xff]
    %v3054 = vld [vmem:[%s5 + $0x18] sm:$0xff]
    %v3056 = vsel %vm2953, 0.0, 0
    %3058 = vmatprep.subr.mxu0 0.0
    %3059 = vmatpush1.msra.mxu0 %v3051
    %3060 = vmatprep.subr.mxu0 0.0
    %3061 = vmatpush1.msra.mxu0 %v3052
    %3062 = vmatprep.subr.mxu0 0.0
    %3063 = vmatpush1.msra.mxu0 %v3053
    %3064 = vmatprep.subr.mxu0 0.0
    %3065 = vmatpush1.msra.mxu0 %v3054
    %3066 = vmatprep.subr.mxu0 0.0
    %3067 = vmatpush1.msra.mxu0 0.0
    %3068 = vmatprep.subr.mxu0 0.0
    %3069 = vmatpush1.msra.mxu0 0.0
    %3070 = vmatprep.subr.mxu0 0.0
    %3071 = vmatpush1.msra.mxu0 0.0
    %3072 = vmatprep.subr.mxu0 0.0
    %3073 = vmatpush1.msra.mxu0 0.0
    %3074 = vmatprep.subr.mxu0 0.0
    %3075 = vmatpush1.msra.mxu0 0.0
    %3076 = vmatprep.subr.mxu0 0.0
    %3077 = vmatpush1.msra.mxu0 0.0
    %3078 = vmatprep.subr.mxu0 0.0
    %3079 = vmatpush1.msra.mxu0 0.0
    %3080 = vmatprep.subr.mxu0 0.0
    %3081 = vmatpush1.msra.mxu0 0.0
    %3082 = vmatprep.subr.mxu0 0.0
    %3083 = vmatpush1.msra.mxu0 0.0
    %3084 = vmatprep.subr.mxu0 0.0
    %3085 = vmatpush1.msra.mxu0 0.0
    %3086 = vmatprep.subr.mxu0 0.0
    %3087 = vmatpush1.msra.mxu0 0.0
    %3088 = vmatprep.subr.mxu0 0.0
    %3089 = vmatpush1.msra.mxu0 0.0
    %3090 = vmatprep.subr.mxu0 0.0
    %3091 = vmatpush1.msra.mxu0 0.0
    %3092 = vmatprep.subr.mxu0 0.0
    %3093 = vmatpush1.msra.mxu0 0.0
    %3094 = vmatprep.subr.mxu0 0.0
    %3095 = vmatpush1.msra.mxu0 0.0
    %3096 = vmatprep.subr.mxu0 0.0
    %3097 = vmatpush1.msra.mxu0 0.0
    %3098 = vmatprep.subr.mxu0 0.0
    %3099 = vmatpush1.msra.mxu0 0.0
    %3100 = vmatprep.subr.mxu0 0.0
    %3101 = vmatpush1.msra.mxu0 0.0
    %3102 = vmatprep.subr.mxu0 0.0
    %3103 = vmatpush1.msra.mxu0 0.0
    %3104 = vmatprep.subr.mxu0 0.0
    %3105 = vmatpush1.msra.mxu0 0.0
    %3106 = vmatprep.subr.mxu0 0.0
    %3107 = vmatpush1.msra.mxu0 0.0
    %3108 = vmatprep.subr.mxu0 0.0
    %3109 = vmatpush1.msra.mxu0 0.0
    %3110 = vmatprep.subr.mxu0 0.0
    %3111 = vmatpush1.msra.mxu0 0.0
    %3112 = vmatprep.subr.mxu0 0.0
    %3113 = vmatpush1.msra.mxu0 0.0
    %3114 = vmatprep.subr.mxu0 0.0
    %3115 = vmatpush1.msra.mxu0 0.0
    %3116 = vmatprep.subr.mxu0 0.0
    %3117 = vmatpush1.msra.mxu0 0.0
    %3118 = vmatprep.subr.mxu0 0.0
    %3119 = vmatpush1.msra.mxu0 0.0
    %3120 = vmatprep.subr.mxu0 0.0
    %3121 = vmatpush1.msra.mxu0 0.0
    %3122 = vmatprep.mubr.f32.mxu0 0.0
    %3123 = vmatmul.mubr.f32.gmra.mrb[0].mxu0 %v3056
    %v3124 = vpop.f32.mrb[0].mxu0
    %v3125 = vadd.f32 0.0, %v3124
    %v3126 = vpop.f32.mrb[0].mxu0
    %3127 = vdwg.mxu0
    %v3128 = vadd.f32 %v3042, %v3125
    %v3129 = vmul.f32 %v3128, 0.5
    %v3130 = vtanh.pop %v3129
    %v3131 = vmul.f32 %v3130, 0.5
    %v3132 = vadd.f32 %v3131, 0.5
    %v3133 = vtanh.pop %v3128
    %v3134 = vmul.f32 %v3132, 0.0
    %3136 = vrot.lane.b32.xlu0 %v3133, 64
    %v3137 = vpop.permute.xlu0 %3136
    %v3139 = vmul.f32 %v3132, %v3137
    %3141 = vrot.lane.b32.xlu0 %v3139, 32
    %v3142 = vpop.permute.xlu0 %3141
    %v3144 = vadd.f32 %v3134, %v3142
    %v3145 = vtanh.pop %v3144
    %3147 = vrot.lane.b32.xlu0 %v3145, 64
    %v3148 = vpop.permute.xlu0 %3147
    %v3150 = vmul.f32 %v3132, %v3148
    %v3151 = vmul.f32 %v3150, 2.0
    %3153 = vrot.lane.b32.xlu0 %v3151, 32
    %v3154 = vpop.permute.xlu0 %3153
    %v3156 = vadd.f32 %v2937, %v3154
    %3158 = vrot.lane.b32.xlu0 %v3150, 32
    %v3159 = vpop.permute.xlu0 %3158
    %v3160 = vsel %vm2953, %v3159, 0
    %3162 = vmatprep.subr.mxu0 0.0
    %3163 = vmatpush1.msra.mxu0 %v3051
    %3164 = vmatprep.subr.mxu0 0.0
    %3165 = vmatpush1.msra.mxu0 %v3052
    %3166 = vmatprep.subr.mxu0 0.0
    %3167 = vmatpush1.msra.mxu0 %v3053
    %3168 = vmatprep.subr.mxu0 0.0
    %3169 = vmatpush1.msra.mxu0 %v3054
    %3170 = vmatprep.subr.mxu0 0.0
    %3171 = vmatpush1.msra.mxu0 0.0
    %3172 = vmatprep.subr.mxu0 0.0
    %3173 = vmatpush1.msra.mxu0 0.0
    %3174 = vmatprep.subr.mxu0 0.0
    %3175 = vmatpush1.msra.mxu0 0.0
    %3176 = vmatprep.subr.mxu0 0.0
    %3177 = vmatpush1.msra.mxu0 0.0
    %3178 = vmatprep.subr.mxu0 0.0
    %3179 = vmatpush1.msra.mxu0 0.0
    %3180 = vmatprep.subr.mxu0 0.0
    %3181 = vmatpush1.msra.mxu0 0.0
    %3182 = vmatprep.subr.mxu0 0.0
    %3183 = vmatpush1.msra.mxu0 0.0
    %3184 = vmatprep.subr.mxu0 0.0
    %3185 = vmatpush1.msra.mxu0 0.0
    %3186 = vmatprep.subr.mxu0 0.0
    %3187 = vmatpush1.msra.mxu0 0.0
    %3188 = vmatprep.subr.mxu0 0.0
    %3189 = vmatpush1.msra.mxu0 0.0
    %3190 = vmatprep.subr.mxu0 0.0
    %3191 = vmatpush1.msra.mxu0 0.0
    %3192 = vmatprep.subr.mxu0 0.0
    %3193 = vmatpush1.msra.mxu0 0.0
    %3194 = vmatprep.subr.mxu0 0.0
    %3195 = vmatpush1.msra.mxu0 0.0
    %3196 = vmatprep.subr.mxu0 0.0
    %3197 = vmatpush1.msra.mxu0 0.0
    %3198 = vmatprep.subr.mxu0 0.0
    %3199 = vmatpush1.msra.mxu0 0.0
    %3200 = vmatprep.subr.mxu0 0.0
    %3201 = vmatpush1.msra.mxu0 0.0
    %3202 = vmatprep.subr.mxu0 0.0
    %3203 = vmatpush1.msra.mxu0 0.0
    %3204 = vmatprep.subr.mxu0 0.0
    %3205 = vmatpush1.msra.mxu0 0.0
    %3206 = vmatprep.subr.mxu0 0.0
    %3207 = vmatpush1.msra.mxu0 0.0
    %3208 = vmatprep.subr.mxu0 0.0
    %3209 = vmatpush1.msra.mxu0 0.0
    %3210 = vmatprep.subr.mxu0 0.0
    %3211 = vmatpush1.msra.mxu0 0.0
    %3212 = vmatprep.subr.mxu0 0.0
    %3213 = vmatpush1.msra.mxu0 0.0
    %3214 = vmatprep.subr.mxu0 0.0
    %3215 = vmatpush1.msra.mxu0 0.0
    %3216 = vmatprep.subr.mxu0 0.0
    %3217 = vmatpush1.msra.mxu0 0.0
    %3218 = vmatprep.subr.mxu0 0.0
    %3219 = vmatpush1.msra.mxu0 0.0
    %3220 = vmatprep.subr.mxu0 0.0
    %3221 = vmatpush1.msra.mxu0 0.0
    %3222 = vmatprep.subr.mxu0 0.0
    %3223 = vmatpush1.msra.mxu0 0.0
    %3224 = vmatprep.subr.mxu0 0.0
    %3225 = vmatpush1.msra.mxu0 0.0
    %3226 = vmatprep.mubr.f32.mxu0 0.0
    %3227 = vmatmul.mubr.f32.gmra.mrb[0].mxu0 %v3160
    %v3228 = vpop.f32.mrb[0].mxu0
    %v3229 = vadd.f32 0.0, %v3228
    %v3230 = vpop.f32.mrb[0].mxu0
    %3231 = vdwg.mxu0
    %v3233 = vrot.slane %v3229, 7
    %v3235 = vadd.f32 %v3042, %v3233
    %v3236 = vmul.f32 %v3235, 0.5
    %v3237 = vtanh.pop %v3236
    %v3238 = vmul.f32 %v3237, 0.5
    %v3239 = vadd.f32 %v3238, 0.5
    %v3240 = vtanh.pop %v3235
    %v3242 = vrot.slane %v3144, 7
    %v3244 = vmul.f32 %v3239, %v3242
    %3246 = vrot.lane.b32.xlu0 %v3240, 64
    %v3247 = vpop.permute.xlu0 %3246
    %v3249 = vmul.f32 %v3239, %v3247
    %3251 = vrot.lane.b32.xlu0 %v3249, 32
    %v3252 = vpop.permute.xlu0 %3251
    %v3254 = vadd.f32 %v3244, %v3252
    %v3255 = vtanh.pop %v3254
    %3257 = vrot.lane.b32.xlu0 %v3255, 64
    %v3258 = vpop.permute.xlu0 %3257
    %v3260 = vmul.f32 %v3239, %v3258
    %v3261 = vmul.f32 %v3260, 2.0
    %3263 = vrot.lane.b32.xlu0 %v3261, 32
    %v3264 = vpop.permute.xlu0 %3263
    %v3266 = vadd.f32 %v2937, %v3264
    %v3268 = vrot.slane %v3260, 1
    %3269 = vrot.lane.b32.xlu0 %v3268, 32
    %v3270 = vpop.permute.xlu0 %3269
    %v3271 = vsel %vm2953, %v3270, 0
    %3273 = vmatprep.subr.mxu0 0.0
    %3274 = vmatpush1.msra.mxu0 %v3051
    %3275 = vmatprep.subr.mxu0 0.0
    %3276 = vmatpush1.msra.mxu0 %v3052
    %3277 = vmatprep.subr.mxu0 0.0
    %3278 = vmatpush1.msra.mxu0 %v3053
    %3279 = vmatprep.subr.mxu0 0.0
    %3280 = vmatpush1.msra.mxu0 %v3054
    %3281 = vmatprep.subr.mxu0 0.0
    %3282 = vmatpush1.msra.mxu0 0.0
    %3283 = vmatprep.subr.mxu0 0.0
    %3284 = vmatpush1.msra.mxu0 0.0
    %3285 = vmatprep.subr.mxu0 0.0
    %3286 = vmatpush1.msra.mxu0 0.0
    %3287 = vmatprep.subr.mxu0 0.0
    %3288 = vmatpush1.msra.mxu0 0.0
    %3289 = vmatprep.subr.mxu0 0.0
    %3290 = vmatpush1.msra.mxu0 0.0
    %3291 = vmatprep.subr.mxu0 0.0
    %3292 = vmatpush1.msra.mxu0 0.0
    %3293 = vmatprep.subr.mxu0 0.0
    %3294 = vmatpush1.msra.mxu0 0.0
    %3295 = vmatprep.subr.mxu0 0.0
    %3296 = vmatpush1.msra.mxu0 0.0
    %3297 = vmatprep.subr.mxu0 0.0
    %3298 = vmatpush1.msra.mxu0 0.0
    %3299 = vmatprep.subr.mxu0 0.0
    %3300 = vmatpush1.msra.mxu0 0.0
    %3301 = vmatprep.subr.mxu0 0.0
    %3302 = vmatpush1.msra.mxu0 0.0
    %3303 = vmatprep.subr.mxu0 0.0
    %3304 = vmatpush1.msra.mxu0 0.0
    %3305 = vmatprep.subr.mxu0 0.0
    %3306 = vmatpush1.msra.mxu0 0.0
    %3307 = vmatprep.subr.mxu0 0.0
    %3308 = vmatpush1.msra.mxu0 0.0
    %3309 = vmatprep.subr.mxu0 0.0
    %3310 = vmatpush1.msra.mxu0 0.0
    %3311 = vmatprep.subr.mxu0 0.0
    %3312 = vmatpush1.msra.mxu0 0.0
    %3313 = vmatprep.subr.mxu0 0.0
    %3314 = vmatpush1.msra.mxu0 0.0
    %3315 = vmatprep.subr.mxu0 0.0
    %3316 = vmatpush1.msra.mxu0 0.0
    %3317 = vmatprep.subr.mxu0 0.0
    %3318 = vmatpush1.msra.mxu0 0.0
    %3319 = vmatprep.subr.mxu0 0.0
    %3320 = vmatpush1.msra.mxu0 0.0
    %3321 = vmatprep.subr.mxu0 0.0
    %3322 = vmatpush1.msra.mxu0 0.0
    %3323 = vmatprep.subr.mxu0 0.0
    %3324 = vmatpush1.msra.mxu0 0.0
    %3325 = vmatprep.subr.mxu0 0.0
    %3326 = vmatpush1.msra.mxu0 0.0
    %3327 = vmatprep.subr.mxu0 0.0
    %3328 = vmatpush1.msra.mxu0 0.0
    %3329 = vmatprep.subr.mxu0 0.0
    %3330 = vmatpush1.msra.mxu0 0.0
    %3331 = vmatprep.subr.mxu0 0.0
    %3332 = vmatpush1.msra.mxu0 0.0
    %3333 = vmatprep.subr.mxu0 0.0
    %3334 = vmatpush1.msra.mxu0 0.0
    %3335 = vmatprep.subr.mxu0 0.0
    %3336 = vmatpush1.msra.mxu0 0.0
    %3337 = vmatprep.mubr.f32.mxu0 0.0
    %3338 = vmatmul.mubr.f32.gmra.mrb[0].mxu0 %v3271
    %v3339 = vpop.f32.mrb[0].mxu0
    %v3340 = vadd.f32 0.0, %v3339
    %v3341 = vpop.f32.mrb[0].mxu0
    %3342 = vdwg.mxu0
    %v3344 = vrot.slane %v3340, 6
    %v3346 = vadd.f32 %v3042, %v3344
    %v3347 = vmul.f32 %v3346, 0.5
    %v3348 = vtanh.pop %v3347
    %v3349 = vmul.f32 %v3348, 0.5
    %v3350 = vadd.f32 %v3349, 0.5
    %v3351 = vtanh.pop %v3346
    %v3353 = vrot.slane %v3254, 7
    %v3355 = vmul.f32 %v3350, %v3353
    %3357 = vrot.lane.b32.xlu0 %v3351, 64
    %v3358 = vpop.permute.xlu0 %3357
    %v3360 = vmul.f32 %v3350, %v3358
    %3362 = vrot.lane.b32.xlu0 %v3360, 32
    %v3363 = vpop.permute.xlu0 %3362
    %v3365 = vadd.f32 %v3355, %v3363
    %v3366 = vtanh.pop %v3365
    %3368 = vrot.lane.b32.xlu0 %v3366, 64
    %v3369 = vpop.permute.xlu0 %3368
    %v3371 = vmul.f32 %v3350, %v3369
    %v3372 = vmul.f32 %v3371, 2.0
    %3374 = vrot.lane.b32.xlu0 %v3372, 32
    %v3375 = vpop.permute.xlu0 %3374
    %v3377 = vadd.f32 %v2937, %v3375
    %v3379 = vrot.slane %v3371, 2
    %3380 = vrot.lane.b32.xlu0 %v3379, 32
    %v3381 = vpop.permute.xlu0 %3380
    %v3382 = vsel %vm2953, %v3381, 0
    %3384 = vmatprep.subr.mxu0 0.0
    %3385 = vmatpush1.msra.mxu0 %v3051
    %3386 = vmatprep.subr.mxu0 0.0
    %3387 = vmatpush1.msra.mxu0 %v3052
    %3388 = vmatprep.subr.mxu0 0.0
    %3389 = vmatpush1.msra.mxu0 %v3053
    %3390 = vmatprep.subr.mxu0 0.0
    %3391 = vmatpush1.msra.mxu0 %v3054
    %3392 = vmatprep.subr.mxu0 0.0
    %3393 = vmatpush1.msra.mxu0 0.0
    %3394 = vmatprep.subr.mxu0 0.0
    %3395 = vmatpush1.msra.mxu0 0.0
    %3396 = vmatprep.subr.mxu0 0.0
    %3397 = vmatpush1.msra.mxu0 0.0
    %3398 = vmatprep.subr.mxu0 0.0
    %3399 = vmatpush1.msra.mxu0 0.0
    %3400 = vmatprep.subr.mxu0 0.0
    %3401 = vmatpush1.msra.mxu0 0.0
    %3402 = vmatprep.subr.mxu0 0.0
    %3403 = vmatpush1.msra.mxu0 0.0
    %3404 = vmatprep.subr.mxu0 0.0
    %3405 = vmatpush1.msra.mxu0 0.0
    %3406 = vmatprep.subr.mxu0 0.0
    %3407 = vmatpush1.msra.mxu0 0.0
    %3408 = vmatprep.subr.mxu0 0.0
    %3409 = vmatpush1.msra.mxu0 0.0
    %3410 = vmatprep.subr.mxu0 0.0
    %3411 = vmatpush1.msra.mxu0 0.0
    %3412 = vmatprep.subr.mxu0 0.0
    %3413 = vmatpush1.msra.mxu0 0.0
    %3414 = vmatprep.subr.mxu0 0.0
    %3415 = vmatpush1.msra.mxu0 0.0
    %3416 = vmatprep.subr.mxu0 0.0
    %3417 = vmatpush1.msra.mxu0 0.0
    %3418 = vmatprep.subr.mxu0 0.0
    %3419 = vmatpush1.msra.mxu0 0.0
    %3420 = vmatprep.subr.mxu0 0.0
    %3421 = vmatpush1.msra.mxu0 0.0
    %3422 = vmatprep.subr.mxu0 0.0
    %3423 = vmatpush1.msra.mxu0 0.0
    %3424 = vmatprep.subr.mxu0 0.0
    %3425 = vmatpush1.msra.mxu0 0.0
    %3426 = vmatprep.subr.mxu0 0.0
    %3427 = vmatpush1.msra.mxu0 0.0
    %3428 = vmatprep.subr.mxu0 0.0
    %3429 = vmatpush1.msra.mxu0 0.0
    %3430 = vmatprep.subr.mxu0 0.0
    %3431 = vmatpush1.msra.mxu0 0.0
    %3432 = vmatprep.subr.mxu0 0.0
    %3433 = vmatpush1.msra.mxu0 0.0
    %3434 = vmatprep.subr.mxu0 0.0
    %3435 = vmatpush1.msra.mxu0 0.0
    %3436 = vmatprep.subr.mxu0 0.0
    %3437 = vmatpush1.msra.mxu0 0.0
    %3438 = vmatprep.subr.mxu0 0.0
    %3439 = vmatpush1.msra.mxu0 0.0
    %3440 = vmatprep.subr.mxu0 0.0
    %3441 = vmatpush1.msra.mxu0 0.0
    %3442 = vmatprep.subr.mxu0 0.0
    %3443 = vmatpush1.msra.mxu0 0.0
    %3444 = vmatprep.subr.mxu0 0.0
    %3445 = vmatpush1.msra.mxu0 0.0
    %3446 = vmatprep.subr.mxu0 0.0
    %3447 = vmatpush1.msra.mxu0 0.0
    %3448 = vmatprep.mubr.f32.mxu0 0.0
    %3449 = vmatmul.mubr.f32.gmra.mrb[0].mxu0 %v3382
    %v3450 = vpop.f32.mrb[0].mxu0
    %v3451 = vadd.f32 0.0, %v3450
    %v3452 = vpop.f32.mrb[0].mxu0
    %3453 = vdwg.mxu0
    %v3455 = vrot.slane %v3451, 5
    %v3457 = vadd.f32 %v3042, %v3455
    %v3458 = vmul.f32 %v3457, 0.5
    %v3459 = vtanh.pop %v3458
    %v3460 = vmul.f32 %v3459, 0.5
    %v3461 = vadd.f32 %v3460, 0.5
    %v3462 = vtanh.pop %v3457
    %v3464 = vrot.slane %v3365, 7
    %v3466 = vmul.f32 %v3461, %v3464
    %3468 = vrot.lane.b32.xlu0 %v3462, 64
    %v3469 = vpop.permute.xlu0 %3468
    %v3471 = vmul.f32 %v3461, %v3469
    %3473 = vrot.lane.b32.xlu0 %v3471, 32
    %v3474 = vpop.permute.xlu0 %3473
    %v3476 = vadd.f32 %v3466, %v3474
    %v3477 = vtanh.pop %v3476
    %3479 = vrot.lane.b32.xlu0 %v3477, 64
    %v3480 = vpop.permute.xlu0 %3479
    %v3482 = vmul.f32 %v3461, %v3480
    %v3483 = vmul.f32 %v3482, 2.0
    %3485 = vrot.lane.b32.xlu0 %v3483, 32
    %v3486 = vpop.permute.xlu0 %3485
    %v3488 = vadd.f32 %v2937, %v3486
    %v3490 = vrot.slane %v3482, 3
    %3491 = vrot.lane.b32.xlu0 %v3490, 32
    %v3492 = vpop.permute.xlu0 %3491
    %v3493 = vsel %vm2953, %v3492, 0
    %3495 = vmatprep.subr.mxu0 0.0
    %3496 = vmatpush1.msra.mxu0 %v3051
    %3497 = vmatprep.subr.mxu0 0.0
    %3498 = vmatpush1.msra.mxu0 %v3052
    %3499 = vmatprep.subr.mxu0 0.0
    %3500 = vmatpush1.msra.mxu0 %v3053
    %3501 = vmatprep.subr.mxu0 0.0
    %3502 = vmatpush1.msra.mxu0 %v3054
    %3503 = vmatprep.subr.mxu0 0.0
    %3504 = vmatpush1.msra.mxu0 0.0
    %3505 = vmatprep.subr.mxu0 0.0
    %3506 = vmatpush1.msra.mxu0 0.0
    %3507 = vmatprep.subr.mxu0 0.0
    %3508 = vmatpush1.msra.mxu0 0.0
    %3509 = vmatprep.subr.mxu0 0.0
    %3510 = vmatpush1.msra.mxu0 0.0
    %3511 = vmatprep.subr.mxu0 0.0
    %3512 = vmatpush1.msra.mxu0 0.0
    %3513 = vmatprep.subr.mxu0 0.0
    %3514 = vmatpush1.msra.mxu0 0.0
    %3515 = vmatprep.subr.mxu0 0.0
    %3516 = vmatpush1.msra.mxu0 0.0
    %3517 = vmatprep.subr.mxu0 0.0
    %3518 = vmatpush1.msra.mxu0 0.0
    %3519 = vmatprep.subr.mxu0 0.0
    %3520 = vmatpush1.msra.mxu0 0.0
    %3521 = vmatprep.subr.mxu0 0.0
    %3522 = vmatpush1.msra.mxu0 0.0
    %3523 = vmatprep.subr.mxu0 0.0
    %3524 = vmatpush1.msra.mxu0 0.0
    %3525 = vmatprep.subr.mxu0 0.0
    %3526 = vmatpush1.msra.mxu0 0.0
    %3527 = vmatprep.subr.mxu0 0.0
    %3528 = vmatpush1.msra.mxu0 0.0
    %3529 = vmatprep.subr.mxu0 0.0
    %3530 = vmatpush1.msra.mxu0 0.0
    %3531 = vmatprep.subr.mxu0 0.0
    %3532 = vmatpush1.msra.mxu0 0.0
    %3533 = vmatprep.subr.mxu0 0.0
    %3534 = vmatpush1.msra.mxu0 0.0
    %3535 = vmatprep.subr.mxu0 0.0
    %3536 = vmatpush1.msra.mxu0 0.0
    %3537 = vmatprep.subr.mxu0 0.0
    %3538 = vmatpush1.msra.mxu0 0.0
    %3539 = vmatprep.subr.mxu0 0.0
    %3540 = vmatpush1.msra.mxu0 0.0
    %3541 = vmatprep.subr.mxu0 0.0
    %3542 = vmatpush1.msra.mxu0 0.0
    %3543 = vmatprep.subr.mxu0 0.0
    %3544 = vmatpush1.msra.mxu0 0.0
    %3545 = vmatprep.subr.mxu0 0.0
    %3546 = vmatpush1.msra.mxu0 0.0
    %3547 = vmatprep.subr.mxu0 0.0
    %3548 = vmatpush1.msra.mxu0 0.0
    %3549 = vmatprep.subr.mxu0 0.0
    %3550 = vmatpush1.msra.mxu0 0.0
    %3551 = vmatprep.subr.mxu0 0.0
    %3552 = vmatpush1.msra.mxu0 0.0
    %3553 = vmatprep.subr.mxu0 0.0
    %3554 = vmatpush1.msra.mxu0 0.0
    %3555 = vmatprep.subr.mxu0 0.0
    %3556 = vmatpush1.msra.mxu0 0.0
    %3557 = vmatprep.subr.mxu0 0.0
    %3558 = vmatpush1.msra.mxu0 0.0
    %3559 = vmatprep.mubr.f32.mxu0 0.0
    %3560 = vmatmul.mubr.f32.gmra.mrb[0].mxu0 %v3493
    %v3561 = vpop.f32.mrb[0].mxu0
    %v3562 = vadd.f32 0.0, %v3561
    %v3563 = vpop.f32.mrb[0].mxu0
    %3564 = vdwg.mxu0
    %v3566 = vrot.slane %v3562, 4
    %v3568 = vadd.f32 %v3042, %v3566
    %v3569 = vmul.f32 %v3568, 0.5
    %v3570 = vtanh.pop %v3569
    %v3571 = vmul.f32 %v3570, 0.5
    %v3572 = vadd.f32 %v3571, 0.5
    %v3573 = vtanh.pop %v3568
    %v3575 = vrot.slane %v3476, 7
    %v3577 = vmul.f32 %v3572, %v3575
    %3579 = vrot.lane.b32.xlu0 %v3573, 64
    %v3580 = vpop.permute.xlu0 %3579
    %v3582 = vmul.f32 %v3572, %v3580
    %3584 = vrot.lane.b32.xlu0 %v3582, 32
    %v3585 = vpop.permute.xlu0 %3584
    %v3587 = vadd.f32 %v3577, %v3585
    %v3588 = vtanh.pop %v3587
    %3590 = vrot.lane.b32.xlu0 %v3588, 64
    %v3591 = vpop.permute.xlu0 %3590
    %v3593 = vmul.f32 %v3572, %v3591
    %v3594 = vmul.f32 %v3593, 2.0
    %3596 = vrot.lane.b32.xlu0 %v3594, 32
    %v3597 = vpop.permute.xlu0 %3596
    %v3599 = vadd.f32 %v2937, %v3597
    %v3601 = vrot.slane %v3593, 4
    %3602 = vrot.lane.b32.xlu0 %v3601, 32
    %v3603 = vpop.permute.xlu0 %3602
    %v3604 = vsel %vm2953, %v3603, 0
    %3606 = vmatprep.subr.mxu0 0.0
    %3607 = vmatpush1.msra.mxu0 %v3051
    %3608 = vmatprep.subr.mxu0 0.0
    %3609 = vmatpush1.msra.mxu0 %v3052
    %3610 = vmatprep.subr.mxu0 0.0
    %3611 = vmatpush1.msra.mxu0 %v3053
    %3612 = vmatprep.subr.mxu0 0.0
    %3613 = vmatpush1.msra.mxu0 %v3054
    %3614 = vmatprep.subr.mxu0 0.0
    %3615 = vmatpush1.msra.mxu0 0.0
    %3616 = vmatprep.subr.mxu0 0.0
    %3617 = vmatpush1.msra.mxu0 0.0
    %3618 = vmatprep.subr.mxu0 0.0
    %3619 = vmatpush1.msra.mxu0 0.0
    %3620 = vmatprep.subr.mxu0 0.0
    %3621 = vmatpush1.msra.mxu0 0.0
    %3622 = vmatprep.subr.mxu0 0.0
    %3623 = vmatpush1.msra.mxu0 0.0
    %3624 = vmatprep.subr.mxu0 0.0
    %3625 = vmatpush1.msra.mxu0 0.0
    %3626 = vmatprep.subr.mxu0 0.0
    %3627 = vmatpush1.msra.mxu0 0.0
    %3628 = vmatprep.subr.mxu0 0.0
    %3629 = vmatpush1.msra.mxu0 0.0
    %3630 = vmatprep.subr.mxu0 0.0
    %3631 = vmatpush1.msra.mxu0 0.0
    %3632 = vmatprep.subr.mxu0 0.0
    %3633 = vmatpush1.msra.mxu0 0.0
    %3634 = vmatprep.subr.mxu0 0.0
    %3635 = vmatpush1.msra.mxu0 0.0
    %3636 = vmatprep.subr.mxu0 0.0
    %3637 = vmatpush1.msra.mxu0 0.0
    %3638 = vmatprep.subr.mxu0 0.0
    %3639 = vmatpush1.msra.mxu0 0.0
    %3640 = vmatprep.subr.mxu0 0.0
    %3641 = vmatpush1.msra.mxu0 0.0
    %3642 = vmatprep.subr.mxu0 0.0
    %3643 = vmatpush1.msra.mxu0 0.0
    %3644 = vmatprep.subr.mxu0 0.0
    %3645 = vmatpush1.msra.mxu0 0.0
    %3646 = vmatprep.subr.mxu0 0.0
    %3647 = vmatpush1.msra.mxu0 0.0
    %3648 = vmatprep.subr.mxu0 0.0
    %3649 = vmatpush1.msra.mxu0 0.0
    %3650 = vmatprep.subr.mxu0 0.0
    %3651 = vmatpush1.msra.mxu0 0.0
    %3652 = vmatprep.subr.mxu0 0.0
    %3653 = vmatpush1.msra.mxu0 0.0
    %3654 = vmatprep.subr.mxu0 0.0
    %3655 = vmatpush1.msra.mxu0 0.0
    %3656 = vmatprep.subr.mxu0 0.0
    %3657 = vmatpush1.msra.mxu0 0.0
    %3658 = vmatprep.subr.mxu0 0.0
    %3659 = vmatpush1.msra.mxu0 0.0
    %3660 = vmatprep.subr.mxu0 0.0
    %3661 = vmatpush1.msra.mxu0 0.0
    %3662 = vmatprep.subr.mxu0 0.0
    %3663 = vmatpush1.msra.mxu0 0.0
    %3664 = vmatprep.subr.mxu0 0.0
    %3665 = vmatpush1.msra.mxu0 0.0
    %3666 = vmatprep.subr.mxu0 0.0
    %3667 = vmatpush1.msra.mxu0 0.0
    %3668 = vmatprep.subr.mxu0 0.0
    %3669 = vmatpush1.msra.mxu0 0.0
    %3670 = vmatprep.mubr.f32.mxu0 0.0
    %3671 = vmatmul.mubr.f32.gmra.mrb[0].mxu0 %v3604
    %v3672 = vpop.f32.mrb[0].mxu0
    %v3673 = vadd.f32 0.0, %v3672
    %v3674 = vpop.f32.mrb[0].mxu0
    %3675 = vdwg.mxu0
    %v3677 = vrot.slane %v3673, 3
    %v3679 = vadd.f32 %v3042, %v3677
    %v3680 = vmul.f32 %v3679, 0.5
    %v3681 = vtanh.pop %v3680
    %v3682 = vmul.f32 %v3681, 0.5
    %v3683 = vadd.f32 %v3682, 0.5
    %v3684 = vtanh.pop %v3679
    %v3686 = vrot.slane %v3587, 7
    %v3688 = vmul.f32 %v3683, %v3686
    %3690 = vrot.lane.b32.xlu0 %v3684, 64
    %v3691 = vpop.permute.xlu0 %3690
    %v3693 = vmul.f32 %v3683, %v3691
    %3695 = vrot.lane.b32.xlu0 %v3693, 32
    %v3696 = vpop.permute.xlu0 %3695
    %v3698 = vadd.f32 %v3688, %v3696
    %v3699 = vtanh.pop %v3698
    %3701 = vrot.lane.b32.xlu0 %v3699, 64
    %v3702 = vpop.permute.xlu0 %3701
    %v3704 = vmul.f32 %v3683, %v3702
    %v3705 = vmul.f32 %v3704, 2.0
    %3707 = vrot.lane.b32.xlu0 %v3705, 32
    %v3708 = vpop.permute.xlu0 %3707
    %v3710 = vadd.f32 %v2937, %v3708
    %v3712 = vrot.slane %v3704, 5
    %3713 = vrot.lane.b32.xlu0 %v3712, 32
    %v3714 = vpop.permute.xlu0 %3713
    %v3715 = vsel %vm2953, %v3714, 0
    %3717 = vmatprep.subr.mxu0 0.0
    %3718 = vmatpush1.msra.mxu0 %v3051
    %3719 = vmatprep.subr.mxu0 0.0
    %3720 = vmatpush1.msra.mxu0 %v3052
    %3721 = vmatprep.subr.mxu0 0.0
    %3722 = vmatpush1.msra.mxu0 %v3053
    %3723 = vmatprep.subr.mxu0 0.0
    %3724 = vmatpush1.msra.mxu0 %v3054
    %3725 = vmatprep.subr.mxu0 0.0
    %3726 = vmatpush1.msra.mxu0 0.0
    %3727 = vmatprep.subr.mxu0 0.0
    %3728 = vmatpush1.msra.mxu0 0.0
    %3729 = vmatprep.subr.mxu0 0.0
    %3730 = vmatpush1.msra.mxu0 0.0
    %3731 = vmatprep.subr.mxu0 0.0
    %3732 = vmatpush1.msra.mxu0 0.0
    %3733 = vmatprep.subr.mxu0 0.0
    %3734 = vmatpush1.msra.mxu0 0.0
    %3735 = vmatprep.subr.mxu0 0.0
    %3736 = vmatpush1.msra.mxu0 0.0
    %3737 = vmatprep.subr.mxu0 0.0
    %3738 = vmatpush1.msra.mxu0 0.0
    %3739 = vmatprep.subr.mxu0 0.0
    %3740 = vmatpush1.msra.mxu0 0.0
    %3741 = vmatprep.subr.mxu0 0.0
    %3742 = vmatpush1.msra.mxu0 0.0
    %3743 = vmatprep.subr.mxu0 0.0
    %3744 = vmatpush1.msra.mxu0 0.0
    %3745 = vmatprep.subr.mxu0 0.0
    %3746 = vmatpush1.msra.mxu0 0.0
    %3747 = vmatprep.subr.mxu0 0.0
    %3748 = vmatpush1.msra.mxu0 0.0
    %3749 = vmatprep.subr.mxu0 0.0
    %3750 = vmatpush1.msra.mxu0 0.0
    %3751 = vmatprep.subr.mxu0 0.0
    %3752 = vmatpush1.msra.mxu0 0.0
    %3753 = vmatprep.subr.mxu0 0.0
    %3754 = vmatpush1.msra.mxu0 0.0
    %3755 = vmatprep.subr.mxu0 0.0
    %3756 = vmatpush1.msra.mxu0 0.0
    %3757 = vmatprep.subr.mxu0 0.0
    %3758 = vmatpush1.msra.mxu0 0.0
    %3759 = vmatprep.subr.mxu0 0.0
    %3760 = vmatpush1.msra.mxu0 0.0
    %3761 = vmatprep.subr.mxu0 0.0
    %3762 = vmatpush1.msra.mxu0 0.0
    %3763 = vmatprep.subr.mxu0 0.0
    %3764 = vmatpush1.msra.mxu0 0.0
    %3765 = vmatprep.subr.mxu0 0.0
    %3766 = vmatpush1.msra.mxu0 0.0
    %3767 = vmatprep.subr.mxu0 0.0
    %3768 = vmatpush1.msra.mxu0 0.0
    %3769 = vmatprep.subr.mxu0 0.0
    %3770 = vmatpush1.msra.mxu0 0.0
    %3771 = vmatprep.subr.mxu0 0.0
    %3772 = vmatpush1.msra.mxu0 0.0
    %3773 = vmatprep.subr.mxu0 0.0
    %3774 = vmatpush1.msra.mxu0 0.0
    %3775 = vmatprep.subr.mxu0 0.0
    %3776 = vmatpush1.msra.mxu0 0.0
    %3777 = vmatprep.subr.mxu0 0.0
    %3778 = vmatpush1.msra.mxu0 0.0
    %3779 = vmatprep.subr.mxu0 0.0
    %3780 = vmatpush1.msra.mxu0 0.0
    %3781 = vmatprep.mubr.f32.mxu0 0.0
    %3782 = vmatmul.mubr.f32.gmra.mrb[0].mxu0 %v3715
    %v3783 = vpop.f32.mrb[0].mxu0
    %v3784 = vadd.f32 0.0, %v3783
    %v3785 = vpop.f32.mrb[0].mxu0
    %3786 = vdwg.mxu0
    %v3788 = vrot.slane %v3784, 2
    %v3790 = vadd.f32 %v3042, %v3788
    %v3791 = vmul.f32 %v3790, 0.5
    %v3792 = vtanh.pop %v3791
    %v3793 = vmul.f32 %v3792, 0.5
    %v3794 = vadd.f32 %v3793, 0.5
    %v3795 = vtanh.pop %v3790
    %v3797 = vrot.slane %v3698, 7
    %v3799 = vmul.f32 %v3794, %v3797
    %3801 = vrot.lane.b32.xlu0 %v3795, 64
    %v3802 = vpop.permute.xlu0 %3801
    %v3804 = vmul.f32 %v3794, %v3802
    %3806 = vrot.lane.b32.xlu0 %v3804, 32
    %v3807 = vpop.permute.xlu0 %3806
    %v3809 = vadd.f32 %v3799, %v3807
    %v3810 = vtanh.pop %v3809
    %3812 = vrot.lane.b32.xlu0 %v3810, 64
    %v3813 = vpop.permute.xlu0 %3812
    %v3815 = vmul.f32 %v3794, %v3813
    %v3816 = vmul.f32 %v3815, 2.0
    %3818 = vrot.lane.b32.xlu0 %v3816, 32
    %v3819 = vpop.permute.xlu0 %3818
    %v3821 = vadd.f32 %v2937, %v3819
    %v3823 = vrot.slane %v3815, 6
    %3824 = vrot.lane.b32.xlu0 %v3823, 32
    %v3825 = vpop.permute.xlu0 %3824
    %v3826 = vsel %vm2953, %v3825, 0
    %3828 = vmatprep.subr.mxu0 0.0
    %3829 = vmatpush1.msra.mxu0 %v3051
    %3830 = vmatprep.subr.mxu0 0.0
    %3831 = vmatpush1.msra.mxu0 %v3052
    %3832 = vmatprep.subr.mxu0 0.0
    %3833 = vmatpush1.msra.mxu0 %v3053
    %3834 = vmatprep.subr.mxu0 0.0
    %3835 = vmatpush1.msra.mxu0 %v3054
    %3836 = vmatprep.subr.mxu0 0.0
    %3837 = vmatpush1.msra.mxu0 0.0
    %3838 = vmatprep.subr.mxu0 0.0
    %3839 = vmatpush1.msra.mxu0 0.0
    %3840 = vmatprep.subr.mxu0 0.0
    %3841 = vmatpush1.msra.mxu0 0.0
    %3842 = vmatprep.subr.mxu0 0.0
    %3843 = vmatpush1.msra.mxu0 0.0
    %3844 = vmatprep.subr.mxu0 0.0
    %3845 = vmatpush1.msra.mxu0 0.0
    %3846 = vmatprep.subr.mxu0 0.0
    %3847 = vmatpush1.msra.mxu0 0.0
    %3848 = vmatprep.subr.mxu0 0.0
    %3849 = vmatpush1.msra.mxu0 0.0
    %3850 = vmatprep.subr.mxu0 0.0
    %3851 = vmatpush1.msra.mxu0 0.0
    %3852 = vmatprep.subr.mxu0 0.0
    %3853 = vmatpush1.msra.mxu0 0.0
    %3854 = vmatprep.subr.mxu0 0.0
    %3855 = vmatpush1.msra.mxu0 0.0
    %3856 = vmatprep.subr.mxu0 0.0
    %3857 = vmatpush1.msra.mxu0 0.0
    %3858 = vmatprep.subr.mxu0 0.0
    %3859 = vmatpush1.msra.mxu0 0.0
    %3860 = vmatprep.subr.mxu0 0.0
    %3861 = vmatpush1.msra.mxu0 0.0
    %3862 = vmatprep.subr.mxu0 0.0
    %3863 = vmatpush1.msra.mxu0 0.0
    %3864 = vmatprep.subr.mxu0 0.0
    %3865 = vmatpush1.msra.mxu0 0.0
    %3866 = vmatprep.subr.mxu0 0.0
    %3867 = vmatpush1.msra.mxu0 0.0
    %3868 = vmatprep.subr.mxu0 0.0
    %3869 = vmatpush1.msra.mxu0 0.0
    %3870 = vmatprep.subr.mxu0 0.0
    %3871 = vmatpush1.msra.mxu0 0.0
    %3872 = vmatprep.subr.mxu0 0.0
    %3873 = vmatpush1.msra.mxu0 0.0
    %3874 = vmatprep.subr.mxu0 0.0
    %3875 = vmatpush1.msra.mxu0 0.0
    %3876 = vmatprep.subr.mxu0 0.0
    %3877 = vmatpush1.msra.mxu0 0.0
    %3878 = vmatprep.subr.mxu0 0.0
    %3879 = vmatpush1.msra.mxu0 0.0
    %3880 = vmatprep.subr.mxu0 0.0
    %3881 = vmatpush1.msra.mxu0 0.0
    %3882 = vmatprep.subr.mxu0 0.0
    %3883 = vmatpush1.msra.mxu0 0.0
    %3884 = vmatprep.subr.mxu0 0.0
    %3885 = vmatpush1.msra.mxu0 0.0
    %3886 = vmatprep.subr.mxu0 0.0
    %3887 = vmatpush1.msra.mxu0 0.0
    %3888 = vmatprep.subr.mxu0 0.0
    %3889 = vmatpush1.msra.mxu0 0.0
    %3890 = vmatprep.subr.mxu0 0.0
    %3891 = vmatpush1.msra.mxu0 0.0
    %3892 = vmatprep.mubr.f32.mxu0 0.0
    %3893 = vmatmul.mubr.f32.gmra.mrb[0].mxu0 %v3826
    %v3894 = vpop.f32.mrb[0].mxu0
    %v3895 = vadd.f32 0.0, %v3894
    %v3896 = vpop.f32.mrb[0].mxu0
    %3897 = vdwg.mxu0
    %v3899 = vrot.slane %v3895, 1
    %v3901 = vadd.f32 %v3042, %v3899
    %v3902 = vmul.f32 %v3901, 0.5
    %v3903 = vtanh.pop %v3902
    %v3904 = vmul.f32 %v3903, 0.5
    %v3905 = vadd.f32 %v3904, 0.5
    %v3906 = vtanh.pop %v3901
    %v3908 = vrot.slane %v3809, 7
    %v3910 = vmul.f32 %v3905, %v3908
    %3912 = vrot.lane.b32.xlu0 %v3906, 64
    %v3913 = vpop.permute.xlu0 %3912
    %v3915 = vmul.f32 %v3905, %v3913
    %3917 = vrot.lane.b32.xlu0 %v3915, 32
    %v3918 = vpop.permute.xlu0 %3917
    %v3920 = vadd.f32 %v3910, %v3918
    %v3921 = vtanh.pop %v3920
    %3923 = vrot.lane.b32.xlu0 %v3921, 64
    %v3924 = vpop.permute.xlu0 %3923
    %v3926 = vmul.f32 %v3905, %v3924
    %v3927 = vmul.f32 %v3926, 2.0
    %3929 = vrot.lane.b32.xlu0 %v3927, 32
    %v3930 = vpop.permute.xlu0 %3929
    %v3932 = vadd.f32 %v2937, %v3930
    %vm3933 = vcmask 1040384
    %v3934 = vsel %vm3933, %v3156, %v3266
    %vm3935 = vcmask 1041408
    %v3936 = vsel %vm3935, %v3934, %v3377
    %vm3937 = vcmask 1042432
    %v3938 = vsel %vm3937, %v3936, %v3488
    %v3939 = vsel %vm561, %v3938, %v3599
    %vm3940 = vcmask 1044480
    %v3941 = vsel %vm3940, %v3939, %v3710
    %vm3942 = vcmask 1045504
    %v3943 = vsel %vm3942, %v3941, %v3821
    %vm3944 = vcmask 1046528
    %v3945 = vsel %vm3944, %v3943, %v3932
    %3946 = vxpose.xlu0.b32.start [1/16] %v3945, 128
    %3947 = vxpose.xlu0.b32.cont [2/16] 0.0, 128
    %3948 = vxpose.xlu0.b32.cont [3/16] 0.0, 128
    %3949 = vxpose.xlu0.b32.cont [4/16] 0.0, 128
    %3950 = vxpose.xlu0.b32.cont [5/16] 0.0, 128
    %3951 = vxpose.xlu0.b32.cont [6/16] 0.0, 128
    %3952 = vxpose.xlu0.b32.cont [7/16] 0.0, 128
    %3953 = vxpose.xlu0.b32.cont [8/16] 0.0, 128
    %3954 = vxpose.xlu0.b32.cont [9/16] 0.0, 128
    %3955 = vxpose.xlu0.b32.cont [10/16] 0.0, 128
    %3956 = vxpose.xlu0.b32.cont [11/16] 0.0, 128
    %3957 = vxpose.xlu0.b32.cont [12/16] 0.0, 128
    %3958 = vxpose.xlu0.b32.cont [13/16] 0.0, 128
    %3959 = vxpose.xlu0.b32.cont [14/16] 0.0, 128
    %3960 = vxpose.xlu0.b32.cont [15/16] 0.0, 128
    %3961 = vxpose.xlu0.b32.end [16/16] 0.0, 128
    %v3962 = vpop.trf.xlu0
    %v3963 = vpop.trf.xlu0
    %v3964 = vpop.trf.xlu0
    %v3965 = vpop.trf.xlu0
    %v3966 = vpop.trf.xlu0
    %v3967 = vpop.trf.xlu0
    %v3968 = vpop.trf.xlu0
    %v3969 = vpop.trf.xlu0
    %v3970 = vpop.trf.xlu0
    %v3971 = vpop.trf.xlu0
    %v3972 = vpop.trf.xlu0
    %v3973 = vpop.trf.xlu0
    %v3974 = vpop.trf.xlu0
    %v3975 = vpop.trf.xlu0
    %v3976 = vpop.trf.xlu0
    %v3977 = vpop.trf.xlu0
    %v3978 = vld [vmem:[%s7] sm:$0xff]
    %v3979 = vld [vmem:[%s7 + $0x8] sm:$0xff]
    %v3980 = vld [vmem:[%s7 + $0x10] sm:$0xff]
    %v3981 = vld [vmem:[%s7 + $0x18] sm:$0xff]
    %v3982 = vld [vmem:[%s7 + $0x20] sm:$0xff]
    %v3983 = vld [vmem:[%s7 + $0x28] sm:$0xff]
    %v3984 = vld [vmem:[%s7 + $0x30] sm:$0xff]
    %v3985 = vld [vmem:[%s7 + $0x38] sm:$0xff]
    %3986 = vmatprep.subr.mxu0 0.0
    %3987 = vmatpush1.msra.mxu0 %v3962
    %3988 = vmatprep.subr.mxu0 0.0
    %3989 = vmatpush1.msra.mxu0 %v3963
    %3990 = vmatprep.subr.mxu0 0.0
    %3991 = vmatpush1.msra.mxu0 %v3964
    %3992 = vmatprep.subr.mxu0 0.0
    %3993 = vmatpush1.msra.mxu0 %v3965
    %3994 = vmatprep.subr.mxu0 0.0
    %3995 = vmatpush1.msra.mxu0 0.0
    %3996 = vmatprep.subr.mxu0 0.0
    %3997 = vmatpush1.msra.mxu0 0.0
    %3998 = vmatprep.subr.mxu0 0.0
    %3999 = vmatpush1.msra.mxu0 0.0
    %4000 = vmatprep.subr.mxu0 0.0
    %4001 = vmatpush1.msra.mxu0 0.0
    %4002 = vmatprep.subr.mxu0 0.0
    %4003 = vmatpush1.msra.mxu0 0.0
    %4004 = vmatprep.subr.mxu0 0.0
    %4005 = vmatpush1.msra.mxu0 0.0
    %4006 = vmatprep.subr.mxu0 0.0
    %4007 = vmatpush1.msra.mxu0 0.0
    %4008 = vmatprep.subr.mxu0 0.0
    %4009 = vmatpush1.msra.mxu0 0.0
    %4010 = vmatprep.subr.mxu0 0.0
    %4011 = vmatpush1.msra.mxu0 0.0
    %4012 = vmatprep.subr.mxu0 0.0
    %4013 = vmatpush1.msra.mxu0 0.0
    %4014 = vmatprep.subr.mxu0 0.0
    %4015 = vmatpush1.msra.mxu0 0.0
    %4016 = vmatprep.subr.mxu0 0.0
    %4017 = vmatpush1.msra.mxu0 0.0
    %4018 = vmatprep.subr.mxu0 0.0
    %4019 = vmatpush1.msra.mxu0 0.0
    %4020 = vmatprep.subr.mxu0 0.0
    %4021 = vmatpush1.msra.mxu0 0.0
    %4022 = vmatprep.subr.mxu0 0.0
    %4023 = vmatpush1.msra.mxu0 0.0
    %4024 = vmatprep.subr.mxu0 0.0
    %4025 = vmatpush1.msra.mxu0 0.0
    %4026 = vmatprep.subr.mxu0 0.0
    %4027 = vmatpush1.msra.mxu0 0.0
    %4028 = vmatprep.subr.mxu0 0.0
    %4029 = vmatpush1.msra.mxu0 0.0
    %4030 = vmatprep.subr.mxu0 0.0
    %4031 = vmatpush1.msra.mxu0 0.0
    %4032 = vmatprep.subr.mxu0 0.0
    %4033 = vmatpush1.msra.mxu0 0.0
    %4034 = vmatprep.subr.mxu0 0.0
    %4035 = vmatpush1.msra.mxu0 0.0
    %4036 = vmatprep.subr.mxu0 0.0
    %4037 = vmatpush1.msra.mxu0 0.0
    %4038 = vmatprep.subr.mxu0 0.0
    %4039 = vmatpush1.msra.mxu0 0.0
    %4040 = vmatprep.subr.mxu0 0.0
    %4041 = vmatpush1.msra.mxu0 0.0
    %4042 = vmatprep.subr.mxu0 0.0
    %4043 = vmatpush1.msra.mxu0 0.0
    %4044 = vmatprep.subr.mxu0 0.0
    %4045 = vmatpush1.msra.mxu0 0.0
    %4046 = vmatprep.subr.mxu0 0.0
    %4047 = vmatpush1.msra.mxu0 0.0
    %4048 = vmatprep.subr.mxu0 0.0
    %4049 = vmatpush1.msra.mxu0 0.0
    %4050 = vmatprep.mubr.f32.mxu0 0.0
    %4051 = vmatmul.mubr.f32.gmra.mrb[0].mxu0 %v2958
    %v4052 = vpop.f32.mrb[0].mxu0
    %v4053 = vadd.f32 0.0, %v4052
    %v4054 = vpop.f32.mrb[0].mxu0
    %4055 = vdwg.mxu0
    %vm4056 = vcmask 60416
    %v4057 = vsel %vm4056, %v4053, -inf
    %4058 = vmax.xlane.f32.xlu0 %v4057
    %v4059 = vpop.xlane.xlu0 %4058
    %v4060 = vsub.f32 %v4053, %v4059
    %v4061 = vmul.f32 %v4060, 1.442695
    %v4062 = vpow.pop %v4061
    %v4063 = vsel %vm4056, %v4062, 0.0
    %4064 = vadd.xlane.f32.xlu0 %v4063
    %v4065 = vpop.xlane.xlu0 %4064
    %v4066 = vrcp.pop %v4065
    %v4067 = vmul.f32 %v4062, %v4066
    %vm4068 = vcmask 64512
    %v4070 = vsel %vm4068, %v4067, 0
    %4072 = vmatprep.subr.mxu0 0.0
    %4073 = vmatpush1.msra.mxu0 %v3945
    %4074 = vmatprep.subr.mxu0 0.0
    %4075 = vmatpush1.msra.mxu0 0.0
    %4076 = vmatprep.subr.mxu0 0.0
    %4077 = vmatpush1.msra.mxu0 0.0
    %4078 = vmatprep.subr.mxu0 0.0
    %4079 = vmatpush1.msra.mxu0 0.0
    %4080 = vmatprep.subr.mxu0 0.0
    %4081 = vmatpush1.msra.mxu0 0.0
    %4082 = vmatprep.subr.mxu0 0.0
    %4083 = vmatpush1.msra.mxu0 0.0
    %4084 = vmatprep.subr.mxu0 0.0
    %4085 = vmatpush1.msra.mxu0 0.0
    %4086 = vmatprep.subr.mxu0 0.0
    %4087 = vmatpush1.msra.mxu0 0.0
    %4088 = vmatprep.subr.mxu0 0.0
    %4089 = vmatpush1.msra.mxu0 0.0
    %4090 = vmatprep.subr.mxu0 0.0
    %4091 = vmatpush1.msra.mxu0 0.0
    %4092 = vmatprep.subr.mxu0 0.0
    %4093 = vmatpush1.msra.mxu0 0.0
    %4094 = vmatprep.subr.mxu0 0.0
    %4095 = vmatpush1.msra.mxu0 0.0
    %4096 = vmatprep.subr.mxu0 0.0
    %4097 = vmatpush1.msra.mxu0 0.0
    %4098 = vmatprep.subr.mxu0 0.0
    %4099 = vmatpush1.msra.mxu0 0.0
    %4100 = vmatprep.subr.mxu0 0.0
    %4101 = vmatpush1.msra.mxu0 0.0
    %4102 = vmatprep.subr.mxu0 0.0
    %4103 = vmatpush1.msra.mxu0 0.0
    %4104 = vmatprep.subr.mxu0 0.0
    %4105 = vmatpush1.msra.mxu0 0.0
    %4106 = vmatprep.subr.mxu0 0.0
    %4107 = vmatpush1.msra.mxu0 0.0
    %4108 = vmatprep.subr.mxu0 0.0
    %4109 = vmatpush1.msra.mxu0 0.0
    %4110 = vmatprep.subr.mxu0 0.0
    %4111 = vmatpush1.msra.mxu0 0.0
    %4112 = vmatprep.subr.mxu0 0.0
    %4113 = vmatpush1.msra.mxu0 0.0
    %4114 = vmatprep.subr.mxu0 0.0
    %4115 = vmatpush1.msra.mxu0 0.0
    %4116 = vmatprep.subr.mxu0 0.0
    %4117 = vmatpush1.msra.mxu0 0.0
    %4118 = vmatprep.subr.mxu0 0.0
    %4119 = vmatpush1.msra.mxu0 0.0
    %4120 = vmatprep.subr.mxu0 0.0
    %4121 = vmatpush1.msra.mxu0 0.0
    %4122 = vmatprep.subr.mxu0 0.0
    %4123 = vmatpush1.msra.mxu0 0.0
    %4124 = vmatprep.subr.mxu0 0.0
    %4125 = vmatpush1.msra.mxu0 0.0
    %4126 = vmatprep.subr.mxu0 0.0
    %4127 = vmatpush1.msra.mxu0 0.0
    %4128 = vmatprep.subr.mxu0 0.0
    %4129 = vmatpush1.msra.mxu0 0.0
    %4130 = vmatprep.subr.mxu0 0.0
    %4131 = vmatpush1.msra.mxu0 0.0
    %4132 = vmatprep.subr.mxu0 0.0
    %4133 = vmatpush1.msra.mxu0 0.0
    %4134 = vmatprep.subr.mxu0 0.0
    %4135 = vmatpush1.msra.mxu0 0.0
    %4136 = vmatprep.mubr.f32.mxu0 0.0
    %4137 = vmatmul.mubr.f32.gmra.mrb[0].mxu0 %v4070
    %v4138 = vpop.f32.mrb[0].mxu0
    %v4139 = vadd.f32 0.0, %v4138
    %v4140 = vpop.f32.mrb[0].mxu0
    %4141 = vdwg.mxu0
    %4142 = vrot.lane.b32.xlu0 %v2942, 32
    %v4143 = vpop.permute.xlu0 %4142
    %v4145 = vsel %vm2953, %v4139, %v4143
    %vm4146 = vcmask 523264
    %v4148 = vsel %vm4146, %v4145, 0
    %4150 = vmatprep.subr.mxu0 0.0
    %4151 = vmatpush1.msra.mxu0 %v3978
    %4152 = vmatprep.subr.mxu0 0.0
    %4153 = vmatpush1.msra.mxu0 %v3979
    %4154 = vmatprep.subr.mxu0 0.0
    %4155 = vmatpush1.msra.mxu0 %v3980
    %4156 = vmatprep.subr.mxu0 0.0
    %4157 = vmatpush1.msra.mxu0 %v3981
    %4158 = vmatprep.subr.mxu0 0.0
    %4159 = vmatpush1.msra.mxu0 %v3982
    %4160 = vmatprep.subr.mxu0 0.0
    %4161 = vmatpush1.msra.mxu0 %v3983
    %4162 = vmatprep.subr.mxu0 0.0
    %4163 = vmatpush1.msra.mxu0 %v3984
    %4164 = vmatprep.subr.mxu0 0.0
    %4165 = vmatpush1.msra.mxu0 %v3985
    %4166 = vmatprep.subr.mxu0 0.0
    %4167 = vmatpush1.msra.mxu0 0.0
    %4168 = vmatprep.subr.mxu0 0.0
    %4169 = vmatpush1.msra.mxu0 0.0
    %4170 = vmatprep.subr.mxu0 0.0
    %4171 = vmatpush1.msra.mxu0 0.0
    %4172 = vmatprep.subr.mxu0 0.0
    %4173 = vmatpush1.msra.mxu0 0.0
    %4174 = vmatprep.subr.mxu0 0.0
    %4175 = vmatpush1.msra.mxu0 0.0
    %4176 = vmatprep.subr.mxu0 0.0
    %4177 = vmatpush1.msra.mxu0 0.0
    %4178 = vmatprep.subr.mxu0 0.0
    %4179 = vmatpush1.msra.mxu0 0.0
    %4180 = vmatprep.subr.mxu0 0.0
    %4181 = vmatpush1.msra.mxu0 0.0
    %4182 = vmatprep.subr.mxu0 0.0
    %4183 = vmatpush1.msra.mxu0 0.0
    %4184 = vmatprep.subr.mxu0 0.0
    %4185 = vmatpush1.msra.mxu0 0.0
    %4186 = vmatprep.subr.mxu0 0.0
    %4187 = vmatpush1.msra.mxu0 0.0
    %4188 = vmatprep.subr.mxu0 0.0
    %4189 = vmatpush1.msra.mxu0 0.0
    %4190 = vmatprep.subr.mxu0 0.0
    %4191 = vmatpush1.msra.mxu0 0.0
    %4192 = vmatprep.subr.mxu0 0.0
    %4193 = vmatpush1.msra.mxu0 0.0
    %4194 = vmatprep.subr.mxu0 0.0
    %4195 = vmatpush1.msra.mxu0 0.0
    %4196 = vmatprep.subr.mxu0 0.0
    %4197 = vmatpush1.msra.mxu0 0.0
    %4198 = vmatprep.subr.mxu0 0.0
    %4199 = vmatpush1.msra.mxu0 0.0
    %4200 = vmatprep.subr.mxu0 0.0
    %4201 = vmatpush1.msra.mxu0 0.0
    %4202 = vmatprep.subr.mxu0 0.0
    %4203 = vmatpush1.msra.mxu0 0.0
    %4204 = vmatprep.subr.mxu0 0.0
    %4205 = vmatpush1.msra.mxu0 0.0
    %4206 = vmatprep.subr.mxu0 0.0
    %4207 = vmatpush1.msra.mxu0 0.0
    %4208 = vmatprep.subr.mxu0 0.0
    %4209 = vmatpush1.msra.mxu0 0.0
    %4210 = vmatprep.subr.mxu0 0.0
    %4211 = vmatpush1.msra.mxu0 0.0
    %4212 = vmatprep.subr.mxu0 0.0
    %4213 = vmatpush1.msra.mxu0 0.0
    %4214 = vmatprep.mubr.f32.mxu0 0.0
    %4215 = vmatmul.mubr.f32.gmra.mrb[0].mxu0 %v4148
    %v4216 = vpop.f32.mrb[0].mxu0
    %v4217 = vadd.f32 0.0, %v4216
    %v4218 = vpop.f32.mrb[0].mxu0
    %4219 = vdwg.mxu0
    %v4220 = vadd.f32 %v3050, %v4217
    %v4221 = vmul.f32 %v4220, 0.5
    %v4222 = vtanh.pop %v4221
    %v4223 = vmul.f32 %v4222, 0.5
    %v4224 = vadd.f32 %v4223, 0.5
    %v4225 = vtanh.pop %v4220
    %v4226 = vmul.f32 %v4224, 0.0
    %4228 = vrot.lane.b32.xlu0 %v4225, 64
    %v4229 = vpop.permute.xlu0 %4228
    %v4231 = vmul.f32 %v4224, %v4229
    %4233 = vrot.lane.b32.xlu0 %v4231, 32
    %v4234 = vpop.permute.xlu0 %4233
    %v4236 = vadd.f32 %v4226, %v4234
    %v4237 = vtanh.pop %v4236
    %4239 = vrot.lane.b32.xlu0 %v4237, 64
    %v4240 = vpop.permute.xlu0 %4239
    %v4242 = vmul.f32 %v4224, %v4240
    %4243 = vrot.lane.b32.xlu0 %v2942, 96
    %v4244 = vpop.permute.xlu0 %4243
    %v4246 = vadd.f32 %v4242, %v4244
    %4248 = vrot.lane.b32.xlu0 %v4246, 32
    %v4249 = vpop.permute.xlu0 %4248
    %v4250 = vsel %vm2953, %v4249, 0
    %4252 = vmatprep.subr.mxu0 0.0
    %4253 = vmatpush1.msra.mxu0 %v3962
    %4254 = vmatprep.subr.mxu0 0.0
    %4255 = vmatpush1.msra.mxu0 %v3963
    %4256 = vmatprep.subr.mxu0 0.0
    %4257 = vmatpush1.msra.mxu0 %v3964
    %4258 = vmatprep.subr.mxu0 0.0
    %4259 = vmatpush1.msra.mxu0 %v3965
    %4260 = vmatprep.subr.mxu0 0.0
    %4261 = vmatpush1.msra.mxu0 0.0
    %4262 = vmatprep.subr.mxu0 0.0
    %4263 = vmatpush1.msra.mxu0 0.0
    %4264 = vmatprep.subr.mxu0 0.0
    %4265 = vmatpush1.msra.mxu0 0.0
    %4266 = vmatprep.subr.mxu0 0.0
    %4267 = vmatpush1.msra.mxu0 0.0
    %4268 = vmatprep.subr.mxu0 0.0
    %4269 = vmatpush1.msra.mxu0 0.0
    %4270 = vmatprep.subr.mxu0 0.0
    %4271 = vmatpush1.msra.mxu0 0.0
    %4272 = vmatprep.subr.mxu0 0.0
    %4273 = vmatpush1.msra.mxu0 0.0
    %4274 = vmatprep.subr.mxu0 0.0
    %4275 = vmatpush1.msra.mxu0 0.0
    %4276 = vmatprep.subr.mxu0 0.0
    %4277 = vmatpush1.msra.mxu0 0.0
    %4278 = vmatprep.subr.mxu0 0.0
    %4279 = vmatpush1.msra.mxu0 0.0
    %4280 = vmatprep.subr.mxu0 0.0
    %4281 = vmatpush1.msra.mxu0 0.0
    %4282 = vmatprep.subr.mxu0 0.0
    %4283 = vmatpush1.msra.mxu0 0.0
    %4284 = vmatprep.subr.mxu0 0.0
    %4285 = vmatpush1.msra.mxu0 0.0
    %4286 = vmatprep.subr.mxu0 0.0
    %4287 = vmatpush1.msra.mxu0 0.0
    %4288 = vmatprep.subr.mxu0 0.0
    %4289 = vmatpush1.msra.mxu0 0.0
    %4290 = vmatprep.subr.mxu0 0.0
    %4291 = vmatpush1.msra.mxu0 0.0
    %4292 = vmatprep.subr.mxu0 0.0
    %4293 = vmatpush1.msra.mxu0 0.0
    %4294 = vmatprep.subr.mxu0 0.0
    %4295 = vmatpush1.msra.mxu0 0.0
    %4296 = vmatprep.subr.mxu0 0.0
    %4297 = vmatpush1.msra.mxu0 0.0
    %4298 = vmatprep.subr.mxu0 0.0
    %4299 = vmatpush1.msra.mxu0 0.0
    %4300 = vmatprep.subr.mxu0 0.0
    %4301 = vmatpush1.msra.mxu0 0.0
    %4302 = vmatprep.subr.mxu0 0.0
    %4303 = vmatpush1.msra.mxu0 0.0
    %4304 = vmatprep.subr.mxu0 0.0
    %4305 = vmatpush1.msra.mxu0 0.0
    %4306 = vmatprep.subr.mxu0 0.0
    %4307 = vmatpush1.msra.mxu0 0.0
    %4308 = vmatprep.subr.mxu0 0.0
    %4309 = vmatpush1.msra.mxu0 0.0
    %4310 = vmatprep.subr.mxu0 0.0
    %4311 = vmatpush1.msra.mxu0 0.0
    %4312 = vmatprep.subr.mxu0 0.0
    %4313 = vmatpush1.msra.mxu0 0.0
    %4314 = vmatprep.subr.mxu0 0.0
    %4315 = vmatpush1.msra.mxu0 0.0
    %4316 = vmatprep.mubr.f32.mxu0 0.0
    %4317 = vmatmul.mubr.f32.gmra.mrb[0].mxu0 %v4250
    %v4318 = vpop.f32.mrb[0].mxu0
    %v4319 = vadd.f32 0.0, %v4318
    %v4320 = vpop.f32.mrb[0].mxu0
    %4321 = vdwg.mxu0
    %v4322 = vsel %vm4056, %v4319, -inf
    %4323 = vmax.xlane.f32.xlu0 %v4322
    %v4324 = vpop.xlane.xlu0 %4323
    %v4325 = vsub.f32 %v4319, %v4324
    %v4326 = vmul.f32 %v4325, 1.442695
    %v4327 = vpow.pop %v4326
    %v4328 = vsel %vm4056, %v4327, 0.0
    %4329 = vadd.xlane.f32.xlu0 %v4328
    %v4330 = vpop.xlane.xlu0 %4329
    %v4331 = vrcp.pop %v4330
    %v4332 = vmul.f32 %v4327, %v4331
    %v4334 = vsel %vm4068, %v4332, 0
    %4336 = vmatprep.subr.mxu0 0.0
    %4337 = vmatpush1.msra.mxu0 %v3945
    %4338 = vmatprep.subr.mxu0 0.0
    %4339 = vmatpush1.msra.mxu0 0.0
    %4340 = vmatprep.subr.mxu0 0.0
    %4341 = vmatpush1.msra.mxu0 0.0
    %4342 = vmatprep.subr.mxu0 0.0
    %4343 = vmatpush1.msra.mxu0 0.0
    %4344 = vmatprep.subr.mxu0 0.0
    %4345 = vmatpush1.msra.mxu0 0.0
    %4346 = vmatprep.subr.mxu0 0.0
    %4347 = vmatpush1.msra.mxu0 0.0
    %4348 = vmatprep.subr.mxu0 0.0
    %4349 = vmatpush1.msra.mxu0 0.0
    %4350 = vmatprep.subr.mxu0 0.0
    %4351 = vmatpush1.msra.mxu0 0.0
    %4352 = vmatprep.subr.mxu0 0.0
    %4353 = vmatpush1.msra.mxu0 0.0
    %4354 = vmatprep.subr.mxu0 0.0
    %4355 = vmatpush1.msra.mxu0 0.0
    %4356 = vmatprep.subr.mxu0 0.0
    %4357 = vmatpush1.msra.mxu0 0.0
    %4358 = vmatprep.subr.mxu0 0.0
    %4359 = vmatpush1.msra.mxu0 0.0
    %4360 = vmatprep.subr.mxu0 0.0
    %4361 = vmatpush1.msra.mxu0 0.0
    %4362 = vmatprep.subr.mxu0 0.0
    %4363 = vmatpush1.msra.mxu0 0.0
    %4364 = vmatprep.subr.mxu0 0.0
    %4365 = vmatpush1.msra.mxu0 0.0
    %4366 = vmatprep.subr.mxu0 0.0
    %4367 = vmatpush1.msra.mxu0 0.0
    %4368 = vmatprep.subr.mxu0 0.0
    %4369 = vmatpush1.msra.mxu0 0.0
    %4370 = vmatprep.subr.mxu0 0.0
    %4371 = vmatpush1.msra.mxu0 0.0
    %4372 = vmatprep.subr.mxu0 0.0
    %4373 = vmatpush1.msra.mxu0 0.0
    %4374 = vmatprep.subr.mxu0 0.0
    %4375 = vmatpush1.msra.mxu0 0.0
    %4376 = vmatprep.subr.mxu0 0.0
    %4377 = vmatpush1.msra.mxu0 0.0
    %4378 = vmatprep.subr.mxu0 0.0
    %4379 = vmatpush1.msra.mxu0 0.0
    %4380 = vmatprep.subr.mxu0 0.0
    %4381 = vmatpush1.msra.mxu0 0.0
    %4382 = vmatprep.subr.mxu0 0.0
    %4383 = vmatpush1.msra.mxu0 0.0
    %4384 = vmatprep.subr.mxu0 0.0
    %4385 = vmatpush1.msra.mxu0 0.0
    %4386 = vmatprep.subr.mxu0 0.0
    %4387 = vmatpush1.msra.mxu0 0.0
    %4388 = vmatprep.subr.mxu0 0.0
    %4389 = vmatpush1.msra.mxu0 0.0
    %4390 = vmatprep.subr.mxu0 0.0
    %4391 = vmatpush1.msra.mxu0 0.0
    %4392 = vmatprep.subr.mxu0 0.0
    %4393 = vmatpush1.msra.mxu0 0.0
    %4394 = vmatprep.subr.mxu0 0.0
    %4395 = vmatpush1.msra.mxu0 0.0
    %4396 = vmatprep.subr.mxu0 0.0
    %4397 = vmatpush1.msra.mxu0 0.0
    %4398 = vmatprep.subr.mxu0 0.0
    %4399 = vmatpush1.msra.mxu0 0.0
    %4400 = vmatprep.mubr.f32.mxu0 0.0
    %4401 = vmatmul.mubr.f32.gmra.mrb[0].mxu0 %v4334
    %v4402 = vpop.f32.mrb[0].mxu0
    %v4403 = vadd.f32 0.0, %v4402
    %v4404 = vpop.f32.mrb[0].mxu0
    %4405 = vdwg.mxu0
    %4406 = vrot.lane.b32.xlu0 %v4246, 64
    %v4407 = vpop.permute.xlu0 %4406
    %v4409 = vsel %vm2953, %v4403, %v4407
    %v4411 = vsel %vm4146, %v4409, 0
    %4413 = vmatprep.subr.mxu0 0.0
    %4414 = vmatpush1.msra.mxu0 %v3978
    %4415 = vmatprep.subr.mxu0 0.0
    %4416 = vmatpush1.msra.mxu0 %v3979
    %4417 = vmatprep.subr.mxu0 0.0
    %4418 = vmatpush1.msra.mxu0 %v3980
    %4419 = vmatprep.subr.mxu0 0.0
    %4420 = vmatpush1.msra.mxu0 %v3981
    %4421 = vmatprep.subr.mxu0 0.0
    %4422 = vmatpush1.msra.mxu0 %v3982
    %4423 = vmatprep.subr.mxu0 0.0
    %4424 = vmatpush1.msra.mxu0 %v3983
    %4425 = vmatprep.subr.mxu0 0.0
    %4426 = vmatpush1.msra.mxu0 %v3984
    %4427 = vmatprep.subr.mxu0 0.0
    %4428 = vmatpush1.msra.mxu0 %v3985
    %4429 = vmatprep.subr.mxu0 0.0
    %4430 = vmatpush1.msra.mxu0 0.0
    %4431 = vmatprep.subr.mxu0 0.0
    %4432 = vmatpush1.msra.mxu0 0.0
    %4433 = vmatprep.subr.mxu0 0.0
    %4434 = vmatpush1.msra.mxu0 0.0
    %4435 = vmatprep.subr.mxu0 0.0
    %4436 = vmatpush1.msra.mxu0 0.0
    %4437 = vmatprep.subr.mxu0 0.0
    %4438 = vmatpush1.msra.mxu0 0.0
    %4439 = vmatprep.subr.mxu0 0.0
    %4440 = vmatpush1.msra.mxu0 0.0
    %4441 = vmatprep.subr.mxu0 0.0
    %4442 = vmatpush1.msra.mxu0 0.0
    %4443 = vmatprep.subr.mxu0 0.0
    %4444 = vmatpush1.msra.mxu0 0.0
    %4445 = vmatprep.subr.mxu0 0.0
    %4446 = vmatpush1.msra.mxu0 0.0
    %4447 = vmatprep.subr.mxu0 0.0
    %4448 = vmatpush1.msra.mxu0 0.0
    %4449 = vmatprep.subr.mxu0 0.0
    %4450 = vmatpush1.msra.mxu0 0.0
    %4451 = vmatprep.subr.mxu0 0.0
    %4452 = vmatpush1.msra.mxu0 0.0
    %4453 = vmatprep.subr.mxu0 0.0
    %4454 = vmatpush1.msra.mxu0 0.0
    %4455 = vmatprep.subr.mxu0 0.0
    %4456 = vmatpush1.msra.mxu0 0.0
    %4457 = vmatprep.subr.mxu0 0.0
    %4458 = vmatpush1.msra.mxu0 0.0
    %4459 = vmatprep.subr.mxu0 0.0
    %4460 = vmatpush1.msra.mxu0 0.0
    %4461 = vmatprep.subr.mxu0 0.0
    %4462 = vmatpush1.msra.mxu0 0.0
    %4463 = vmatprep.subr.mxu0 0.0
    %4464 = vmatpush1.msra.mxu0 0.0
    %4465 = vmatprep.subr.mxu0 0.0
    %4466 = vmatpush1.msra.mxu0 0.0
    %4467 = vmatprep.subr.mxu0 0.0
    %4468 = vmatpush1.msra.mxu0 0.0
    %4469 = vmatprep.subr.mxu0 0.0
    %4470 = vmatpush1.msra.mxu0 0.0
    %4471 = vmatprep.subr.mxu0 0.0
    %4472 = vmatpush1.msra.mxu0 0.0
    %4473 = vmatprep.subr.mxu0 0.0
    %4474 = vmatpush1.msra.mxu0 0.0
    %4475 = vmatprep.subr.mxu0 0.0
    %4476 = vmatpush1.msra.mxu0 0.0
    %4477 = vmatprep.mubr.f32.mxu0 0.0
    %4478 = vmatmul.mubr.f32.gmra.mrb[0].mxu0 %v4411
    %v4479 = vpop.f32.mrb[0].mxu0
    %v4480 = vadd.f32 0.0, %v4479
    %v4481 = vpop.f32.mrb[0].mxu0
    %4482 = vdwg.mxu0
    %v4483 = vadd.f32 %v3050, %v4480
    %v4484 = vmul.f32 %v4483, 0.5
    %v4485 = vtanh.pop %v4484
    %v4486 = vmul.f32 %v4485, 0.5
    %v4487 = vadd.f32 %v4486, 0.5
    %v4488 = vtanh.pop %v4483
    %v4489 = vmul.f32 %v4487, %v4236
    %4491 = vrot.lane.b32.xlu0 %v4488, 64
    %v4492 = vpop.permute.xlu0 %4491
    %v4494 = vmul.f32 %v4487, %v4492
    %4496 = vrot.lane.b32.xlu0 %v4494, 32
    %v4497 = vpop.permute.xlu0 %4496
    %v4499 = vadd.f32 %v4489, %v4497
    %v4500 = vtanh.pop %v4499
    %4502 = vrot.lane.b32.xlu0 %v4500, 64
    %v4503 = vpop.permute.xlu0 %4502
    %v4505 = vmul.f32 %v4487, %v4503
    %v4506 = vadd.f32 %v4505, %v4244
    %4508 = vrot.lane.b32.xlu0 %v4506, 32
    %v4509 = vpop.permute.xlu0 %4508
    %v4510 = vsel %vm2953, %v4509, 0
    %4512 = vmatprep.subr.mxu0 0.0
    %4513 = vmatpush1.msra.mxu0 %v3962
    %4514 = vmatprep.subr.mxu0 0.0
    %4515 = vmatpush1.msra.mxu0 %v3963
    %4516 = vmatprep.subr.mxu0 0.0
    %4517 = vmatpush1.msra.mxu0 %v3964
    %4518 = vmatprep.subr.mxu0 0.0
    %4519 = vmatpush1.msra.mxu0 %v3965
    %4520 = vmatprep.subr.mxu0 0.0
    %4521 = vmatpush1.msra.mxu0 0.0
    %4522 = vmatprep.subr.mxu0 0.0
    %4523 = vmatpush1.msra.mxu0 0.0
    %4524 = vmatprep.subr.mxu0 0.0
    %4525 = vmatpush1.msra.mxu0 0.0
    %4526 = vmatprep.subr.mxu0 0.0
    %4527 = vmatpush1.msra.mxu0 0.0
    %4528 = vmatprep.subr.mxu0 0.0
    %4529 = vmatpush1.msra.mxu0 0.0
    %4530 = vmatprep.subr.mxu0 0.0
    %4531 = vmatpush1.msra.mxu0 0.0
    %4532 = vmatprep.subr.mxu0 0.0
    %4533 = vmatpush1.msra.mxu0 0.0
    %4534 = vmatprep.subr.mxu0 0.0
    %4535 = vmatpush1.msra.mxu0 0.0
    %4536 = vmatprep.subr.mxu0 0.0
    %4537 = vmatpush1.msra.mxu0 0.0
    %4538 = vmatprep.subr.mxu0 0.0
    %4539 = vmatpush1.msra.mxu0 0.0
    %4540 = vmatprep.subr.mxu0 0.0
    %4541 = vmatpush1.msra.mxu0 0.0
    %4542 = vmatprep.subr.mxu0 0.0
    %4543 = vmatpush1.msra.mxu0 0.0
    %4544 = vmatprep.subr.mxu0 0.0
    %4545 = vmatpush1.msra.mxu0 0.0
    %4546 = vmatprep.subr.mxu0 0.0
    %4547 = vmatpush1.msra.mxu0 0.0
    %4548 = vmatprep.subr.mxu0 0.0
    %4549 = vmatpush1.msra.mxu0 0.0
    %4550 = vmatprep.subr.mxu0 0.0
    %4551 = vmatpush1.msra.mxu0 0.0
    %4552 = vmatprep.subr.mxu0 0.0
    %4553 = vmatpush1.msra.mxu0 0.0
    %4554 = vmatprep.subr.mxu0 0.0
    %4555 = vmatpush1.msra.mxu0 0.0
    %4556 = vmatprep.subr.mxu0 0.0
    %4557 = vmatpush1.msra.mxu0 0.0
    %4558 = vmatprep.subr.mxu0 0.0
    %4559 = vmatpush1.msra.mxu0 0.0
    %4560 = vmatprep.subr.mxu0 0.0
    %4561 = vmatpush1.msra.mxu0 0.0
    %4562 = vmatprep.subr.mxu0 0.0
    %4563 = vmatpush1.msra.mxu0 0.0
    %4564 = vmatprep.subr.mxu0 0.0
    %4565 = vmatpush1.msra.mxu0 0.0
    %4566 = vmatprep.subr.mxu0 0.0
    %4567 = vmatpush1.msra.mxu0 0.0
    %4568 = vmatprep.subr.mxu0 0.0
    %4569 = vmatpush1.msra.mxu0 0.0
    %4570 = vmatprep.subr.mxu0 0.0
    %4571 = vmatpush1.msra.mxu0 0.0
    %4572 = vmatprep.subr.mxu0 0.0
    %4573 = vmatpush1.msra.mxu0 0.0
    %4574 = vmatprep.subr.mxu0 0.0
    %4575 = vmatpush1.msra.mxu0 0.0
    %4576 = vmatprep.mubr.f32.mxu0 0.0
    %4577 = vmatmul.mubr.f32.gmra.mrb[0].mxu0 %v4510
    %v4578 = vpop.f32.mrb[0].mxu0
    %v4579 = vadd.f32 0.0, %v4578
    %v4580 = vpop.f32.mrb[0].mxu0
    %4581 = vdwg.mxu0
    %v4582 = vsel %vm4056, %v4579, -inf
    %4583 = vmax.xlane.f32.xlu0 %v4582
    %v4584 = vpop.xlane.xlu0 %4583
    %v4585 = vsub.f32 %v4579, %v4584
    %v4586 = vmul.f32 %v4585, 1.442695
    %v4587 = vpow.pop %v4586
    %v4588 = vsel %vm4056, %v4587, 0.0
    %4589 = vadd.xlane.f32.xlu0 %v4588
    %v4590 = vpop.xlane.xlu0 %4589
    %v4591 = vrcp.pop %v4590
    %v4592 = vmul.f32 %v4587, %v4591
    %v4594 = vsel %vm4068, %v4592, 0
    %4596 = vmatprep.subr.mxu0 0.0
    %4597 = vmatpush1.msra.mxu0 %v3945
    %4598 = vmatprep.subr.mxu0 0.0
    %4599 = vmatpush1.msra.mxu0 0.0
    %4600 = vmatprep.subr.mxu0 0.0
    %4601 = vmatpush1.msra.mxu0 0.0
    %4602 = vmatprep.subr.mxu0 0.0
    %4603 = vmatpush1.msra.mxu0 0.0
    %4604 = vmatprep.subr.mxu0 0.0
    %4605 = vmatpush1.msra.mxu0 0.0
    %4606 = vmatprep.subr.mxu0 0.0
    %4607 = vmatpush1.msra.mxu0 0.0
    %4608 = vmatprep.subr.mxu0 0.0
    %4609 = vmatpush1.msra.mxu0 0.0
    %4610 = vmatprep.subr.mxu0 0.0
    %4611 = vmatpush1.msra.mxu0 0.0
    %4612 = vmatprep.subr.mxu0 0.0
    %4613 = vmatpush1.msra.mxu0 0.0
    %4614 = vmatprep.subr.mxu0 0.0
    %4615 = vmatpush1.msra.mxu0 0.0
    %4616 = vmatprep.subr.mxu0 0.0
    %4617 = vmatpush1.msra.mxu0 0.0
    %4618 = vmatprep.subr.mxu0 0.0
    %4619 = vmatpush1.msra.mxu0 0.0
    %4620 = vmatprep.subr.mxu0 0.0
    %4621 = vmatpush1.msra.mxu0 0.0
    %4622 = vmatprep.subr.mxu0 0.0
    %4623 = vmatpush1.msra.mxu0 0.0
    %4624 = vmatprep.subr.mxu0 0.0
    %4625 = vmatpush1.msra.mxu0 0.0
    %4626 = vmatprep.subr.mxu0 0.0
    %4627 = vmatpush1.msra.mxu0 0.0
    %4628 = vmatprep.subr.mxu0 0.0
    %4629 = vmatpush1.msra.mxu0 0.0
    %4630 = vmatprep.subr.mxu0 0.0
    %4631 = vmatpush1.msra.mxu0 0.0
    %4632 = vmatprep.subr.mxu0 0.0
    %4633 = vmatpush1.msra.mxu0 0.0
    %4634 = vmatprep.subr.mxu0 0.0
    %4635 = vmatpush1.msra.mxu0 0.0
    %4636 = vmatprep.subr.mxu0 0.0
    %4637 = vmatpush1.msra.mxu0 0.0
    %4638 = vmatprep.subr.mxu0 0.0
    %4639 = vmatpush1.msra.mxu0 0.0
    %4640 = vmatprep.subr.mxu0 0.0
    %4641 = vmatpush1.msra.mxu0 0.0
    %4642 = vmatprep.subr.mxu0 0.0
    %4643 = vmatpush1.msra.mxu0 0.0
    %4644 = vmatprep.subr.mxu0 0.0
    %4645 = vmatpush1.msra.mxu0 0.0
    %4646 = vmatprep.subr.mxu0 0.0
    %4647 = vmatpush1.msra.mxu0 0.0
    %4648 = vmatprep.subr.mxu0 0.0
    %4649 = vmatpush1.msra.mxu0 0.0
    %4650 = vmatprep.subr.mxu0 0.0
    %4651 = vmatpush1.msra.mxu0 0.0
    %4652 = vmatprep.subr.mxu0 0.0
    %4653 = vmatpush1.msra.mxu0 0.0
    %4654 = vmatprep.subr.mxu0 0.0
    %4655 = vmatpush1.msra.mxu0 0.0
    %4656 = vmatprep.subr.mxu0 0.0
    %4657 = vmatpush1.msra.mxu0 0.0
    %4658 = vmatprep.subr.mxu0 0.0
    %4659 = vmatpush1.msra.mxu0 0.0
    %4660 = vmatprep.mubr.f32.mxu0 0.0
    %4661 = vmatmul.mubr.f32.gmra.mrb[0].mxu0 %v4594
    %v4662 = vpop.f32.mrb[0].mxu0
    %v4663 = vadd.f32 0.0, %v4662
    %v4664 = vpop.f32.mrb[0].mxu0
    %4665 = vdwg.mxu0
    %4666 = vrot.lane.b32.xlu0 %v4506, 64
    %v4667 = vpop.permute.xlu0 %4666
    %v4669 = vsel %vm2953, %v4663, %v4667
    %v4671 = vsel %vm4146, %v4669, 0
    %4673 = vmatprep.subr.mxu0 0.0
    %4674 = vmatpush1.msra.mxu0 %v3978
    %4675 = vmatprep.subr.mxu0 0.0
    %4676 = vmatpush1.msra.mxu0 %v3979
    %4677 = vmatprep.subr.mxu0 0.0
    %4678 = vmatpush1.msra.mxu0 %v3980
    %4679 = vmatprep.subr.mxu0 0.0
    %4680 = vmatpush1.msra.mxu0 %v3981
    %4681 = vmatprep.subr.mxu0 0.0
    %4682 = vmatpush1.msra.mxu0 %v3982
    %4683 = vmatprep.subr.mxu0 0.0
    %4684 = vmatpush1.msra.mxu0 %v3983
    %4685 = vmatprep.subr.mxu0 0.0
    %4686 = vmatpush1.msra.mxu0 %v3984
    %4687 = vmatprep.subr.mxu0 0.0
    %4688 = vmatpush1.msra.mxu0 %v3985
    %4689 = vmatprep.subr.mxu0 0.0
    %4690 = vmatpush1.msra.mxu0 0.0
    %4691 = vmatprep.subr.mxu0 0.0
    %4692 = vmatpush1.msra.mxu0 0.0
    %4693 = vmatprep.subr.mxu0 0.0
    %4694 = vmatpush1.msra.mxu0 0.0
    %4695 = vmatprep.subr.mxu0 0.0
    %4696 = vmatpush1.msra.mxu0 0.0
    %4697 = vmatprep.subr.mxu0 0.0
    %4698 = vmatpush1.msra.mxu0 0.0
    %4699 = vmatprep.subr.mxu0 0.0
    %4700 = vmatpush1.msra.mxu0 0.0
    %4701 = vmatprep.subr.mxu0 0.0
    %4702 = vmatpush1.msra.mxu0 0.0
    %4703 = vmatprep.subr.mxu0 0.0
    %4704 = vmatpush1.msra.mxu0 0.0
    %4705 = vmatprep.subr.mxu0 0.0
    %4706 = vmatpush1.msra.mxu0 0.0
    %4707 = vmatprep.subr.mxu0 0.0
    %4708 = vmatpush1.msra.mxu0 0.0
    %4709 = vmatprep.subr.mxu0 0.0
    %4710 = vmatpush1.msra.mxu0 0.0
    %4711 = vmatprep.subr.mxu0 0.0
    %4712 = vmatpush1.msra.mxu0 0.0
    %4713 = vmatprep.subr.mxu0 0.0
    %4714 = vmatpush1.msra.mxu0 0.0
    %4715 = vmatprep.subr.mxu0 0.0
    %4716 = vmatpush1.msra.mxu0 0.0
    %4717 = vmatprep.subr.mxu0 0.0
    %4718 = vmatpush1.msra.mxu0 0.0
    %4719 = vmatprep.subr.mxu0 0.0
    %4720 = vmatpush1.msra.mxu0 0.0
    %4721 = vmatprep.subr.mxu0 0.0
    %4722 = vmatpush1.msra.mxu0 0.0
    %4723 = vmatprep.subr.mxu0 0.0
    %4724 = vmatpush1.msra.mxu0 0.0
    %4725 = vmatprep.subr.mxu0 0.0
    %4726 = vmatpush1.msra.mxu0 0.0
    %4727 = vmatprep.subr.mxu0 0.0
    %4728 = vmatpush1.msra.mxu0 0.0
    %4729 = vmatprep.subr.mxu0 0.0
    %4730 = vmatpush1.msra.mxu0 0.0
    %4731 = vmatprep.subr.mxu0 0.0
    %4732 = vmatpush1.msra.mxu0 0.0
    %4733 = vmatprep.subr.mxu0 0.0
    %4734 = vmatpush1.msra.mxu0 0.0
    %4735 = vmatprep.subr.mxu0 0.0
    %4736 = vmatpush1.msra.mxu0 0.0
    %4737 = vmatprep.mubr.f32.mxu0 0.0
    %4738 = vmatmul.mubr.f32.gmra.mrb[0].mxu0 %v4671
    %v4739 = vpop.f32.mrb[0].mxu0
    %v4740 = vadd.f32 0.0, %v4739
    %v4741 = vpop.f32.mrb[0].mxu0
    %4742 = vdwg.mxu0
    %v4743 = vadd.f32 %v3050, %v4740
    %v4744 = vmul.f32 %v4743, 0.5
    %v4745 = vtanh.pop %v4744
    %v4746 = vmul.f32 %v4745, 0.5
    %v4747 = vadd.f32 %v4746, 0.5
    %v4748 = vtanh.pop %v4743
    %v4749 = vmul.f32 %v4747, %v4499
    %4751 = vrot.lane.b32.xlu0 %v4748, 64
    %v4752 = vpop.permute.xlu0 %4751
    %v4754 = vmul.f32 %v4747, %v4752
    %4756 = vrot.lane.b32.xlu0 %v4754, 32
    %v4757 = vpop.permute.xlu0 %4756
    %v4759 = vadd.f32 %v4749, %v4757
    %v4760 = vtanh.pop %v4759
    %4762 = vrot.lane.b32.xlu0 %v4760, 64
    %v4763 = vpop.permute.xlu0 %4762
    %v4765 = vmul.f32 %v4747, %v4763
    %v4766 = vadd.f32 %v4765, %v4244
    %4768 = vrot.lane.b32.xlu0 %v4766, 32
    %v4769 = vpop.permute.xlu0 %4768
    %v4770 = vsel %vm2953, %v4769, 0
    %4772 = vmatprep.subr.mxu0 0.0
    %4773 = vmatpush1.msra.mxu0 %v3962
    %4774 = vmatprep.subr.mxu0 0.0
    %4775 = vmatpush1.msra.mxu0 %v3963
    %4776 = vmatprep.subr.mxu0 0.0
    %4777 = vmatpush1.msra.mxu0 %v3964
    %4778 = vmatprep.subr.mxu0 0.0
    %4779 = vmatpush1.msra.mxu0 %v3965
    %4780 = vmatprep.subr.mxu0 0.0
    %4781 = vmatpush1.msra.mxu0 0.0
    %4782 = vmatprep.subr.mxu0 0.0
    %4783 = vmatpush1.msra.mxu0 0.0
    %4784 = vmatprep.subr.mxu0 0.0
    %4785 = vmatpush1.msra.mxu0 0.0
    %4786 = vmatprep.subr.mxu0 0.0
    %4787 = vmatpush1.msra.mxu0 0.0
    %4788 = vmatprep.subr.mxu0 0.0
    %4789 = vmatpush1.msra.mxu0 0.0
    %4790 = vmatprep.subr.mxu0 0.0
    %4791 = vmatpush1.msra.mxu0 0.0
    %4792 = vmatprep.subr.mxu0 0.0
    %4793 = vmatpush1.msra.mxu0 0.0
    %4794 = vmatprep.subr.mxu0 0.0
    %4795 = vmatpush1.msra.mxu0 0.0
    %4796 = vmatprep.subr.mxu0 0.0
    %4797 = vmatpush1.msra.mxu0 0.0
    %4798 = vmatprep.subr.mxu0 0.0
    %4799 = vmatpush1.msra.mxu0 0.0
    %4800 = vmatprep.subr.mxu0 0.0
    %4801 = vmatpush1.msra.mxu0 0.0
    %4802 = vmatprep.subr.mxu0 0.0
    %4803 = vmatpush1.msra.mxu0 0.0
    %4804 = vmatprep.subr.mxu0 0.0
    %4805 = vmatpush1.msra.mxu0 0.0
    %4806 = vmatprep.subr.mxu0 0.0
    %4807 = vmatpush1.msra.mxu0 0.0
    %4808 = vmatprep.subr.mxu0 0.0
    %4809 = vmatpush1.msra.mxu0 0.0
    %4810 = vmatprep.subr.mxu0 0.0
    %4811 = vmatpush1.msra.mxu0 0.0
    %4812 = vmatprep.subr.mxu0 0.0
    %4813 = vmatpush1.msra.mxu0 0.0
    %4814 = vmatprep.subr.mxu0 0.0
    %4815 = vmatpush1.msra.mxu0 0.0
    %4816 = vmatprep.subr.mxu0 0.0
    %4817 = vmatpush1.msra.mxu0 0.0
    %4818 = vmatprep.subr.mxu0 0.0
    %4819 = vmatpush1.msra.mxu0 0.0
    %4820 = vmatprep.subr.mxu0 0.0
    %4821 = vmatpush1.msra.mxu0 0.0
    %4822 = vmatprep.subr.mxu0 0.0
    %4823 = vmatpush1.msra.mxu0 0.0
    %4824 = vmatprep.subr.mxu0 0.0
    %4825 = vmatpush1.msra.mxu0 0.0
    %4826 = vmatprep.subr.mxu0 0.0
    %4827 = vmatpush1.msra.mxu0 0.0
    %4828 = vmatprep.subr.mxu0 0.0
    %4829 = vmatpush1.msra.mxu0 0.0
    %4830 = vmatprep.subr.mxu0 0.0
    %4831 = vmatpush1.msra.mxu0 0.0
    %4832 = vmatprep.subr.mxu0 0.0
    %4833 = vmatpush1.msra.mxu0 0.0
    %4834 = vmatprep.subr.mxu0 0.0
    %4835 = vmatpush1.msra.mxu0 0.0
    %4836 = vmatprep.mubr.f32.mxu0 0.0
    %4837 = vmatmul.mubr.f32.gmra.mrb[0].mxu0 %v4770
    %v4838 = vpop.f32.mrb[0].mxu0
    %v4839 = vadd.f32 0.0, %v4838
    %v4840 = vpop.f32.mrb[0].mxu0
    %4841 = vdwg.mxu0
    %v4842 = vsel %vm4056, %v4839, -inf
    %4843 = vmax.xlane.f32.xlu0 %v4842
    %v4844 = vpop.xlane.xlu0 %4843
    %v4845 = vsub.f32 %v4839, %v4844
    %v4846 = vmul.f32 %v4845, 1.442695
    %v4847 = vpow.pop %v4846
    %v4848 = vsel %vm4056, %v4847, 0.0
    %4849 = vadd.xlane.f32.xlu0 %v4848
    %v4850 = vpop.xlane.xlu0 %4849
    %v4851 = vrcp.pop %v4850
    %v4852 = vmul.f32 %v4847, %v4851
    %v4854 = vsel %vm4068, %v4852, 0
    %4856 = vmatprep.subr.mxu0 0.0
    %4857 = vmatpush1.msra.mxu0 %v3945
    %4858 = vmatprep.subr.mxu0 0.0
    %4859 = vmatpush1.msra.mxu0 0.0
    %4860 = vmatprep.subr.mxu0 0.0
    %4861 = vmatpush1.msra.mxu0 0.0
    %4862 = vmatprep.subr.mxu0 0.0
    %4863 = vmatpush1.msra.mxu0 0.0
    %4864 = vmatprep.subr.mxu0 0.0
    %4865 = vmatpush1.msra.mxu0 0.0
    %4866 = vmatprep.subr.mxu0 0.0
    %4867 = vmatpush1.msra.mxu0 0.0
    %4868 = vmatprep.subr.mxu0 0.0
    %4869 = vmatpush1.msra.mxu0 0.0
    %4870 = vmatprep.subr.mxu0 0.0
    %4871 = vmatpush1.msra.mxu0 0.0
    %4872 = vmatprep.subr.mxu0 0.0
    %4873 = vmatpush1.msra.mxu0 0.0
    %4874 = vmatprep.subr.mxu0 0.0
    %4875 = vmatpush1.msra.mxu0 0.0
    %4876 = vmatprep.subr.mxu0 0.0
    %4877 = vmatpush1.msra.mxu0 0.0
    %4878 = vmatprep.subr.mxu0 0.0
    %4879 = vmatpush1.msra.mxu0 0.0
    %4880 = vmatprep.subr.mxu0 0.0
    %4881 = vmatpush1.msra.mxu0 0.0
    %4882 = vmatprep.subr.mxu0 0.0
    %4883 = vmatpush1.msra.mxu0 0.0
    %4884 = vmatprep.subr.mxu0 0.0
    %4885 = vmatpush1.msra.mxu0 0.0
    %4886 = vmatprep.subr.mxu0 0.0
    %4887 = vmatpush1.msra.mxu0 0.0
    %4888 = vmatprep.subr.mxu0 0.0
    %4889 = vmatpush1.msra.mxu0 0.0
    %4890 = vmatprep.subr.mxu0 0.0
    %4891 = vmatpush1.msra.mxu0 0.0
    %4892 = vmatprep.subr.mxu0 0.0
    %4893 = vmatpush1.msra.mxu0 0.0
    %4894 = vmatprep.subr.mxu0 0.0
    %4895 = vmatpush1.msra.mxu0 0.0
    %4896 = vmatprep.subr.mxu0 0.0
    %4897 = vmatpush1.msra.mxu0 0.0
    %4898 = vmatprep.subr.mxu0 0.0
    %4899 = vmatpush1.msra.mxu0 0.0
    %4900 = vmatprep.subr.mxu0 0.0
    %4901 = vmatpush1.msra.mxu0 0.0
    %4902 = vmatprep.subr.mxu0 0.0
    %4903 = vmatpush1.msra.mxu0 0.0
    %4904 = vmatprep.subr.mxu0 0.0
    %4905 = vmatpush1.msra.mxu0 0.0
    %4906 = vmatprep.subr.mxu0 0.0
    %4907 = vmatpush1.msra.mxu0 0.0
    %4908 = vmatprep.subr.mxu0 0.0
    %4909 = vmatpush1.msra.mxu0 0.0
    %4910 = vmatprep.subr.mxu0 0.0
    %4911 = vmatpush1.msra.mxu0 0.0
    %4912 = vmatprep.subr.mxu0 0.0
    %4913 = vmatpush1.msra.mxu0 0.0
    %4914 = vmatprep.subr.mxu0 0.0
    %4915 = vmatpush1.msra.mxu0 0.0
    %4916 = vmatprep.subr.mxu0 0.0
    %4917 = vmatpush1.msra.mxu0 0.0
    %4918 = vmatprep.subr.mxu0 0.0
    %4919 = vmatpush1.msra.mxu0 0.0
    %4920 = vmatprep.mubr.f32.mxu0 0.0
    %4921 = vmatmul.mubr.f32.gmra.mrb[0].mxu0 %v4854
    %v4922 = vpop.f32.mrb[0].mxu0
    %v4923 = vadd.f32 0.0, %v4922
    %v4924 = vpop.f32.mrb[0].mxu0
    %4925 = vdwg.mxu0
    %4926 = vrot.lane.b32.xlu0 %v4766, 64
    %v4927 = vpop.permute.xlu0 %4926
    %v4929 = vsel %vm2953, %v4923, %v4927
    %v4931 = vsel %vm4146, %v4929, 0
    %4933 = vmatprep.subr.mxu0 0.0
    %4934 = vmatpush1.msra.mxu0 %v3978
    %4935 = vmatprep.subr.mxu0 0.0
    %4936 = vmatpush1.msra.mxu0 %v3979
    %4937 = vmatprep.subr.mxu0 0.0
    %4938 = vmatpush1.msra.mxu0 %v3980
    %4939 = vmatprep.subr.mxu0 0.0
    %4940 = vmatpush1.msra.mxu0 %v3981
    %4941 = vmatprep.subr.mxu0 0.0
    %4942 = vmatpush1.msra.mxu0 %v3982
    %4943 = vmatprep.subr.mxu0 0.0
    %4944 = vmatpush1.msra.mxu0 %v3983
    %4945 = vmatprep.subr.mxu0 0.0
    %4946 = vmatpush1.msra.mxu0 %v3984
    %4947 = vmatprep.subr.mxu0 0.0
    %4948 = vmatpush1.msra.mxu0 %v3985
    %4949 = vmatprep.subr.mxu0 0.0
    %4950 = vmatpush1.msra.mxu0 0.0
    %4951 = vmatprep.subr.mxu0 0.0
    %4952 = vmatpush1.msra.mxu0 0.0
    %4953 = vmatprep.subr.mxu0 0.0
    %4954 = vmatpush1.msra.mxu0 0.0
    %4955 = vmatprep.subr.mxu0 0.0
    %4956 = vmatpush1.msra.mxu0 0.0
    %4957 = vmatprep.subr.mxu0 0.0
    %4958 = vmatpush1.msra.mxu0 0.0
    %4959 = vmatprep.subr.mxu0 0.0
    %4960 = vmatpush1.msra.mxu0 0.0
    %4961 = vmatprep.subr.mxu0 0.0
    %4962 = vmatpush1.msra.mxu0 0.0
    %4963 = vmatprep.subr.mxu0 0.0
    %4964 = vmatpush1.msra.mxu0 0.0
    %4965 = vmatprep.subr.mxu0 0.0
    %4966 = vmatpush1.msra.mxu0 0.0
    %4967 = vmatprep.subr.mxu0 0.0
    %4968 = vmatpush1.msra.mxu0 0.0
    %4969 = vmatprep.subr.mxu0 0.0
    %4970 = vmatpush1.msra.mxu0 0.0
    %4971 = vmatprep.subr.mxu0 0.0
    %4972 = vmatpush1.msra.mxu0 0.0
    %4973 = vmatprep.subr.mxu0 0.0
    %4974 = vmatpush1.msra.mxu0 0.0
    %4975 = vmatprep.subr.mxu0 0.0
    %4976 = vmatpush1.msra.mxu0 0.0
    %4977 = vmatprep.subr.mxu0 0.0
    %4978 = vmatpush1.msra.mxu0 0.0
    %4979 = vmatprep.subr.mxu0 0.0
    %4980 = vmatpush1.msra.mxu0 0.0
    %4981 = vmatprep.subr.mxu0 0.0
    %4982 = vmatpush1.msra.mxu0 0.0
    %4983 = vmatprep.subr.mxu0 0.0
    %4984 = vmatpush1.msra.mxu0 0.0
    %4985 = vmatprep.subr.mxu0 0.0
    %4986 = vmatpush1.msra.mxu0 0.0
    %4987 = vmatprep.subr.mxu0 0.0
    %4988 = vmatpush1.msra.mxu0 0.0
    %4989 = vmatprep.subr.mxu0 0.0
    %4990 = vmatpush1.msra.mxu0 0.0
    %4991 = vmatprep.subr.mxu0 0.0
    %4992 = vmatpush1.msra.mxu0 0.0
    %4993 = vmatprep.subr.mxu0 0.0
    %4994 = vmatpush1.msra.mxu0 0.0
    %4995 = vmatprep.subr.mxu0 0.0
    %4996 = vmatpush1.msra.mxu0 0.0
    %4997 = vmatprep.mubr.f32.mxu0 0.0
    %4998 = vmatmul.mubr.f32.gmra.mrb[0].mxu0 %v4931
    %v4999 = vpop.f32.mrb[0].mxu0
    %v5000 = vadd.f32 0.0, %v4999
    %v5001 = vpop.f32.mrb[0].mxu0
    %5002 = vdwg.mxu0
    %v5003 = vadd.f32 %v3050, %v5000
    %v5004 = vmul.f32 %v5003, 0.5
    %v5005 = vtanh.pop %v5004
    %v5006 = vmul.f32 %v5005, 0.5
    %v5007 = vadd.f32 %v5006, 0.5
    %v5008 = vtanh.pop %v5003
    %v5009 = vmul.f32 %v5007, %v4759
    %5011 = vrot.lane.b32.xlu0 %v5008, 64
    %v5012 = vpop.permute.xlu0 %5011
    %v5014 = vmul.f32 %v5007, %v5012
    %5016 = vrot.lane.b32.xlu0 %v5014, 32
    %v5017 = vpop.permute.xlu0 %5016
    %v5019 = vadd.f32 %v5009, %v5017
    %v5020 = vtanh.pop %v5019
    %5022 = vrot.lane.b32.xlu0 %v5020, 64
    %v5023 = vpop.permute.xlu0 %5022
    %v5025 = vmul.f32 %v5007, %v5023
    %v5026 = vadd.f32 %v5025, %v4244
    %5028 = vrot.lane.b32.xlu0 %v5026, 32
    %v5029 = vpop.permute.xlu0 %5028
    %v5030 = vsel %vm2953, %v5029, 0
    %5032 = vmatprep.subr.mxu0 0.0
    %5033 = vmatpush1.msra.mxu0 %v3962
    %5034 = vmatprep.subr.mxu0 0.0
    %5035 = vmatpush1.msra.mxu0 %v3963
    %5036 = vmatprep.subr.mxu0 0.0
    %5037 = vmatpush1.msra.mxu0 %v3964
    %5038 = vmatprep.subr.mxu0 0.0
    %5039 = vmatpush1.msra.mxu0 %v3965
    %5040 = vmatprep.subr.mxu0 0.0
    %5041 = vmatpush1.msra.mxu0 0.0
    %5042 = vmatprep.subr.mxu0 0.0
    %5043 = vmatpush1.msra.mxu0 0.0
    %5044 = vmatprep.subr.mxu0 0.0
    %5045 = vmatpush1.msra.mxu0 0.0
    %5046 = vmatprep.subr.mxu0 0.0
    %5047 = vmatpush1.msra.mxu0 0.0
    %5048 = vmatprep.subr.mxu0 0.0
    %5049 = vmatpush1.msra.mxu0 0.0
    %5050 = vmatprep.subr.mxu0 0.0
    %5051 = vmatpush1.msra.mxu0 0.0
    %5052 = vmatprep.subr.mxu0 0.0
    %5053 = vmatpush1.msra.mxu0 0.0
    %5054 = vmatprep.subr.mxu0 0.0
    %5055 = vmatpush1.msra.mxu0 0.0
    %5056 = vmatprep.subr.mxu0 0.0
    %5057 = vmatpush1.msra.mxu0 0.0
    %5058 = vmatprep.subr.mxu0 0.0
    %5059 = vmatpush1.msra.mxu0 0.0
    %5060 = vmatprep.subr.mxu0 0.0
    %5061 = vmatpush1.msra.mxu0 0.0
    %5062 = vmatprep.subr.mxu0 0.0
    %5063 = vmatpush1.msra.mxu0 0.0
    %5064 = vmatprep.subr.mxu0 0.0
    %5065 = vmatpush1.msra.mxu0 0.0
    %5066 = vmatprep.subr.mxu0 0.0
    %5067 = vmatpush1.msra.mxu0 0.0
    %5068 = vmatprep.subr.mxu0 0.0
    %5069 = vmatpush1.msra.mxu0 0.0
    %5070 = vmatprep.subr.mxu0 0.0
    %5071 = vmatpush1.msra.mxu0 0.0
    %5072 = vmatprep.subr.mxu0 0.0
    %5073 = vmatpush1.msra.mxu0 0.0
    %5074 = vmatprep.subr.mxu0 0.0
    %5075 = vmatpush1.msra.mxu0 0.0
    %5076 = vmatprep.subr.mxu0 0.0
    %5077 = vmatpush1.msra.mxu0 0.0
    %5078 = vmatprep.subr.mxu0 0.0
    %5079 = vmatpush1.msra.mxu0 0.0
    %5080 = vmatprep.subr.mxu0 0.0
    %5081 = vmatpush1.msra.mxu0 0.0
    %5082 = vmatprep.subr.mxu0 0.0
    %5083 = vmatpush1.msra.mxu0 0.0
    %5084 = vmatprep.subr.mxu0 0.0
    %5085 = vmatpush1.msra.mxu0 0.0
    %5086 = vmatprep.subr.mxu0 0.0
    %5087 = vmatpush1.msra.mxu0 0.0
    %5088 = vmatprep.subr.mxu0 0.0
    %5089 = vmatpush1.msra.mxu0 0.0
    %5090 = vmatprep.subr.mxu0 0.0
    %5091 = vmatpush1.msra.mxu0 0.0
    %5092 = vmatprep.subr.mxu0 0.0
    %5093 = vmatpush1.msra.mxu0 0.0
    %5094 = vmatprep.subr.mxu0 0.0
    %5095 = vmatpush1.msra.mxu0 0.0
    %5096 = vmatprep.mubr.f32.mxu0 0.0
    %5097 = vmatmul.mubr.f32.gmra.mrb[0].mxu0 %v5030
    %v5098 = vpop.f32.mrb[0].mxu0
    %v5099 = vadd.f32 0.0, %v5098
    %v5100 = vpop.f32.mrb[0].mxu0
    %5101 = vdwg.mxu0
    %v5102 = vsel %vm4056, %v5099, -inf
    %5103 = vmax.xlane.f32.xlu0 %v5102
    %v5104 = vpop.xlane.xlu0 %5103
    %v5105 = vsub.f32 %v5099, %v5104
    %v5106 = vmul.f32 %v5105, 1.442695
    %v5107 = vpow.pop %v5106
    %v5108 = vsel %vm4056, %v5107, 0.0
    %5109 = vadd.xlane.f32.xlu0 %v5108
    %v5110 = vpop.xlane.xlu0 %5109
    %v5111 = vrcp.pop %v5110
    %v5112 = vmul.f32 %v5107, %v5111
    %v5114 = vsel %vm4068, %v5112, 0
    %5116 = vmatprep.subr.mxu0 0.0
    %5117 = vmatpush1.msra.mxu0 %v3945
    %5118 = vmatprep.subr.mxu0 0.0
    %5119 = vmatpush1.msra.mxu0 0.0
    %5120 = vmatprep.subr.mxu0 0.0
    %5121 = vmatpush1.msra.mxu0 0.0
    %5122 = vmatprep.subr.mxu0 0.0
    %5123 = vmatpush1.msra.mxu0 0.0
    %5124 = vmatprep.subr.mxu0 0.0
    %5125 = vmatpush1.msra.mxu0 0.0
    %5126 = vmatprep.subr.mxu0 0.0
    %5127 = vmatpush1.msra.mxu0 0.0
    %5128 = vmatprep.subr.mxu0 0.0
    %5129 = vmatpush1.msra.mxu0 0.0
    %5130 = vmatprep.subr.mxu0 0.0
    %5131 = vmatpush1.msra.mxu0 0.0
    %5132 = vmatprep.subr.mxu0 0.0
    %5133 = vmatpush1.msra.mxu0 0.0
    %5134 = vmatprep.subr.mxu0 0.0
    %5135 = vmatpush1.msra.mxu0 0.0
    %5136 = vmatprep.subr.mxu0 0.0
    %5137 = vmatpush1.msra.mxu0 0.0
    %5138 = vmatprep.subr.mxu0 0.0
    %5139 = vmatpush1.msra.mxu0 0.0
    %5140 = vmatprep.subr.mxu0 0.0
    %5141 = vmatpush1.msra.mxu0 0.0
    %5142 = vmatprep.subr.mxu0 0.0
    %5143 = vmatpush1.msra.mxu0 0.0
    %5144 = vmatprep.subr.mxu0 0.0
    %5145 = vmatpush1.msra.mxu0 0.0
    %5146 = vmatprep.subr.mxu0 0.0
    %5147 = vmatpush1.msra.mxu0 0.0
    %5148 = vmatprep.subr.mxu0 0.0
    %5149 = vmatpush1.msra.mxu0 0.0
    %5150 = vmatprep.subr.mxu0 0.0
    %5151 = vmatpush1.msra.mxu0 0.0
    %5152 = vmatprep.subr.mxu0 0.0
    %5153 = vmatpush1.msra.mxu0 0.0
    %5154 = vmatprep.subr.mxu0 0.0
    %5155 = vmatpush1.msra.mxu0 0.0
    %5156 = vmatprep.subr.mxu0 0.0
    %5157 = vmatpush1.msra.mxu0 0.0
    %5158 = vmatprep.subr.mxu0 0.0
    %5159 = vmatpush1.msra.mxu0 0.0
    %5160 = vmatprep.subr.mxu0 0.0
    %5161 = vmatpush1.msra.mxu0 0.0
    %5162 = vmatprep.subr.mxu0 0.0
    %5163 = vmatpush1.msra.mxu0 0.0
    %5164 = vmatprep.subr.mxu0 0.0
    %5165 = vmatpush1.msra.mxu0 0.0
    %5166 = vmatprep.subr.mxu0 0.0
    %5167 = vmatpush1.msra.mxu0 0.0
    %5168 = vmatprep.subr.mxu0 0.0
    %5169 = vmatpush1.msra.mxu0 0.0
    %5170 = vmatprep.subr.mxu0 0.0
    %5171 = vmatpush1.msra.mxu0 0.0
    %5172 = vmatprep.subr.mxu0 0.0
    %5173 = vmatpush1.msra.mxu0 0.0
    %5174 = vmatprep.subr.mxu0 0.0
    %5175 = vmatpush1.msra.mxu0 0.0
    %5176 = vmatprep.subr.mxu0 0.0
    %5177 = vmatpush1.msra.mxu0 0.0
    %5178 = vmatprep.subr.mxu0 0.0
    %5179 = vmatpush1.msra.mxu0 0.0
    %5180 = vmatprep.mubr.f32.mxu0 0.0
    %5181 = vmatmul.mubr.f32.gmra.mrb[0].mxu0 %v5114
    %v5182 = vpop.f32.mrb[0].mxu0
    %v5183 = vadd.f32 0.0, %v5182
    %v5184 = vpop.f32.mrb[0].mxu0
    %5185 = vdwg.mxu0
    %5186 = vrot.lane.b32.xlu0 %v5026, 64
    %v5187 = vpop.permute.xlu0 %5186
    %v5189 = vsel %vm2953, %v5183, %v5187
    %v5191 = vsel %vm4146, %v5189, 0
    %5193 = vmatprep.subr.mxu0 0.0
    %5194 = vmatpush1.msra.mxu0 %v3978
    %5195 = vmatprep.subr.mxu0 0.0
    %5196 = vmatpush1.msra.mxu0 %v3979
    %5197 = vmatprep.subr.mxu0 0.0
    %5198 = vmatpush1.msra.mxu0 %v3980
    %5199 = vmatprep.subr.mxu0 0.0
    %5200 = vmatpush1.msra.mxu0 %v3981
    %5201 = vmatprep.subr.mxu0 0.0
    %5202 = vmatpush1.msra.mxu0 %v3982
    %5203 = vmatprep.subr.mxu0 0.0
    %5204 = vmatpush1.msra.mxu0 %v3983
    %5205 = vmatprep.subr.mxu0 0.0
    %5206 = vmatpush1.msra.mxu0 %v3984
    %5207 = vmatprep.subr.mxu0 0.0
    %5208 = vmatpush1.msra.mxu0 %v3985
    %5209 = vmatprep.subr.mxu0 0.0
    %5210 = vmatpush1.msra.mxu0 0.0
    %5211 = vmatprep.subr.mxu0 0.0
    %5212 = vmatpush1.msra.mxu0 0.0
    %5213 = vmatprep.subr.mxu0 0.0
    %5214 = vmatpush1.msra.mxu0 0.0
    %5215 = vmatprep.subr.mxu0 0.0
    %5216 = vmatpush1.msra.mxu0 0.0
    %5217 = vmatprep.subr.mxu0 0.0
    %5218 = vmatpush1.msra.mxu0 0.0
    %5219 = vmatprep.subr.mxu0 0.0
    %5220 = vmatpush1.msra.mxu0 0.0
    %5221 = vmatprep.subr.mxu0 0.0
    %5222 = vmatpush1.msra.mxu0 0.0
    %5223 = vmatprep.subr.mxu0 0.0
    %5224 = vmatpush1.msra.mxu0 0.0
    %5225 = vmatprep.subr.mxu0 0.0
    %5226 = vmatpush1.msra.mxu0 0.0
    %5227 = vmatprep.subr.mxu0 0.0
    %5228 = vmatpush1.msra.mxu0 0.0
    %5229 = vmatprep.subr.mxu0 0.0
    %5230 = vmatpush1.msra.mxu0 0.0
    %5231 = vmatprep.subr.mxu0 0.0
    %5232 = vmatpush1.msra.mxu0 0.0
    %5233 = vmatprep.subr.mxu0 0.0
    %5234 = vmatpush1.msra.mxu0 0.0
    %5235 = vmatprep.subr.mxu0 0.0
    %5236 = vmatpush1.msra.mxu0 0.0
    %5237 = vmatprep.subr.mxu0 0.0
    %5238 = vmatpush1.msra.mxu0 0.0
    %5239 = vmatprep.subr.mxu0 0.0
    %5240 = vmatpush1.msra.mxu0 0.0
    %5241 = vmatprep.subr.mxu0 0.0
    %5242 = vmatpush1.msra.mxu0 0.0
    %5243 = vmatprep.subr.mxu0 0.0
    %5244 = vmatpush1.msra.mxu0 0.0
    %5245 = vmatprep.subr.mxu0 0.0
    %5246 = vmatpush1.msra.mxu0 0.0
    %5247 = vmatprep.subr.mxu0 0.0
    %5248 = vmatpush1.msra.mxu0 0.0
    %5249 = vmatprep.subr.mxu0 0.0
    %5250 = vmatpush1.msra.mxu0 0.0
    %5251 = vmatprep.subr.mxu0 0.0
    %5252 = vmatpush1.msra.mxu0 0.0
    %5253 = vmatprep.subr.mxu0 0.0
    %5254 = vmatpush1.msra.mxu0 0.0
    %5255 = vmatprep.subr.mxu0 0.0
    %5256 = vmatpush1.msra.mxu0 0.0
    %5257 = vmatprep.mubr.f32.mxu0 0.0
    %5258 = vmatmul.mubr.f32.gmra.mrb[0].mxu0 %v5191
    %v5259 = vpop.f32.mrb[0].mxu0
    %v5260 = vadd.f32 0.0, %v5259
    %v5261 = vpop.f32.mrb[0].mxu0
    %5262 = vdwg.mxu0
    %v5263 = vadd.f32 %v3050, %v5260
    %v5264 = vmul.f32 %v5263, 0.5
    %v5265 = vtanh.pop %v5264
    %v5266 = vmul.f32 %v5265, 0.5
    %v5267 = vadd.f32 %v5266, 0.5
    %v5268 = vtanh.pop %v5263
    %v5269 = vmul.f32 %v5267, %v5019
    %5271 = vrot.lane.b32.xlu0 %v5268, 64
    %v5272 = vpop.permute.xlu0 %5271
    %v5274 = vmul.f32 %v5267, %v5272
    %5276 = vrot.lane.b32.xlu0 %v5274, 32
    %v5277 = vpop.permute.xlu0 %5276
    %v5279 = vadd.f32 %v5269, %v5277
    %v5280 = vtanh.pop %v5279
    %5282 = vrot.lane.b32.xlu0 %v5280, 64
    %v5283 = vpop.permute.xlu0 %5282
    %v5285 = vmul.f32 %v5267, %v5283
    %v5286 = vadd.f32 %v5285, %v4244
    %5288 = vrot.lane.b32.xlu0 %v5286, 32
    %v5289 = vpop.permute.xlu0 %5288
    %v5290 = vsel %vm2953, %v5289, 0
    %5292 = vmatprep.subr.mxu0 0.0
    %5293 = vmatpush1.msra.mxu0 %v3962
    %5294 = vmatprep.subr.mxu0 0.0
    %5295 = vmatpush1.msra.mxu0 %v3963
    %5296 = vmatprep.subr.mxu0 0.0
    %5297 = vmatpush1.msra.mxu0 %v3964
    %5298 = vmatprep.subr.mxu0 0.0
    %5299 = vmatpush1.msra.mxu0 %v3965
    %5300 = vmatprep.subr.mxu0 0.0
    %5301 = vmatpush1.msra.mxu0 0.0
    %5302 = vmatprep.subr.mxu0 0.0
    %5303 = vmatpush1.msra.mxu0 0.0
    %5304 = vmatprep.subr.mxu0 0.0
    %5305 = vmatpush1.msra.mxu0 0.0
    %5306 = vmatprep.subr.mxu0 0.0
    %5307 = vmatpush1.msra.mxu0 0.0
    %5308 = vmatprep.subr.mxu0 0.0
    %5309 = vmatpush1.msra.mxu0 0.0
    %5310 = vmatprep.subr.mxu0 0.0
    %5311 = vmatpush1.msra.mxu0 0.0
    %5312 = vmatprep.subr.mxu0 0.0
    %5313 = vmatpush1.msra.mxu0 0.0
    %5314 = vmatprep.subr.mxu0 0.0
    %5315 = vmatpush1.msra.mxu0 0.0
    %5316 = vmatprep.subr.mxu0 0.0
    %5317 = vmatpush1.msra.mxu0 0.0
    %5318 = vmatprep.subr.mxu0 0.0
    %5319 = vmatpush1.msra.mxu0 0.0
    %5320 = vmatprep.subr.mxu0 0.0
    %5321 = vmatpush1.msra.mxu0 0.0
    %5322 = vmatprep.subr.mxu0 0.0
    %5323 = vmatpush1.msra.mxu0 0.0
    %5324 = vmatprep.subr.mxu0 0.0
    %5325 = vmatpush1.msra.mxu0 0.0
    %5326 = vmatprep.subr.mxu0 0.0
    %5327 = vmatpush1.msra.mxu0 0.0
    %5328 = vmatprep.subr.mxu0 0.0
    %5329 = vmatpush1.msra.mxu0 0.0
    %5330 = vmatprep.subr.mxu0 0.0
    %5331 = vmatpush1.msra.mxu0 0.0
    %5332 = vmatprep.subr.mxu0 0.0
    %5333 = vmatpush1.msra.mxu0 0.0
    %5334 = vmatprep.subr.mxu0 0.0
    %5335 = vmatpush1.msra.mxu0 0.0
    %5336 = vmatprep.subr.mxu0 0.0
    %5337 = vmatpush1.msra.mxu0 0.0
    %5338 = vmatprep.subr.mxu0 0.0
    %5339 = vmatpush1.msra.mxu0 0.0
    %5340 = vmatprep.subr.mxu0 0.0
    %5341 = vmatpush1.msra.mxu0 0.0
    %5342 = vmatprep.subr.mxu0 0.0
    %5343 = vmatpush1.msra.mxu0 0.0
    %5344 = vmatprep.subr.mxu0 0.0
    %5345 = vmatpush1.msra.mxu0 0.0
    %5346 = vmatprep.subr.mxu0 0.0
    %5347 = vmatpush1.msra.mxu0 0.0
    %5348 = vmatprep.subr.mxu0 0.0
    %5349 = vmatpush1.msra.mxu0 0.0
    %5350 = vmatprep.subr.mxu0 0.0
    %5351 = vmatpush1.msra.mxu0 0.0
    %5352 = vmatprep.subr.mxu0 0.0
    %5353 = vmatpush1.msra.mxu0 0.0
    %5354 = vmatprep.subr.mxu0 0.0
    %5355 = vmatpush1.msra.mxu0 0.0
    %5356 = vmatprep.mubr.f32.mxu0 0.0
    %5357 = vmatmul.mubr.f32.gmra.mrb[0].mxu0 %v5290
    %v5358 = vpop.f32.mrb[0].mxu0
    %v5359 = vadd.f32 0.0, %v5358
    %v5360 = vpop.f32.mrb[0].mxu0
    %5361 = vdwg.mxu0
    %v5362 = vsel %vm4056, %v5359, -inf
    %5363 = vmax.xlane.f32.xlu0 %v5362
    %v5364 = vpop.xlane.xlu0 %5363
    %v5365 = vsub.f32 %v5359, %v5364
    %v5366 = vmul.f32 %v5365, 1.442695
    %v5367 = vpow.pop %v5366
    %v5368 = vsel %vm4056, %v5367, 0.0
    %5369 = vadd.xlane.f32.xlu0 %v5368
    %v5370 = vpop.xlane.xlu0 %5369
    %v5371 = vrcp.pop %v5370
    %v5372 = vmul.f32 %v5367, %v5371
    %v5374 = vsel %vm4068, %v5372, 0
    %5376 = vmatprep.subr.mxu0 0.0
    %5377 = vmatpush1.msra.mxu0 %v3945
    %5378 = vmatprep.subr.mxu0 0.0
    %5379 = vmatpush1.msra.mxu0 0.0
    %5380 = vmatprep.subr.mxu0 0.0
    %5381 = vmatpush1.msra.mxu0 0.0
    %5382 = vmatprep.subr.mxu0 0.0
    %5383 = vmatpush1.msra.mxu0 0.0
    %5384 = vmatprep.subr.mxu0 0.0
    %5385 = vmatpush1.msra.mxu0 0.0
    %5386 = vmatprep.subr.mxu0 0.0
    %5387 = vmatpush1.msra.mxu0 0.0
    %5388 = vmatprep.subr.mxu0 0.0
    %5389 = vmatpush1.msra.mxu0 0.0
    %5390 = vmatprep.subr.mxu0 0.0
    %5391 = vmatpush1.msra.mxu0 0.0
    %5392 = vmatprep.subr.mxu0 0.0
    %5393 = vmatpush1.msra.mxu0 0.0
    %5394 = vmatprep.subr.mxu0 0.0
    %5395 = vmatpush1.msra.mxu0 0.0
    %5396 = vmatprep.subr.mxu0 0.0
    %5397 = vmatpush1.msra.mxu0 0.0
    %5398 = vmatprep.subr.mxu0 0.0
    %5399 = vmatpush1.msra.mxu0 0.0
    %5400 = vmatprep.subr.mxu0 0.0
    %5401 = vmatpush1.msra.mxu0 0.0
    %5402 = vmatprep.subr.mxu0 0.0
    %5403 = vmatpush1.msra.mxu0 0.0
    %5404 = vmatprep.subr.mxu0 0.0
    %5405 = vmatpush1.msra.mxu0 0.0
    %5406 = vmatprep.subr.mxu0 0.0
    %5407 = vmatpush1.msra.mxu0 0.0
    %5408 = vmatprep.subr.mxu0 0.0
    %5409 = vmatpush1.msra.mxu0 0.0
    %5410 = vmatprep.subr.mxu0 0.0
    %5411 = vmatpush1.msra.mxu0 0.0
    %5412 = vmatprep.subr.mxu0 0.0
    %5413 = vmatpush1.msra.mxu0 0.0
    %5414 = vmatprep.subr.mxu0 0.0
    %5415 = vmatpush1.msra.mxu0 0.0
    %5416 = vmatprep.subr.mxu0 0.0
    %5417 = vmatpush1.msra.mxu0 0.0
    %5418 = vmatprep.subr.mxu0 0.0
    %5419 = vmatpush1.msra.mxu0 0.0
    %5420 = vmatprep.subr.mxu0 0.0
    %5421 = vmatpush1.msra.mxu0 0.0
    %5422 = vmatprep.subr.mxu0 0.0
    %5423 = vmatpush1.msra.mxu0 0.0
    %5424 = vmatprep.subr.mxu0 0.0
    %5425 = vmatpush1.msra.mxu0 0.0
    %5426 = vmatprep.subr.mxu0 0.0
    %5427 = vmatpush1.msra.mxu0 0.0
    %5428 = vmatprep.subr.mxu0 0.0
    %5429 = vmatpush1.msra.mxu0 0.0
    %5430 = vmatprep.subr.mxu0 0.0
    %5431 = vmatpush1.msra.mxu0 0.0
    %5432 = vmatprep.subr.mxu0 0.0
    %5433 = vmatpush1.msra.mxu0 0.0
    %5434 = vmatprep.subr.mxu0 0.0
    %5435 = vmatpush1.msra.mxu0 0.0
    %5436 = vmatprep.subr.mxu0 0.0
    %5437 = vmatpush1.msra.mxu0 0.0
    %5438 = vmatprep.subr.mxu0 0.0
    %5439 = vmatpush1.msra.mxu0 0.0
    %5440 = vmatprep.mubr.f32.mxu0 0.0
    %5441 = vmatmul.mubr.f32.gmra.mrb[0].mxu0 %v5374
    %v5442 = vpop.f32.mrb[0].mxu0
    %v5443 = vadd.f32 0.0, %v5442
    %v5444 = vpop.f32.mrb[0].mxu0
    %5445 = vdwg.mxu0
    %5446 = vrot.lane.b32.xlu0 %v5286, 64
    %v5447 = vpop.permute.xlu0 %5446
    %v5449 = vsel %vm2953, %v5443, %v5447
    %v5451 = vsel %vm4146, %v5449, 0
    %5453 = vmatprep.subr.mxu0 0.0
    %5454 = vmatpush1.msra.mxu0 %v3978
    %5455 = vmatprep.subr.mxu0 0.0
    %5456 = vmatpush1.msra.mxu0 %v3979
    %5457 = vmatprep.subr.mxu0 0.0
    %5458 = vmatpush1.msra.mxu0 %v3980
    %5459 = vmatprep.subr.mxu0 0.0
    %5460 = vmatpush1.msra.mxu0 %v3981
    %5461 = vmatprep.subr.mxu0 0.0
    %5462 = vmatpush1.msra.mxu0 %v3982
    %5463 = vmatprep.subr.mxu0 0.0
    %5464 = vmatpush1.msra.mxu0 %v3983
    %5465 = vmatprep.subr.mxu0 0.0
    %5466 = vmatpush1.msra.mxu0 %v3984
    %5467 = vmatprep.subr.mxu0 0.0
    %5468 = vmatpush1.msra.mxu0 %v3985
    %5469 = vmatprep.subr.mxu0 0.0
    %5470 = vmatpush1.msra.mxu0 0.0
    %5471 = vmatprep.subr.mxu0 0.0
    %5472 = vmatpush1.msra.mxu0 0.0
    %5473 = vmatprep.subr.mxu0 0.0
    %5474 = vmatpush1.msra.mxu0 0.0
    %5475 = vmatprep.subr.mxu0 0.0
    %5476 = vmatpush1.msra.mxu0 0.0
    %5477 = vmatprep.subr.mxu0 0.0
    %5478 = vmatpush1.msra.mxu0 0.0
    %5479 = vmatprep.subr.mxu0 0.0
    %5480 = vmatpush1.msra.mxu0 0.0
    %5481 = vmatprep.subr.mxu0 0.0
    %5482 = vmatpush1.msra.mxu0 0.0
    %5483 = vmatprep.subr.mxu0 0.0
    %5484 = vmatpush1.msra.mxu0 0.0
    %5485 = vmatprep.subr.mxu0 0.0
    %5486 = vmatpush1.msra.mxu0 0.0
    %5487 = vmatprep.subr.mxu0 0.0
    %5488 = vmatpush1.msra.mxu0 0.0
    %5489 = vmatprep.subr.mxu0 0.0
    %5490 = vmatpush1.msra.mxu0 0.0
    %5491 = vmatprep.subr.mxu0 0.0
    %5492 = vmatpush1.msra.mxu0 0.0
    %5493 = vmatprep.subr.mxu0 0.0
    %5494 = vmatpush1.msra.mxu0 0.0
    %5495 = vmatprep.subr.mxu0 0.0
    %5496 = vmatpush1.msra.mxu0 0.0
    %5497 = vmatprep.subr.mxu0 0.0
    %5498 = vmatpush1.msra.mxu0 0.0
    %5499 = vmatprep.subr.mxu0 0.0
    %5500 = vmatpush1.msra.mxu0 0.0
    %5501 = vmatprep.subr.mxu0 0.0
    %5502 = vmatpush1.msra.mxu0 0.0
    %5503 = vmatprep.subr.mxu0 0.0
    %5504 = vmatpush1.msra.mxu0 0.0
    %5505 = vmatprep.subr.mxu0 0.0
    %5506 = vmatpush1.msra.mxu0 0.0
    %5507 = vmatprep.subr.mxu0 0.0
    %5508 = vmatpush1.msra.mxu0 0.0
    %5509 = vmatprep.subr.mxu0 0.0
    %5510 = vmatpush1.msra.mxu0 0.0
    %5511 = vmatprep.subr.mxu0 0.0
    %5512 = vmatpush1.msra.mxu0 0.0
    %5513 = vmatprep.subr.mxu0 0.0
    %5514 = vmatpush1.msra.mxu0 0.0
    %5515 = vmatprep.subr.mxu0 0.0
    %5516 = vmatpush1.msra.mxu0 0.0
    %5517 = vmatprep.mubr.f32.mxu0 0.0
    %5518 = vmatmul.mubr.f32.gmra.mrb[0].mxu0 %v5451
    %v5519 = vpop.f32.mrb[0].mxu0
    %v5520 = vadd.f32 0.0, %v5519
    %v5521 = vpop.f32.mrb[0].mxu0
    %5522 = vdwg.mxu0
    %v5523 = vadd.f32 %v3050, %v5520
    %v5524 = vmul.f32 %v5523, 0.5
    %v5525 = vtanh.pop %v5524
    %v5526 = vmul.f32 %v5525, 0.5
    %v5527 = vadd.f32 %v5526, 0.5
    %v5528 = vtanh.pop %v5523
    %v5529 = vmul.f32 %v5527, %v5279
    %5531 = vrot.lane.b32.xlu0 %v5528, 64
    %v5532 = vpop.permute.xlu0 %5531
    %v5534 = vmul.f32 %v5527, %v5532
    %5536 = vrot.lane.b32.xlu0 %v5534, 32
    %v5537 = vpop.permute.xlu0 %5536
    %v5539 = vadd.f32 %v5529, %v5537
    %v5540 = vtanh.pop %v5539
    %5542 = vrot.lane.b32.xlu0 %v5540, 64
    %v5543 = vpop.permute.xlu0 %5542
    %v5545 = vmul.f32 %v5527, %v5543
    %v5546 = vadd.f32 %v5545, %v4244
    %5548 = vrot.lane.b32.xlu0 %v5546, 32
    %v5549 = vpop.permute.xlu0 %5548
    %v5550 = vsel %vm2953, %v5549, 0
    %5552 = vmatprep.subr.mxu0 0.0
    %5553 = vmatpush1.msra.mxu0 %v3962
    %5554 = vmatprep.subr.mxu0 0.0
    %5555 = vmatpush1.msra.mxu0 %v3963
    %5556 = vmatprep.subr.mxu0 0.0
    %5557 = vmatpush1.msra.mxu0 %v3964
    %5558 = vmatprep.subr.mxu0 0.0
    %5559 = vmatpush1.msra.mxu0 %v3965
    %5560 = vmatprep.subr.mxu0 0.0
    %5561 = vmatpush1.msra.mxu0 0.0
    %5562 = vmatprep.subr.mxu0 0.0
    %5563 = vmatpush1.msra.mxu0 0.0
    %5564 = vmatprep.subr.mxu0 0.0
    %5565 = vmatpush1.msra.mxu0 0.0
    %5566 = vmatprep.subr.mxu0 0.0
    %5567 = vmatpush1.msra.mxu0 0.0
    %5568 = vmatprep.subr.mxu0 0.0
    %5569 = vmatpush1.msra.mxu0 0.0
    %5570 = vmatprep.subr.mxu0 0.0
    %5571 = vmatpush1.msra.mxu0 0.0
    %5572 = vmatprep.subr.mxu0 0.0
    %5573 = vmatpush1.msra.mxu0 0.0
    %5574 = vmatprep.subr.mxu0 0.0
    %5575 = vmatpush1.msra.mxu0 0.0
    %5576 = vmatprep.subr.mxu0 0.0
    %5577 = vmatpush1.msra.mxu0 0.0
    %5578 = vmatprep.subr.mxu0 0.0
    %5579 = vmatpush1.msra.mxu0 0.0
    %5580 = vmatprep.subr.mxu0 0.0
    %5581 = vmatpush1.msra.mxu0 0.0
    %5582 = vmatprep.subr.mxu0 0.0
    %5583 = vmatpush1.msra.mxu0 0.0
    %5584 = vmatprep.subr.mxu0 0.0
    %5585 = vmatpush1.msra.mxu0 0.0
    %5586 = vmatprep.subr.mxu0 0.0
    %5587 = vmatpush1.msra.mxu0 0.0
    %5588 = vmatprep.subr.mxu0 0.0
    %5589 = vmatpush1.msra.mxu0 0.0
    %5590 = vmatprep.subr.mxu0 0.0
    %5591 = vmatpush1.msra.mxu0 0.0
    %5592 = vmatprep.subr.mxu0 0.0
    %5593 = vmatpush1.msra.mxu0 0.0
    %5594 = vmatprep.subr.mxu0 0.0
    %5595 = vmatpush1.msra.mxu0 0.0
    %5596 = vmatprep.subr.mxu0 0.0
    %5597 = vmatpush1.msra.mxu0 0.0
    %5598 = vmatprep.subr.mxu0 0.0
    %5599 = vmatpush1.msra.mxu0 0.0
    %5600 = vmatprep.subr.mxu0 0.0
    %5601 = vmatpush1.msra.mxu0 0.0
    %5602 = vmatprep.subr.mxu0 0.0
    %5603 = vmatpush1.msra.mxu0 0.0
    %5604 = vmatprep.subr.mxu0 0.0
    %5605 = vmatpush1.msra.mxu0 0.0
    %5606 = vmatprep.subr.mxu0 0.0
    %5607 = vmatpush1.msra.mxu0 0.0
    %5608 = vmatprep.subr.mxu0 0.0
    %5609 = vmatpush1.msra.mxu0 0.0
    %5610 = vmatprep.subr.mxu0 0.0
    %5611 = vmatpush1.msra.mxu0 0.0
    %5612 = vmatprep.subr.mxu0 0.0
    %5613 = vmatpush1.msra.mxu0 0.0
    %5614 = vmatprep.subr.mxu0 0.0
    %5615 = vmatpush1.msra.mxu0 0.0
    %5616 = vmatprep.mubr.f32.mxu0 0.0
    %5617 = vmatmul.mubr.f32.gmra.mrb[0].mxu0 %v5550
    %v5618 = vpop.f32.mrb[0].mxu0
    %v5619 = vadd.f32 0.0, %v5618
    %v5620 = vpop.f32.mrb[0].mxu0
    %5621 = vdwg.mxu0
    %v5622 = vsel %vm4056, %v5619, -inf
    %5623 = vmax.xlane.f32.xlu0 %v5622
    %v5624 = vpop.xlane.xlu0 %5623
    %v5625 = vsub.f32 %v5619, %v5624
    %v5626 = vmul.f32 %v5625, 1.442695
    %v5627 = vpow.pop %v5626
    %v5628 = vsel %vm4056, %v5627, 0.0
    %5629 = vadd.xlane.f32.xlu0 %v5628
    %v5630 = vpop.xlane.xlu0 %5629
    %v5631 = vrcp.pop %v5630
    %v5632 = vmul.f32 %v5627, %v5631
    %v5634 = vsel %vm4068, %v5632, 0
    %5636 = vmatprep.subr.mxu0 0.0
    %5637 = vmatpush1.msra.mxu0 %v3945
    %5638 = vmatprep.subr.mxu0 0.0
    %5639 = vmatpush1.msra.mxu0 0.0
    %5640 = vmatprep.subr.mxu0 0.0
    %5641 = vmatpush1.msra.mxu0 0.0
    %5642 = vmatprep.subr.mxu0 0.0
    %5643 = vmatpush1.msra.mxu0 0.0
    %5644 = vmatprep.subr.mxu0 0.0
    %5645 = vmatpush1.msra.mxu0 0.0
    %5646 = vmatprep.subr.mxu0 0.0
    %5647 = vmatpush1.msra.mxu0 0.0
    %5648 = vmatprep.subr.mxu0 0.0
    %5649 = vmatpush1.msra.mxu0 0.0
    %5650 = vmatprep.subr.mxu0 0.0
    %5651 = vmatpush1.msra.mxu0 0.0
    %5652 = vmatprep.subr.mxu0 0.0
    %5653 = vmatpush1.msra.mxu0 0.0
    %5654 = vmatprep.subr.mxu0 0.0
    %5655 = vmatpush1.msra.mxu0 0.0
    %5656 = vmatprep.subr.mxu0 0.0
    %5657 = vmatpush1.msra.mxu0 0.0
    %5658 = vmatprep.subr.mxu0 0.0
    %5659 = vmatpush1.msra.mxu0 0.0
    %5660 = vmatprep.subr.mxu0 0.0
    %5661 = vmatpush1.msra.mxu0 0.0
    %5662 = vmatprep.subr.mxu0 0.0
    %5663 = vmatpush1.msra.mxu0 0.0
    %5664 = vmatprep.subr.mxu0 0.0
    %5665 = vmatpush1.msra.mxu0 0.0
    %5666 = vmatprep.subr.mxu0 0.0
    %5667 = vmatpush1.msra.mxu0 0.0
    %5668 = vmatprep.subr.mxu0 0.0
    %5669 = vmatpush1.msra.mxu0 0.0
    %5670 = vmatprep.subr.mxu0 0.0
    %5671 = vmatpush1.msra.mxu0 0.0
    %5672 = vmatprep.subr.mxu0 0.0
    %5673 = vmatpush1.msra.mxu0 0.0
    %5674 = vmatprep.subr.mxu0 0.0
    %5675 = vmatpush1.msra.mxu0 0.0
    %5676 = vmatprep.subr.mxu0 0.0
    %5677 = vmatpush1.msra.mxu0 0.0
    %5678 = vmatprep.subr.mxu0 0.0
    %5679 = vmatpush1.msra.mxu0 0.0
    %5680 = vmatprep.subr.mxu0 0.0
    %5681 = vmatpush1.msra.mxu0 0.0
    %5682 = vmatprep.subr.mxu0 0.0
    %5683 = vmatpush1.msra.mxu0 0.0
    %5684 = vmatprep.subr.mxu0 0.0
    %5685 = vmatpush1.msra.mxu0 0.0
    %5686 = vmatprep.subr.mxu0 0.0
    %5687 = vmatpush1.msra.mxu0 0.0
    %5688 = vmatprep.subr.mxu0 0.0
    %5689 = vmatpush1.msra.mxu0 0.0
    %5690 = vmatprep.subr.mxu0 0.0
    %5691 = vmatpush1.msra.mxu0 0.0
    %5692 = vmatprep.subr.mxu0 0.0
    %5693 = vmatpush1.msra.mxu0 0.0
    %5694 = vmatprep.subr.mxu0 0.0
    %5695 = vmatpush1.msra.mxu0 0.0
    %5696 = vmatprep.subr.mxu0 0.0
    %5697 = vmatpush1.msra.mxu0 0.0
    %5698 = vmatprep.subr.mxu0 0.0
    %5699 = vmatpush1.msra.mxu0 0.0
    %5700 = vmatprep.mubr.f32.mxu0 0.0
    %5701 = vmatmul.mubr.f32.gmra.mrb[0].mxu0 %v5634
    %v5702 = vpop.f32.mrb[0].mxu0
    %v5703 = vadd.f32 0.0, %v5702
    %v5704 = vpop.f32.mrb[0].mxu0
    %5705 = vdwg.mxu0
    %5706 = vrot.lane.b32.xlu0 %v5546, 64
    %v5707 = vpop.permute.xlu0 %5706
    %v5709 = vsel %vm2953, %v5703, %v5707
    %v5711 = vsel %vm4146, %v5709, 0
    %5713 = vmatprep.subr.mxu0 0.0
    %5714 = vmatpush1.msra.mxu0 %v3978
    %5715 = vmatprep.subr.mxu0 0.0
    %5716 = vmatpush1.msra.mxu0 %v3979
    %5717 = vmatprep.subr.mxu0 0.0
    %5718 = vmatpush1.msra.mxu0 %v3980
    %5719 = vmatprep.subr.mxu0 0.0
    %5720 = vmatpush1.msra.mxu0 %v3981
    %5721 = vmatprep.subr.mxu0 0.0
    %5722 = vmatpush1.msra.mxu0 %v3982
    %5723 = vmatprep.subr.mxu0 0.0
    %5724 = vmatpush1.msra.mxu0 %v3983
    %5725 = vmatprep.subr.mxu0 0.0
    %5726 = vmatpush1.msra.mxu0 %v3984
    %5727 = vmatprep.subr.mxu0 0.0
    %5728 = vmatpush1.msra.mxu0 %v3985
    %5729 = vmatprep.subr.mxu0 0.0
    %5730 = vmatpush1.msra.mxu0 0.0
    %5731 = vmatprep.subr.mxu0 0.0
    %5732 = vmatpush1.msra.mxu0 0.0
    %5733 = vmatprep.subr.mxu0 0.0
    %5734 = vmatpush1.msra.mxu0 0.0
    %5735 = vmatprep.subr.mxu0 0.0
    %5736 = vmatpush1.msra.mxu0 0.0
    %5737 = vmatprep.subr.mxu0 0.0
    %5738 = vmatpush1.msra.mxu0 0.0
    %5739 = vmatprep.subr.mxu0 0.0
    %5740 = vmatpush1.msra.mxu0 0.0
    %5741 = vmatprep.subr.mxu0 0.0
    %5742 = vmatpush1.msra.mxu0 0.0
    %5743 = vmatprep.subr.mxu0 0.0
    %5744 = vmatpush1.msra.mxu0 0.0
    %5745 = vmatprep.subr.mxu0 0.0
    %5746 = vmatpush1.msra.mxu0 0.0
    %5747 = vmatprep.subr.mxu0 0.0
    %5748 = vmatpush1.msra.mxu0 0.0
    %5749 = vmatprep.subr.mxu0 0.0
    %5750 = vmatpush1.msra.mxu0 0.0
    %5751 = vmatprep.subr.mxu0 0.0
    %5752 = vmatpush1.msra.mxu0 0.0
    %5753 = vmatprep.subr.mxu0 0.0
    %5754 = vmatpush1.msra.mxu0 0.0
    %5755 = vmatprep.subr.mxu0 0.0
    %5756 = vmatpush1.msra.mxu0 0.0
    %5757 = vmatprep.subr.mxu0 0.0
    %5758 = vmatpush1.msra.mxu0 0.0
    %5759 = vmatprep.subr.mxu0 0.0
    %5760 = vmatpush1.msra.mxu0 0.0
    %5761 = vmatprep.subr.mxu0 0.0
    %5762 = vmatpush1.msra.mxu0 0.0
    %5763 = vmatprep.subr.mxu0 0.0
    %5764 = vmatpush1.msra.mxu0 0.0
    %5765 = vmatprep.subr.mxu0 0.0
    %5766 = vmatpush1.msra.mxu0 0.0
    %5767 = vmatprep.subr.mxu0 0.0
    %5768 = vmatpush1.msra.mxu0 0.0
    %5769 = vmatprep.subr.mxu0 0.0
    %5770 = vmatpush1.msra.mxu0 0.0
    %5771 = vmatprep.subr.mxu0 0.0
    %5772 = vmatpush1.msra.mxu0 0.0
    %5773 = vmatprep.subr.mxu0 0.0
    %5774 = vmatpush1.msra.mxu0 0.0
    %5775 = vmatprep.subr.mxu0 0.0
    %5776 = vmatpush1.msra.mxu0 0.0
    %5777 = vmatprep.mubr.f32.mxu0 0.0
    %5778 = vmatmul.mubr.f32.gmra.mrb[0].mxu0 %v5711
    %v5779 = vpop.f32.mrb[0].mxu0
    %v5780 = vadd.f32 0.0, %v5779
    %v5781 = vpop.f32.mrb[0].mxu0
    %5782 = vdwg.mxu0
    %v5783 = vadd.f32 %v3050, %v5780
    %v5784 = vmul.f32 %v5783, 0.5
    %v5785 = vtanh.pop %v5784
    %v5786 = vmul.f32 %v5785, 0.5
    %v5787 = vadd.f32 %v5786, 0.5
    %v5788 = vtanh.pop %v5783
    %v5789 = vmul.f32 %v5787, %v5539
    %5791 = vrot.lane.b32.xlu0 %v5788, 64
    %v5792 = vpop.permute.xlu0 %5791
    %v5794 = vmul.f32 %v5787, %v5792
    %5796 = vrot.lane.b32.xlu0 %v5794, 32
    %v5797 = vpop.permute.xlu0 %5796
    %v5799 = vadd.f32 %v5789, %v5797
    %v5800 = vtanh.pop %v5799
    %5802 = vrot.lane.b32.xlu0 %v5800, 64
    %v5803 = vpop.permute.xlu0 %5802
    %v5805 = vmul.f32 %v5787, %v5803
    %v5806 = vadd.f32 %v5805, %v4244
    %5808 = vrot.lane.b32.xlu0 %v5806, 32
    %v5809 = vpop.permute.xlu0 %5808
    %v5810 = vsel %vm2953, %v5809, 0
    %5812 = vmatprep.subr.mxu0 0.0
    %5813 = vmatpush1.msra.mxu0 %v3962
    %5814 = vmatprep.subr.mxu0 0.0
    %5815 = vmatpush1.msra.mxu0 %v3963
    %5816 = vmatprep.subr.mxu0 0.0
    %5817 = vmatpush1.msra.mxu0 %v3964
    %5818 = vmatprep.subr.mxu0 0.0
    %5819 = vmatpush1.msra.mxu0 %v3965
    %5820 = vmatprep.subr.mxu0 0.0
    %5821 = vmatpush1.msra.mxu0 0.0
    %5822 = vmatprep.subr.mxu0 0.0
    %5823 = vmatpush1.msra.mxu0 0.0
    %5824 = vmatprep.subr.mxu0 0.0
    %5825 = vmatpush1.msra.mxu0 0.0
    %5826 = vmatprep.subr.mxu0 0.0
    %5827 = vmatpush1.msra.mxu0 0.0
    %5828 = vmatprep.subr.mxu0 0.0
    %5829 = vmatpush1.msra.mxu0 0.0
    %5830 = vmatprep.subr.mxu0 0.0
    %5831 = vmatpush1.msra.mxu0 0.0
    %5832 = vmatprep.subr.mxu0 0.0
    %5833 = vmatpush1.msra.mxu0 0.0
    %5834 = vmatprep.subr.mxu0 0.0
    %5835 = vmatpush1.msra.mxu0 0.0
    %5836 = vmatprep.subr.mxu0 0.0
    %5837 = vmatpush1.msra.mxu0 0.0
    %5838 = vmatprep.subr.mxu0 0.0
    %5839 = vmatpush1.msra.mxu0 0.0
    %5840 = vmatprep.subr.mxu0 0.0
    %5841 = vmatpush1.msra.mxu0 0.0
    %5842 = vmatprep.subr.mxu0 0.0
    %5843 = vmatpush1.msra.mxu0 0.0
    %5844 = vmatprep.subr.mxu0 0.0
    %5845 = vmatpush1.msra.mxu0 0.0
    %5846 = vmatprep.subr.mxu0 0.0
    %5847 = vmatpush1.msra.mxu0 0.0
    %5848 = vmatprep.subr.mxu0 0.0
    %5849 = vmatpush1.msra.mxu0 0.0
    %5850 = vmatprep.subr.mxu0 0.0
    %5851 = vmatpush1.msra.mxu0 0.0
    %5852 = vmatprep.subr.mxu0 0.0
    %5853 = vmatpush1.msra.mxu0 0.0
    %5854 = vmatprep.subr.mxu0 0.0
    %5855 = vmatpush1.msra.mxu0 0.0
    %5856 = vmatprep.subr.mxu0 0.0
    %5857 = vmatpush1.msra.mxu0 0.0
    %5858 = vmatprep.subr.mxu0 0.0
    %5859 = vmatpush1.msra.mxu0 0.0
    %5860 = vmatprep.subr.mxu0 0.0
    %5861 = vmatpush1.msra.mxu0 0.0
    %5862 = vmatprep.subr.mxu0 0.0
    %5863 = vmatpush1.msra.mxu0 0.0
    %5864 = vmatprep.subr.mxu0 0.0
    %5865 = vmatpush1.msra.mxu0 0.0
    %5866 = vmatprep.subr.mxu0 0.0
    %5867 = vmatpush1.msra.mxu0 0.0
    %5868 = vmatprep.subr.mxu0 0.0
    %5869 = vmatpush1.msra.mxu0 0.0
    %5870 = vmatprep.subr.mxu0 0.0
    %5871 = vmatpush1.msra.mxu0 0.0
    %5872 = vmatprep.subr.mxu0 0.0
    %5873 = vmatpush1.msra.mxu0 0.0
    %5874 = vmatprep.subr.mxu0 0.0
    %5875 = vmatpush1.msra.mxu0 0.0
    %5876 = vmatprep.mubr.f32.mxu0 0.0
    %5877 = vmatmul.mubr.f32.gmra.mrb[0].mxu0 %v5810
    %v5878 = vpop.f32.mrb[0].mxu0
    %v5879 = vadd.f32 0.0, %v5878
    %v5880 = vpop.f32.mrb[0].mxu0
    %5881 = vdwg.mxu0
    %v5882 = vsel %vm4056, %v5879, -inf
    %5883 = vmax.xlane.f32.xlu0 %v5882
    %v5884 = vpop.xlane.xlu0 %5883
    %v5885 = vsub.f32 %v5879, %v5884
    %v5886 = vmul.f32 %v5885, 1.442695
    %v5887 = vpow.pop %v5886
    %v5888 = vsel %vm4056, %v5887, 0.0
    %5889 = vadd.xlane.f32.xlu0 %v5888
    %v5890 = vpop.xlane.xlu0 %5889
    %v5891 = vrcp.pop %v5890
    %v5892 = vmul.f32 %v5887, %v5891
    %v5894 = vsel %vm4068, %v5892, 0
    %5896 = vmatprep.subr.mxu0 0.0
    %5897 = vmatpush1.msra.mxu0 %v3945
    %5898 = vmatprep.subr.mxu0 0.0
    %5899 = vmatpush1.msra.mxu0 0.0
    %5900 = vmatprep.subr.mxu0 0.0
    %5901 = vmatpush1.msra.mxu0 0.0
    %5902 = vmatprep.subr.mxu0 0.0
    %5903 = vmatpush1.msra.mxu0 0.0
    %5904 = vmatprep.subr.mxu0 0.0
    %5905 = vmatpush1.msra.mxu0 0.0
    %5906 = vmatprep.subr.mxu0 0.0
    %5907 = vmatpush1.msra.mxu0 0.0
    %5908 = vmatprep.subr.mxu0 0.0
    %5909 = vmatpush1.msra.mxu0 0.0
    %5910 = vmatprep.subr.mxu0 0.0
    %5911 = vmatpush1.msra.mxu0 0.0
    %5912 = vmatprep.subr.mxu0 0.0
    %5913 = vmatpush1.msra.mxu0 0.0
    %5914 = vmatprep.subr.mxu0 0.0
    %5915 = vmatpush1.msra.mxu0 0.0
    %5916 = vmatprep.subr.mxu0 0.0
    %5917 = vmatpush1.msra.mxu0 0.0
    %5918 = vmatprep.subr.mxu0 0.0
    %5919 = vmatpush1.msra.mxu0 0.0
    %5920 = vmatprep.subr.mxu0 0.0
    %5921 = vmatpush1.msra.mxu0 0.0
    %5922 = vmatprep.subr.mxu0 0.0
    %5923 = vmatpush1.msra.mxu0 0.0
    %5924 = vmatprep.subr.mxu0 0.0
    %5925 = vmatpush1.msra.mxu0 0.0
    %5926 = vmatprep.subr.mxu0 0.0
    %5927 = vmatpush1.msra.mxu0 0.0
    %5928 = vmatprep.subr.mxu0 0.0
    %5929 = vmatpush1.msra.mxu0 0.0
    %5930 = vmatprep.subr.mxu0 0.0
    %5931 = vmatpush1.msra.mxu0 0.0
    %5932 = vmatprep.subr.mxu0 0.0
    %5933 = vmatpush1.msra.mxu0 0.0
    %5934 = vmatprep.subr.mxu0 0.0
    %5935 = vmatpush1.msra.mxu0 0.0
    %5936 = vmatprep.subr.mxu0 0.0
    %5937 = vmatpush1.msra.mxu0 0.0
    %5938 = vmatprep.subr.mxu0 0.0
    %5939 = vmatpush1.msra.mxu0 0.0
    %5940 = vmatprep.subr.mxu0 0.0
    %5941 = vmatpush1.msra.mxu0 0.0
    %5942 = vmatprep.subr.mxu0 0.0
    %5943 = vmatpush1.msra.mxu0 0.0
    %5944 = vmatprep.subr.mxu0 0.0
    %5945 = vmatpush1.msra.mxu0 0.0
    %5946 = vmatprep.subr.mxu0 0.0
    %5947 = vmatpush1.msra.mxu0 0.0
    %5948 = vmatprep.subr.mxu0 0.0
    %5949 = vmatpush1.msra.mxu0 0.0
    %5950 = vmatprep.subr.mxu0 0.0
    %5951 = vmatpush1.msra.mxu0 0.0
    %5952 = vmatprep.subr.mxu0 0.0
    %5953 = vmatpush1.msra.mxu0 0.0
    %5954 = vmatprep.subr.mxu0 0.0
    %5955 = vmatpush1.msra.mxu0 0.0
    %5956 = vmatprep.subr.mxu0 0.0
    %5957 = vmatpush1.msra.mxu0 0.0
    %5958 = vmatprep.subr.mxu0 0.0
    %5959 = vmatpush1.msra.mxu0 0.0
    %5960 = vmatprep.mubr.f32.mxu0 0.0
    %5961 = vmatmul.mubr.f32.gmra.mrb[0].mxu0 %v5894
    %v5962 = vpop.f32.mrb[0].mxu0
    %v5963 = vadd.f32 0.0, %v5962
    %v5964 = vpop.f32.mrb[0].mxu0
    %5965 = vdwg.mxu0
    %5966 = vrot.lane.b32.xlu0 %v5806, 64
    %v5967 = vpop.permute.xlu0 %5966
    %v5969 = vsel %vm2953, %v5963, %v5967
    %v5971 = vsel %vm4146, %v5969, 0
    %5973 = vmatprep.subr.mxu0 0.0
    %5974 = vmatpush1.msra.mxu0 %v3978
    %5975 = vmatprep.subr.mxu0 0.0
    %5976 = vmatpush1.msra.mxu0 %v3979
    %5977 = vmatprep.subr.mxu0 0.0
    %5978 = vmatpush1.msra.mxu0 %v3980
    %5979 = vmatprep.subr.mxu0 0.0
    %5980 = vmatpush1.msra.mxu0 %v3981
    %5981 = vmatprep.subr.mxu0 0.0
    %5982 = vmatpush1.msra.mxu0 %v3982
    %5983 = vmatprep.subr.mxu0 0.0
    %5984 = vmatpush1.msra.mxu0 %v3983
    %5985 = vmatprep.subr.mxu0 0.0
    %5986 = vmatpush1.msra.mxu0 %v3984
    %5987 = vmatprep.subr.mxu0 0.0
    %5988 = vmatpush1.msra.mxu0 %v3985
    %5989 = vmatprep.subr.mxu0 0.0
    %5990 = vmatpush1.msra.mxu0 0.0
    %5991 = vmatprep.subr.mxu0 0.0
    %5992 = vmatpush1.msra.mxu0 0.0
    %5993 = vmatprep.subr.mxu0 0.0
    %5994 = vmatpush1.msra.mxu0 0.0
    %5995 = vmatprep.subr.mxu0 0.0
    %5996 = vmatpush1.msra.mxu0 0.0
    %5997 = vmatprep.subr.mxu0 0.0
    %5998 = vmatpush1.msra.mxu0 0.0
    %5999 = vmatprep.subr.mxu0 0.0
    %6000 = vmatpush1.msra.mxu0 0.0
    %6001 = vmatprep.subr.mxu0 0.0
    %6002 = vmatpush1.msra.mxu0 0.0
    %6003 = vmatprep.subr.mxu0 0.0
    %6004 = vmatpush1.msra.mxu0 0.0
    %6005 = vmatprep.subr.mxu0 0.0
    %6006 = vmatpush1.msra.mxu0 0.0
    %6007 = vmatprep.subr.mxu0 0.0
    %6008 = vmatpush1.msra.mxu0 0.0
    %6009 = vmatprep.subr.mxu0 0.0
    %6010 = vmatpush1.msra.mxu0 0.0
    %6011 = vmatprep.subr.mxu0 0.0
    %6012 = vmatpush1.msra.mxu0 0.0
    %6013 = vmatprep.subr.mxu0 0.0
    %6014 = vmatpush1.msra.mxu0 0.0
    %6015 = vmatprep.subr.mxu0 0.0
    %6016 = vmatpush1.msra.mxu0 0.0
    %6017 = vmatprep.subr.mxu0 0.0
    %6018 = vmatpush1.msra.mxu0 0.0
    %6019 = vmatprep.subr.mxu0 0.0
    %6020 = vmatpush1.msra.mxu0 0.0
    %6021 = vmatprep.subr.mxu0 0.0
    %6022 = vmatpush1.msra.mxu0 0.0
    %6023 = vmatprep.subr.mxu0 0.0
    %6024 = vmatpush1.msra.mxu0 0.0
    %6025 = vmatprep.subr.mxu0 0.0
    %6026 = vmatpush1.msra.mxu0 0.0
    %6027 = vmatprep.subr.mxu0 0.0
    %6028 = vmatpush1.msra.mxu0 0.0
    %6029 = vmatprep.subr.mxu0 0.0
    %6030 = vmatpush1.msra.mxu0 0.0
    %6031 = vmatprep.subr.mxu0 0.0
    %6032 = vmatpush1.msra.mxu0 0.0
    %6033 = vmatprep.subr.mxu0 0.0
    %6034 = vmatpush1.msra.mxu0 0.0
    %6035 = vmatprep.subr.mxu0 0.0
    %6036 = vmatpush1.msra.mxu0 0.0
    %6037 = vmatprep.mubr.f32.mxu0 0.0
    %6038 = vmatmul.mubr.f32.gmra.mrb[0].mxu0 %v5971
    %v6039 = vpop.f32.mrb[0].mxu0
    %v6040 = vadd.f32 0.0, %v6039
    %v6041 = vpop.f32.mrb[0].mxu0
    %6042 = vdwg.mxu0
    %v6043 = vadd.f32 %v3050, %v6040
    %v6044 = vmul.f32 %v6043, 0.5
    %v6045 = vtanh.pop %v6044
    %v6046 = vmul.f32 %v6045, 0.5
    %v6047 = vadd.f32 %v6046, 0.5
    %v6048 = vtanh.pop %v6043
    %v6049 = vmul.f32 %v6047, %v5799
    %6051 = vrot.lane.b32.xlu0 %v6048, 64
    %v6052 = vpop.permute.xlu0 %6051
    %v6054 = vmul.f32 %v6047, %v6052
    %6056 = vrot.lane.b32.xlu0 %v6054, 32
    %v6057 = vpop.permute.xlu0 %6056
    %v6059 = vadd.f32 %v6049, %v6057
    %v6060 = vtanh.pop %v6059
    %6062 = vrot.lane.b32.xlu0 %v6060, 64
    %v6063 = vpop.permute.xlu0 %6062
    %v6065 = vmul.f32 %v6047, %v6063
    %v6066 = vadd.f32 %v6065, %v4244
    %v6067 = vmul.f32 %v6066, %v6066
    %6069 = vrot.lane.b32.xlu0 %v6067, 32
    %v6070 = vpop.permute.xlu0 %6069
    %vm6072 = vcmask 257024
    %v6073 = vsel %vm6072, %v6070, 0.0
    %6074 = vadd.xlane.f32.xlu0 %v6073
    %v6075 = vpop.xlane.xlu0 %6074
    %v6076 = vmax.f32 %v6075, 1e-24
    %v6077 = vrsqrt.pop %v6076
    %v6078 = vmul.f32 %v6066, %v6077
    %v6079 = vmul.f32 %v3962, %v3962
    %v6080 = vmul.f32 %v3963, %v3963
    %v6081 = vmul.f32 %v3964, %v3964
    %v6082 = vmul.f32 %v3965, %v3965
    %v6083 = vsel %vm4068, %v6079, 0.0
    %v6084 = vsel %vm4068, %v6080, 0.0
    %v6085 = vadd.f32 %v6083, %v6084
    %v6086 = vsel %vm4068, %v6081, 0.0
    %v6087 = vadd.f32 %v6085, %v6086
    %v6088 = vsel %vm4068, %v6082, 0.0
    %v6089 = vadd.f32 %v6087, %v6088
    %v6090 = vrot.slane %v6089, 4
    %v6091 = vadd.f32 %v6089, %v6090
    %v6092 = vrot.slane %v6091, 2
    %v6093 = vadd.f32 %v6091, %v6092
    %v6094 = vrot.slane %v6093, 1
    %v6095 = vadd.f32 %v6093, %v6094
    %v6096 = vmax.f32 %v6095, 1e-24
    %v6097 = vrsqrt.pop %v6096
    %v6098 = vmul.f32 %v3962, %v6097
    %v6099 = vmul.f32 %v3963, %v6097
    %v6100 = vmul.f32 %v3964, %v6097
    %v6101 = vmul.f32 %v3965, %v6097
    %6103 = vrot.lane.b32.xlu0 %v6078, 32
    %v6104 = vpop.permute.xlu0 %6103
    %v6105 = vsel %vm2953, %v6104, 0
    %6107 = vmatprep.subr.mxu0 0.0
    %6108 = vmatpush1.msra.mxu0 %v6098
    %6109 = vmatprep.subr.mxu0 0.0
    %6110 = vmatpush1.msra.mxu0 %v6099
    %6111 = vmatprep.subr.mxu0 0.0
    %6112 = vmatpush1.msra.mxu0 %v6100
    %6113 = vmatprep.subr.mxu0 0.0
    %6114 = vmatpush1.msra.mxu0 %v6101
    %6115 = vmatprep.subr.mxu0 0.0
    %6116 = vmatpush1.msra.mxu0 0.0
    %6117 = vmatprep.subr.mxu0 0.0
    %6118 = vmatpush1.msra.mxu0 0.0
    %6119 = vmatprep.subr.mxu0 0.0
    %6120 = vmatpush1.msra.mxu0 0.0
    %6121 = vmatprep.subr.mxu0 0.0
    %6122 = vmatpush1.msra.mxu0 0.0
    %6123 = vmatprep.subr.mxu0 0.0
    %6124 = vmatpush1.msra.mxu0 0.0
    %6125 = vmatprep.subr.mxu0 0.0
    %6126 = vmatpush1.msra.mxu0 0.0
    %6127 = vmatprep.subr.mxu0 0.0
    %6128 = vmatpush1.msra.mxu0 0.0
    %6129 = vmatprep.subr.mxu0 0.0
    %6130 = vmatpush1.msra.mxu0 0.0
    %6131 = vmatprep.subr.mxu0 0.0
    %6132 = vmatpush1.msra.mxu0 0.0
    %6133 = vmatprep.subr.mxu0 0.0
    %6134 = vmatpush1.msra.mxu0 0.0
    %6135 = vmatprep.subr.mxu0 0.0
    %6136 = vmatpush1.msra.mxu0 0.0
    %6137 = vmatprep.subr.mxu0 0.0
    %6138 = vmatpush1.msra.mxu0 0.0
    %6139 = vmatprep.subr.mxu0 0.0
    %6140 = vmatpush1.msra.mxu0 0.0
    %6141 = vmatprep.subr.mxu0 0.0
    %6142 = vmatpush1.msra.mxu0 0.0
    %6143 = vmatprep.subr.mxu0 0.0
    %6144 = vmatpush1.msra.mxu0 0.0
    %6145 = vmatprep.subr.mxu0 0.0
    %6146 = vmatpush1.msra.mxu0 0.0
    %6147 = vmatprep.subr.mxu0 0.0
    %6148 = vmatpush1.msra.mxu0 0.0
    %6149 = vmatprep.subr.mxu0 0.0
    %6150 = vmatpush1.msra.mxu0 0.0
    %6151 = vmatprep.subr.mxu0 0.0
    %6152 = vmatpush1.msra.mxu0 0.0
    %6153 = vmatprep.subr.mxu0 0.0
    %6154 = vmatpush1.msra.mxu0 0.0
    %6155 = vmatprep.subr.mxu0 0.0
    %6156 = vmatpush1.msra.mxu0 0.0
    %6157 = vmatprep.subr.mxu0 0.0
    %6158 = vmatpush1.msra.mxu0 0.0
    %6159 = vmatprep.subr.mxu0 0.0
    %6160 = vmatpush1.msra.mxu0 0.0
    %6161 = vmatprep.subr.mxu0 0.0
    %6162 = vmatpush1.msra.mxu0 0.0
    %6163 = vmatprep.subr.mxu0 0.0
    %6164 = vmatpush1.msra.mxu0 0.0
    %6165 = vmatprep.subr.mxu0 0.0
    %6166 = vmatpush1.msra.mxu0 0.0
    %6167 = vmatprep.subr.mxu0 0.0
    %6168 = vmatpush1.msra.mxu0 0.0
    %6169 = vmatprep.subr.mxu0 0.0
    %6170 = vmatpush1.msra.mxu0 0.0
    %6171 = vmatprep.mubr.f32.mxu0 0.0
    %6172 = vmatmul.mubr.f32.gmra.mrb[0].mxu0 %v6105
    %v6173 = vpop.f32.mrb[0].mxu0
    %v6174 = vadd.f32 0.0, %v6173
    %v6175 = vpop.f32.mrb[0].mxu0
    %6176 = vdwg.mxu0
    %6177 = vst.msk [vmem:[#allocation2] sm:$0xf] %vm4056, %v6174
    // Predicated region
    $region38: #{matching_net_forward.1} parent=1 // pred_check
      _
    $region39: #{matching_net_forward.1} parent=1 // pred_check_branch
      %6179 = sbr.rel (0) target = $region41
    $region40: #{matching_net_forward.1} parent=1 // pred_region
      %s6181 = ssub.s32 64, 64
      %6182 = vsyncadd [#allocation3], %s6181
      %s6184 = sshll.u32 [#allocation2], 4
      %s6185 = int_to_ptr.vmem [resolvable:$true] %s6184
      %6187 = dma.vmem_to_hbm [thread:$0]  %s6185, 64, %s9, [#allocation3]
    $region41: #{matching_net_forward.1} parent=1 // pred_fallthru
      _
    // Predicated region
    $region42: #{matching_net_forward.1} parent=1 // pred_check
      _
    $region43: #{matching_net_forward.1} parent=1 // pred_check_branch
      %6189 = sbr.rel (0) target = $region45
    $region44: #{matching_net_forward.1} parent=1 // pred_region
      %6190 = dma.done [#allocation3], 64
    $region45: #{matching_net_forward.1} parent=1 // pred_fallthru
      _
    %6191 = vsyncpa [#allocation3], 1

</llo_original>
